<compile_context>
chip_gen: v7x
topology: tpu7x:2x2x1
jax: 0.10.0
libtpu: 0.0.40
codegen_flags: <defaults>
</compile_context>

<pallas_src>
import functools
import math

import jax
import jax.numpy as jnp
from jax.experimental import pallas as pl
from jax.experimental.pallas import tpu as pltpu


# ----------------------------- shared math helpers ---------------------------

def _layernorm(x, g, b, eps=1e-5):
    mu = jnp.mean(x, axis=-1, keepdims=True)
    var = jnp.mean(jnp.square(x - mu), axis=-1, keepdims=True)
    return (x - mu) * jax.lax.rsqrt(var + eps) * g + b


def _gelu_tanh(x):
    # TODO(synk): PyTorch nn.GELU() defaults to the erf-based form; erf has no
    # reliable Mosaic lowering, so the tanh approximation (|diff| < 1e-3) is
    # used STATICALLY in both the kernel and the reference.
    c = 0.7978845608028654  # sqrt(2/pi)
    return 0.5 * x * (1.0 + jnp.tanh(c * (x + 0.044715 * x * x * x)))


# --------------------------------- kernel ------------------------------------

def _transformer_block_kernel(
    feats_ref, rel_ref,
    pos_small_ref, pw2_ref, wqkv_ref, wo_ref, fw1_ref, fw2_ref, vecs_ref,
    o_ref,
    *, heads, dim_head, nbrs, mxu_dtype,
):
    feats = feats_ref[...]                       # (R, D)  f32, lane-dense
    rel = rel_ref[...]                           # (R, 2)  f32 (y-x, z-x)
    R, D = feats.shape
    inner = heads * dim_head
    npts = R // nbrs                             # whole points in this tile

    ps = pos_small_ref[...]                      # (5, D//8) packed small params
    vecs = vecs_ref[...]                         # (8, D)    packed vector params
    pos_b2, n1_g, n1_b, bo = vecs[0:1], vecs[1:2], vecs[2:3], vecs[3:4]
    n2_g, n2_b, fb1, fb2 = vecs[4:5], vecs[5:6], vecs[6:7], vecs[7:8]

    # --- relative-position MLP ---
    # Contraction depth 2 (the x-component of the relative position is
    # identically zero and was dropped in the wrapper) -> broadcast FMAs on
    # the VPU instead of an MXU dot.
    h = ps[2:3] + rel[:, 0:1] * ps[0:1] + rel[:, 1:2] * ps[1:2]
    h = _layernorm(h, ps[3:4], ps[4:5])
    h = jnp.maximum(h, 0.0)
    pos = jnp.dot(h.astype(mxu_dtype), pw2_ref[...],
                  preferred_element_type=jnp.float32) + pos_b2

    # --- norm1(features + pos) ---
    y = _layernorm(feats + pos, n1_g, n1_b)                      # (R, D) f32

    # --- fused grouped Q/K/V: one (R, D) @ (D, 3*inner) MXU matmul ---
    # Kept in the MXU dtype: it is the largest live value in the kernel and is
    # only ever consumed by MXU ops.
    # TODO(synk): block-diagonal dense weights waste `heads`x FLOPs here; at
    # production dims (D/heads >= 128) switch to a grouped contraction.
    qkv = jnp.dot(y.astype(mxu_dtype), wqkv_ref[...],
                  preferred_element_type=jnp.float32).astype(mxu_dtype)

    # --- per-head attention + per-head output projection (accumulated) ---
    scale = dim_head ** (-0.5)
    att = feats + bo                             # f32 accumulator: residual + out-bias
    for hd in range(heads):                      # small static unroll
        q0 = hd * dim_head                       # 128-aligned lane slices
        qh = qkv[:, q0:q0 + dim_head].reshape(npts, nbrs, dim_head)
        kh = qkv[:, inner + q0:inner + q0 + dim_head].reshape(npts, nbrs, dim_head)
        vh = qkv[:, 2 * inner + q0:2 * inner + q0 + dim_head].reshape(npts, nbrs, dim_head)
        dots = jnp.einsum("pid,pjd->pij", qh, kh,
                          preferred_element_type=jnp.float32) * scale
        dots = dots - jnp.max(dots, axis=-1, keepdims=True)
        e = jnp.exp(dots)
        attn = e * pl.reciprocal(jnp.sum(e, axis=-1, keepdims=True), approx=True)
        oh = jnp.einsum("pij,pjd->pid", attn.astype(mxu_dtype), vh,
                        preferred_element_type=jnp.float32)      # (npts, nbrs, Dh) f32
        # project through this head's 128-aligned slice of Wo and accumulate:
        # avoids materializing the (R, inner) concat slab entirely.
        att = att + jnp.dot(oh.reshape(R, dim_head).astype(mxu_dtype),
                            wo_ref[q0:q0 + dim_head, :],
                            preferred_element_type=jnp.float32)

    # --- FFN(norm2(att)) + residual ---
    z = _layernorm(att, n2_g, n2_b)
    z = jnp.dot(z.astype(mxu_dtype), fw1_ref[...],
                preferred_element_type=jnp.float32) + fb1
    z = _gelu_tanh(z)
    z = jnp.dot(z.astype(mxu_dtype), fw2_ref[...],
                preferred_element_type=jnp.float32) + fb2
    o_ref[...] = (z + att).astype(o_ref.dtype)


# ------------------------- chip detection / tiling ---------------------------

def _tpu_config():
    """Return (tensorcores_per_chip, scoped-VMEM limit in bytes)."""
    vmem_bytes = None
    cores = 1
    try:
        info = pltpu.get_tpu_info()
        vb = int(getattr(info, "vmem_capacity_bytes", 0) or 0)
        if vb > 0:
            vmem_bytes = vb
    except Exception:
        pass
    try:
        kind = (jax.devices()[0].device_kind or "").lower()
    except Exception:
        kind = ""
    if ("v7" in kind) or ("7x" in kind):
        cores = 2                                # v7x: 2 TensorCores / chip
        if vmem_bytes is None:
            vmem_bytes = 64 * 1024 * 1024
    if vmem_bytes is None:
        # unknown chip: keep the conservative budget that is known to work
        return cores, 32 * 1024 * 1024
    limit = int(vmem_bytes * 3 // 4)             # leave compiler headroom
    limit = max(32 * 1024 * 1024, min(limit, 100 * 1024 * 1024))
    return cores, limit


def _pick_points_per_tile(total_points, nbrs, num_cores):
    """Row tiles made of whole points.  Use the largest divisor of
    total_points whose row count stays <= ~1024 (big M for the MXU, few
    grid-step overheads); only force a grid split when the chip actually has
    more than one TensorCore (v7x)."""
    max_pts = max(1, 1024 // nbrs)
    if num_cores > 1:
        max_pts = min(max_pts, max(1, total_points // num_cores))
    cand = max(1, min(max_pts, total_points))
    while total_points % cand:
        cand -= 1
    return cand


# ------------------------ one-time parameter packing -------------------------

def prepare_params(params, *, mxu_dtype=jnp.bfloat16):
    """Pack / cast parameters once (hoisted out of the per-forward path)."""
    pos_small = jnp.concatenate(
        [params["pos_w1"][1:3],                  # drop the dead x-weight row
         params["pos_b1"], params["pos_ln_g"], params["pos_ln_b"]],
        axis=0).astype(jnp.float32)              # (5, D//8)
    vecs = jnp.concatenate(
        [params["pos_b2"], params["n1_g"], params["n1_b"], params["bo"],
         params["n2_g"], params["n2_b"], params["ffn_b1"], params["ffn_b2"]],
        axis=0).astype(jnp.float32)              # (8, D)
    wqkv = jnp.concatenate([params["wq"], params["wk"], params["wv"]],
                           axis=1).astype(mxu_dtype)             # (D, 3*inner)
    return {
        "pos_small": pos_small,
        "vecs": vecs,
        "wqkv": wqkv,
        "pw2": params["pos_w2"].astype(mxu_dtype),
        "wo": params["wo"].astype(mxu_dtype),
        "fw1": params["ffn_w1"].astype(mxu_dtype),
        "fw2": params["ffn_w2"].astype(mxu_dtype),
        "mxu_dtype": mxu_dtype,
    }


# -------------------------------- wrapper ------------------------------------

def transformer_block(x, prepared, heads, dim_head, *, points_per_tile=None):
    """Forward pass of TransformerBlock.  x: (B, P, K, D+3) float32."""
    B, P, K, Dp3 = x.shape
    D = Dp3 - 3
    inner = heads * dim_head
    mxu_dtype = prepared["mxu_dtype"]

    # Split coords/features in the wrapper: kernel only sees lane-dense slabs.
    coords = x[..., :3]
    feats = x[..., 3:].reshape(B * P * K, D)
    # relative position: x-component is identically zero -> pass only (y-x, z-x)
    rel = (coords[..., 1:3] - coords[..., 0:1]).reshape(B * P * K, 2)

    num_cores, vmem_limit = _tpu_config()
    total_points = B * P
    if points_per_tile is None:
        points_per_tile = _pick_points_per_tile(total_points, K, num_cores)
    assert total_points % points_per_tile == 0
    tile_rows = points_per_tile * K
    grid = (total_points // points_per_tile,)

    kernel = functools.partial(
        _transformer_block_kernel,
        heads=heads, dim_head=dim_head, nbrs=K, mxu_dtype=mxu_dtype)

    def rows_map(i):
        return (i, 0)

    def full_map(i):
        return (0, 0)

    # Advisory cost estimate (helps XLA schedule around the custom call).
    R = B * P * K
    d8 = D // 8
    flops = R * (4 * d8 + 2 * d8 * D + 6 * D * inner
                 + 4 * heads * K * dim_head + 2 * inner * D + 4 * D * D)
    transcendentals = R * (heads * K + D)
    wbytes = (d8 * D + 3 * D * inner + inner * D + 2 * D * D) \
        * jnp.dtype(mxu_dtype).itemsize
    bytes_accessed = 4 * R * (2 * D + 2) + 4 * (5 * d8 + 8 * D) + wbytes
    cost = pl.CostEstimate(flops=int(flops),
                           transcendentals=int(transcendentals),
                           bytes_accessed=int(bytes_accessed))

    # TODO(synk): the weight operands are grid-invariant; at production D on
    # v7x, single-buffering them (pipeline_mode=pl.Buffered(1)) would free
    # VMEM for larger row tiles. Left at the default here (negligible at these
    # dims) for lowering robustness.
    out_flat = pl.pallas_call(
        kernel,
        out_shape=jax.ShapeDtypeStruct((B * P * K, D), jnp.float32),
        grid=grid,
        in_specs=[
            pl.BlockSpec((tile_rows, D), rows_map),
            pl.BlockSpec((tile_rows, 2), rows_map),
            pl.BlockSpec(prepared["pos_small"].shape, full_map),
            pl.BlockSpec(prepared["pw2"].shape, full_map),
            pl.BlockSpec(prepared["wqkv"].shape, full_map),
            pl.BlockSpec(prepared["wo"].shape, full_map),
            pl.BlockSpec(prepared["fw1"].shape, full_map),
            pl.BlockSpec(prepared["fw2"].shape, full_map),
            pl.BlockSpec(prepared["vecs"].shape, full_map),
        ],
        out_specs=pl.BlockSpec((tile_rows, D), rows_map),
        compiler_params=pltpu.CompilerParams(
            dimension_semantics=("parallel",),
            vmem_limit_bytes=vmem_limit,
        ),
        cost_estimate=cost,
    )(feats, rel, prepared["pos_small"], prepared["pw2"], prepared["wqkv"],
      prepared["wo"], prepared["fw1"], prepared["fw2"], prepared["vecs"])

    out = out_flat.reshape(B, P, K, D)
    # glue: coords passthrough + concat, like torch.cat([coords, out], dim=-1)
    return jnp.concatenate([coords, out], axis=-1)


# ----------------------------- parameter init --------------------------------

def init_params(key, dim, heads, dim_head):
    d8 = dim // 8
    gin = dim // heads
    inner = heads * dim_head
    ks = jax.random.split(key, 13)

    def lin(k, fan_in, shape):
        bound = 1.0 / math.sqrt(fan_in)
        return jax.random.uniform(k, shape, jnp.float32, -bound, bound)

    def grouped(k):
        # grouped 1x1 conv weight (inner, gin, 1, 1) -> block-diag dense (dim, inner)
        w = lin(k, gin, (heads, gin, dim_head))
        dense = jnp.zeros((dim, inner), jnp.float32)
        for h in range(heads):
            dense = dense.at[h * gin:(h + 1) * gin,
                             h * dim_head:(h + 1) * dim_head].set(w[h])
        return dense

    return {
        "pos_w1": lin(ks[0], 3, (3, d8)),
        "pos_b1": lin(ks[1], 3, (1, d8)),
        "pos_ln_g": jnp.ones((1, d8), jnp.float32),
        "pos_ln_b": jnp.zeros((1, d8), jnp.float32),
        "pos_w2": lin(ks[2], d8, (d8, dim)),
        "pos_b2": lin(ks[3], d8, (1, dim)),
        "n1_g": jnp.ones((1, dim), jnp.float32),
        "n1_b": jnp.zeros((1, dim), jnp.float32),
        "wq": grouped(ks[4]),
        "wk": grouped(ks[5]),
        "wv": grouped(ks[6]),
        "wo": lin(ks[7], inner, (inner, dim)),
        "bo": lin(ks[8], inner, (1, dim)),
        "n2_g": jnp.ones((1, dim), jnp.float32),
        "n2_b": jnp.zeros((1, dim), jnp.float32),
        "ffn_w1": lin(ks[9], dim, (dim, dim)),
        "ffn_b1": lin(ks[10], dim, (1, dim)),
        "ffn_w2": lin(ks[11], dim, (dim, dim)),
        "ffn_b2": lin(ks[12], dim, (1, dim)),
    }


# ------------------------- pure-JAX reference (check) ------------------------

def reference_forward(x, p, heads, dim_head, mxu_dtype=jnp.float32):
    dt = mxu_dtype
    with jax.default_matmul_precision("highest"):
        B, P, K, _ = x.shape
        coords, feats = x[..., :3], x[..., 3:]
        inner = heads * dim_head

        rel = coords - coords[..., 0:1]
        h = rel @ p["pos_w1"] + p["pos_b1"]
        h = _layernorm(h, p["pos_ln_g"], p["pos_ln_b"])
        h = jax.nn.relu(h)
        pos = jnp.dot(h.astype(dt), p["pos_w2"].astype(dt),
                      preferred_element_type=jnp.float32) + p["pos_b2"]

        y = _layernorm(feats + pos, p["n1_g"], p["n1_b"])
        yd = y.astype(dt)
        q = jnp.dot(yd, p["wq"].astype(dt), preferred_element_type=jnp.float32)
        k = jnp.dot(yd, p["wk"].astype(dt), preferred_element_type=jnp.float32)
        v = jnp.dot(yd, p["wv"].astype(dt), preferred_element_type=jnp.float32)
        q = q.reshape(B, P, K, heads, dim_head)
        k = k.reshape(B, P, K, heads, dim_head)
        v = v.reshape(B, P, K, heads, dim_head)
        dots = jnp.einsum("bpihd,bpjhd->bphij", q.astype(dt), k.astype(dt),
                          preferred_element_type=jnp.float32) * dim_head ** (-0.5)
        attn = jax.nn.softmax(dots, axis=-1)
        o = jnp.einsum("bphij,bpjhd->bpihd", attn.astype(dt), v.astype(dt),
                       preferred_element_type=jnp.float32)
        o = o.reshape(B, P, K, inner)
        att = jnp.dot(o.astype(dt), p["wo"].astype(dt),
                      preferred_element_type=jnp.float32) + p["bo"] + feats

        z = _layernorm(att, p["n2_g"], p["n2_b"])
        z = jnp.dot(z.astype(dt), p["ffn_w1"].astype(dt),
                    preferred_element_type=jnp.float32) + p["ffn_b1"]
        z = _gelu_tanh(z)
        z = jnp.dot(z.astype(dt), p["ffn_w2"].astype(dt),
                    preferred_element_type=jnp.float32) + p["ffn_b2"]
        out = z + att
        return jnp.concatenate([coords, out], axis=-1)


# ----------------------------------- main ------------------------------------

if __name__ == "__main__":
    B, P, K = 2, 4, 8
    # dims chosen 128-aligned so the matmuls, head slices and stores are
    # lane-dense (lane-dense I/O, >=128 matmul dims)
    DIM, HEADS, DIM_HEAD = 128, 4, 128

    key = jax.random.PRNGKey(0)
    kx, kp = jax.random.split(key)
    x = jax.random.normal(kx, (B, P, K, DIM + 3), dtype=jnp.float32)
    params = init_params(kp, DIM, HEADS, DIM_HEAD)

    # 1) correctness at full f32 MXU precision
    prepared_f32 = prepare_params(params, mxu_dtype=jnp.float32)  # one-time
    out_f32 = jax.block_until_ready(
        transformer_block(x, prepared_f32, HEADS, DIM_HEAD))
    ref_f32 = reference_forward(x, params, HEADS, DIM_HEAD,
                                mxu_dtype=jnp.float32)
    assert out_f32.shape == (B, P, K, DIM + 3), out_f32.shape
    err32 = float(jnp.max(jnp.abs(out_f32 - ref_f32)))
    assert err32 < 3e-2, f"f32 max abs error too large: {err32}"

    # 2) perf configuration: bf16 MXU operands (v6e/v7x), f32 elementwise math
    prepared_bf16 = prepare_params(params, mxu_dtype=jnp.bfloat16)  # one-time
    out_bf16 = jax.block_until_ready(
        transformer_block(x, prepared_bf16, HEADS, DIM_HEAD))
    ref_bf16 = reference_forward(x, params, HEADS, DIM_HEAD,
                                 mxu_dtype=jnp.bfloat16)
    errbf = float(jnp.max(jnp.abs(out_bf16 - ref_bf16)))
    assert errbf < 1e-1, f"bf16 max abs error too large: {errbf}"

    print("KERNEL_OK")
</pallas_src>

<mosaic_0001>
module attributes {stable_mosaic.version = 11 : i64} {
  func.func @_transformer_block_kernel(%arg0: i32, %arg1: memref<64x128xf32, #tpu.memory_space<vmem>>, %arg2: memref<64x2xf32, #tpu.memory_space<vmem>>, %arg3: memref<5x16xf32, #tpu.memory_space<vmem>>, %arg4: memref<16x128xf32, #tpu.memory_space<vmem>>, %arg5: memref<128x1536xf32, #tpu.memory_space<vmem>>, %arg6: memref<512x128xf32, #tpu.memory_space<vmem>>, %arg7: memref<128x128xf32, #tpu.memory_space<vmem>>, %arg8: memref<128x128xf32, #tpu.memory_space<vmem>>, %arg9: memref<8x128xf32, #tpu.memory_space<vmem>>, %arg10: memref<64x128xf32, #tpu.memory_space<vmem>>) attributes {dimension_semantics = [#tpu.dimension_semantics<parallel>], iteration_bounds = array<i64: 1>, scalar_prefetch = 0 : i64, scratch_operands = 0 : i64, tpu.core_type = #tpu.core_type<tc>, window_params = [{transform_indices = @transform_0, window_bounds = array<i64: 64, 128>}, {transform_indices = @transform_1, window_bounds = array<i64: 64, 2>}, {pipeline_mode = #tpu.pipeline_mode<synchronous>, transform_indices = @transform_2, window_bounds = array<i64: 5, 16>}, {pipeline_mode = #tpu.pipeline_mode<synchronous>, transform_indices = @transform_3, window_bounds = array<i64: 16, 128>}, {pipeline_mode = #tpu.pipeline_mode<synchronous>, transform_indices = @transform_4, window_bounds = array<i64: 128, 1536>}, {pipeline_mode = #tpu.pipeline_mode<synchronous>, transform_indices = @transform_5, window_bounds = array<i64: 512, 128>}, {pipeline_mode = #tpu.pipeline_mode<synchronous>, transform_indices = @transform_6, window_bounds = array<i64: 128, 128>}, {pipeline_mode = #tpu.pipeline_mode<synchronous>, transform_indices = @transform_7, window_bounds = array<i64: 128, 128>}, {pipeline_mode = #tpu.pipeline_mode<synchronous>, transform_indices = @transform_8, window_bounds = array<i64: 8, 128>}, {transform_indices = @transform_9, window_bounds = array<i64: 64, 128>}]} {
    %c0 = arith.constant 0 : index
    %c0_0 = arith.constant 0 : index
    %0 = vector.load %arg1[%c0, %c0_0] : memref<64x128xf32, #tpu.memory_space<vmem>>, vector<64x128xf32>
    %c0_1 = arith.constant 0 : index
    %c0_2 = arith.constant 0 : index
    %1 = vector.load %arg2[%c0_1, %c0_2] : memref<64x2xf32, #tpu.memory_space<vmem>>, vector<64x2xf32>
    %c0_3 = arith.constant 0 : index
    %c0_4 = arith.constant 0 : index
    %2 = vector.load %arg3[%c0_3, %c0_4] : memref<5x16xf32, #tpu.memory_space<vmem>>, vector<5x16xf32>
    %c0_5 = arith.constant 0 : index
    %c0_6 = arith.constant 0 : index
    %3 = vector.load %arg9[%c0_5, %c0_6] : memref<8x128xf32, #tpu.memory_space<vmem>>, vector<8x128xf32>
    %4 = vector.extract_strided_slice %3 {offsets = [0, 0], sizes = [1, 128], strides = [1, 1]} : vector<8x128xf32> to vector<1x128xf32>
    %5 = vector.extract_strided_slice %3 {offsets = [1, 0], sizes = [1, 128], strides = [1, 1]} : vector<8x128xf32> to vector<1x128xf32>
    %6 = vector.extract_strided_slice %3 {offsets = [2, 0], sizes = [1, 128], strides = [1, 1]} : vector<8x128xf32> to vector<1x128xf32>
    %7 = vector.extract_strided_slice %3 {offsets = [3, 0], sizes = [1, 128], strides = [1, 1]} : vector<8x128xf32> to vector<1x128xf32>
    %8 = vector.extract_strided_slice %3 {offsets = [4, 0], sizes = [1, 128], strides = [1, 1]} : vector<8x128xf32> to vector<1x128xf32>
    %9 = vector.extract_strided_slice %3 {offsets = [5, 0], sizes = [1, 128], strides = [1, 1]} : vector<8x128xf32> to vector<1x128xf32>
    %10 = vector.extract_strided_slice %3 {offsets = [6, 0], sizes = [1, 128], strides = [1, 1]} : vector<8x128xf32> to vector<1x128xf32>
    %11 = vector.extract_strided_slice %3 {offsets = [7, 0], sizes = [1, 128], strides = [1, 1]} : vector<8x128xf32> to vector<1x128xf32>
    %12 = vector.extract_strided_slice %2 {offsets = [2, 0], sizes = [1, 16], strides = [1, 1]} : vector<5x16xf32> to vector<1x16xf32>
    %13 = vector.extract_strided_slice %1 {offsets = [0, 0], sizes = [64, 1], strides = [1, 1]} : vector<64x2xf32> to vector<64x1xf32>
    %14 = vector.extract_strided_slice %2 {offsets = [0, 0], sizes = [1, 16], strides = [1, 1]} : vector<5x16xf32> to vector<1x16xf32>
    %15 = vector.broadcast %13 : vector<64x1xf32> to vector<64x16xf32>
    %16 = vector.broadcast %14 : vector<1x16xf32> to vector<64x16xf32>
    %17 = arith.mulf %15, %16 : vector<64x16xf32>
    %18 = vector.broadcast %12 : vector<1x16xf32> to vector<64x16xf32>
    %19 = arith.addf %18, %17 : vector<64x16xf32>
    %20 = vector.extract_strided_slice %1 {offsets = [0, 1], sizes = [64, 1], strides = [1, 1]} : vector<64x2xf32> to vector<64x1xf32>
    %21 = vector.extract_strided_slice %2 {offsets = [1, 0], sizes = [1, 16], strides = [1, 1]} : vector<5x16xf32> to vector<1x16xf32>
    %22 = vector.broadcast %20 : vector<64x1xf32> to vector<64x16xf32>
    %23 = vector.broadcast %21 : vector<1x16xf32> to vector<64x16xf32>
    %24 = arith.mulf %22, %23 : vector<64x16xf32>
    %25 = arith.addf %19, %24 : vector<64x16xf32>
    %26 = vector.extract_strided_slice %2 {offsets = [3, 0], sizes = [1, 16], strides = [1, 1]} : vector<5x16xf32> to vector<1x16xf32>
    %27 = vector.extract_strided_slice %2 {offsets = [4, 0], sizes = [1, 16], strides = [1, 1]} : vector<5x16xf32> to vector<1x16xf32>
    %cst = arith.constant dense<0.000000e+00> : vector<64xf32>
    %28 = vector.multi_reduction <add>, %25, %cst [1] : vector<64x16xf32> to vector<64xf32>
    %29 = vector.shape_cast %28 : vector<64xf32> to vector<64x1xf32>
    %cst_7 = arith.constant 1.600000e+01 : f32
    %30 = vector.broadcast %cst_7 : f32 to vector<64x1xf32>
    %31 = arith.divf %29, %30 : vector<64x1xf32>
    %32 = vector.broadcast %31 : vector<64x1xf32> to vector<64x16xf32>
    %33 = arith.subf %25, %32 : vector<64x16xf32>
    %34 = arith.mulf %33, %33 : vector<64x16xf32>
    %cst_8 = arith.constant dense<0.000000e+00> : vector<64xf32>
    %35 = vector.multi_reduction <add>, %34, %cst_8 [1] : vector<64x16xf32> to vector<64xf32>
    %36 = vector.shape_cast %35 : vector<64xf32> to vector<64x1xf32>
    %cst_9 = arith.constant 1.600000e+01 : f32
    %37 = vector.broadcast %cst_9 : f32 to vector<64x1xf32>
    %38 = arith.divf %36, %37 : vector<64x1xf32>
    %39 = vector.broadcast %31 : vector<64x1xf32> to vector<64x16xf32>
    %40 = arith.subf %25, %39 : vector<64x16xf32>
    %cst_10 = arith.constant 9.99999974E-6 : f32
    %41 = vector.broadcast %cst_10 : f32 to vector<64x1xf32>
    %42 = arith.addf %38, %41 : vector<64x1xf32>
    %43 = math.rsqrt %42 : vector<64x1xf32>
    %44 = vector.broadcast %43 : vector<64x1xf32> to vector<64x16xf32>
    %45 = arith.mulf %40, %44 : vector<64x16xf32>
    %46 = vector.broadcast %26 : vector<1x16xf32> to vector<64x16xf32>
    %47 = arith.mulf %45, %46 : vector<64x16xf32>
    %48 = vector.broadcast %27 : vector<1x16xf32> to vector<64x16xf32>
    %49 = arith.addf %47, %48 : vector<64x16xf32>
    %cst_11 = arith.constant 0.000000e+00 : f32
    %50 = vector.broadcast %cst_11 : f32 to vector<64x16xf32>
    %51 = arith.maximumf %49, %50 : vector<64x16xf32>
    %c0_12 = arith.constant 0 : index
    %c0_13 = arith.constant 0 : index
    %52 = vector.load %arg4[%c0_12, %c0_13] : memref<16x128xf32, #tpu.memory_space<vmem>>, vector<16x128xf32>
    %cst_14 = arith.constant dense<0.000000e+00> : vector<64x128xf32>
    %53 = tpu.matmul %51, %52, %cst_14 {dimension_numbers = #tpu.dot_dimension_numbers<[1], [0], [0], [1], [0, 0, 1, 1], [], []>} : vector<64x16xf32>, vector<16x128xf32>, vector<64x128xf32> -> vector<64x128xf32>
    %54 = vector.broadcast %4 : vector<1x128xf32> to vector<64x128xf32>
    %55 = arith.addf %53, %54 : vector<64x128xf32>
    %56 = arith.addf %0, %55 : vector<64x128xf32>
    %cst_15 = arith.constant dense<0.000000e+00> : vector<64xf32>
    %57 = vector.multi_reduction <add>, %56, %cst_15 [1] : vector<64x128xf32> to vector<64xf32>
    %58 = vector.shape_cast %57 : vector<64xf32> to vector<64x1xf32>
    %cst_16 = arith.constant 1.280000e+02 : f32
    %59 = vector.broadcast %cst_16 : f32 to vector<64x1xf32>
    %60 = arith.divf %58, %59 : vector<64x1xf32>
    %61 = vector.broadcast %60 : vector<64x1xf32> to vector<64x128xf32>
    %62 = arith.subf %56, %61 : vector<64x128xf32>
    %63 = arith.mulf %62, %62 : vector<64x128xf32>
    %cst_17 = arith.constant dense<0.000000e+00> : vector<64xf32>
    %64 = vector.multi_reduction <add>, %63, %cst_17 [1] : vector<64x128xf32> to vector<64xf32>
    %65 = vector.shape_cast %64 : vector<64xf32> to vector<64x1xf32>
    %cst_18 = arith.constant 1.280000e+02 : f32
    %66 = vector.broadcast %cst_18 : f32 to vector<64x1xf32>
    %67 = arith.divf %65, %66 : vector<64x1xf32>
    %68 = vector.broadcast %60 : vector<64x1xf32> to vector<64x128xf32>
    %69 = arith.subf %56, %68 : vector<64x128xf32>
    %cst_19 = arith.constant 9.99999974E-6 : f32
    %70 = vector.broadcast %cst_19 : f32 to vector<64x1xf32>
    %71 = arith.addf %67, %70 : vector<64x1xf32>
    %72 = math.rsqrt %71 : vector<64x1xf32>
    %73 = vector.broadcast %72 : vector<64x1xf32> to vector<64x128xf32>
    %74 = arith.mulf %69, %73 : vector<64x128xf32>
    %75 = vector.broadcast %5 : vector<1x128xf32> to vector<64x128xf32>
    %76 = arith.mulf %74, %75 : vector<64x128xf32>
    %77 = vector.broadcast %6 : vector<1x128xf32> to vector<64x128xf32>
    %78 = arith.addf %76, %77 : vector<64x128xf32>
    %c0_20 = arith.constant 0 : index
    %c0_21 = arith.constant 0 : index
    %79 = vector.load %arg5[%c0_20, %c0_21] : memref<128x1536xf32, #tpu.memory_space<vmem>>, vector<128x1536xf32>
    %cst_22 = arith.constant dense<0.000000e+00> : vector<64x1536xf32>
    %80 = tpu.matmul %78, %79, %cst_22 {dimension_numbers = #tpu.dot_dimension_numbers<[1], [0], [0], [1], [0, 0, 1, 1], [], []>} : vector<64x128xf32>, vector<128x1536xf32>, vector<64x1536xf32> -> vector<64x1536xf32>
    %81 = vector.broadcast %7 : vector<1x128xf32> to vector<64x128xf32>
    %82 = arith.addf %0, %81 : vector<64x128xf32>
    %83 = vector.extract_strided_slice %80 {offsets = [0, 0], sizes = [64, 128], strides = [1, 1]} : vector<64x1536xf32> to vector<64x128xf32>
    %84 = vector.shape_cast %83 : vector<64x128xf32> to vector<8x8x128xf32>
    %85 = vector.extract_strided_slice %80 {offsets = [0, 512], sizes = [64, 128], strides = [1, 1]} : vector<64x1536xf32> to vector<64x128xf32>
    %86 = vector.shape_cast %85 : vector<64x128xf32> to vector<8x8x128xf32>
    %87 = vector.extract_strided_slice %80 {offsets = [0, 1024], sizes = [64, 128], strides = [1, 1]} : vector<64x1536xf32> to vector<64x128xf32>
    %88 = vector.shape_cast %87 : vector<64x128xf32> to vector<8x8x128xf32>
    "tpu.trace_start"() <{level = 10 : i32, message = "pid,pjd->pij"}> : () -> ()
    %cst_23 = arith.constant dense<0.000000e+00> : vector<8x8x8xf32>
    %89 = tpu.matmul %84, %86, %cst_23 {dimension_numbers = #tpu.dot_dimension_numbers<[2], [2], [1], [1], [0, 0, 0, 1, 1, 1], [0], [0]>} : vector<8x8x128xf32>, vector<8x8x128xf32>, vector<8x8x8xf32> -> vector<8x8x8xf32>
    "tpu.trace_stop"() : () -> ()
    %cst_24 = arith.constant 0.0883883461 : f32
    %90 = vector.broadcast %cst_24 : f32 to vector<8x8x8xf32>
    %91 = arith.mulf %89, %90 : vector<8x8x8xf32>
    %cst_25 = arith.constant dense<0xFF800000> : vector<8x8xf32>
    %92 = vector.multi_reduction <maximumf>, %91, %cst_25 [2] : vector<8x8x8xf32> to vector<8x8xf32>
    %93 = vector.shape_cast %92 : vector<8x8xf32> to vector<8x8x1xf32>
    %94 = vector.broadcast %93 : vector<8x8x1xf32> to vector<8x8x8xf32>
    %95 = arith.subf %91, %94 : vector<8x8x8xf32>
    %96 = math.exp %95 : vector<8x8x8xf32>
    %cst_26 = arith.constant dense<0.000000e+00> : vector<8x8xf32>
    %97 = vector.multi_reduction <add>, %96, %cst_26 [2] : vector<8x8x8xf32> to vector<8x8xf32>
    %98 = vector.shape_cast %97 : vector<8x8xf32> to vector<8x8x1xf32>
    %99 = tpu.reciprocal %98 {approx = true} : vector<8x8x1xf32> -> vector<8x8x1xf32>
    %100 = vector.broadcast %99 : vector<8x8x1xf32> to vector<8x8x8xf32>
    %101 = arith.mulf %96, %100 : vector<8x8x8xf32>
    "tpu.trace_start"() <{level = 10 : i32, message = "pij,pjd->pid"}> : () -> ()
    %cst_27 = arith.constant dense<0.000000e+00> : vector<8x8x128xf32>
    %102 = tpu.matmul %101, %88, %cst_27 {dimension_numbers = #tpu.dot_dimension_numbers<[2], [1], [1], [2], [0, 0, 0, 1, 1, 2], [0], [0]>} : vector<8x8x8xf32>, vector<8x8x128xf32>, vector<8x8x128xf32> -> vector<8x8x128xf32>
    "tpu.trace_stop"() : () -> ()
    %103 = vector.shape_cast %102 : vector<8x8x128xf32> to vector<64x128xf32>
    %c0_28 = arith.constant 0 : index
    %c0_29 = arith.constant 0 : index
    %104 = vector.load %arg6[%c0_28, %c0_29] : memref<512x128xf32, #tpu.memory_space<vmem>>, vector<128x128xf32>
    %cst_30 = arith.constant dense<0.000000e+00> : vector<64x128xf32>
    %105 = tpu.matmul %103, %104, %cst_30 {dimension_numbers = #tpu.dot_dimension_numbers<[1], [0], [0], [1], [0, 0, 1, 1], [], []>} : vector<64x128xf32>, vector<128x128xf32>, vector<64x128xf32> -> vector<64x128xf32>
    %106 = arith.addf %82, %105 : vector<64x128xf32>
    %107 = vector.extract_strided_slice %80 {offsets = [0, 128], sizes = [64, 128], strides = [1, 1]} : vector<64x1536xf32> to vector<64x128xf32>
    %108 = vector.shape_cast %107 : vector<64x128xf32> to vector<8x8x128xf32>
    %109 = vector.extract_strided_slice %80 {offsets = [0, 640], sizes = [64, 128], strides = [1, 1]} : vector<64x1536xf32> to vector<64x128xf32>
    %110 = vector.shape_cast %109 : vector<64x128xf32> to vector<8x8x128xf32>
    %111 = vector.extract_strided_slice %80 {offsets = [0, 1152], sizes = [64, 128], strides = [1, 1]} : vector<64x1536xf32> to vector<64x128xf32>
    %112 = vector.shape_cast %111 : vector<64x128xf32> to vector<8x8x128xf32>
    "tpu.trace_start"() <{level = 10 : i32, message = "pid,pjd->pij"}> : () -> ()
    %cst_31 = arith.constant dense<0.000000e+00> : vector<8x8x8xf32>
    %113 = tpu.matmul %108, %110, %cst_31 {dimension_numbers = #tpu.dot_dimension_numbers<[2], [2], [1], [1], [0, 0, 0, 1, 1, 1], [0], [0]>} : vector<8x8x128xf32>, vector<8x8x128xf32>, vector<8x8x8xf32> -> vector<8x8x8xf32>
    "tpu.trace_stop"() : () -> ()
    %cst_32 = arith.constant 0.0883883461 : f32
    %114 = vector.broadcast %cst_32 : f32 to vector<8x8x8xf32>
    %115 = arith.mulf %113, %114 : vector<8x8x8xf32>
    %cst_33 = arith.constant dense<0xFF800000> : vector<8x8xf32>
    %116 = vector.multi_reduction <maximumf>, %115, %cst_33 [2] : vector<8x8x8xf32> to vector<8x8xf32>
    %117 = vector.shape_cast %116 : vector<8x8xf32> to vector<8x8x1xf32>
    %118 = vector.broadcast %117 : vector<8x8x1xf32> to vector<8x8x8xf32>
    %119 = arith.subf %115, %118 : vector<8x8x8xf32>
    %120 = math.exp %119 : vector<8x8x8xf32>
    %cst_34 = arith.constant dense<0.000000e+00> : vector<8x8xf32>
    %121 = vector.multi_reduction <add>, %120, %cst_34 [2] : vector<8x8x8xf32> to vector<8x8xf32>
    %122 = vector.shape_cast %121 : vector<8x8xf32> to vector<8x8x1xf32>
    %123 = tpu.reciprocal %122 {approx = true} : vector<8x8x1xf32> -> vector<8x8x1xf32>
    %124 = vector.broadcast %123 : vector<8x8x1xf32> to vector<8x8x8xf32>
    %125 = arith.mulf %120, %124 : vector<8x8x8xf32>
    "tpu.trace_start"() <{level = 10 : i32, message = "pij,pjd->pid"}> : () -> ()
    %cst_35 = arith.constant dense<0.000000e+00> : vector<8x8x128xf32>
    %126 = tpu.matmul %125, %112, %cst_35 {dimension_numbers = #tpu.dot_dimension_numbers<[2], [1], [1], [2], [0, 0, 0, 1, 1, 2], [0], [0]>} : vector<8x8x8xf32>, vector<8x8x128xf32>, vector<8x8x128xf32> -> vector<8x8x128xf32>
    "tpu.trace_stop"() : () -> ()
    %127 = vector.shape_cast %126 : vector<8x8x128xf32> to vector<64x128xf32>
    %c128 = arith.constant 128 : index
    %c0_36 = arith.constant 0 : index
    %128 = vector.load %arg6[%c128, %c0_36] : memref<512x128xf32, #tpu.memory_space<vmem>>, vector<128x128xf32>
    %cst_37 = arith.constant dense<0.000000e+00> : vector<64x128xf32>
    %129 = tpu.matmul %127, %128, %cst_37 {dimension_numbers = #tpu.dot_dimension_numbers<[1], [0], [0], [1], [0, 0, 1, 1], [], []>} : vector<64x128xf32>, vector<128x128xf32>, vector<64x128xf32> -> vector<64x128xf32>
    %130 = arith.addf %106, %129 : vector<64x128xf32>
    %131 = vector.extract_strided_slice %80 {offsets = [0, 256], sizes = [64, 128], strides = [1, 1]} : vector<64x1536xf32> to vector<64x128xf32>
    %132 = vector.shape_cast %131 : vector<64x128xf32> to vector<8x8x128xf32>
    %133 = vector.extract_strided_slice %80 {offsets = [0, 768], sizes = [64, 128], strides = [1, 1]} : vector<64x1536xf32> to vector<64x128xf32>
    %134 = vector.shape_cast %133 : vector<64x128xf32> to vector<8x8x128xf32>
    %135 = vector.extract_strided_slice %80 {offsets = [0, 1280], sizes = [64, 128], strides = [1, 1]} : vector<64x1536xf32> to vector<64x128xf32>
    %136 = vector.shape_cast %135 : vector<64x128xf32> to vector<8x8x128xf32>
    "tpu.trace_start"() <{level = 10 : i32, message = "pid,pjd->pij"}> : () -> ()
    %cst_38 = arith.constant dense<0.000000e+00> : vector<8x8x8xf32>
    %137 = tpu.matmul %132, %134, %cst_38 {dimension_numbers = #tpu.dot_dimension_numbers<[2], [2], [1], [1], [0, 0, 0, 1, 1, 1], [0], [0]>} : vector<8x8x128xf32>, vector<8x8x128xf32>, vector<8x8x8xf32> -> vector<8x8x8xf32>
    "tpu.trace_stop"() : () -> ()
    %cst_39 = arith.constant 0.0883883461 : f32
    %138 = vector.broadcast %cst_39 : f32 to vector<8x8x8xf32>
    %139 = arith.mulf %137, %138 : vector<8x8x8xf32>
    %cst_40 = arith.constant dense<0xFF800000> : vector<8x8xf32>
    %140 = vector.multi_reduction <maximumf>, %139, %cst_40 [2] : vector<8x8x8xf32> to vector<8x8xf32>
    %141 = vector.shape_cast %140 : vector<8x8xf32> to vector<8x8x1xf32>
    %142 = vector.broadcast %141 : vector<8x8x1xf32> to vector<8x8x8xf32>
    %143 = arith.subf %139, %142 : vector<8x8x8xf32>
    %144 = math.exp %143 : vector<8x8x8xf32>
    %cst_41 = arith.constant dense<0.000000e+00> : vector<8x8xf32>
    %145 = vector.multi_reduction <add>, %144, %cst_41 [2] : vector<8x8x8xf32> to vector<8x8xf32>
    %146 = vector.shape_cast %145 : vector<8x8xf32> to vector<8x8x1xf32>
    %147 = tpu.reciprocal %146 {approx = true} : vector<8x8x1xf32> -> vector<8x8x1xf32>
    %148 = vector.broadcast %147 : vector<8x8x1xf32> to vector<8x8x8xf32>
    %149 = arith.mulf %144, %148 : vector<8x8x8xf32>
    "tpu.trace_start"() <{level = 10 : i32, message = "pij,pjd->pid"}> : () -> ()
    %cst_42 = arith.constant dense<0.000000e+00> : vector<8x8x128xf32>
    %150 = tpu.matmul %149, %136, %cst_42 {dimension_numbers = #tpu.dot_dimension_numbers<[2], [1], [1], [2], [0, 0, 0, 1, 1, 2], [0], [0]>} : vector<8x8x8xf32>, vector<8x8x128xf32>, vector<8x8x128xf32> -> vector<8x8x128xf32>
    "tpu.trace_stop"() : () -> ()
    %151 = vector.shape_cast %150 : vector<8x8x128xf32> to vector<64x128xf32>
    %c256 = arith.constant 256 : index
    %c0_43 = arith.constant 0 : index
    %152 = vector.load %arg6[%c256, %c0_43] : memref<512x128xf32, #tpu.memory_space<vmem>>, vector<128x128xf32>
    %cst_44 = arith.constant dense<0.000000e+00> : vector<64x128xf32>
    %153 = tpu.matmul %151, %152, %cst_44 {dimension_numbers = #tpu.dot_dimension_numbers<[1], [0], [0], [1], [0, 0, 1, 1], [], []>} : vector<64x128xf32>, vector<128x128xf32>, vector<64x128xf32> -> vector<64x128xf32>
    %154 = arith.addf %130, %153 : vector<64x128xf32>
    %155 = vector.extract_strided_slice %80 {offsets = [0, 384], sizes = [64, 128], strides = [1, 1]} : vector<64x1536xf32> to vector<64x128xf32>
    %156 = vector.shape_cast %155 : vector<64x128xf32> to vector<8x8x128xf32>
    %157 = vector.extract_strided_slice %80 {offsets = [0, 896], sizes = [64, 128], strides = [1, 1]} : vector<64x1536xf32> to vector<64x128xf32>
    %158 = vector.shape_cast %157 : vector<64x128xf32> to vector<8x8x128xf32>
    %159 = vector.extract_strided_slice %80 {offsets = [0, 1408], sizes = [64, 128], strides = [1, 1]} : vector<64x1536xf32> to vector<64x128xf32>
    %160 = vector.shape_cast %159 : vector<64x128xf32> to vector<8x8x128xf32>
    "tpu.trace_start"() <{level = 10 : i32, message = "pid,pjd->pij"}> : () -> ()
    %cst_45 = arith.constant dense<0.000000e+00> : vector<8x8x8xf32>
    %161 = tpu.matmul %156, %158, %cst_45 {dimension_numbers = #tpu.dot_dimension_numbers<[2], [2], [1], [1], [0, 0, 0, 1, 1, 1], [0], [0]>} : vector<8x8x128xf32>, vector<8x8x128xf32>, vector<8x8x8xf32> -> vector<8x8x8xf32>
    "tpu.trace_stop"() : () -> ()
    %cst_46 = arith.constant 0.0883883461 : f32
    %162 = vector.broadcast %cst_46 : f32 to vector<8x8x8xf32>
    %163 = arith.mulf %161, %162 : vector<8x8x8xf32>
    %cst_47 = arith.constant dense<0xFF800000> : vector<8x8xf32>
    %164 = vector.multi_reduction <maximumf>, %163, %cst_47 [2] : vector<8x8x8xf32> to vector<8x8xf32>
    %165 = vector.shape_cast %164 : vector<8x8xf32> to vector<8x8x1xf32>
    %166 = vector.broadcast %165 : vector<8x8x1xf32> to vector<8x8x8xf32>
    %167 = arith.subf %163, %166 : vector<8x8x8xf32>
    %168 = math.exp %167 : vector<8x8x8xf32>
    %cst_48 = arith.constant dense<0.000000e+00> : vector<8x8xf32>
    %169 = vector.multi_reduction <add>, %168, %cst_48 [2] : vector<8x8x8xf32> to vector<8x8xf32>
    %170 = vector.shape_cast %169 : vector<8x8xf32> to vector<8x8x1xf32>
    %171 = tpu.reciprocal %170 {approx = true} : vector<8x8x1xf32> -> vector<8x8x1xf32>
    %172 = vector.broadcast %171 : vector<8x8x1xf32> to vector<8x8x8xf32>
    %173 = arith.mulf %168, %172 : vector<8x8x8xf32>
    "tpu.trace_start"() <{level = 10 : i32, message = "pij,pjd->pid"}> : () -> ()
    %cst_49 = arith.constant dense<0.000000e+00> : vector<8x8x128xf32>
    %174 = tpu.matmul %173, %160, %cst_49 {dimension_numbers = #tpu.dot_dimension_numbers<[2], [1], [1], [2], [0, 0, 0, 1, 1, 2], [0], [0]>} : vector<8x8x8xf32>, vector<8x8x128xf32>, vector<8x8x128xf32> -> vector<8x8x128xf32>
    "tpu.trace_stop"() : () -> ()
    %175 = vector.shape_cast %174 : vector<8x8x128xf32> to vector<64x128xf32>
    %c384 = arith.constant 384 : index
    %c0_50 = arith.constant 0 : index
    %176 = vector.load %arg6[%c384, %c0_50] : memref<512x128xf32, #tpu.memory_space<vmem>>, vector<128x128xf32>
    %cst_51 = arith.constant dense<0.000000e+00> : vector<64x128xf32>
    %177 = tpu.matmul %175, %176, %cst_51 {dimension_numbers = #tpu.dot_dimension_numbers<[1], [0], [0], [1], [0, 0, 1, 1], [], []>} : vector<64x128xf32>, vector<128x128xf32>, vector<64x128xf32> -> vector<64x128xf32>
    %178 = arith.addf %154, %177 : vector<64x128xf32>
    %cst_52 = arith.constant dense<0.000000e+00> : vector<64xf32>
    %179 = vector.multi_reduction <add>, %178, %cst_52 [1] : vector<64x128xf32> to vector<64xf32>
    %180 = vector.shape_cast %179 : vector<64xf32> to vector<64x1xf32>
    %cst_53 = arith.constant 1.280000e+02 : f32
    %181 = vector.broadcast %cst_53 : f32 to vector<64x1xf32>
    %182 = arith.divf %180, %181 : vector<64x1xf32>
    %183 = vector.broadcast %182 : vector<64x1xf32> to vector<64x128xf32>
    %184 = arith.subf %178, %183 : vector<64x128xf32>
    %185 = arith.mulf %184, %184 : vector<64x128xf32>
    %cst_54 = arith.constant dense<0.000000e+00> : vector<64xf32>
    %186 = vector.multi_reduction <add>, %185, %cst_54 [1] : vector<64x128xf32> to vector<64xf32>
    %187 = vector.shape_cast %186 : vector<64xf32> to vector<64x1xf32>
    %cst_55 = arith.constant 1.280000e+02 : f32
    %188 = vector.broadcast %cst_55 : f32 to vector<64x1xf32>
    %189 = arith.divf %187, %188 : vector<64x1xf32>
    %190 = vector.broadcast %182 : vector<64x1xf32> to vector<64x128xf32>
    %191 = arith.subf %178, %190 : vector<64x128xf32>
    %cst_56 = arith.constant 9.99999974E-6 : f32
    %192 = vector.broadcast %cst_56 : f32 to vector<64x1xf32>
    %193 = arith.addf %189, %192 : vector<64x1xf32>
    %194 = math.rsqrt %193 : vector<64x1xf32>
    %195 = vector.broadcast %194 : vector<64x1xf32> to vector<64x128xf32>
    %196 = arith.mulf %191, %195 : vector<64x128xf32>
    %197 = vector.broadcast %8 : vector<1x128xf32> to vector<64x128xf32>
    %198 = arith.mulf %196, %197 : vector<64x128xf32>
    %199 = vector.broadcast %9 : vector<1x128xf32> to vector<64x128xf32>
    %200 = arith.addf %198, %199 : vector<64x128xf32>
    %c0_57 = arith.constant 0 : index
    %c0_58 = arith.constant 0 : index
    %201 = vector.load %arg7[%c0_57, %c0_58] : memref<128x128xf32, #tpu.memory_space<vmem>>, vector<128x128xf32>
    %cst_59 = arith.constant dense<0.000000e+00> : vector<64x128xf32>
    %202 = tpu.matmul %200, %201, %cst_59 {dimension_numbers = #tpu.dot_dimension_numbers<[1], [0], [0], [1], [0, 0, 1, 1], [], []>} : vector<64x128xf32>, vector<128x128xf32>, vector<64x128xf32> -> vector<64x128xf32>
    %203 = vector.broadcast %10 : vector<1x128xf32> to vector<64x128xf32>
    %204 = arith.addf %202, %203 : vector<64x128xf32>
    %cst_60 = arith.constant 5.000000e-01 : f32
    %205 = vector.broadcast %cst_60 : f32 to vector<64x128xf32>
    %206 = arith.mulf %205, %204 : vector<64x128xf32>
    %cst_61 = arith.constant 4.471500e-02 : f32
    %207 = vector.broadcast %cst_61 : f32 to vector<64x128xf32>
    %208 = arith.mulf %207, %204 : vector<64x128xf32>
    %209 = arith.mulf %208, %204 : vector<64x128xf32>
    %210 = arith.mulf %209, %204 : vector<64x128xf32>
    %211 = arith.addf %204, %210 : vector<64x128xf32>
    %cst_62 = arith.constant 0.797884583 : f32
    %212 = vector.broadcast %cst_62 : f32 to vector<64x128xf32>
    %213 = arith.mulf %212, %211 : vector<64x128xf32>
    %214 = math.tanh %213 : vector<64x128xf32>
    %cst_63 = arith.constant 1.000000e+00 : f32
    %215 = vector.broadcast %cst_63 : f32 to vector<64x128xf32>
    %216 = arith.addf %215, %214 : vector<64x128xf32>
    %217 = arith.mulf %206, %216 : vector<64x128xf32>
    %c0_64 = arith.constant 0 : index
    %c0_65 = arith.constant 0 : index
    %218 = vector.load %arg8[%c0_64, %c0_65] : memref<128x128xf32, #tpu.memory_space<vmem>>, vector<128x128xf32>
    %cst_66 = arith.constant dense<0.000000e+00> : vector<64x128xf32>
    %219 = tpu.matmul %217, %218, %cst_66 {dimension_numbers = #tpu.dot_dimension_numbers<[1], [0], [0], [1], [0, 0, 1, 1], [], []>} : vector<64x128xf32>, vector<128x128xf32>, vector<64x128xf32> -> vector<64x128xf32>
    %220 = vector.broadcast %11 : vector<1x128xf32> to vector<64x128xf32>
    %221 = arith.addf %219, %220 : vector<64x128xf32>
    %222 = arith.addf %221, %178 : vector<64x128xf32>
    %c0_67 = arith.constant 0 : index
    %c0_68 = arith.constant 0 : index
    %223 = vector.load %arg10[%c0_67, %c0_68] : memref<64x128xf32, #tpu.memory_space<vmem>>, vector<64x128xf32>
    tpu.vector_store %arg10[%c0_67, %c0_68], %222 {strides = array<i32>} : memref<64x128xf32, #tpu.memory_space<vmem>>, vector<64x128xf32>,
    return
  }
  func.func @transform_0(%arg0: i32) -> (i32, i32) {
    %c0_i32 = arith.constant 0 : i32
    %c0_i32_0 = arith.constant 0 : i32
    return %arg0, %c0_i32 : i32, i32
  }
  func.func @transform_1(%arg0: i32) -> (i32, i32) {
    %c0_i32 = arith.constant 0 : i32
    %c0_i32_0 = arith.constant 0 : i32
    return %arg0, %c0_i32 : i32, i32
  }
  func.func @transform_2(%arg0: i32) -> (i32, i32) {
    %c0_i32 = arith.constant 0 : i32
    %c0_i32_0 = arith.constant 0 : i32
    %c0_i32_1 = arith.constant 0 : i32
    return %c0_i32, %c0_i32_0 : i32, i32
  }
  func.func @transform_3(%arg0: i32) -> (i32, i32) {
    %c0_i32 = arith.constant 0 : i32
    %c0_i32_0 = arith.constant 0 : i32
    %c0_i32_1 = arith.constant 0 : i32
    return %c0_i32, %c0_i32_0 : i32, i32
  }
  func.func @transform_4(%arg0: i32) -> (i32, i32) {
    %c0_i32 = arith.constant 0 : i32
    %c0_i32_0 = arith.constant 0 : i32
    %c0_i32_1 = arith.constant 0 : i32
    return %c0_i32, %c0_i32_0 : i32, i32
  }
  func.func @transform_5(%arg0: i32) -> (i32, i32) {
    %c0_i32 = arith.constant 0 : i32
    %c0_i32_0 = arith.constant 0 : i32
    %c0_i32_1 = arith.constant 0 : i32
    return %c0_i32, %c0_i32_0 : i32, i32
  }
  func.func @transform_6(%arg0: i32) -> (i32, i32) {
    %c0_i32 = arith.constant 0 : i32
    %c0_i32_0 = arith.constant 0 : i32
    %c0_i32_1 = arith.constant 0 : i32
    return %c0_i32, %c0_i32_0 : i32, i32
  }
  func.func @transform_7(%arg0: i32) -> (i32, i32) {
    %c0_i32 = arith.constant 0 : i32
    %c0_i32_0 = arith.constant 0 : i32
    %c0_i32_1 = arith.constant 0 : i32
    return %c0_i32, %c0_i32_0 : i32, i32
  }
  func.func @transform_8(%arg0: i32) -> (i32, i32) {
    %c0_i32 = arith.constant 0 : i32
    %c0_i32_0 = arith.constant 0 : i32
    %c0_i32_1 = arith.constant 0 : i32
    return %c0_i32, %c0_i32_0 : i32, i32
  }
  func.func @transform_9(%arg0: i32) -> (i32, i32) {
    %c0_i32 = arith.constant 0 : i32
    %c0_i32_0 = arith.constant 0 : i32
    return %arg0, %c0_i32 : i32, i32
  }
}

</mosaic_0001>

<llo_original>
// kernel: tpu_custom_call.1
$region0: #{tpu_custom_call.1}
  #allocation0 [shape = 'u32[]', space=smem, size = 0x4, offset = 0x4, fixed_abs, tag = 'smem constant byte address 0x4 - core index']
  #allocation1 [shape = 'u32[144,128]{1,0:T(1,128)}', space=vmem, size = 0x12000, scoped, tag = 'internal scratch']
  %s0 = inlined_call_operand.vmem [shape: f32[64,128], index: 0, kind: input, shape index: {}]
  %s1 = inlined_call_operand.vmem [shape: f32[64,2], index: 1, kind: input, shape index: {}]
  %s2 = inlined_call_operand.vmem [shape: f32[5,16], index: 2, kind: input, shape index: {}]
  %s3 = inlined_call_operand.hbm [shape: f32[16,128], index: 3, kind: input, shape index: {}]
  %s4 = inlined_call_operand.hbm [shape: f32[128,1536], index: 4, kind: input, shape index: {}]
  %s5 = inlined_call_operand.hbm [shape: f32[512,128], index: 5, kind: input, shape index: {}]
  %s6 = inlined_call_operand.hbm [shape: f32[128,128], index: 6, kind: input, shape index: {}]
  %s7 = inlined_call_operand.hbm [shape: f32[128,128], index: 7, kind: input, shape index: {}]
  %s8 = inlined_call_operand.vmem [shape: f32[8,128], index: 8, kind: input, shape index: {}]
  %s9 = inlined_call_operand.hbm [shape: f32[64,128], index: 9, kind: output, shape index: {}]
  %s10 = sld [smem:[#allocation0]]
  $region66: #{tpu_custom_call.1} parent=0
    _
  %s12 = ssub.s32 1, %s10
  %s13 = scalar_select 0, %s12, %s10
  $region1: #{tpu_custom_call.1} parent=0
    #allocation2 [shape = 'u8[8192]{0}', space=vmem, size = 0x2000, scoped, tag = 'input window, operand 3, single buffered']
    #allocation3 [shape = 's32[1]{0}', space=sflag, size = 0x4, scoped, tag = 'scoped memory for tpu_custom_call.1']
    #allocation4 [shape = 's32[1]{0}', space=sflag, size = 0x4, scoped, tag = 'scoped memory for tpu_custom_call.1']
    #allocation5 [shape = 'u8[786432]{0}', space=vmem, size = 0xc0000, scoped, tag = 'input window, operand 4, single buffered']
    #allocation6 [shape = 's32[1]{0}', space=sflag, size = 0x4, scoped, tag = 'scoped memory for tpu_custom_call.1']
    #allocation7 [shape = 'u8[262144]{0}', space=vmem, size = 0x40000, scoped, tag = 'input window, operand 5, single buffered']
    #allocation8 [shape = 'u8[65536]{0}', space=vmem, size = 0x10000, scoped, tag = 'input window, operand 6, single buffered']
    #allocation9 [shape = 's32[1]{0}', space=sflag, size = 0x4, scoped, tag = 'scoped memory for tpu_custom_call.1']
    #allocation10 [shape = 'u8[65536]{0}', space=vmem, size = 0x10000, scoped, tag = 'input window, operand 7, single buffered']
    #allocation11 [shape = 'u8[32768]{0}', space=vmem, size = 0x8000, scoped, tag = 'output window, operand 0, single buffered']
    %14 = vsyncpa [#allocation3], 0
    %15 = vsyncpa [#allocation6], 0
    %16 = vsyncpa [#allocation9], 0
    %17 = vsyncpa [#allocation4], 0
    // Predicated region
    $region2: #{tpu_custom_call.1} parent=1 // pred_check
      _
    $region3: #{tpu_custom_call.1} parent=1 // pred_check_branch
      %19 = sbr.rel (0) target = $region5
    $region4: #{tpu_custom_call.1} parent=1 // pred_region
      _
    $region5: #{tpu_custom_call.1} parent=1 // pred_fallthru
      _
    // Predicated region
    $region6: #{tpu_custom_call.1} parent=1 // pred_check
      _
    $region7: #{tpu_custom_call.1} parent=1 // pred_check_branch
      %21 = sbr.rel (0) target = $region9
    $region8: #{tpu_custom_call.1} parent=1 // pred_region
      _
    $region9: #{tpu_custom_call.1} parent=1 // pred_fallthru
      _
    // Predicated region
    $region10: #{tpu_custom_call.1} parent=1 // pred_check
      _
    $region11: #{tpu_custom_call.1} parent=1 // pred_check_branch
      %23 = sbr.rel (0) target = $region13
    $region12: #{tpu_custom_call.1} parent=1 // pred_region
      _
    $region13: #{tpu_custom_call.1} parent=1 // pred_fallthru
      _
    // Predicated region
    $region14: #{tpu_custom_call.1} parent=1 // pred_check
      _
    $region15: #{tpu_custom_call.1} parent=1 // pred_check_branch
      %25 = sbr.rel (0) target = $region17
    $region16: #{tpu_custom_call.1} parent=1 // pred_region
      %s27 = ssub.s32 256, 256
      %28 = vsyncadd [#allocation3], %s27
      %s29 = sshll.u32 [#allocation2], 4
      %s30 = int_to_ptr.vmem [resolvable:$true] %s29
      %35 = dma.hbm_to_vmem [thread:$0]  %s3, 256, %s30, [#allocation3], 128, 128, 8
    $region17: #{tpu_custom_call.1} parent=1 // pred_fallthru
      _
    // Predicated region
    $region18: #{tpu_custom_call.1} parent=1 // pred_check
      _
    $region19: #{tpu_custom_call.1} parent=1 // pred_check_branch
      %37 = sbr.rel (0) target = $region21
    $region20: #{tpu_custom_call.1} parent=1 // pred_region
      %s39 = ssub.s32 24576, 24576
      %40 = vsyncadd [#allocation6], %s39
      %s41 = sshll.u32 [#allocation5], 4
      %s42 = int_to_ptr.vmem [resolvable:$true] %s41
      %47 = dma.hbm_to_vmem [thread:$0]  %s4, 24576, %s42, [#allocation6], 1536, 1536, 96
    $region21: #{tpu_custom_call.1} parent=1 // pred_fallthru
      _
    // Predicated region
    $region22: #{tpu_custom_call.1} parent=1 // pred_check
      _
    $region23: #{tpu_custom_call.1} parent=1 // pred_check_branch
      %49 = sbr.rel (0) target = $region25
    $region24: #{tpu_custom_call.1} parent=1 // pred_region
      %s51 = ssub.s32 8192, 8192
      %52 = vsyncadd [#allocation6], %s51
      %s53 = sshll.u32 [#allocation7], 4
      %s54 = int_to_ptr.vmem [resolvable:$true] %s53
      %59 = dma.hbm_to_vmem [thread:$0]  %s5, 8192, %s54, [#allocation6], 128, 128, 8
    $region25: #{tpu_custom_call.1} parent=1 // pred_fallthru
      _
    // Predicated region
    $region26: #{tpu_custom_call.1} parent=1 // pred_check
      _
    $region27: #{tpu_custom_call.1} parent=1 // pred_check_branch
      %61 = sbr.rel (0) target = $region29
    $region28: #{tpu_custom_call.1} parent=1 // pred_region
      %s63 = ssub.s32 2048, 2048
      %64 = vsyncadd [#allocation9], %s63
      %s65 = sshll.u32 [#allocation8], 4
      %s66 = int_to_ptr.vmem [resolvable:$true] %s65
      %71 = dma.hbm_to_vmem [thread:$0]  %s6, 2048, %s66, [#allocation9], 128, 128, 8
    $region29: #{tpu_custom_call.1} parent=1 // pred_fallthru
      _
    // Predicated region
    $region30: #{tpu_custom_call.1} parent=1 // pred_check
      _
    $region31: #{tpu_custom_call.1} parent=1 // pred_check_branch
      %73 = sbr.rel (0) target = $region33
    $region32: #{tpu_custom_call.1} parent=1 // pred_region
      %s75 = ssub.s32 2048, 2048
      %76 = vsyncadd [#allocation9], %s75
      %s77 = sshll.u32 [#allocation10], 4
      %s78 = int_to_ptr.vmem [resolvable:$true] %s77
      %83 = dma.hbm_to_vmem [thread:$0]  %s7, 2048, %s78, [#allocation9], 128, 128, 8
    $region33: #{tpu_custom_call.1} parent=1 // pred_fallthru
      _
    // Predicated region
    $region34: #{tpu_custom_call.1} parent=1 // pred_check
      _
    $region35: #{tpu_custom_call.1} parent=1 // pred_check_branch
      %85 = sbr.rel (0) target = $region37
    $region36: #{tpu_custom_call.1} parent=1 // pred_region
      _
    $region37: #{tpu_custom_call.1} parent=1 // pred_fallthru
      _
    // Predicated region
    $region38: #{tpu_custom_call.1} parent=1 // pred_check
      _
    $region39: #{tpu_custom_call.1} parent=1 // pred_check_branch
      %87 = sbr.rel (0) target = $region41
    $region40: #{tpu_custom_call.1} parent=1 // pred_region
      %88 = dma.done [#allocation3], 256
    $region41: #{tpu_custom_call.1} parent=1 // pred_fallthru
      _
    // Predicated region
    $region42: #{tpu_custom_call.1} parent=1 // pred_check
      _
    $region43: #{tpu_custom_call.1} parent=1 // pred_check_branch
      %90 = sbr.rel (0) target = $region45
    $region44: #{tpu_custom_call.1} parent=1 // pred_region
      %91 = dma.done [#allocation6], 24576
    $region45: #{tpu_custom_call.1} parent=1 // pred_fallthru
      _
    // Predicated region
    $region46: #{tpu_custom_call.1} parent=1 // pred_check
      _
    $region47: #{tpu_custom_call.1} parent=1 // pred_check_branch
      %93 = sbr.rel (0) target = $region49
    $region48: #{tpu_custom_call.1} parent=1 // pred_region
      %94 = dma.done [#allocation6], 8192
    $region49: #{tpu_custom_call.1} parent=1 // pred_fallthru
      _
    // Predicated region
    $region50: #{tpu_custom_call.1} parent=1 // pred_check
      _
    $region51: #{tpu_custom_call.1} parent=1 // pred_check_branch
      %96 = sbr.rel (0) target = $region53
    $region52: #{tpu_custom_call.1} parent=1 // pred_region
      %97 = dma.done [#allocation9], 2048
    $region53: #{tpu_custom_call.1} parent=1 // pred_fallthru
      _
    // Predicated region
    $region54: #{tpu_custom_call.1} parent=1 // pred_check
      _
    $region55: #{tpu_custom_call.1} parent=1 // pred_check_branch
      %99 = sbr.rel (0) target = $region57
    $region56: #{tpu_custom_call.1} parent=1 // pred_region
      %100 = dma.done [#allocation9], 2048
    $region57: #{tpu_custom_call.1} parent=1 // pred_fallthru
      _
    %v101 = vld [vmem:[%s0] sm:$0xff]
    %v102 = vld [vmem:[%s0 + $0x8] sm:$0xff]
    %v103 = vld [vmem:[%s0 + $0x10] sm:$0xff]
    %v104 = vld [vmem:[%s0 + $0x18] sm:$0xff]
    %v105 = vld [vmem:[%s0 + $0x20] sm:$0xff]
    %v106 = vld [vmem:[%s0 + $0x28] sm:$0xff]
    %v107 = vld [vmem:[%s0 + $0x30] sm:$0xff]
    %v108 = vld [vmem:[%s0 + $0x38] sm:$0xff]
    %v109 = vld [vmem:[%s1] sm:$0xff]
    %v110 = vld [vmem:[%s1 + $0x8] sm:$0xff]
    %v111 = vld [vmem:[%s1 + $0x10] sm:$0xff]
    %v112 = vld [vmem:[%s1 + $0x18] sm:$0xff]
    %v113 = vld [vmem:[%s1 + $0x20] sm:$0xff]
    %v114 = vld [vmem:[%s1 + $0x28] sm:$0xff]
    %v115 = vld [vmem:[%s1 + $0x30] sm:$0xff]
    %v116 = vld [vmem:[%s1 + $0x38] sm:$0xff]
    %v117 = vld [vmem:[%s2] sm:$0x1f]
    %v118 = vld [vmem:[%s8] sm:$0xff]
    %120 = vset.pattern.permute.xlu0 0
    %121 = vperm.xlu0 %120, %v109
    %v122 = vpop.permute.xlu0 %121
    %125 = vset.pattern.permute.xlu0 0
    %126 = vperm.xlu0 %125, %v110
    %v127 = vpop.permute.xlu0 %126
    %130 = vset.pattern.permute.xlu0 0
    %131 = vperm.xlu0 %130, %v111
    %v132 = vpop.permute.xlu0 %131
    %135 = vset.pattern.permute.xlu0 0
    %136 = vperm.xlu0 %135, %v112
    %v137 = vpop.permute.xlu0 %136
    %140 = vset.pattern.permute.xlu0 0
    %141 = vperm.xlu0 %140, %v113
    %v142 = vpop.permute.xlu0 %141
    %145 = vset.pattern.permute.xlu0 0
    %146 = vperm.xlu0 %145, %v114
    %v147 = vpop.permute.xlu0 %146
    %150 = vset.pattern.permute.xlu0 0
    %151 = vperm.xlu0 %150, %v115
    %v152 = vpop.permute.xlu0 %151
    %155 = vset.pattern.permute.xlu0 0
    %156 = vperm.xlu0 %155, %v116
    %v157 = vpop.permute.xlu0 %156
    %v159 = vlaneseq
    %v160 = vshrl.u32 %v159, 7
    %v161 = vsub.s32 0, %v160
    %v162 = vrot.slane %v117, %v161
    %v163 = vmul.f32 %v122, %v162
    %v164 = vmul.f32 %v127, %v162
    %v165 = vmul.f32 %v132, %v162
    %v166 = vmul.f32 %v137, %v162
    %v167 = vmul.f32 %v142, %v162
    %v168 = vmul.f32 %v147, %v162
    %v169 = vmul.f32 %v152, %v162
    %v170 = vmul.f32 %v157, %v162
    %v171 = vlaneseq
    %v172 = vshrl.u32 %v171, 7
    %v173 = vsub.s32 2, %v172
    %v174 = vrot.slane %v117, %v173
    %v175 = vadd.f32 %v174, %v163
    %v176 = vadd.f32 %v174, %v164
    %v177 = vadd.f32 %v174, %v165
    %v178 = vadd.f32 %v174, %v166
    %v179 = vadd.f32 %v174, %v167
    %v180 = vadd.f32 %v174, %v168
    %v181 = vadd.f32 %v174, %v169
    %v182 = vadd.f32 %v174, %v170
    %183 = vset.pattern.permute.xlu0 1
    %184 = vperm.xlu0 %183, %v109
    %v185 = vpop.permute.xlu0 %184
    %187 = vset.pattern.permute.xlu0 1
    %188 = vperm.xlu0 %187, %v110
    %v189 = vpop.permute.xlu0 %188
    %191 = vset.pattern.permute.xlu0 1
    %192 = vperm.xlu0 %191, %v111
    %v193 = vpop.permute.xlu0 %192
    %195 = vset.pattern.permute.xlu0 1
    %196 = vperm.xlu0 %195, %v112
    %v197 = vpop.permute.xlu0 %196
    %199 = vset.pattern.permute.xlu0 1
    %200 = vperm.xlu0 %199, %v113
    %v201 = vpop.permute.xlu0 %200
    %203 = vset.pattern.permute.xlu0 1
    %204 = vperm.xlu0 %203, %v114
    %v205 = vpop.permute.xlu0 %204
    %207 = vset.pattern.permute.xlu0 1
    %208 = vperm.xlu0 %207, %v115
    %v209 = vpop.permute.xlu0 %208
    %211 = vset.pattern.permute.xlu0 1
    %212 = vperm.xlu0 %211, %v116
    %v213 = vpop.permute.xlu0 %212
    %v215 = vlaneseq
    %v216 = vshrl.u32 %v215, 7
    %v217 = vsub.s32 1, %v216
    %v218 = vrot.slane %v117, %v217
    %v219 = vmul.f32 %v185, %v218
    %v220 = vmul.f32 %v189, %v218
    %v221 = vmul.f32 %v193, %v218
    %v222 = vmul.f32 %v197, %v218
    %v223 = vmul.f32 %v201, %v218
    %v224 = vmul.f32 %v205, %v218
    %v225 = vmul.f32 %v209, %v218
    %v226 = vmul.f32 %v213, %v218
    %v227 = vadd.f32 %v175, %v219
    %v228 = vadd.f32 %v176, %v220
    %v229 = vadd.f32 %v177, %v221
    %v230 = vadd.f32 %v178, %v222
    %v231 = vadd.f32 %v179, %v223
    %v232 = vadd.f32 %v180, %v224
    %v233 = vadd.f32 %v181, %v225
    %v234 = vadd.f32 %v182, %v226
    %vm235 = vcmask 130048
    %v236 = vsel %vm235, %v227, 0.0
    %237 = vadd.xlane.f32.xlu0 %v236
    %v238 = vpop.xlane.xlu0 %237
    %v239 = vsel %vm235, %v228, 0.0
    %240 = vadd.xlane.f32.xlu0 %v239
    %v241 = vpop.xlane.xlu0 %240
    %v242 = vsel %vm235, %v229, 0.0
    %243 = vadd.xlane.f32.xlu0 %v242
    %v244 = vpop.xlane.xlu0 %243
    %v245 = vsel %vm235, %v230, 0.0
    %246 = vadd.xlane.f32.xlu0 %v245
    %v247 = vpop.xlane.xlu0 %246
    %v248 = vsel %vm235, %v231, 0.0
    %249 = vadd.xlane.f32.xlu0 %v248
    %v250 = vpop.xlane.xlu0 %249
    %v251 = vsel %vm235, %v232, 0.0
    %252 = vadd.xlane.f32.xlu0 %v251
    %v253 = vpop.xlane.xlu0 %252
    %v254 = vsel %vm235, %v233, 0.0
    %255 = vadd.xlane.f32.xlu0 %v254
    %v256 = vpop.xlane.xlu0 %255
    %v257 = vsel %vm235, %v234, 0.0
    %258 = vadd.xlane.f32.xlu0 %v257
    %v259 = vpop.xlane.xlu0 %258
    %v260 = vrcp.pop 16.0
    %v261 = vmul.f32 %v238, %v260
    %v262 = vmul.f32 %v241, %v260
    %v263 = vmul.f32 %v244, %v260
    %v264 = vmul.f32 %v247, %v260
    %v265 = vmul.f32 %v250, %v260
    %v266 = vmul.f32 %v253, %v260
    %v267 = vmul.f32 %v256, %v260
    %v268 = vmul.f32 %v259, %v260
    %v269 = vsub.f32 %v227, %v261
    %v270 = vsub.f32 %v228, %v262
    %v271 = vsub.f32 %v229, %v263
    %v272 = vsub.f32 %v230, %v264
    %v273 = vsub.f32 %v231, %v265
    %v274 = vsub.f32 %v232, %v266
    %v275 = vsub.f32 %v233, %v267
    %v276 = vsub.f32 %v234, %v268
    %v277 = vmul.f32 %v269, %v269
    %v278 = vmul.f32 %v270, %v270
    %v279 = vmul.f32 %v271, %v271
    %v280 = vmul.f32 %v272, %v272
    %v281 = vmul.f32 %v273, %v273
    %v282 = vmul.f32 %v274, %v274
    %v283 = vmul.f32 %v275, %v275
    %v284 = vmul.f32 %v276, %v276
    %v285 = vsel %vm235, %v277, 0.0
    %286 = vadd.xlane.f32.xlu0 %v285
    %v287 = vpop.xlane.xlu0 %286
    %v288 = vsel %vm235, %v278, 0.0
    %289 = vadd.xlane.f32.xlu0 %v288
    %v290 = vpop.xlane.xlu0 %289
    %v291 = vsel %vm235, %v279, 0.0
    %292 = vadd.xlane.f32.xlu0 %v291
    %v293 = vpop.xlane.xlu0 %292
    %v294 = vsel %vm235, %v280, 0.0
    %295 = vadd.xlane.f32.xlu0 %v294
    %v296 = vpop.xlane.xlu0 %295
    %v297 = vsel %vm235, %v281, 0.0
    %298 = vadd.xlane.f32.xlu0 %v297
    %v299 = vpop.xlane.xlu0 %298
    %v300 = vsel %vm235, %v282, 0.0
    %301 = vadd.xlane.f32.xlu0 %v300
    %v302 = vpop.xlane.xlu0 %301
    %v303 = vsel %vm235, %v283, 0.0
    %304 = vadd.xlane.f32.xlu0 %v303
    %v305 = vpop.xlane.xlu0 %304
    %v306 = vsel %vm235, %v284, 0.0
    %307 = vadd.xlane.f32.xlu0 %v306
    %v308 = vpop.xlane.xlu0 %307
    %v309 = vmul.f32 %v287, %v260
    %v310 = vmul.f32 %v290, %v260
    %v311 = vmul.f32 %v293, %v260
    %v312 = vmul.f32 %v296, %v260
    %v313 = vmul.f32 %v299, %v260
    %v314 = vmul.f32 %v302, %v260
    %v315 = vmul.f32 %v305, %v260
    %v316 = vmul.f32 %v308, %v260
    %v317 = vadd.f32 %v309, 1e-05
    %v318 = vadd.f32 %v310, 1e-05
    %v319 = vadd.f32 %v311, 1e-05
    %v320 = vadd.f32 %v312, 1e-05
    %v321 = vadd.f32 %v313, 1e-05
    %v322 = vadd.f32 %v314, 1e-05
    %v323 = vadd.f32 %v315, 1e-05
    %v324 = vadd.f32 %v316, 1e-05
    %v325 = vrsqrt.pop %v317
    %v326 = vrsqrt.pop %v318
    %v327 = vrsqrt.pop %v319
    %v328 = vrsqrt.pop %v320
    %v329 = vrsqrt.pop %v321
    %v330 = vrsqrt.pop %v322
    %v331 = vrsqrt.pop %v323
    %v332 = vrsqrt.pop %v324
    %v333 = vmul.f32 %v269, %v325
    %v334 = vmul.f32 %v270, %v326
    %v335 = vmul.f32 %v271, %v327
    %v336 = vmul.f32 %v272, %v328
    %v337 = vmul.f32 %v273, %v329
    %v338 = vmul.f32 %v274, %v330
    %v339 = vmul.f32 %v275, %v331
    %v340 = vmul.f32 %v276, %v332
    %v341 = vlaneseq
    %v342 = vshrl.u32 %v341, 7
    %v343 = vsub.s32 3, %v342
    %v344 = vrot.slane %v117, %v343
    %v345 = vmul.f32 %v333, %v344
    %v346 = vmul.f32 %v334, %v344
    %v347 = vmul.f32 %v335, %v344
    %v348 = vmul.f32 %v336, %v344
    %v349 = vmul.f32 %v337, %v344
    %v350 = vmul.f32 %v338, %v344
    %v351 = vmul.f32 %v339, %v344
    %v352 = vmul.f32 %v340, %v344
    %v353 = vlaneseq
    %v354 = vshrl.u32 %v353, 7
    %v355 = vsub.s32 4, %v354
    %v356 = vrot.slane %v117, %v355
    %v357 = vadd.f32 %v345, %v356
    %v358 = vadd.f32 %v346, %v356
    %v359 = vadd.f32 %v347, %v356
    %v360 = vadd.f32 %v348, %v356
    %v361 = vadd.f32 %v349, %v356
    %v362 = vadd.f32 %v350, %v356
    %v363 = vadd.f32 %v351, %v356
    %v364 = vadd.f32 %v352, %v356
    %v365 = vmax.f32 %v357, 0.0
    %v366 = vmax.f32 %v358, 0.0
    %v367 = vmax.f32 %v359, 0.0
    %v368 = vmax.f32 %v360, 0.0
    %v369 = vmax.f32 %v361, 0.0
    %v370 = vmax.f32 %v362, 0.0
    %v371 = vmax.f32 %v363, 0.0
    %v372 = vmax.f32 %v364, 0.0
    %v373 = vld [vmem:[#allocation2] sm:$0xff]
    %v374 = vld [vmem:[#allocation2 + $0x8] sm:$0xff]
    %v375 = vlaneseq
    %v376 = vshrl.u32 %v375, 7
    %v377 = vsub.s32 0, %v376
    %v378 = vrot.slane %v118, %v377
    %v380 = vsel %vm235, %v365, 0
    %v383 = vsel %vm235, %v366, 0
    %v386 = vsel %vm235, %v367, 0
    %v389 = vsel %vm235, %v368, 0
    %v392 = vsel %vm235, %v369, 0
    %v395 = vsel %vm235, %v370, 0
    %v398 = vsel %vm235, %v371, 0
    %v401 = vsel %vm235, %v372, 0
    %403 = vmatprep.subr.mxu0 0.0
    %404 = vmatpush1.msra.mxu0 %v373
    %405 = vmatprep.subr.mxu0 0.0
    %406 = vmatpush1.msra.mxu0 %v374
    %407 = vmatprep.subr.mxu0 0.0
    %408 = vmatpush1.msra.mxu0 0.0
    %409 = vmatprep.subr.mxu0 0.0
    %410 = vmatpush1.msra.mxu0 0.0
    %411 = vmatprep.subr.mxu0 0.0
    %412 = vmatpush1.msra.mxu0 0.0
    %413 = vmatprep.subr.mxu0 0.0
    %414 = vmatpush1.msra.mxu0 0.0
    %415 = vmatprep.subr.mxu0 0.0
    %416 = vmatpush1.msra.mxu0 0.0
    %417 = vmatprep.subr.mxu0 0.0
    %418 = vmatpush1.msra.mxu0 0.0
    %419 = vmatprep.subr.mxu0 0.0
    %420 = vmatpush1.msra.mxu0 0.0
    %421 = vmatprep.subr.mxu0 0.0
    %422 = vmatpush1.msra.mxu0 0.0
    %423 = vmatprep.subr.mxu0 0.0
    %424 = vmatpush1.msra.mxu0 0.0
    %425 = vmatprep.subr.mxu0 0.0
    %426 = vmatpush1.msra.mxu0 0.0
    %427 = vmatprep.subr.mxu0 0.0
    %428 = vmatpush1.msra.mxu0 0.0
    %429 = vmatprep.subr.mxu0 0.0
    %430 = vmatpush1.msra.mxu0 0.0
    %431 = vmatprep.subr.mxu0 0.0
    %432 = vmatpush1.msra.mxu0 0.0
    %433 = vmatprep.subr.mxu0 0.0
    %434 = vmatpush1.msra.mxu0 0.0
    %435 = vmatprep.subr.mxu0 0.0
    %436 = vmatpush1.msra.mxu0 0.0
    %437 = vmatprep.subr.mxu0 0.0
    %438 = vmatpush1.msra.mxu0 0.0
    %439 = vmatprep.subr.mxu0 0.0
    %440 = vmatpush1.msra.mxu0 0.0
    %441 = vmatprep.subr.mxu0 0.0
    %442 = vmatpush1.msra.mxu0 0.0
    %443 = vmatprep.subr.mxu0 0.0
    %444 = vmatpush1.msra.mxu0 0.0
    %445 = vmatprep.subr.mxu0 0.0
    %446 = vmatpush1.msra.mxu0 0.0
    %447 = vmatprep.subr.mxu0 0.0
    %448 = vmatpush1.msra.mxu0 0.0
    %449 = vmatprep.subr.mxu0 0.0
    %450 = vmatpush1.msra.mxu0 0.0
    %451 = vmatprep.subr.mxu0 0.0
    %452 = vmatpush1.msra.mxu0 0.0
    %453 = vmatprep.subr.mxu0 0.0
    %454 = vmatpush1.msra.mxu0 0.0
    %455 = vmatprep.subr.mxu0 0.0
    %456 = vmatpush1.msra.mxu0 0.0
    %457 = vmatprep.subr.mxu0 0.0
    %458 = vmatpush1.msra.mxu0 0.0
    %459 = vmatprep.subr.mxu0 0.0
    %460 = vmatpush1.msra.mxu0 0.0
    %461 = vmatprep.subr.mxu0 0.0
    %462 = vmatpush1.msra.mxu0 0.0
    %463 = vmatprep.subr.mxu0 0.0
    %464 = vmatpush1.msra.mxu0 0.0
    %465 = vmatprep.subr.mxu0 0.0
    %466 = vmatpush1.msra.mxu0 0.0
    %467 = vmatprep.mubr.f32.mxu0 0.0
    %468 = vmatmul.mubr.f32.gmra.mrb[0].mxu0 %v380
    %v469 = vpop.f32.mrb[0].mxu0
    %v470 = vadd.f32 %v378, %v469
    %v471 = vpop.f32.mrb[0].mxu0
    %472 = vmatprep.mubr.f32.mxu0 0.0
    %473 = vmatmul.mubr.f32.gmra.mrb[0].mxu0 %v383
    %v474 = vpop.f32.mrb[0].mxu0
    %v475 = vadd.f32 %v378, %v474
    %v476 = vpop.f32.mrb[0].mxu0
    %477 = vmatprep.mubr.f32.mxu0 0.0
    %478 = vmatmul.mubr.f32.gmra.mrb[0].mxu0 %v386
    %v479 = vpop.f32.mrb[0].mxu0
    %v480 = vadd.f32 %v378, %v479
    %v481 = vpop.f32.mrb[0].mxu0
    %482 = vmatprep.mubr.f32.mxu0 0.0
    %483 = vmatmul.mubr.f32.gmra.mrb[0].mxu0 %v389
    %v484 = vpop.f32.mrb[0].mxu0
    %v485 = vadd.f32 %v378, %v484
    %v486 = vpop.f32.mrb[0].mxu0
    %487 = vmatprep.mubr.f32.mxu0 0.0
    %488 = vmatmul.mubr.f32.gmra.mrb[0].mxu0 %v392
    %v489 = vpop.f32.mrb[0].mxu0
    %v490 = vadd.f32 %v378, %v489
    %v491 = vpop.f32.mrb[0].mxu0
    %492 = vmatprep.mubr.f32.mxu0 0.0
    %493 = vmatmul.mubr.f32.gmra.mrb[0].mxu0 %v395
    %v494 = vpop.f32.mrb[0].mxu0
    %v495 = vadd.f32 %v378, %v494
    %v496 = vpop.f32.mrb[0].mxu0
    %497 = vmatprep.mubr.f32.mxu0 0.0
    %498 = vmatmul.mubr.f32.gmra.mrb[0].mxu0 %v398
    %v499 = vpop.f32.mrb[0].mxu0
    %v500 = vadd.f32 %v378, %v499
    %v501 = vpop.f32.mrb[0].mxu0
    %502 = vmatprep.mubr.f32.mxu0 0.0
    %503 = vmatmul.mubr.f32.gmra.mrb[0].mxu0 %v401
    %v504 = vpop.f32.mrb[0].mxu0
    %v505 = vadd.f32 %v378, %v504
    %v506 = vpop.f32.mrb[0].mxu0
    %507 = vdwg.mxu0
    %v508 = vadd.f32 %v101, %v470
    %v509 = vadd.f32 %v102, %v475
    %v510 = vadd.f32 %v103, %v480
    %v511 = vadd.f32 %v104, %v485
    %v512 = vadd.f32 %v105, %v490
    %v513 = vadd.f32 %v106, %v495
    %v514 = vadd.f32 %v107, %v500
    %v515 = vadd.f32 %v108, %v505
    %516 = vadd.xlane.f32.xlu0 %v508
    %v517 = vpop.xlane.xlu0 %516
    %518 = vadd.xlane.f32.xlu0 %v509
    %v519 = vpop.xlane.xlu0 %518
    %520 = vadd.xlane.f32.xlu0 %v510
    %v521 = vpop.xlane.xlu0 %520
    %522 = vadd.xlane.f32.xlu0 %v511
    %v523 = vpop.xlane.xlu0 %522
    %524 = vadd.xlane.f32.xlu0 %v512
    %v525 = vpop.xlane.xlu0 %524
    %526 = vadd.xlane.f32.xlu0 %v513
    %v527 = vpop.xlane.xlu0 %526
    %528 = vadd.xlane.f32.xlu0 %v514
    %v529 = vpop.xlane.xlu0 %528
    %530 = vadd.xlane.f32.xlu0 %v515
    %v531 = vpop.xlane.xlu0 %530
    %v532 = vrcp.pop 128.0
    %v533 = vmul.f32 %v517, %v532
    %v534 = vmul.f32 %v519, %v532
    %v535 = vmul.f32 %v521, %v532
    %v536 = vmul.f32 %v523, %v532
    %v537 = vmul.f32 %v525, %v532
    %v538 = vmul.f32 %v527, %v532
    %v539 = vmul.f32 %v529, %v532
    %v540 = vmul.f32 %v531, %v532
    %v541 = vsub.f32 %v508, %v533
    %v542 = vsub.f32 %v509, %v534
    %v543 = vsub.f32 %v510, %v535
    %v544 = vsub.f32 %v511, %v536
    %v545 = vsub.f32 %v512, %v537
    %v546 = vsub.f32 %v513, %v538
    %v547 = vsub.f32 %v514, %v539
    %v548 = vsub.f32 %v515, %v540
    %v549 = vmul.f32 %v541, %v541
    %v550 = vmul.f32 %v542, %v542
    %v551 = vmul.f32 %v543, %v543
    %v552 = vmul.f32 %v544, %v544
    %v553 = vmul.f32 %v545, %v545
    %v554 = vmul.f32 %v546, %v546
    %v555 = vmul.f32 %v547, %v547
    %v556 = vmul.f32 %v548, %v548
    %557 = vadd.xlane.f32.xlu0 %v549
    %v558 = vpop.xlane.xlu0 %557
    %559 = vadd.xlane.f32.xlu0 %v550
    %v560 = vpop.xlane.xlu0 %559
    %561 = vadd.xlane.f32.xlu0 %v551
    %v562 = vpop.xlane.xlu0 %561
    %563 = vadd.xlane.f32.xlu0 %v552
    %v564 = vpop.xlane.xlu0 %563
    %565 = vadd.xlane.f32.xlu0 %v553
    %v566 = vpop.xlane.xlu0 %565
    %567 = vadd.xlane.f32.xlu0 %v554
    %v568 = vpop.xlane.xlu0 %567
    %569 = vadd.xlane.f32.xlu0 %v555
    %v570 = vpop.xlane.xlu0 %569
    %571 = vadd.xlane.f32.xlu0 %v556
    %v572 = vpop.xlane.xlu0 %571
    %v573 = vmul.f32 %v558, %v532
    %v574 = vmul.f32 %v560, %v532
    %v575 = vmul.f32 %v562, %v532
    %v576 = vmul.f32 %v564, %v532
    %v577 = vmul.f32 %v566, %v532
    %v578 = vmul.f32 %v568, %v532
    %v579 = vmul.f32 %v570, %v532
    %v580 = vmul.f32 %v572, %v532
    %v581 = vadd.f32 %v573, 1e-05
    %v582 = vadd.f32 %v574, 1e-05
    %v583 = vadd.f32 %v575, 1e-05
    %v584 = vadd.f32 %v576, 1e-05
    %v585 = vadd.f32 %v577, 1e-05
    %v586 = vadd.f32 %v578, 1e-05
    %v587 = vadd.f32 %v579, 1e-05
    %v588 = vadd.f32 %v580, 1e-05
    %v589 = vrsqrt.pop %v581
    %v590 = vrsqrt.pop %v582
    %v591 = vrsqrt.pop %v583
    %v592 = vrsqrt.pop %v584
    %v593 = vrsqrt.pop %v585
    %v594 = vrsqrt.pop %v586
    %v595 = vrsqrt.pop %v587
    %v596 = vrsqrt.pop %v588
    %v597 = vmul.f32 %v541, %v589
    %v598 = vmul.f32 %v542, %v590
    %v599 = vmul.f32 %v543, %v591
    %v600 = vmul.f32 %v544, %v592
    %v601 = vmul.f32 %v545, %v593
    %v602 = vmul.f32 %v546, %v594
    %v603 = vmul.f32 %v547, %v595
    %v604 = vmul.f32 %v548, %v596
    %v605 = vlaneseq
    %v606 = vshrl.u32 %v605, 7
    %v607 = vsub.s32 1, %v606
    %v608 = vrot.slane %v118, %v607
    %v609 = vmul.f32 %v597, %v608
    %v610 = vmul.f32 %v598, %v608
    %v611 = vmul.f32 %v599, %v608
    %v612 = vmul.f32 %v600, %v608
    %v613 = vmul.f32 %v601, %v608
    %v614 = vmul.f32 %v602, %v608
    %v615 = vmul.f32 %v603, %v608
    %v616 = vmul.f32 %v604, %v608
    %v617 = vlaneseq
    %v618 = vshrl.u32 %v617, 7
    %v619 = vsub.s32 2, %v618
    %v620 = vrot.slane %v118, %v619
    %v621 = vadd.f32 %v609, %v620
    %v622 = vadd.f32 %v610, %v620
    %v623 = vadd.f32 %v611, %v620
    %v624 = vadd.f32 %v612, %v620
    %v625 = vadd.f32 %v613, %v620
    %v626 = vadd.f32 %v614, %v620
    %v627 = vadd.f32 %v615, %v620
    %v628 = vadd.f32 %v616, %v620
    %v629 = vld [vmem:[#allocation5] sm:$0xff]
    %v630 = vld [vmem:[#allocation5 + $0x8] sm:$0xff]
    %v631 = vld [vmem:[#allocation5 + $0x10] sm:$0xff]
    %v632 = vld [vmem:[#allocation5 + $0x18] sm:$0xff]
    %v633 = vld [vmem:[#allocation5 + $0x20] sm:$0xff]
    %v634 = vld [vmem:[#allocation5 + $0x28] sm:$0xff]
    %v635 = vld [vmem:[#allocation5 + $0x30] sm:$0xff]
    %v636 = vld [vmem:[#allocation5 + $0x38] sm:$0xff]
    %v637 = vld [vmem:[#allocation5 + $0x40] sm:$0xff]
    %v638 = vld [vmem:[#allocation5 + $0x48] sm:$0xff]
    %v639 = vld [vmem:[#allocation5 + $0x50] sm:$0xff]
    %v640 = vld [vmem:[#allocation5 + $0x58] sm:$0xff]
    %v641 = vld [vmem:[#allocation5 + $0x60] sm:$0xff]
    %v642 = vld [vmem:[#allocation5 + $0x68] sm:$0xff]
    %v643 = vld [vmem:[#allocation5 + $0x70] sm:$0xff]
    %v644 = vld [vmem:[#allocation5 + $0x78] sm:$0xff]
    %v645 = vld [vmem:[#allocation5 + $0x80] sm:$0xff]
    %v646 = vld [vmem:[#allocation5 + $0x88] sm:$0xff]
    %v647 = vld [vmem:[#allocation5 + $0x90] sm:$0xff]
    %v648 = vld [vmem:[#allocation5 + $0x98] sm:$0xff]
    %v649 = vld [vmem:[#allocation5 + $0xa0] sm:$0xff]
    %v650 = vld [vmem:[#allocation5 + $0xa8] sm:$0xff]
    %v651 = vld [vmem:[#allocation5 + $0xb0] sm:$0xff]
    %v652 = vld [vmem:[#allocation5 + $0xb8] sm:$0xff]
    %v653 = vld [vmem:[#allocation5 + $0xc0] sm:$0xff]
    %v654 = vld [vmem:[#allocation5 + $0xc8] sm:$0xff]
    %v655 = vld [vmem:[#allocation5 + $0xd0] sm:$0xff]
    %v656 = vld [vmem:[#allocation5 + $0xd8] sm:$0xff]
    %v657 = vld [vmem:[#allocation5 + $0xe0] sm:$0xff]
    %v658 = vld [vmem:[#allocation5 + $0xe8] sm:$0xff]
    %v659 = vld [vmem:[#allocation5 + $0xf0] sm:$0xff]
    %v660 = vld [vmem:[#allocation5 + $0xf8] sm:$0xff]
    %v661 = vld [vmem:[#allocation5 + $0x100] sm:$0xff]
    %v662 = vld [vmem:[#allocation5 + $0x108] sm:$0xff]
    %v663 = vld [vmem:[#allocation5 + $0x110] sm:$0xff]
    %v664 = vld [vmem:[#allocation5 + $0x118] sm:$0xff]
    %v665 = vld [vmem:[#allocation5 + $0x120] sm:$0xff]
    %v666 = vld [vmem:[#allocation5 + $0x128] sm:$0xff]
    %v667 = vld [vmem:[#allocation5 + $0x130] sm:$0xff]
    %v668 = vld [vmem:[#allocation5 + $0x138] sm:$0xff]
    %v669 = vld [vmem:[#allocation5 + $0x140] sm:$0xff]
    %v670 = vld [vmem:[#allocation5 + $0x148] sm:$0xff]
    %v671 = vld [vmem:[#allocation5 + $0x150] sm:$0xff]
    %v672 = vld [vmem:[#allocation5 + $0x158] sm:$0xff]
    %v673 = vld [vmem:[#allocation5 + $0x160] sm:$0xff]
    %v674 = vld [vmem:[#allocation5 + $0x168] sm:$0xff]
    %v675 = vld [vmem:[#allocation5 + $0x170] sm:$0xff]
    %v676 = vld [vmem:[#allocation5 + $0x178] sm:$0xff]
    %v677 = vld [vmem:[#allocation5 + $0x180] sm:$0xff]
    %v678 = vld [vmem:[#allocation5 + $0x188] sm:$0xff]
    %v679 = vld [vmem:[#allocation5 + $0x190] sm:$0xff]
    %v680 = vld [vmem:[#allocation5 + $0x198] sm:$0xff]
    %v681 = vld [vmem:[#allocation5 + $0x1a0] sm:$0xff]
    %v682 = vld [vmem:[#allocation5 + $0x1a8] sm:$0xff]
    %v683 = vld [vmem:[#allocation5 + $0x1b0] sm:$0xff]
    %v684 = vld [vmem:[#allocation5 + $0x1b8] sm:$0xff]
    %v685 = vld [vmem:[#allocation5 + $0x1c0] sm:$0xff]
    %v686 = vld [vmem:[#allocation5 + $0x1c8] sm:$0xff]
    %v687 = vld [vmem:[#allocation5 + $0x1d0] sm:$0xff]
    %v688 = vld [vmem:[#allocation5 + $0x1d8] sm:$0xff]
    %v689 = vld [vmem:[#allocation5 + $0x1e0] sm:$0xff]
    %v690 = vld [vmem:[#allocation5 + $0x1e8] sm:$0xff]
    %v691 = vld [vmem:[#allocation5 + $0x1f0] sm:$0xff]
    %v692 = vld [vmem:[#allocation5 + $0x1f8] sm:$0xff]
    %v693 = vld [vmem:[#allocation5 + $0x200] sm:$0xff]
    %v694 = vld [vmem:[#allocation5 + $0x208] sm:$0xff]
    %v695 = vld [vmem:[#allocation5 + $0x210] sm:$0xff]
    %v696 = vld [vmem:[#allocation5 + $0x218] sm:$0xff]
    %v697 = vld [vmem:[#allocation5 + $0x220] sm:$0xff]
    %v698 = vld [vmem:[#allocation5 + $0x228] sm:$0xff]
    %v699 = vld [vmem:[#allocation5 + $0x230] sm:$0xff]
    %v700 = vld [vmem:[#allocation5 + $0x238] sm:$0xff]
    %v701 = vld [vmem:[#allocation5 + $0x240] sm:$0xff]
    %v702 = vld [vmem:[#allocation5 + $0x248] sm:$0xff]
    %v703 = vld [vmem:[#allocation5 + $0x250] sm:$0xff]
    %v704 = vld [vmem:[#allocation5 + $0x258] sm:$0xff]
    %v705 = vld [vmem:[#allocation5 + $0x260] sm:$0xff]
    %v706 = vld [vmem:[#allocation5 + $0x268] sm:$0xff]
    %v707 = vld [vmem:[#allocation5 + $0x270] sm:$0xff]
    %v708 = vld [vmem:[#allocation5 + $0x278] sm:$0xff]
    %v709 = vld [vmem:[#allocation5 + $0x280] sm:$0xff]
    %v710 = vld [vmem:[#allocation5 + $0x288] sm:$0xff]
    %v711 = vld [vmem:[#allocation5 + $0x290] sm:$0xff]
    %v712 = vld [vmem:[#allocation5 + $0x298] sm:$0xff]
    %v713 = vld [vmem:[#allocation5 + $0x2a0] sm:$0xff]
    %v714 = vld [vmem:[#allocation5 + $0x2a8] sm:$0xff]
    %v715 = vld [vmem:[#allocation5 + $0x2b0] sm:$0xff]
    %v716 = vld [vmem:[#allocation5 + $0x2b8] sm:$0xff]
    %v717 = vld [vmem:[#allocation5 + $0x2c0] sm:$0xff]
    %v718 = vld [vmem:[#allocation5 + $0x2c8] sm:$0xff]
    %v719 = vld [vmem:[#allocation5 + $0x2d0] sm:$0xff]
    %v720 = vld [vmem:[#allocation5 + $0x2d8] sm:$0xff]
    %v721 = vld [vmem:[#allocation5 + $0x2e0] sm:$0xff]
    %v722 = vld [vmem:[#allocation5 + $0x2e8] sm:$0xff]
    %v723 = vld [vmem:[#allocation5 + $0x2f0] sm:$0xff]
    %v724 = vld [vmem:[#allocation5 + $0x2f8] sm:$0xff]
    %v725 = vld [vmem:[#allocation5 + $0x300] sm:$0xff]
    %v726 = vld [vmem:[#allocation5 + $0x308] sm:$0xff]
    %v727 = vld [vmem:[#allocation5 + $0x310] sm:$0xff]
    %v728 = vld [vmem:[#allocation5 + $0x318] sm:$0xff]
    %v729 = vld [vmem:[#allocation5 + $0x320] sm:$0xff]
    %v730 = vld [vmem:[#allocation5 + $0x328] sm:$0xff]
    %v731 = vld [vmem:[#allocation5 + $0x330] sm:$0xff]
    %v732 = vld [vmem:[#allocation5 + $0x338] sm:$0xff]
    %v733 = vld [vmem:[#allocation5 + $0x340] sm:$0xff]
    %v734 = vld [vmem:[#allocation5 + $0x348] sm:$0xff]
    %v735 = vld [vmem:[#allocation5 + $0x350] sm:$0xff]
    %v736 = vld [vmem:[#allocation5 + $0x358] sm:$0xff]
    %v737 = vld [vmem:[#allocation5 + $0x360] sm:$0xff]
    %v738 = vld [vmem:[#allocation5 + $0x368] sm:$0xff]
    %v739 = vld [vmem:[#allocation5 + $0x370] sm:$0xff]
    %v740 = vld [vmem:[#allocation5 + $0x378] sm:$0xff]
    %v741 = vld [vmem:[#allocation5 + $0x380] sm:$0xff]
    %v742 = vld [vmem:[#allocation5 + $0x388] sm:$0xff]
    %v743 = vld [vmem:[#allocation5 + $0x390] sm:$0xff]
    %v744 = vld [vmem:[#allocation5 + $0x398] sm:$0xff]
    %v745 = vld [vmem:[#allocation5 + $0x3a0] sm:$0xff]
    %v746 = vld [vmem:[#allocation5 + $0x3a8] sm:$0xff]
    %v747 = vld [vmem:[#allocation5 + $0x3b0] sm:$0xff]
    %v748 = vld [vmem:[#allocation5 + $0x3b8] sm:$0xff]
    %v749 = vld [vmem:[#allocation5 + $0x3c0] sm:$0xff]
    %v750 = vld [vmem:[#allocation5 + $0x3c8] sm:$0xff]
    %v751 = vld [vmem:[#allocation5 + $0x3d0] sm:$0xff]
    %v752 = vld [vmem:[#allocation5 + $0x3d8] sm:$0xff]
    %v753 = vld [vmem:[#allocation5 + $0x3e0] sm:$0xff]
    %v754 = vld [vmem:[#allocation5 + $0x3e8] sm:$0xff]
    %v755 = vld [vmem:[#allocation5 + $0x3f0] sm:$0xff]
    %v756 = vld [vmem:[#allocation5 + $0x3f8] sm:$0xff]
    %v757 = vld [vmem:[#allocation5 + $0x400] sm:$0xff]
    %v758 = vld [vmem:[#allocation5 + $0x408] sm:$0xff]
    %v759 = vld [vmem:[#allocation5 + $0x410] sm:$0xff]
    %v760 = vld [vmem:[#allocation5 + $0x418] sm:$0xff]
    %v761 = vld [vmem:[#allocation5 + $0x420] sm:$0xff]
    %v762 = vld [vmem:[#allocation5 + $0x428] sm:$0xff]
    %v763 = vld [vmem:[#allocation5 + $0x430] sm:$0xff]
    %v764 = vld [vmem:[#allocation5 + $0x438] sm:$0xff]
    %v765 = vld [vmem:[#allocation5 + $0x440] sm:$0xff]
    %v766 = vld [vmem:[#allocation5 + $0x448] sm:$0xff]
    %v767 = vld [vmem:[#allocation5 + $0x450] sm:$0xff]
    %v768 = vld [vmem:[#allocation5 + $0x458] sm:$0xff]
    %v769 = vld [vmem:[#allocation5 + $0x460] sm:$0xff]
    %v770 = vld [vmem:[#allocation5 + $0x468] sm:$0xff]
    %v771 = vld [vmem:[#allocation5 + $0x470] sm:$0xff]
    %v772 = vld [vmem:[#allocation5 + $0x478] sm:$0xff]
    %v773 = vld [vmem:[#allocation5 + $0x480] sm:$0xff]
    %v774 = vld [vmem:[#allocation5 + $0x488] sm:$0xff]
    %v775 = vld [vmem:[#allocation5 + $0x490] sm:$0xff]
    %v776 = vld [vmem:[#allocation5 + $0x498] sm:$0xff]
    %v777 = vld [vmem:[#allocation5 + $0x4a0] sm:$0xff]
    %v778 = vld [vmem:[#allocation5 + $0x4a8] sm:$0xff]
    %v779 = vld [vmem:[#allocation5 + $0x4b0] sm:$0xff]
    %v780 = vld [vmem:[#allocation5 + $0x4b8] sm:$0xff]
    %v781 = vld [vmem:[#allocation5 + $0x4c0] sm:$0xff]
    %v782 = vld [vmem:[#allocation5 + $0x4c8] sm:$0xff]
    %v783 = vld [vmem:[#allocation5 + $0x4d0] sm:$0xff]
    %v784 = vld [vmem:[#allocation5 + $0x4d8] sm:$0xff]
    %v785 = vld [vmem:[#allocation5 + $0x4e0] sm:$0xff]
    %v786 = vld [vmem:[#allocation5 + $0x4e8] sm:$0xff]
    %v787 = vld [vmem:[#allocation5 + $0x4f0] sm:$0xff]
    %v788 = vld [vmem:[#allocation5 + $0x4f8] sm:$0xff]
    %v789 = vld [vmem:[#allocation5 + $0x500] sm:$0xff]
    %v790 = vld [vmem:[#allocation5 + $0x508] sm:$0xff]
    %v791 = vld [vmem:[#allocation5 + $0x510] sm:$0xff]
    %v792 = vld [vmem:[#allocation5 + $0x518] sm:$0xff]
    %v793 = vld [vmem:[#allocation5 + $0x520] sm:$0xff]
    %v794 = vld [vmem:[#allocation5 + $0x528] sm:$0xff]
    %v795 = vld [vmem:[#allocation5 + $0x530] sm:$0xff]
    %v796 = vld [vmem:[#allocation5 + $0x538] sm:$0xff]
    %v797 = vld [vmem:[#allocation5 + $0x540] sm:$0xff]
    %v798 = vld [vmem:[#allocation5 + $0x548] sm:$0xff]
    %v799 = vld [vmem:[#allocation5 + $0x550] sm:$0xff]
    %v800 = vld [vmem:[#allocation5 + $0x558] sm:$0xff]
    %v801 = vld [vmem:[#allocation5 + $0x560] sm:$0xff]
    %v802 = vld [vmem:[#allocation5 + $0x568] sm:$0xff]
    %v803 = vld [vmem:[#allocation5 + $0x570] sm:$0xff]
    %v804 = vld [vmem:[#allocation5 + $0x578] sm:$0xff]
    %v805 = vld [vmem:[#allocation5 + $0x580] sm:$0xff]
    %v806 = vld [vmem:[#allocation5 + $0x588] sm:$0xff]
    %v807 = vld [vmem:[#allocation5 + $0x590] sm:$0xff]
    %v808 = vld [vmem:[#allocation5 + $0x598] sm:$0xff]
    %v809 = vld [vmem:[#allocation5 + $0x5a0] sm:$0xff]
    %v810 = vld [vmem:[#allocation5 + $0x5a8] sm:$0xff]
    %v811 = vld [vmem:[#allocation5 + $0x5b0] sm:$0xff]
    %v812 = vld [vmem:[#allocation5 + $0x5b8] sm:$0xff]
    %v813 = vld [vmem:[#allocation5 + $0x5c0] sm:$0xff]
    %v814 = vld [vmem:[#allocation5 + $0x5c8] sm:$0xff]
    %v815 = vld [vmem:[#allocation5 + $0x5d0] sm:$0xff]
    %v816 = vld [vmem:[#allocation5 + $0x5d8] sm:$0xff]
    %v817 = vld [vmem:[#allocation5 + $0x5e0] sm:$0xff]
    %v818 = vld [vmem:[#allocation5 + $0x5e8] sm:$0xff]
    %v819 = vld [vmem:[#allocation5 + $0x5f0] sm:$0xff]
    %v820 = vld [vmem:[#allocation5 + $0x5f8] sm:$0xff]
    %821 = vmatprep.subr.mxu0 %v630
    %822 = vmatpush1.msra.mxu0 %v629
    %823 = vmatprep.subr.mxu0 %v642
    %824 = vmatpush1.msra.mxu0 %v641
    %825 = vmatprep.subr.mxu0 %v654
    %826 = vmatpush1.msra.mxu0 %v653
    %827 = vmatprep.subr.mxu0 %v666
    %828 = vmatpush1.msra.mxu0 %v665
    %829 = vmatprep.subr.mxu0 %v678
    %830 = vmatpush1.msra.mxu0 %v677
    %831 = vmatprep.subr.mxu0 %v690
    %832 = vmatpush1.msra.mxu0 %v689
    %833 = vmatprep.subr.mxu0 %v702
    %834 = vmatpush1.msra.mxu0 %v701
    %835 = vmatprep.subr.mxu0 %v714
    %836 = vmatpush1.msra.mxu0 %v713
    %837 = vmatprep.subr.mxu0 %v726
    %838 = vmatpush1.msra.mxu0 %v725
    %839 = vmatprep.subr.mxu0 %v738
    %840 = vmatpush1.msra.mxu0 %v737
    %841 = vmatprep.subr.mxu0 %v750
    %842 = vmatpush1.msra.mxu0 %v749
    %843 = vmatprep.subr.mxu0 %v762
    %844 = vmatpush1.msra.mxu0 %v761
    %845 = vmatprep.subr.mxu0 %v774
    %846 = vmatpush1.msra.mxu0 %v773
    %847 = vmatprep.subr.mxu0 %v786
    %848 = vmatpush1.msra.mxu0 %v785
    %849 = vmatprep.subr.mxu0 %v798
    %850 = vmatpush1.msra.mxu0 %v797
    %851 = vmatprep.subr.mxu0 %v810
    %852 = vmatpush1.msra.mxu0 %v809
    %853 = vmatprep.subr.mxu0 0.0
    %854 = vmatpush1.msra.mxu0 0.0
    %855 = vmatprep.subr.mxu0 0.0
    %856 = vmatpush1.msra.mxu0 0.0
    %857 = vmatprep.subr.mxu0 0.0
    %858 = vmatpush1.msra.mxu0 0.0
    %859 = vmatprep.subr.mxu0 0.0
    %860 = vmatpush1.msra.mxu0 0.0
    %861 = vmatprep.subr.mxu0 0.0
    %862 = vmatpush1.msra.mxu0 0.0
    %863 = vmatprep.subr.mxu0 0.0
    %864 = vmatpush1.msra.mxu0 0.0
    %865 = vmatprep.subr.mxu0 0.0
    %866 = vmatpush1.msra.mxu0 0.0
    %867 = vmatprep.subr.mxu0 0.0
    %868 = vmatpush1.msra.mxu0 0.0
    %869 = vmatprep.subr.mxu0 0.0
    %870 = vmatpush1.msra.mxu0 0.0
    %871 = vmatprep.subr.mxu0 0.0
    %872 = vmatpush1.msra.mxu0 0.0
    %873 = vmatprep.subr.mxu0 0.0
    %874 = vmatpush1.msra.mxu0 0.0
    %875 = vmatprep.subr.mxu0 0.0
    %876 = vmatpush1.msra.mxu0 0.0
    %877 = vmatprep.subr.mxu0 0.0
    %878 = vmatpush1.msra.mxu0 0.0
    %879 = vmatprep.subr.mxu0 0.0
    %880 = vmatpush1.msra.mxu0 0.0
    %881 = vmatprep.subr.mxu0 0.0
    %882 = vmatpush1.msra.mxu0 0.0
    %883 = vmatprep.subr.mxu0 0.0
    %884 = vmatpush1.msra.mxu0 0.0
    %885 = vmatprep.mubr.f32.mxu0 0.0
    %886 = vmatmul.mubr.f32.gmra.mrb[0].mxu0 %v621
    %v887 = vpop.f32.mrb[0].mxu0
    %v888 = vadd.f32 0.0, %v887
    %v889 = vpop.f32.mrb[0].mxu0
    %v890 = vadd.f32 0.0, %v889
    %891 = vmatprep.mubr.f32.mxu0 0.0
    %892 = vmatmul.mubr.f32.gmra.mrb[0].mxu0 %v622
    %v893 = vpop.f32.mrb[0].mxu0
    %v894 = vadd.f32 0.0, %v893
    %v895 = vpop.f32.mrb[0].mxu0
    %v896 = vadd.f32 0.0, %v895
    %897 = vmatprep.mubr.f32.mxu0 0.0
    %898 = vmatmul.mubr.f32.gmra.mrb[0].mxu0 %v623
    %v899 = vpop.f32.mrb[0].mxu0
    %v900 = vadd.f32 0.0, %v899
    %v901 = vpop.f32.mrb[0].mxu0
    %v902 = vadd.f32 0.0, %v901
    %903 = vmatprep.mubr.f32.mxu0 0.0
    %904 = vmatmul.mubr.f32.gmra.mrb[0].mxu0 %v624
    %v905 = vpop.f32.mrb[0].mxu0
    %v906 = vadd.f32 0.0, %v905
    %v907 = vpop.f32.mrb[0].mxu0
    %v908 = vadd.f32 0.0, %v907
    %909 = vmatprep.mubr.f32.mxu0 0.0
    %910 = vmatmul.mubr.f32.gmra.mrb[0].mxu0 %v625
    %v911 = vpop.f32.mrb[0].mxu0
    %v912 = vadd.f32 0.0, %v911
    %v913 = vpop.f32.mrb[0].mxu0
    %v914 = vadd.f32 0.0, %v913
    %915 = vmatprep.mubr.f32.mxu0 0.0
    %916 = vmatmul.mubr.f32.gmra.mrb[0].mxu0 %v626
    %v917 = vpop.f32.mrb[0].mxu0
    %v918 = vadd.f32 0.0, %v917
    %v919 = vpop.f32.mrb[0].mxu0
    %v920 = vadd.f32 0.0, %v919
    %921 = vmatprep.mubr.f32.mxu0 0.0
    %922 = vmatmul.mubr.f32.gmra.mrb[0].mxu0 %v627
    %v923 = vpop.f32.mrb[0].mxu0
    %v924 = vadd.f32 0.0, %v923
    %v925 = vpop.f32.mrb[0].mxu0
    %v926 = vadd.f32 0.0, %v925
    %927 = vmatprep.mubr.f32.mxu0 0.0
    %928 = vmatmul.mubr.f32.gmra.mrb[0].mxu0 %v628
    %v929 = vpop.f32.mrb[0].mxu0
    %v930 = vadd.f32 0.0, %v929
    %v931 = vpop.f32.mrb[0].mxu0
    %v932 = vadd.f32 0.0, %v931
    %933 = vdwg.mxu0
    %934 = vmatprep.subr.mxu0 %v632
    %935 = vmatpush1.msra.mxu0 %v631
    %936 = vmatprep.subr.mxu0 %v644
    %937 = vmatpush1.msra.mxu0 %v643
    %938 = vmatprep.subr.mxu0 %v656
    %939 = vmatpush1.msra.mxu0 %v655
    %940 = vmatprep.subr.mxu0 %v668
    %941 = vmatpush1.msra.mxu0 %v667
    %942 = vmatprep.subr.mxu0 %v680
    %943 = vmatpush1.msra.mxu0 %v679
    %944 = vmatprep.subr.mxu0 %v692
    %945 = vmatpush1.msra.mxu0 %v691
    %946 = vmatprep.subr.mxu0 %v704
    %947 = vmatpush1.msra.mxu0 %v703
    %948 = vmatprep.subr.mxu0 %v716
    %949 = vmatpush1.msra.mxu0 %v715
    %950 = vmatprep.subr.mxu0 %v728
    %951 = vmatpush1.msra.mxu0 %v727
    %952 = vmatprep.subr.mxu0 %v740
    %953 = vmatpush1.msra.mxu0 %v739
    %954 = vmatprep.subr.mxu0 %v752
    %955 = vmatpush1.msra.mxu0 %v751
    %956 = vmatprep.subr.mxu0 %v764
    %957 = vmatpush1.msra.mxu0 %v763
    %958 = vmatprep.subr.mxu0 %v776
    %959 = vmatpush1.msra.mxu0 %v775
    %960 = vmatprep.subr.mxu0 %v788
    %961 = vmatpush1.msra.mxu0 %v787
    %962 = vmatprep.subr.mxu0 %v800
    %963 = vmatpush1.msra.mxu0 %v799
    %964 = vmatprep.subr.mxu0 %v812
    %965 = vmatpush1.msra.mxu0 %v811
    %966 = vmatprep.subr.mxu0 0.0
    %967 = vmatpush1.msra.mxu0 0.0
    %968 = vmatprep.subr.mxu0 0.0
    %969 = vmatpush1.msra.mxu0 0.0
    %970 = vmatprep.subr.mxu0 0.0
    %971 = vmatpush1.msra.mxu0 0.0
    %972 = vmatprep.subr.mxu0 0.0
    %973 = vmatpush1.msra.mxu0 0.0
    %974 = vmatprep.subr.mxu0 0.0
    %975 = vmatpush1.msra.mxu0 0.0
    %976 = vmatprep.subr.mxu0 0.0
    %977 = vmatpush1.msra.mxu0 0.0
    %978 = vmatprep.subr.mxu0 0.0
    %979 = vmatpush1.msra.mxu0 0.0
    %980 = vmatprep.subr.mxu0 0.0
    %981 = vmatpush1.msra.mxu0 0.0
    %982 = vmatprep.subr.mxu0 0.0
    %983 = vmatpush1.msra.mxu0 0.0
    %984 = vmatprep.subr.mxu0 0.0
    %985 = vmatpush1.msra.mxu0 0.0
    %986 = vmatprep.subr.mxu0 0.0
    %987 = vmatpush1.msra.mxu0 0.0
    %988 = vmatprep.subr.mxu0 0.0
    %989 = vmatpush1.msra.mxu0 0.0
    %990 = vmatprep.subr.mxu0 0.0
    %991 = vmatpush1.msra.mxu0 0.0
    %992 = vmatprep.subr.mxu0 0.0
    %993 = vmatpush1.msra.mxu0 0.0
    %994 = vmatprep.subr.mxu0 0.0
    %995 = vmatpush1.msra.mxu0 0.0
    %996 = vmatprep.subr.mxu0 0.0
    %997 = vmatpush1.msra.mxu0 0.0
    %998 = vmatprep.mubr.f32.mxu0 0.0
    %999 = vmatmul.mubr.f32.gmra.mrb[0].mxu0 %v621
    %v1000 = vpop.f32.mrb[0].mxu0
    %v1001 = vadd.f32 0.0, %v1000
    %v1002 = vpop.f32.mrb[0].mxu0
    %v1003 = vadd.f32 0.0, %v1002
    %1004 = vmatprep.mubr.f32.mxu0 0.0
    %1005 = vmatmul.mubr.f32.gmra.mrb[0].mxu0 %v622
    %v1006 = vpop.f32.mrb[0].mxu0
    %v1007 = vadd.f32 0.0, %v1006
    %v1008 = vpop.f32.mrb[0].mxu0
    %v1009 = vadd.f32 0.0, %v1008
    %1010 = vmatprep.mubr.f32.mxu0 0.0
    %1011 = vmatmul.mubr.f32.gmra.mrb[0].mxu0 %v623
    %v1012 = vpop.f32.mrb[0].mxu0
    %v1013 = vadd.f32 0.0, %v1012
    %v1014 = vpop.f32.mrb[0].mxu0
    %v1015 = vadd.f32 0.0, %v1014
    %1016 = vmatprep.mubr.f32.mxu0 0.0
    %1017 = vmatmul.mubr.f32.gmra.mrb[0].mxu0 %v624
    %v1018 = vpop.f32.mrb[0].mxu0
    %v1019 = vadd.f32 0.0, %v1018
    %v1020 = vpop.f32.mrb[0].mxu0
    %v1021 = vadd.f32 0.0, %v1020
    %1022 = vmatprep.mubr.f32.mxu0 0.0
    %1023 = vmatmul.mubr.f32.gmra.mrb[0].mxu0 %v625
    %v1024 = vpop.f32.mrb[0].mxu0
    %v1025 = vadd.f32 0.0, %v1024
    %v1026 = vpop.f32.mrb[0].mxu0
    %v1027 = vadd.f32 0.0, %v1026
    %1028 = vmatprep.mubr.f32.mxu0 0.0
    %1029 = vmatmul.mubr.f32.gmra.mrb[0].mxu0 %v626
    %v1030 = vpop.f32.mrb[0].mxu0
    %v1031 = vadd.f32 0.0, %v1030
    %v1032 = vpop.f32.mrb[0].mxu0
    %v1033 = vadd.f32 0.0, %v1032
    %1034 = vmatprep.mubr.f32.mxu0 0.0
    %1035 = vmatmul.mubr.f32.gmra.mrb[0].mxu0 %v627
    %v1036 = vpop.f32.mrb[0].mxu0
    %v1037 = vadd.f32 0.0, %v1036
    %v1038 = vpop.f32.mrb[0].mxu0
    %v1039 = vadd.f32 0.0, %v1038
    %1040 = vmatprep.mubr.f32.mxu0 0.0
    %1041 = vmatmul.mubr.f32.gmra.mrb[0].mxu0 %v628
    %v1042 = vpop.f32.mrb[0].mxu0
    %v1043 = vadd.f32 0.0, %v1042
    %v1044 = vpop.f32.mrb[0].mxu0
    %v1045 = vadd.f32 0.0, %v1044
    %1046 = vdwg.mxu0
    %1047 = vmatprep.subr.mxu0 %v634
    %1048 = vmatpush1.msra.mxu0 %v633
    %1049 = vmatprep.subr.mxu0 %v646
    %1050 = vmatpush1.msra.mxu0 %v645
    %1051 = vmatprep.subr.mxu0 %v658
    %1052 = vmatpush1.msra.mxu0 %v657
    %1053 = vmatprep.subr.mxu0 %v670
    %1054 = vmatpush1.msra.mxu0 %v669
    %1055 = vmatprep.subr.mxu0 %v682
    %1056 = vmatpush1.msra.mxu0 %v681
    %1057 = vmatprep.subr.mxu0 %v694
    %1058 = vmatpush1.msra.mxu0 %v693
    %1059 = vmatprep.subr.mxu0 %v706
    %1060 = vmatpush1.msra.mxu0 %v705
    %1061 = vmatprep.subr.mxu0 %v718
    %1062 = vmatpush1.msra.mxu0 %v717
    %1063 = vmatprep.subr.mxu0 %v730
    %1064 = vmatpush1.msra.mxu0 %v729
    %1065 = vmatprep.subr.mxu0 %v742
    %1066 = vmatpush1.msra.mxu0 %v741
    %1067 = vmatprep.subr.mxu0 %v754
    %1068 = vmatpush1.msra.mxu0 %v753
    %1069 = vmatprep.subr.mxu0 %v766
    %1070 = vmatpush1.msra.mxu0 %v765
    %1071 = vmatprep.subr.mxu0 %v778
    %1072 = vmatpush1.msra.mxu0 %v777
    %1073 = vmatprep.subr.mxu0 %v790
    %1074 = vmatpush1.msra.mxu0 %v789
    %1075 = vmatprep.subr.mxu0 %v802
    %1076 = vmatpush1.msra.mxu0 %v801
    %1077 = vmatprep.subr.mxu0 %v814
    %1078 = vmatpush1.msra.mxu0 %v813
    %1079 = vmatprep.subr.mxu0 0.0
    %1080 = vmatpush1.msra.mxu0 0.0
    %1081 = vmatprep.subr.mxu0 0.0
    %1082 = vmatpush1.msra.mxu0 0.0
    %1083 = vmatprep.subr.mxu0 0.0
    %1084 = vmatpush1.msra.mxu0 0.0
    %1085 = vmatprep.subr.mxu0 0.0
    %1086 = vmatpush1.msra.mxu0 0.0
    %1087 = vmatprep.subr.mxu0 0.0
    %1088 = vmatpush1.msra.mxu0 0.0
    %1089 = vmatprep.subr.mxu0 0.0
    %1090 = vmatpush1.msra.mxu0 0.0
    %1091 = vmatprep.subr.mxu0 0.0
    %1092 = vmatpush1.msra.mxu0 0.0
    %1093 = vmatprep.subr.mxu0 0.0
    %1094 = vmatpush1.msra.mxu0 0.0
    %1095 = vmatprep.subr.mxu0 0.0
    %1096 = vmatpush1.msra.mxu0 0.0
    %1097 = vmatprep.subr.mxu0 0.0
    %1098 = vmatpush1.msra.mxu0 0.0
    %1099 = vmatprep.subr.mxu0 0.0
    %1100 = vmatpush1.msra.mxu0 0.0
    %1101 = vmatprep.subr.mxu0 0.0
    %1102 = vmatpush1.msra.mxu0 0.0
    %1103 = vmatprep.subr.mxu0 0.0
    %1104 = vmatpush1.msra.mxu0 0.0
    %1105 = vmatprep.subr.mxu0 0.0
    %1106 = vmatpush1.msra.mxu0 0.0
    %1107 = vmatprep.subr.mxu0 0.0
    %1108 = vmatpush1.msra.mxu0 0.0
    %1109 = vmatprep.subr.mxu0 0.0
    %1110 = vmatpush1.msra.mxu0 0.0
    %1111 = vmatprep.mubr.f32.mxu0 0.0
    %1112 = vmatmul.mubr.f32.gmra.mrb[0].mxu0 %v621
    %v1113 = vpop.f32.mrb[0].mxu0
    %v1114 = vadd.f32 0.0, %v1113
    %v1115 = vpop.f32.mrb[0].mxu0
    %v1116 = vadd.f32 0.0, %v1115
    %1117 = vmatprep.mubr.f32.mxu0 0.0
    %1118 = vmatmul.mubr.f32.gmra.mrb[0].mxu0 %v622
    %v1119 = vpop.f32.mrb[0].mxu0
    %v1120 = vadd.f32 0.0, %v1119
    %v1121 = vpop.f32.mrb[0].mxu0
    %v1122 = vadd.f32 0.0, %v1121
    %1123 = vmatprep.mubr.f32.mxu0 0.0
    %1124 = vmatmul.mubr.f32.gmra.mrb[0].mxu0 %v623
    %v1125 = vpop.f32.mrb[0].mxu0
    %v1126 = vadd.f32 0.0, %v1125
    %v1127 = vpop.f32.mrb[0].mxu0
    %v1128 = vadd.f32 0.0, %v1127
    %1129 = vmatprep.mubr.f32.mxu0 0.0
    %1130 = vmatmul.mubr.f32.gmra.mrb[0].mxu0 %v624
    %v1131 = vpop.f32.mrb[0].mxu0
    %v1132 = vadd.f32 0.0, %v1131
    %v1133 = vpop.f32.mrb[0].mxu0
    %v1134 = vadd.f32 0.0, %v1133
    %1135 = vmatprep.mubr.f32.mxu0 0.0
    %1136 = vmatmul.mubr.f32.gmra.mrb[0].mxu0 %v625
    %v1137 = vpop.f32.mrb[0].mxu0
    %v1138 = vadd.f32 0.0, %v1137
    %v1139 = vpop.f32.mrb[0].mxu0
    %v1140 = vadd.f32 0.0, %v1139
    %1141 = vmatprep.mubr.f32.mxu0 0.0
    %1142 = vmatmul.mubr.f32.gmra.mrb[0].mxu0 %v626
    %v1143 = vpop.f32.mrb[0].mxu0
    %v1144 = vadd.f32 0.0, %v1143
    %v1145 = vpop.f32.mrb[0].mxu0
    %v1146 = vadd.f32 0.0, %v1145
    %1147 = vmatprep.mubr.f32.mxu0 0.0
    %1148 = vmatmul.mubr.f32.gmra.mrb[0].mxu0 %v627
    %v1149 = vpop.f32.mrb[0].mxu0
    %v1150 = vadd.f32 0.0, %v1149
    %v1151 = vpop.f32.mrb[0].mxu0
    %v1152 = vadd.f32 0.0, %v1151
    %1153 = vmatprep.mubr.f32.mxu0 0.0
    %1154 = vmatmul.mubr.f32.gmra.mrb[0].mxu0 %v628
    %v1155 = vpop.f32.mrb[0].mxu0
    %v1156 = vadd.f32 0.0, %v1155
    %v1157 = vpop.f32.mrb[0].mxu0
    %v1158 = vadd.f32 0.0, %v1157
    %1159 = vdwg.mxu0
    %1160 = vmatprep.subr.mxu0 %v636
    %1161 = vmatpush1.msra.mxu0 %v635
    %1162 = vmatprep.subr.mxu0 %v648
    %1163 = vmatpush1.msra.mxu0 %v647
    %1164 = vmatprep.subr.mxu0 %v660
    %1165 = vmatpush1.msra.mxu0 %v659
    %1166 = vmatprep.subr.mxu0 %v672
    %1167 = vmatpush1.msra.mxu0 %v671
    %1168 = vmatprep.subr.mxu0 %v684
    %1169 = vmatpush1.msra.mxu0 %v683
    %1170 = vmatprep.subr.mxu0 %v696
    %1171 = vmatpush1.msra.mxu0 %v695
    %1172 = vmatprep.subr.mxu0 %v708
    %1173 = vmatpush1.msra.mxu0 %v707
    %1174 = vmatprep.subr.mxu0 %v720
    %1175 = vmatpush1.msra.mxu0 %v719
    %1176 = vmatprep.subr.mxu0 %v732
    %1177 = vmatpush1.msra.mxu0 %v731
    %1178 = vmatprep.subr.mxu0 %v744
    %1179 = vmatpush1.msra.mxu0 %v743
    %1180 = vmatprep.subr.mxu0 %v756
    %1181 = vmatpush1.msra.mxu0 %v755
    %1182 = vmatprep.subr.mxu0 %v768
    %1183 = vmatpush1.msra.mxu0 %v767
    %1184 = vmatprep.subr.mxu0 %v780
    %1185 = vmatpush1.msra.mxu0 %v779
    %1186 = vmatprep.subr.mxu0 %v792
    %1187 = vmatpush1.msra.mxu0 %v791
    %1188 = vmatprep.subr.mxu0 %v804
    %1189 = vmatpush1.msra.mxu0 %v803
    %1190 = vmatprep.subr.mxu0 %v816
    %1191 = vmatpush1.msra.mxu0 %v815
    %1192 = vmatprep.subr.mxu0 0.0
    %1193 = vmatpush1.msra.mxu0 0.0
    %1194 = vmatprep.subr.mxu0 0.0
    %1195 = vmatpush1.msra.mxu0 0.0
    %1196 = vmatprep.subr.mxu0 0.0
    %1197 = vmatpush1.msra.mxu0 0.0
    %1198 = vmatprep.subr.mxu0 0.0
    %1199 = vmatpush1.msra.mxu0 0.0
    %1200 = vmatprep.subr.mxu0 0.0
    %1201 = vmatpush1.msra.mxu0 0.0
    %1202 = vmatprep.subr.mxu0 0.0
    %1203 = vmatpush1.msra.mxu0 0.0
    %1204 = vmatprep.subr.mxu0 0.0
    %1205 = vmatpush1.msra.mxu0 0.0
    %1206 = vmatprep.subr.mxu0 0.0
    %1207 = vmatpush1.msra.mxu0 0.0
    %1208 = vmatprep.subr.mxu0 0.0
    %1209 = vmatpush1.msra.mxu0 0.0
    %1210 = vmatprep.subr.mxu0 0.0
    %1211 = vmatpush1.msra.mxu0 0.0
    %1212 = vmatprep.subr.mxu0 0.0
    %1213 = vmatpush1.msra.mxu0 0.0
    %1214 = vmatprep.subr.mxu0 0.0
    %1215 = vmatpush1.msra.mxu0 0.0
    %1216 = vmatprep.subr.mxu0 0.0
    %1217 = vmatpush1.msra.mxu0 0.0
    %1218 = vmatprep.subr.mxu0 0.0
    %1219 = vmatpush1.msra.mxu0 0.0
    %1220 = vmatprep.subr.mxu0 0.0
    %1221 = vmatpush1.msra.mxu0 0.0
    %1222 = vmatprep.subr.mxu0 0.0
    %1223 = vmatpush1.msra.mxu0 0.0
    %1224 = vmatprep.mubr.f32.mxu0 0.0
    %1225 = vmatmul.mubr.f32.gmra.mrb[0].mxu0 %v621
    %v1226 = vpop.f32.mrb[0].mxu0
    %v1227 = vadd.f32 0.0, %v1226
    %v1228 = vpop.f32.mrb[0].mxu0
    %v1229 = vadd.f32 0.0, %v1228
    %1230 = vmatprep.mubr.f32.mxu0 0.0
    %1231 = vmatmul.mubr.f32.gmra.mrb[0].mxu0 %v622
    %v1232 = vpop.f32.mrb[0].mxu0
    %v1233 = vadd.f32 0.0, %v1232
    %v1234 = vpop.f32.mrb[0].mxu0
    %v1235 = vadd.f32 0.0, %v1234
    %1236 = vmatprep.mubr.f32.mxu0 0.0
    %1237 = vmatmul.mubr.f32.gmra.mrb[0].mxu0 %v623
    %v1238 = vpop.f32.mrb[0].mxu0
    %v1239 = vadd.f32 0.0, %v1238
    %v1240 = vpop.f32.mrb[0].mxu0
    %v1241 = vadd.f32 0.0, %v1240
    %1242 = vmatprep.mubr.f32.mxu0 0.0
    %1243 = vmatmul.mubr.f32.gmra.mrb[0].mxu0 %v624
    %v1244 = vpop.f32.mrb[0].mxu0
    %v1245 = vadd.f32 0.0, %v1244
    %v1246 = vpop.f32.mrb[0].mxu0
    %v1247 = vadd.f32 0.0, %v1246
    %1248 = vmatprep.mubr.f32.mxu0 0.0
    %1249 = vmatmul.mubr.f32.gmra.mrb[0].mxu0 %v625
    %v1250 = vpop.f32.mrb[0].mxu0
    %v1251 = vadd.f32 0.0, %v1250
    %v1252 = vpop.f32.mrb[0].mxu0
    %v1253 = vadd.f32 0.0, %v1252
    %1254 = vmatprep.mubr.f32.mxu0 0.0
    %1255 = vmatmul.mubr.f32.gmra.mrb[0].mxu0 %v626
    %v1256 = vpop.f32.mrb[0].mxu0
    %v1257 = vadd.f32 0.0, %v1256
    %v1258 = vpop.f32.mrb[0].mxu0
    %v1259 = vadd.f32 0.0, %v1258
    %1260 = vmatprep.mubr.f32.mxu0 0.0
    %1261 = vmatmul.mubr.f32.gmra.mrb[0].mxu0 %v627
    %v1262 = vpop.f32.mrb[0].mxu0
    %v1263 = vadd.f32 0.0, %v1262
    %v1264 = vpop.f32.mrb[0].mxu0
    %v1265 = vadd.f32 0.0, %v1264
    %1266 = vmatprep.mubr.f32.mxu0 0.0
    %1267 = vmatmul.mubr.f32.gmra.mrb[0].mxu0 %v628
    %v1268 = vpop.f32.mrb[0].mxu0
    %v1269 = vadd.f32 0.0, %v1268
    %v1270 = vpop.f32.mrb[0].mxu0
    %v1271 = vadd.f32 0.0, %v1270
    %1272 = vdwg.mxu0
    %1273 = vmatprep.subr.mxu0 %v638
    %1274 = vmatpush1.msra.mxu0 %v637
    %1275 = vmatprep.subr.mxu0 %v650
    %1276 = vmatpush1.msra.mxu0 %v649
    %1277 = vmatprep.subr.mxu0 %v662
    %1278 = vmatpush1.msra.mxu0 %v661
    %1279 = vmatprep.subr.mxu0 %v674
    %1280 = vmatpush1.msra.mxu0 %v673
    %1281 = vmatprep.subr.mxu0 %v686
    %1282 = vmatpush1.msra.mxu0 %v685
    %1283 = vmatprep.subr.mxu0 %v698
    %1284 = vmatpush1.msra.mxu0 %v697
    %1285 = vmatprep.subr.mxu0 %v710
    %1286 = vmatpush1.msra.mxu0 %v709
    %1287 = vmatprep.subr.mxu0 %v722
    %1288 = vmatpush1.msra.mxu0 %v721
    %1289 = vmatprep.subr.mxu0 %v734
    %1290 = vmatpush1.msra.mxu0 %v733
    %1291 = vmatprep.subr.mxu0 %v746
    %1292 = vmatpush1.msra.mxu0 %v745
    %1293 = vmatprep.subr.mxu0 %v758
    %1294 = vmatpush1.msra.mxu0 %v757
    %1295 = vmatprep.subr.mxu0 %v770
    %1296 = vmatpush1.msra.mxu0 %v769
    %1297 = vmatprep.subr.mxu0 %v782
    %1298 = vmatpush1.msra.mxu0 %v781
    %1299 = vmatprep.subr.mxu0 %v794
    %1300 = vmatpush1.msra.mxu0 %v793
    %1301 = vmatprep.subr.mxu0 %v806
    %1302 = vmatpush1.msra.mxu0 %v805
    %1303 = vmatprep.subr.mxu0 %v818
    %1304 = vmatpush1.msra.mxu0 %v817
    %1305 = vmatprep.subr.mxu0 0.0
    %1306 = vmatpush1.msra.mxu0 0.0
    %1307 = vmatprep.subr.mxu0 0.0
    %1308 = vmatpush1.msra.mxu0 0.0
    %1309 = vmatprep.subr.mxu0 0.0
    %1310 = vmatpush1.msra.mxu0 0.0
    %1311 = vmatprep.subr.mxu0 0.0
    %1312 = vmatpush1.msra.mxu0 0.0
    %1313 = vmatprep.subr.mxu0 0.0
    %1314 = vmatpush1.msra.mxu0 0.0
    %1315 = vmatprep.subr.mxu0 0.0
    %1316 = vmatpush1.msra.mxu0 0.0
    %1317 = vmatprep.subr.mxu0 0.0
    %1318 = vmatpush1.msra.mxu0 0.0
    %1319 = vmatprep.subr.mxu0 0.0
    %1320 = vmatpush1.msra.mxu0 0.0
    %1321 = vmatprep.subr.mxu0 0.0
    %1322 = vmatpush1.msra.mxu0 0.0
    %1323 = vmatprep.subr.mxu0 0.0
    %1324 = vmatpush1.msra.mxu0 0.0
    %1325 = vmatprep.subr.mxu0 0.0
    %1326 = vmatpush1.msra.mxu0 0.0
    %1327 = vmatprep.subr.mxu0 0.0
    %1328 = vmatpush1.msra.mxu0 0.0
    %1329 = vmatprep.subr.mxu0 0.0
    %1330 = vmatpush1.msra.mxu0 0.0
    %1331 = vmatprep.subr.mxu0 0.0
    %1332 = vmatpush1.msra.mxu0 0.0
    %1333 = vmatprep.subr.mxu0 0.0
    %1334 = vmatpush1.msra.mxu0 0.0
    %1335 = vmatprep.subr.mxu0 0.0
    %1336 = vmatpush1.msra.mxu0 0.0
    %1337 = vmatprep.mubr.f32.mxu0 0.0
    %1338 = vmatmul.mubr.f32.gmra.mrb[0].mxu0 %v621
    %v1339 = vpop.f32.mrb[0].mxu0
    %v1340 = vadd.f32 0.0, %v1339
    %v1341 = vpop.f32.mrb[0].mxu0
    %v1342 = vadd.f32 0.0, %v1341
    %1343 = vmatprep.mubr.f32.mxu0 0.0
    %1344 = vmatmul.mubr.f32.gmra.mrb[0].mxu0 %v622
    %v1345 = vpop.f32.mrb[0].mxu0
    %v1346 = vadd.f32 0.0, %v1345
    %v1347 = vpop.f32.mrb[0].mxu0
    %v1348 = vadd.f32 0.0, %v1347
    %1349 = vmatprep.mubr.f32.mxu0 0.0
    %1350 = vmatmul.mubr.f32.gmra.mrb[0].mxu0 %v623
    %v1351 = vpop.f32.mrb[0].mxu0
    %v1352 = vadd.f32 0.0, %v1351
    %v1353 = vpop.f32.mrb[0].mxu0
    %v1354 = vadd.f32 0.0, %v1353
    %1355 = vmatprep.mubr.f32.mxu0 0.0
    %1356 = vmatmul.mubr.f32.gmra.mrb[0].mxu0 %v624
    %v1357 = vpop.f32.mrb[0].mxu0
    %v1358 = vadd.f32 0.0, %v1357
    %v1359 = vpop.f32.mrb[0].mxu0
    %v1360 = vadd.f32 0.0, %v1359
    %1361 = vmatprep.mubr.f32.mxu0 0.0
    %1362 = vmatmul.mubr.f32.gmra.mrb[0].mxu0 %v625
    %v1363 = vpop.f32.mrb[0].mxu0
    %v1364 = vadd.f32 0.0, %v1363
    %v1365 = vpop.f32.mrb[0].mxu0
    %v1366 = vadd.f32 0.0, %v1365
    %1367 = vmatprep.mubr.f32.mxu0 0.0
    %1368 = vmatmul.mubr.f32.gmra.mrb[0].mxu0 %v626
    %v1369 = vpop.f32.mrb[0].mxu0
    %v1370 = vadd.f32 0.0, %v1369
    %v1371 = vpop.f32.mrb[0].mxu0
    %v1372 = vadd.f32 0.0, %v1371
    %1373 = vmatprep.mubr.f32.mxu0 0.0
    %1374 = vmatmul.mubr.f32.gmra.mrb[0].mxu0 %v627
    %v1375 = vpop.f32.mrb[0].mxu0
    %v1376 = vadd.f32 0.0, %v1375
    %v1377 = vpop.f32.mrb[0].mxu0
    %v1378 = vadd.f32 0.0, %v1377
    %1379 = vmatprep.mubr.f32.mxu0 0.0
    %1380 = vmatmul.mubr.f32.gmra.mrb[0].mxu0 %v628
    %v1381 = vpop.f32.mrb[0].mxu0
    %v1382 = vadd.f32 0.0, %v1381
    %v1383 = vpop.f32.mrb[0].mxu0
    %v1384 = vadd.f32 0.0, %v1383
    %1385 = vdwg.mxu0
    %1386 = vmatprep.subr.mxu0 %v640
    %1387 = vmatpush1.msra.mxu0 %v639
    %1388 = vmatprep.subr.mxu0 %v652
    %1389 = vmatpush1.msra.mxu0 %v651
    %1390 = vmatprep.subr.mxu0 %v664
    %1391 = vmatpush1.msra.mxu0 %v663
    %1392 = vmatprep.subr.mxu0 %v676
    %1393 = vmatpush1.msra.mxu0 %v675
    %1394 = vmatprep.subr.mxu0 %v688
    %1395 = vmatpush1.msra.mxu0 %v687
    %1396 = vmatprep.subr.mxu0 %v700
    %1397 = vmatpush1.msra.mxu0 %v699
    %1398 = vmatprep.subr.mxu0 %v712
    %1399 = vmatpush1.msra.mxu0 %v711
    %1400 = vmatprep.subr.mxu0 %v724
    %1401 = vmatpush1.msra.mxu0 %v723
    %1402 = vmatprep.subr.mxu0 %v736
    %1403 = vmatpush1.msra.mxu0 %v735
    %1404 = vmatprep.subr.mxu0 %v748
    %1405 = vmatpush1.msra.mxu0 %v747
    %1406 = vmatprep.subr.mxu0 %v760
    %1407 = vmatpush1.msra.mxu0 %v759
    %1408 = vmatprep.subr.mxu0 %v772
    %1409 = vmatpush1.msra.mxu0 %v771
    %1410 = vmatprep.subr.mxu0 %v784
    %1411 = vmatpush1.msra.mxu0 %v783
    %1412 = vmatprep.subr.mxu0 %v796
    %1413 = vmatpush1.msra.mxu0 %v795
    %1414 = vmatprep.subr.mxu0 %v808
    %1415 = vmatpush1.msra.mxu0 %v807
    %1416 = vmatprep.subr.mxu0 %v820
    %1417 = vmatpush1.msra.mxu0 %v819
    %1418 = vmatprep.subr.mxu0 0.0
    %1419 = vmatpush1.msra.mxu0 0.0
    %1420 = vmatprep.subr.mxu0 0.0
    %1421 = vmatpush1.msra.mxu0 0.0
    %1422 = vmatprep.subr.mxu0 0.0
    %1423 = vmatpush1.msra.mxu0 0.0
    %1424 = vmatprep.subr.mxu0 0.0
    %1425 = vmatpush1.msra.mxu0 0.0
    %1426 = vmatprep.subr.mxu0 0.0
    %1427 = vmatpush1.msra.mxu0 0.0
    %1428 = vmatprep.subr.mxu0 0.0
    %1429 = vmatpush1.msra.mxu0 0.0
    %1430 = vmatprep.subr.mxu0 0.0
    %1431 = vmatpush1.msra.mxu0 0.0
    %1432 = vmatprep.subr.mxu0 0.0
    %1433 = vmatpush1.msra.mxu0 0.0
    %1434 = vmatprep.subr.mxu0 0.0
    %1435 = vmatpush1.msra.mxu0 0.0
    %1436 = vmatprep.subr.mxu0 0.0
    %1437 = vmatpush1.msra.mxu0 0.0
    %1438 = vmatprep.subr.mxu0 0.0
    %1439 = vmatpush1.msra.mxu0 0.0
    %1440 = vmatprep.subr.mxu0 0.0
    %1441 = vmatpush1.msra.mxu0 0.0
    %1442 = vmatprep.subr.mxu0 0.0
    %1443 = vmatpush1.msra.mxu0 0.0
    %1444 = vmatprep.subr.mxu0 0.0
    %1445 = vmatpush1.msra.mxu0 0.0
    %1446 = vmatprep.subr.mxu0 0.0
    %1447 = vmatpush1.msra.mxu0 0.0
    %1448 = vmatprep.subr.mxu0 0.0
    %1449 = vmatpush1.msra.mxu0 0.0
    %1450 = vmatprep.mubr.f32.mxu0 0.0
    %1451 = vmatmul.mubr.f32.gmra.mrb[0].mxu0 %v621
    %v1452 = vpop.f32.mrb[0].mxu0
    %v1453 = vadd.f32 0.0, %v1452
    %v1454 = vpop.f32.mrb[0].mxu0
    %v1455 = vadd.f32 0.0, %v1454
    %1456 = vmatprep.mubr.f32.mxu0 0.0
    %1457 = vmatmul.mubr.f32.gmra.mrb[0].mxu0 %v622
    %v1458 = vpop.f32.mrb[0].mxu0
    %v1459 = vadd.f32 0.0, %v1458
    %v1460 = vpop.f32.mrb[0].mxu0
    %v1461 = vadd.f32 0.0, %v1460
    %1462 = vmatprep.mubr.f32.mxu0 0.0
    %1463 = vmatmul.mubr.f32.gmra.mrb[0].mxu0 %v623
    %v1464 = vpop.f32.mrb[0].mxu0
    %v1465 = vadd.f32 0.0, %v1464
    %v1466 = vpop.f32.mrb[0].mxu0
    %v1467 = vadd.f32 0.0, %v1466
    %1468 = vmatprep.mubr.f32.mxu0 0.0
    %1469 = vmatmul.mubr.f32.gmra.mrb[0].mxu0 %v624
    %v1470 = vpop.f32.mrb[0].mxu0
    %v1471 = vadd.f32 0.0, %v1470
    %v1472 = vpop.f32.mrb[0].mxu0
    %v1473 = vadd.f32 0.0, %v1472
    %1474 = vmatprep.mubr.f32.mxu0 0.0
    %1475 = vmatmul.mubr.f32.gmra.mrb[0].mxu0 %v625
    %v1476 = vpop.f32.mrb[0].mxu0
    %v1477 = vadd.f32 0.0, %v1476
    %v1478 = vpop.f32.mrb[0].mxu0
    %v1479 = vadd.f32 0.0, %v1478
    %1480 = vmatprep.mubr.f32.mxu0 0.0
    %1481 = vmatmul.mubr.f32.gmra.mrb[0].mxu0 %v626
    %v1482 = vpop.f32.mrb[0].mxu0
    %v1483 = vadd.f32 0.0, %v1482
    %v1484 = vpop.f32.mrb[0].mxu0
    %v1485 = vadd.f32 0.0, %v1484
    %1486 = vmatprep.mubr.f32.mxu0 0.0
    %1487 = vmatmul.mubr.f32.gmra.mrb[0].mxu0 %v627
    %v1488 = vpop.f32.mrb[0].mxu0
    %v1489 = vadd.f32 0.0, %v1488
    %v1490 = vpop.f32.mrb[0].mxu0
    %v1491 = vadd.f32 0.0, %v1490
    %1492 = vmatprep.mubr.f32.mxu0 0.0
    %1493 = vmatmul.mubr.f32.gmra.mrb[0].mxu0 %v628
    %v1494 = vpop.f32.mrb[0].mxu0
    %v1495 = vadd.f32 0.0, %v1494
    %v1496 = vpop.f32.mrb[0].mxu0
    %v1497 = vadd.f32 0.0, %v1496
    %1498 = vdwg.mxu0
    %v1499 = vlaneseq
    %v1500 = vshrl.u32 %v1499, 7
    %v1501 = vsub.s32 3, %v1500
    %v1502 = vrot.slane %v118, %v1501
    %v1503 = vadd.f32 %v101, %v1502
    %v1504 = vadd.f32 %v102, %v1502
    %v1505 = vadd.f32 %v103, %v1502
    %v1506 = vadd.f32 %v104, %v1502
    %v1507 = vadd.f32 %v105, %v1502
    %v1508 = vadd.f32 %v106, %v1502
    %v1509 = vadd.f32 %v107, %v1502
    %v1510 = vadd.f32 %v108, %v1502
    %1511 = vmatprep.subr.mxu0 0.0
    %1512 = vmatpush1.xpose.msra.mxu0 %v1114
    %1513 = vmatprep.subr.mxu0 0.0
    %1514 = vmatpush1.xpose.msra.mxu0 0.0
    %1515 = vmatprep.subr.mxu0 0.0
    %1516 = vmatpush1.xpose.msra.mxu0 0.0
    %1517 = vmatprep.subr.mxu0 0.0
    %1518 = vmatpush1.xpose.msra.mxu0 0.0
    %1519 = vmatprep.subr.mxu0 0.0
    %1520 = vmatpush1.xpose.msra.mxu0 0.0
    %1521 = vmatprep.subr.mxu0 0.0
    %1522 = vmatpush1.xpose.msra.mxu0 0.0
    %1523 = vmatprep.subr.mxu0 0.0
    %1524 = vmatpush1.xpose.msra.mxu0 0.0
    %1525 = vmatprep.subr.mxu0 0.0
    %1526 = vmatpush1.xpose.msra.mxu0 0.0
    %1527 = vmatprep.subr.mxu0 0.0
    %1528 = vmatpush1.xpose.msra.mxu0 0.0
    %1529 = vmatprep.subr.mxu0 0.0
    %1530 = vmatpush1.xpose.msra.mxu0 0.0
    %1531 = vmatprep.subr.mxu0 0.0
    %1532 = vmatpush1.xpose.msra.mxu0 0.0
    %1533 = vmatprep.subr.mxu0 0.0
    %1534 = vmatpush1.xpose.msra.mxu0 0.0
    %1535 = vmatprep.subr.mxu0 0.0
    %1536 = vmatpush1.xpose.msra.mxu0 0.0
    %1537 = vmatprep.subr.mxu0 0.0
    %1538 = vmatpush1.xpose.msra.mxu0 0.0
    %1539 = vmatprep.subr.mxu0 0.0
    %1540 = vmatpush1.xpose.msra.mxu0 0.0
    %1541 = vmatprep.subr.mxu0 0.0
    %1542 = vmatpush1.xpose.msra.mxu0 0.0
    %1543 = vmatprep.subr.mxu0 0.0
    %1544 = vmatpush1.xpose.msra.mxu0 0.0
    %1545 = vmatprep.subr.mxu0 0.0
    %1546 = vmatpush1.xpose.msra.mxu0 0.0
    %1547 = vmatprep.subr.mxu0 0.0
    %1548 = vmatpush1.xpose.msra.mxu0 0.0
    %1549 = vmatprep.subr.mxu0 0.0
    %1550 = vmatpush1.xpose.msra.mxu0 0.0
    %1551 = vmatprep.subr.mxu0 0.0
    %1552 = vmatpush1.xpose.msra.mxu0 0.0
    %1553 = vmatprep.subr.mxu0 0.0
    %1554 = vmatpush1.xpose.msra.mxu0 0.0
    %1555 = vmatprep.subr.mxu0 0.0
    %1556 = vmatpush1.xpose.msra.mxu0 0.0
    %1557 = vmatprep.subr.mxu0 0.0
    %1558 = vmatpush1.xpose.msra.mxu0 0.0
    %1559 = vmatprep.subr.mxu0 0.0
    %1560 = vmatpush1.xpose.msra.mxu0 0.0
    %1561 = vmatprep.subr.mxu0 0.0
    %1562 = vmatpush1.xpose.msra.mxu0 0.0
    %1563 = vmatprep.subr.mxu0 0.0
    %1564 = vmatpush1.xpose.msra.mxu0 0.0
    %1565 = vmatprep.subr.mxu0 0.0
    %1566 = vmatpush1.xpose.msra.mxu0 0.0
    %1567 = vmatprep.subr.mxu0 0.0
    %1568 = vmatpush1.xpose.msra.mxu0 0.0
    %1569 = vmatprep.subr.mxu0 0.0
    %1570 = vmatpush1.xpose.msra.mxu0 0.0
    %1571 = vmatprep.subr.mxu0 0.0
    %1572 = vmatpush1.xpose.msra.mxu0 0.0
    %1573 = vmatprep.subr.mxu0 0.0
    %1574 = vmatpush1.xpose.msra.mxu0 0.0
    %1575 = vmatprep.mubr.f32.mxu0 0.0
    %1576 = vmatmul.mubr.f32.gmra.mrb[0].mxu0 %v888
    %v1577 = vpop.f32.mrb[0].mxu0
    %v1578 = vadd.f32 0.0, %v1577
    %v1579 = vpop.f32.mrb[0].mxu0
    %1580 = vdwg.mxu0
    %1581 = vmatprep.subr.mxu0 0.0
    %1582 = vmatpush1.xpose.msra.mxu0 %v1120
    %1583 = vmatprep.subr.mxu0 0.0
    %1584 = vmatpush1.xpose.msra.mxu0 0.0
    %1585 = vmatprep.subr.mxu0 0.0
    %1586 = vmatpush1.xpose.msra.mxu0 0.0
    %1587 = vmatprep.subr.mxu0 0.0
    %1588 = vmatpush1.xpose.msra.mxu0 0.0
    %1589 = vmatprep.subr.mxu0 0.0
    %1590 = vmatpush1.xpose.msra.mxu0 0.0
    %1591 = vmatprep.subr.mxu0 0.0
    %1592 = vmatpush1.xpose.msra.mxu0 0.0
    %1593 = vmatprep.subr.mxu0 0.0
    %1594 = vmatpush1.xpose.msra.mxu0 0.0
    %1595 = vmatprep.subr.mxu0 0.0
    %1596 = vmatpush1.xpose.msra.mxu0 0.0
    %1597 = vmatprep.subr.mxu0 0.0
    %1598 = vmatpush1.xpose.msra.mxu0 0.0
    %1599 = vmatprep.subr.mxu0 0.0
    %1600 = vmatpush1.xpose.msra.mxu0 0.0
    %1601 = vmatprep.subr.mxu0 0.0
    %1602 = vmatpush1.xpose.msra.mxu0 0.0
    %1603 = vmatprep.subr.mxu0 0.0
    %1604 = vmatpush1.xpose.msra.mxu0 0.0
    %1605 = vmatprep.subr.mxu0 0.0
    %1606 = vmatpush1.xpose.msra.mxu0 0.0
    %1607 = vmatprep.subr.mxu0 0.0
    %1608 = vmatpush1.xpose.msra.mxu0 0.0
    %1609 = vmatprep.subr.mxu0 0.0
    %1610 = vmatpush1.xpose.msra.mxu0 0.0
    %1611 = vmatprep.subr.mxu0 0.0
    %1612 = vmatpush1.xpose.msra.mxu0 0.0
    %1613 = vmatprep.subr.mxu0 0.0
    %1614 = vmatpush1.xpose.msra.mxu0 0.0
    %1615 = vmatprep.subr.mxu0 0.0
    %1616 = vmatpush1.xpose.msra.mxu0 0.0
    %1617 = vmatprep.subr.mxu0 0.0
    %1618 = vmatpush1.xpose.msra.mxu0 0.0
    %1619 = vmatprep.subr.mxu0 0.0
    %1620 = vmatpush1.xpose.msra.mxu0 0.0
    %1621 = vmatprep.subr.mxu0 0.0
    %1622 = vmatpush1.xpose.msra.mxu0 0.0
    %1623 = vmatprep.subr.mxu0 0.0
    %1624 = vmatpush1.xpose.msra.mxu0 0.0
    %1625 = vmatprep.subr.mxu0 0.0
    %1626 = vmatpush1.xpose.msra.mxu0 0.0
    %1627 = vmatprep.subr.mxu0 0.0
    %1628 = vmatpush1.xpose.msra.mxu0 0.0
    %1629 = vmatprep.subr.mxu0 0.0
    %1630 = vmatpush1.xpose.msra.mxu0 0.0
    %1631 = vmatprep.subr.mxu0 0.0
    %1632 = vmatpush1.xpose.msra.mxu0 0.0
    %1633 = vmatprep.subr.mxu0 0.0
    %1634 = vmatpush1.xpose.msra.mxu0 0.0
    %1635 = vmatprep.subr.mxu0 0.0
    %1636 = vmatpush1.xpose.msra.mxu0 0.0
    %1637 = vmatprep.subr.mxu0 0.0
    %1638 = vmatpush1.xpose.msra.mxu0 0.0
    %1639 = vmatprep.subr.mxu0 0.0
    %1640 = vmatpush1.xpose.msra.mxu0 0.0
    %1641 = vmatprep.subr.mxu0 0.0
    %1642 = vmatpush1.xpose.msra.mxu0 0.0
    %1643 = vmatprep.subr.mxu0 0.0
    %1644 = vmatpush1.xpose.msra.mxu0 0.0
    %1645 = vmatprep.mubr.f32.mxu0 0.0
    %1646 = vmatmul.mubr.f32.gmra.mrb[0].mxu0 %v894
    %v1647 = vpop.f32.mrb[0].mxu0
    %v1648 = vadd.f32 0.0, %v1647
    %v1649 = vpop.f32.mrb[0].mxu0
    %1650 = vdwg.mxu0
    %1651 = vmatprep.subr.mxu0 0.0
    %1652 = vmatpush1.xpose.msra.mxu0 %v1126
    %1653 = vmatprep.subr.mxu0 0.0
    %1654 = vmatpush1.xpose.msra.mxu0 0.0
    %1655 = vmatprep.subr.mxu0 0.0
    %1656 = vmatpush1.xpose.msra.mxu0 0.0
    %1657 = vmatprep.subr.mxu0 0.0
    %1658 = vmatpush1.xpose.msra.mxu0 0.0
    %1659 = vmatprep.subr.mxu0 0.0
    %1660 = vmatpush1.xpose.msra.mxu0 0.0
    %1661 = vmatprep.subr.mxu0 0.0
    %1662 = vmatpush1.xpose.msra.mxu0 0.0
    %1663 = vmatprep.subr.mxu0 0.0
    %1664 = vmatpush1.xpose.msra.mxu0 0.0
    %1665 = vmatprep.subr.mxu0 0.0
    %1666 = vmatpush1.xpose.msra.mxu0 0.0
    %1667 = vmatprep.subr.mxu0 0.0
    %1668 = vmatpush1.xpose.msra.mxu0 0.0
    %1669 = vmatprep.subr.mxu0 0.0
    %1670 = vmatpush1.xpose.msra.mxu0 0.0
    %1671 = vmatprep.subr.mxu0 0.0
    %1672 = vmatpush1.xpose.msra.mxu0 0.0
    %1673 = vmatprep.subr.mxu0 0.0
    %1674 = vmatpush1.xpose.msra.mxu0 0.0
    %1675 = vmatprep.subr.mxu0 0.0
    %1676 = vmatpush1.xpose.msra.mxu0 0.0
    %1677 = vmatprep.subr.mxu0 0.0
    %1678 = vmatpush1.xpose.msra.mxu0 0.0
    %1679 = vmatprep.subr.mxu0 0.0
    %1680 = vmatpush1.xpose.msra.mxu0 0.0
    %1681 = vmatprep.subr.mxu0 0.0
    %1682 = vmatpush1.xpose.msra.mxu0 0.0
    %1683 = vmatprep.subr.mxu0 0.0
    %1684 = vmatpush1.xpose.msra.mxu0 0.0
    %1685 = vmatprep.subr.mxu0 0.0
    %1686 = vmatpush1.xpose.msra.mxu0 0.0
    %1687 = vmatprep.subr.mxu0 0.0
    %1688 = vmatpush1.xpose.msra.mxu0 0.0
    %1689 = vmatprep.subr.mxu0 0.0
    %1690 = vmatpush1.xpose.msra.mxu0 0.0
    %1691 = vmatprep.subr.mxu0 0.0
    %1692 = vmatpush1.xpose.msra.mxu0 0.0
    %1693 = vmatprep.subr.mxu0 0.0
    %1694 = vmatpush1.xpose.msra.mxu0 0.0
    %1695 = vmatprep.subr.mxu0 0.0
    %1696 = vmatpush1.xpose.msra.mxu0 0.0
    %1697 = vmatprep.subr.mxu0 0.0
    %1698 = vmatpush1.xpose.msra.mxu0 0.0
    %1699 = vmatprep.subr.mxu0 0.0
    %1700 = vmatpush1.xpose.msra.mxu0 0.0
    %1701 = vmatprep.subr.mxu0 0.0
    %1702 = vmatpush1.xpose.msra.mxu0 0.0
    %1703 = vmatprep.subr.mxu0 0.0
    %1704 = vmatpush1.xpose.msra.mxu0 0.0
    %1705 = vmatprep.subr.mxu0 0.0
    %1706 = vmatpush1.xpose.msra.mxu0 0.0
    %1707 = vmatprep.subr.mxu0 0.0
    %1708 = vmatpush1.xpose.msra.mxu0 0.0
    %1709 = vmatprep.subr.mxu0 0.0
    %1710 = vmatpush1.xpose.msra.mxu0 0.0
    %1711 = vmatprep.subr.mxu0 0.0
    %1712 = vmatpush1.xpose.msra.mxu0 0.0
    %1713 = vmatprep.subr.mxu0 0.0
    %1714 = vmatpush1.xpose.msra.mxu0 0.0
    %1715 = vmatprep.mubr.f32.mxu0 0.0
    %1716 = vmatmul.mubr.f32.gmra.mrb[0].mxu0 %v900
    %v1717 = vpop.f32.mrb[0].mxu0
    %v1718 = vadd.f32 0.0, %v1717
    %v1719 = vpop.f32.mrb[0].mxu0
    %1720 = vdwg.mxu0
    %1721 = vmatprep.subr.mxu0 0.0
    %1722 = vmatpush1.xpose.msra.mxu0 %v1132
    %1723 = vmatprep.subr.mxu0 0.0
    %1724 = vmatpush1.xpose.msra.mxu0 0.0
    %1725 = vmatprep.subr.mxu0 0.0
    %1726 = vmatpush1.xpose.msra.mxu0 0.0
    %1727 = vmatprep.subr.mxu0 0.0
    %1728 = vmatpush1.xpose.msra.mxu0 0.0
    %1729 = vmatprep.subr.mxu0 0.0
    %1730 = vmatpush1.xpose.msra.mxu0 0.0
    %1731 = vmatprep.subr.mxu0 0.0
    %1732 = vmatpush1.xpose.msra.mxu0 0.0
    %1733 = vmatprep.subr.mxu0 0.0
    %1734 = vmatpush1.xpose.msra.mxu0 0.0
    %1735 = vmatprep.subr.mxu0 0.0
    %1736 = vmatpush1.xpose.msra.mxu0 0.0
    %1737 = vmatprep.subr.mxu0 0.0
    %1738 = vmatpush1.xpose.msra.mxu0 0.0
    %1739 = vmatprep.subr.mxu0 0.0
    %1740 = vmatpush1.xpose.msra.mxu0 0.0
    %1741 = vmatprep.subr.mxu0 0.0
    %1742 = vmatpush1.xpose.msra.mxu0 0.0
    %1743 = vmatprep.subr.mxu0 0.0
    %1744 = vmatpush1.xpose.msra.mxu0 0.0
    %1745 = vmatprep.subr.mxu0 0.0
    %1746 = vmatpush1.xpose.msra.mxu0 0.0
    %1747 = vmatprep.subr.mxu0 0.0
    %1748 = vmatpush1.xpose.msra.mxu0 0.0
    %1749 = vmatprep.subr.mxu0 0.0
    %1750 = vmatpush1.xpose.msra.mxu0 0.0
    %1751 = vmatprep.subr.mxu0 0.0
    %1752 = vmatpush1.xpose.msra.mxu0 0.0
    %1753 = vmatprep.subr.mxu0 0.0
    %1754 = vmatpush1.xpose.msra.mxu0 0.0
    %1755 = vmatprep.subr.mxu0 0.0
    %1756 = vmatpush1.xpose.msra.mxu0 0.0
    %1757 = vmatprep.subr.mxu0 0.0
    %1758 = vmatpush1.xpose.msra.mxu0 0.0
    %1759 = vmatprep.subr.mxu0 0.0
    %1760 = vmatpush1.xpose.msra.mxu0 0.0
    %1761 = vmatprep.subr.mxu0 0.0
    %1762 = vmatpush1.xpose.msra.mxu0 0.0
    %1763 = vmatprep.subr.mxu0 0.0
    %1764 = vmatpush1.xpose.msra.mxu0 0.0
    %1765 = vmatprep.subr.mxu0 0.0
    %1766 = vmatpush1.xpose.msra.mxu0 0.0
    %1767 = vmatprep.subr.mxu0 0.0
    %1768 = vmatpush1.xpose.msra.mxu0 0.0
    %1769 = vmatprep.subr.mxu0 0.0
    %1770 = vmatpush1.xpose.msra.mxu0 0.0
    %1771 = vmatprep.subr.mxu0 0.0
    %1772 = vmatpush1.xpose.msra.mxu0 0.0
    %1773 = vmatprep.subr.mxu0 0.0
    %1774 = vmatpush1.xpose.msra.mxu0 0.0
    %1775 = vmatprep.subr.mxu0 0.0
    %1776 = vmatpush1.xpose.msra.mxu0 0.0
    %1777 = vmatprep.subr.mxu0 0.0
    %1778 = vmatpush1.xpose.msra.mxu0 0.0
    %1779 = vmatprep.subr.mxu0 0.0
    %1780 = vmatpush1.xpose.msra.mxu0 0.0
    %1781 = vmatprep.subr.mxu0 0.0
    %1782 = vmatpush1.xpose.msra.mxu0 0.0
    %1783 = vmatprep.subr.mxu0 0.0
    %1784 = vmatpush1.xpose.msra.mxu0 0.0
    %1785 = vmatprep.mubr.f32.mxu0 0.0
    %1786 = vmatmul.mubr.f32.gmra.mrb[0].mxu0 %v906
    %v1787 = vpop.f32.mrb[0].mxu0
    %v1788 = vadd.f32 0.0, %v1787
    %v1789 = vpop.f32.mrb[0].mxu0
    %1790 = vdwg.mxu0
    %1791 = vmatprep.subr.mxu0 0.0
    %1792 = vmatpush1.xpose.msra.mxu0 %v1138
    %1793 = vmatprep.subr.mxu0 0.0
    %1794 = vmatpush1.xpose.msra.mxu0 0.0
    %1795 = vmatprep.subr.mxu0 0.0
    %1796 = vmatpush1.xpose.msra.mxu0 0.0
    %1797 = vmatprep.subr.mxu0 0.0
    %1798 = vmatpush1.xpose.msra.mxu0 0.0
    %1799 = vmatprep.subr.mxu0 0.0
    %1800 = vmatpush1.xpose.msra.mxu0 0.0
    %1801 = vmatprep.subr.mxu0 0.0
    %1802 = vmatpush1.xpose.msra.mxu0 0.0
    %1803 = vmatprep.subr.mxu0 0.0
    %1804 = vmatpush1.xpose.msra.mxu0 0.0
    %1805 = vmatprep.subr.mxu0 0.0
    %1806 = vmatpush1.xpose.msra.mxu0 0.0
    %1807 = vmatprep.subr.mxu0 0.0
    %1808 = vmatpush1.xpose.msra.mxu0 0.0
    %1809 = vmatprep.subr.mxu0 0.0
    %1810 = vmatpush1.xpose.msra.mxu0 0.0
    %1811 = vmatprep.subr.mxu0 0.0
    %1812 = vmatpush1.xpose.msra.mxu0 0.0
    %1813 = vmatprep.subr.mxu0 0.0
    %1814 = vmatpush1.xpose.msra.mxu0 0.0
    %1815 = vmatprep.subr.mxu0 0.0
    %1816 = vmatpush1.xpose.msra.mxu0 0.0
    %1817 = vmatprep.subr.mxu0 0.0
    %1818 = vmatpush1.xpose.msra.mxu0 0.0
    %1819 = vmatprep.subr.mxu0 0.0
    %1820 = vmatpush1.xpose.msra.mxu0 0.0
    %1821 = vmatprep.subr.mxu0 0.0
    %1822 = vmatpush1.xpose.msra.mxu0 0.0
    %1823 = vmatprep.subr.mxu0 0.0
    %1824 = vmatpush1.xpose.msra.mxu0 0.0
    %1825 = vmatprep.subr.mxu0 0.0
    %1826 = vmatpush1.xpose.msra.mxu0 0.0
    %1827 = vmatprep.subr.mxu0 0.0
    %1828 = vmatpush1.xpose.msra.mxu0 0.0
    %1829 = vmatprep.subr.mxu0 0.0
    %1830 = vmatpush1.xpose.msra.mxu0 0.0
    %1831 = vmatprep.subr.mxu0 0.0
    %1832 = vmatpush1.xpose.msra.mxu0 0.0
    %1833 = vmatprep.subr.mxu0 0.0
    %1834 = vmatpush1.xpose.msra.mxu0 0.0
    %1835 = vmatprep.subr.mxu0 0.0
    %1836 = vmatpush1.xpose.msra.mxu0 0.0
    %1837 = vmatprep.subr.mxu0 0.0
    %1838 = vmatpush1.xpose.msra.mxu0 0.0
    %1839 = vmatprep.subr.mxu0 0.0
    %1840 = vmatpush1.xpose.msra.mxu0 0.0
    %1841 = vmatprep.subr.mxu0 0.0
    %1842 = vmatpush1.xpose.msra.mxu0 0.0
    %1843 = vmatprep.subr.mxu0 0.0
    %1844 = vmatpush1.xpose.msra.mxu0 0.0
    %1845 = vmatprep.subr.mxu0 0.0
    %1846 = vmatpush1.xpose.msra.mxu0 0.0
    %1847 = vmatprep.subr.mxu0 0.0
    %1848 = vmatpush1.xpose.msra.mxu0 0.0
    %1849 = vmatprep.subr.mxu0 0.0
    %1850 = vmatpush1.xpose.msra.mxu0 0.0
    %1851 = vmatprep.subr.mxu0 0.0
    %1852 = vmatpush1.xpose.msra.mxu0 0.0
    %1853 = vmatprep.subr.mxu0 0.0
    %1854 = vmatpush1.xpose.msra.mxu0 0.0
    %1855 = vmatprep.mubr.f32.mxu0 0.0
    %1856 = vmatmul.mubr.f32.gmra.mrb[0].mxu0 %v912
    %v1857 = vpop.f32.mrb[0].mxu0
    %v1858 = vadd.f32 0.0, %v1857
    %v1859 = vpop.f32.mrb[0].mxu0
    %1860 = vdwg.mxu0
    %1861 = vmatprep.subr.mxu0 0.0
    %1862 = vmatpush1.xpose.msra.mxu0 %v1144
    %1863 = vmatprep.subr.mxu0 0.0
    %1864 = vmatpush1.xpose.msra.mxu0 0.0
    %1865 = vmatprep.subr.mxu0 0.0
    %1866 = vmatpush1.xpose.msra.mxu0 0.0
    %1867 = vmatprep.subr.mxu0 0.0
    %1868 = vmatpush1.xpose.msra.mxu0 0.0
    %1869 = vmatprep.subr.mxu0 0.0
    %1870 = vmatpush1.xpose.msra.mxu0 0.0
    %1871 = vmatprep.subr.mxu0 0.0
    %1872 = vmatpush1.xpose.msra.mxu0 0.0
    %1873 = vmatprep.subr.mxu0 0.0
    %1874 = vmatpush1.xpose.msra.mxu0 0.0
    %1875 = vmatprep.subr.mxu0 0.0
    %1876 = vmatpush1.xpose.msra.mxu0 0.0
    %1877 = vmatprep.subr.mxu0 0.0
    %1878 = vmatpush1.xpose.msra.mxu0 0.0
    %1879 = vmatprep.subr.mxu0 0.0
    %1880 = vmatpush1.xpose.msra.mxu0 0.0
    %1881 = vmatprep.subr.mxu0 0.0
    %1882 = vmatpush1.xpose.msra.mxu0 0.0
    %1883 = vmatprep.subr.mxu0 0.0
    %1884 = vmatpush1.xpose.msra.mxu0 0.0
    %1885 = vmatprep.subr.mxu0 0.0
    %1886 = vmatpush1.xpose.msra.mxu0 0.0
    %1887 = vmatprep.subr.mxu0 0.0
    %1888 = vmatpush1.xpose.msra.mxu0 0.0
    %1889 = vmatprep.subr.mxu0 0.0
    %1890 = vmatpush1.xpose.msra.mxu0 0.0
    %1891 = vmatprep.subr.mxu0 0.0
    %1892 = vmatpush1.xpose.msra.mxu0 0.0
    %1893 = vmatprep.subr.mxu0 0.0
    %1894 = vmatpush1.xpose.msra.mxu0 0.0
    %1895 = vmatprep.subr.mxu0 0.0
    %1896 = vmatpush1.xpose.msra.mxu0 0.0
    %1897 = vmatprep.subr.mxu0 0.0
    %1898 = vmatpush1.xpose.msra.mxu0 0.0
    %1899 = vmatprep.subr.mxu0 0.0
    %1900 = vmatpush1.xpose.msra.mxu0 0.0
    %1901 = vmatprep.subr.mxu0 0.0
    %1902 = vmatpush1.xpose.msra.mxu0 0.0
    %1903 = vmatprep.subr.mxu0 0.0
    %1904 = vmatpush1.xpose.msra.mxu0 0.0
    %1905 = vmatprep.subr.mxu0 0.0
    %1906 = vmatpush1.xpose.msra.mxu0 0.0
    %1907 = vmatprep.subr.mxu0 0.0
    %1908 = vmatpush1.xpose.msra.mxu0 0.0
    %1909 = vmatprep.subr.mxu0 0.0
    %1910 = vmatpush1.xpose.msra.mxu0 0.0
    %1911 = vmatprep.subr.mxu0 0.0
    %1912 = vmatpush1.xpose.msra.mxu0 0.0
    %1913 = vmatprep.subr.mxu0 0.0
    %1914 = vmatpush1.xpose.msra.mxu0 0.0
    %1915 = vmatprep.subr.mxu0 0.0
    %1916 = vmatpush1.xpose.msra.mxu0 0.0
    %1917 = vmatprep.subr.mxu0 0.0
    %1918 = vmatpush1.xpose.msra.mxu0 0.0
    %1919 = vmatprep.subr.mxu0 0.0
    %1920 = vmatpush1.xpose.msra.mxu0 0.0
    %1921 = vmatprep.subr.mxu0 0.0
    %1922 = vmatpush1.xpose.msra.mxu0 0.0
    %1923 = vmatprep.subr.mxu0 0.0
    %1924 = vmatpush1.xpose.msra.mxu0 0.0
    %1925 = vmatprep.mubr.f32.mxu0 0.0
    %1926 = vmatmul.mubr.f32.gmra.mrb[0].mxu0 %v918
    %v1927 = vpop.f32.mrb[0].mxu0
    %v1928 = vadd.f32 0.0, %v1927
    %v1929 = vpop.f32.mrb[0].mxu0
    %1930 = vdwg.mxu0
    %1931 = vmatprep.subr.mxu0 0.0
    %1932 = vmatpush1.xpose.msra.mxu0 %v1150
    %1933 = vmatprep.subr.mxu0 0.0
    %1934 = vmatpush1.xpose.msra.mxu0 0.0
    %1935 = vmatprep.subr.mxu0 0.0
    %1936 = vmatpush1.xpose.msra.mxu0 0.0
    %1937 = vmatprep.subr.mxu0 0.0
    %1938 = vmatpush1.xpose.msra.mxu0 0.0
    %1939 = vmatprep.subr.mxu0 0.0
    %1940 = vmatpush1.xpose.msra.mxu0 0.0
    %1941 = vmatprep.subr.mxu0 0.0
    %1942 = vmatpush1.xpose.msra.mxu0 0.0
    %1943 = vmatprep.subr.mxu0 0.0
    %1944 = vmatpush1.xpose.msra.mxu0 0.0
    %1945 = vmatprep.subr.mxu0 0.0
    %1946 = vmatpush1.xpose.msra.mxu0 0.0
    %1947 = vmatprep.subr.mxu0 0.0
    %1948 = vmatpush1.xpose.msra.mxu0 0.0
    %1949 = vmatprep.subr.mxu0 0.0
    %1950 = vmatpush1.xpose.msra.mxu0 0.0
    %1951 = vmatprep.subr.mxu0 0.0
    %1952 = vmatpush1.xpose.msra.mxu0 0.0
    %1953 = vmatprep.subr.mxu0 0.0
    %1954 = vmatpush1.xpose.msra.mxu0 0.0
    %1955 = vmatprep.subr.mxu0 0.0
    %1956 = vmatpush1.xpose.msra.mxu0 0.0
    %1957 = vmatprep.subr.mxu0 0.0
    %1958 = vmatpush1.xpose.msra.mxu0 0.0
    %1959 = vmatprep.subr.mxu0 0.0
    %1960 = vmatpush1.xpose.msra.mxu0 0.0
    %1961 = vmatprep.subr.mxu0 0.0
    %1962 = vmatpush1.xpose.msra.mxu0 0.0
    %1963 = vmatprep.subr.mxu0 0.0
    %1964 = vmatpush1.xpose.msra.mxu0 0.0
    %1965 = vmatprep.subr.mxu0 0.0
    %1966 = vmatpush1.xpose.msra.mxu0 0.0
    %1967 = vmatprep.subr.mxu0 0.0
    %1968 = vmatpush1.xpose.msra.mxu0 0.0
    %1969 = vmatprep.subr.mxu0 0.0
    %1970 = vmatpush1.xpose.msra.mxu0 0.0
    %1971 = vmatprep.subr.mxu0 0.0
    %1972 = vmatpush1.xpose.msra.mxu0 0.0
    %1973 = vmatprep.subr.mxu0 0.0
    %1974 = vmatpush1.xpose.msra.mxu0 0.0
    %1975 = vmatprep.subr.mxu0 0.0
    %1976 = vmatpush1.xpose.msra.mxu0 0.0
    %1977 = vmatprep.subr.mxu0 0.0
    %1978 = vmatpush1.xpose.msra.mxu0 0.0
    %1979 = vmatprep.subr.mxu0 0.0
    %1980 = vmatpush1.xpose.msra.mxu0 0.0
    %1981 = vmatprep.subr.mxu0 0.0
    %1982 = vmatpush1.xpose.msra.mxu0 0.0
    %1983 = vmatprep.subr.mxu0 0.0
    %1984 = vmatpush1.xpose.msra.mxu0 0.0
    %1985 = vmatprep.subr.mxu0 0.0
    %1986 = vmatpush1.xpose.msra.mxu0 0.0
    %1987 = vmatprep.subr.mxu0 0.0
    %1988 = vmatpush1.xpose.msra.mxu0 0.0
    %1989 = vmatprep.subr.mxu0 0.0
    %1990 = vmatpush1.xpose.msra.mxu0 0.0
    %1991 = vmatprep.subr.mxu0 0.0
    %1992 = vmatpush1.xpose.msra.mxu0 0.0
    %1993 = vmatprep.subr.mxu0 0.0
    %1994 = vmatpush1.xpose.msra.mxu0 0.0
    %1995 = vmatprep.mubr.f32.mxu0 0.0
    %1996 = vmatmul.mubr.f32.gmra.mrb[0].mxu0 %v924
    %v1997 = vpop.f32.mrb[0].mxu0
    %v1998 = vadd.f32 0.0, %v1997
    %v1999 = vpop.f32.mrb[0].mxu0
    %2000 = vdwg.mxu0
    %2001 = vmatprep.subr.mxu0 0.0
    %2002 = vmatpush1.xpose.msra.mxu0 %v1156
    %2003 = vmatprep.subr.mxu0 0.0
    %2004 = vmatpush1.xpose.msra.mxu0 0.0
    %2005 = vmatprep.subr.mxu0 0.0
    %2006 = vmatpush1.xpose.msra.mxu0 0.0
    %2007 = vmatprep.subr.mxu0 0.0
    %2008 = vmatpush1.xpose.msra.mxu0 0.0
    %2009 = vmatprep.subr.mxu0 0.0
    %2010 = vmatpush1.xpose.msra.mxu0 0.0
    %2011 = vmatprep.subr.mxu0 0.0
    %2012 = vmatpush1.xpose.msra.mxu0 0.0
    %2013 = vmatprep.subr.mxu0 0.0
    %2014 = vmatpush1.xpose.msra.mxu0 0.0
    %2015 = vmatprep.subr.mxu0 0.0
    %2016 = vmatpush1.xpose.msra.mxu0 0.0
    %2017 = vmatprep.subr.mxu0 0.0
    %2018 = vmatpush1.xpose.msra.mxu0 0.0
    %2019 = vmatprep.subr.mxu0 0.0
    %2020 = vmatpush1.xpose.msra.mxu0 0.0
    %2021 = vmatprep.subr.mxu0 0.0
    %2022 = vmatpush1.xpose.msra.mxu0 0.0
    %2023 = vmatprep.subr.mxu0 0.0
    %2024 = vmatpush1.xpose.msra.mxu0 0.0
    %2025 = vmatprep.subr.mxu0 0.0
    %2026 = vmatpush1.xpose.msra.mxu0 0.0
    %2027 = vmatprep.subr.mxu0 0.0
    %2028 = vmatpush1.xpose.msra.mxu0 0.0
    %2029 = vmatprep.subr.mxu0 0.0
    %2030 = vmatpush1.xpose.msra.mxu0 0.0
    %2031 = vmatprep.subr.mxu0 0.0
    %2032 = vmatpush1.xpose.msra.mxu0 0.0
    %2033 = vmatprep.subr.mxu0 0.0
    %2034 = vmatpush1.xpose.msra.mxu0 0.0
    %2035 = vmatprep.subr.mxu0 0.0
    %2036 = vmatpush1.xpose.msra.mxu0 0.0
    %2037 = vmatprep.subr.mxu0 0.0
    %2038 = vmatpush1.xpose.msra.mxu0 0.0
    %2039 = vmatprep.subr.mxu0 0.0
    %2040 = vmatpush1.xpose.msra.mxu0 0.0
    %2041 = vmatprep.subr.mxu0 0.0
    %2042 = vmatpush1.xpose.msra.mxu0 0.0
    %2043 = vmatprep.subr.mxu0 0.0
    %2044 = vmatpush1.xpose.msra.mxu0 0.0
    %2045 = vmatprep.subr.mxu0 0.0
    %2046 = vmatpush1.xpose.msra.mxu0 0.0
    %2047 = vmatprep.subr.mxu0 0.0
    %2048 = vmatpush1.xpose.msra.mxu0 0.0
    %2049 = vmatprep.subr.mxu0 0.0
    %2050 = vmatpush1.xpose.msra.mxu0 0.0
    %2051 = vmatprep.subr.mxu0 0.0
    %2052 = vmatpush1.xpose.msra.mxu0 0.0
    %2053 = vmatprep.subr.mxu0 0.0
    %2054 = vmatpush1.xpose.msra.mxu0 0.0
    %2055 = vmatprep.subr.mxu0 0.0
    %2056 = vmatpush1.xpose.msra.mxu0 0.0
    %2057 = vmatprep.subr.mxu0 0.0
    %2058 = vmatpush1.xpose.msra.mxu0 0.0
    %2059 = vmatprep.subr.mxu0 0.0
    %2060 = vmatpush1.xpose.msra.mxu0 0.0
    %2061 = vmatprep.subr.mxu0 0.0
    %2062 = vmatpush1.xpose.msra.mxu0 0.0
    %2063 = vmatprep.subr.mxu0 0.0
    %2064 = vmatpush1.xpose.msra.mxu0 0.0
    %2065 = vmatprep.mubr.f32.mxu0 0.0
    %2066 = vmatmul.mubr.f32.gmra.mrb[0].mxu0 %v930
    %v2067 = vpop.f32.mrb[0].mxu0
    %v2068 = vadd.f32 0.0, %v2067
    %v2069 = vpop.f32.mrb[0].mxu0
    %2070 = vdwg.mxu0
    %v2071 = vmul.f32 %v1578, 0.088388346
    %v2072 = vmul.f32 %v1648, 0.088388346
    %v2073 = vmul.f32 %v1718, 0.088388346
    %v2074 = vmul.f32 %v1788, 0.088388346
    %v2075 = vmul.f32 %v1858, 0.088388346
    %v2076 = vmul.f32 %v1928, 0.088388346
    %v2077 = vmul.f32 %v1998, 0.088388346
    %v2078 = vmul.f32 %v2068, 0.088388346
    %vm2079 = vcmask 64512
    %v2080 = vsel %vm2079, %v2071, -inf
    %2081 = vmax.xlane.f32.xlu0 %v2080
    %v2082 = vpop.xlane.xlu0 %2081
    %v2083 = vsel %vm2079, %v2072, -inf
    %2084 = vmax.xlane.f32.xlu0 %v2083
    %v2085 = vpop.xlane.xlu0 %2084
    %v2086 = vsel %vm2079, %v2073, -inf
    %2087 = vmax.xlane.f32.xlu0 %v2086
    %v2088 = vpop.xlane.xlu0 %2087
    %v2089 = vsel %vm2079, %v2074, -inf
    %2090 = vmax.xlane.f32.xlu0 %v2089
    %v2091 = vpop.xlane.xlu0 %2090
    %v2092 = vsel %vm2079, %v2075, -inf
    %2093 = vmax.xlane.f32.xlu0 %v2092
    %v2094 = vpop.xlane.xlu0 %2093
    %v2095 = vsel %vm2079, %v2076, -inf
    %2096 = vmax.xlane.f32.xlu0 %v2095
    %v2097 = vpop.xlane.xlu0 %2096
    %v2098 = vsel %vm2079, %v2077, -inf
    %2099 = vmax.xlane.f32.xlu0 %v2098
    %v2100 = vpop.xlane.xlu0 %2099
    %v2101 = vsel %vm2079, %v2078, -inf
    %2102 = vmax.xlane.f32.xlu0 %v2101
    %v2103 = vpop.xlane.xlu0 %2102
    %v2104 = vsub.f32 %v2071, %v2082
    %v2105 = vsub.f32 %v2072, %v2085
    %v2106 = vsub.f32 %v2073, %v2088
    %v2107 = vsub.f32 %v2074, %v2091
    %v2108 = vsub.f32 %v2075, %v2094
    %v2109 = vsub.f32 %v2076, %v2097
    %v2110 = vsub.f32 %v2077, %v2100
    %v2111 = vsub.f32 %v2078, %v2103
    %v2112 = vmul.f32 %v2104, 1.442695
    %v2113 = vpow.pop %v2112
    %v2114 = vmul.f32 %v2105, 1.442695
    %v2115 = vpow.pop %v2114
    %v2116 = vmul.f32 %v2106, 1.442695
    %v2117 = vpow.pop %v2116
    %v2118 = vmul.f32 %v2107, 1.442695
    %v2119 = vpow.pop %v2118
    %v2120 = vmul.f32 %v2108, 1.442695
    %v2121 = vpow.pop %v2120
    %v2122 = vmul.f32 %v2109, 1.442695
    %v2123 = vpow.pop %v2122
    %v2124 = vmul.f32 %v2110, 1.442695
    %v2125 = vpow.pop %v2124
    %v2126 = vmul.f32 %v2111, 1.442695
    %v2127 = vpow.pop %v2126
    %v2128 = vsel %vm2079, %v2113, 0.0
    %2129 = vadd.xlane.f32.xlu0 %v2128
    %v2130 = vpop.xlane.xlu0 %2129
    %v2131 = vsel %vm2079, %v2115, 0.0
    %2132 = vadd.xlane.f32.xlu0 %v2131
    %v2133 = vpop.xlane.xlu0 %2132
    %v2134 = vsel %vm2079, %v2117, 0.0
    %2135 = vadd.xlane.f32.xlu0 %v2134
    %v2136 = vpop.xlane.xlu0 %2135
    %v2137 = vsel %vm2079, %v2119, 0.0
    %2138 = vadd.xlane.f32.xlu0 %v2137
    %v2139 = vpop.xlane.xlu0 %2138
    %v2140 = vsel %vm2079, %v2121, 0.0
    %2141 = vadd.xlane.f32.xlu0 %v2140
    %v2142 = vpop.xlane.xlu0 %2141
    %v2143 = vsel %vm2079, %v2123, 0.0
    %2144 = vadd.xlane.f32.xlu0 %v2143
    %v2145 = vpop.xlane.xlu0 %2144
    %v2146 = vsel %vm2079, %v2125, 0.0
    %2147 = vadd.xlane.f32.xlu0 %v2146
    %v2148 = vpop.xlane.xlu0 %2147
    %v2149 = vsel %vm2079, %v2127, 0.0
    %2150 = vadd.xlane.f32.xlu0 %v2149
    %v2151 = vpop.xlane.xlu0 %2150
    %v2152 = vrcp.pop %v2130
    %v2153 = vrcp.pop %v2133
    %v2154 = vrcp.pop %v2136
    %v2155 = vrcp.pop %v2139
    %v2156 = vrcp.pop %v2142
    %v2157 = vrcp.pop %v2145
    %v2158 = vrcp.pop %v2148
    %v2159 = vrcp.pop %v2151
    %v2160 = vmul.f32 %v2113, %v2152
    %v2161 = vmul.f32 %v2115, %v2153
    %v2162 = vmul.f32 %v2117, %v2154
    %v2163 = vmul.f32 %v2119, %v2155
    %v2164 = vmul.f32 %v2121, %v2156
    %v2165 = vmul.f32 %v2123, %v2157
    %v2166 = vmul.f32 %v2125, %v2158
    %v2167 = vmul.f32 %v2127, %v2159
    %v2169 = vsel %vm2079, %v2160, 0
    %2171 = vmatprep.subr.mxu0 0.0
    %2172 = vmatpush1.msra.mxu0 %v1340
    %2173 = vmatprep.subr.mxu0 0.0
    %2174 = vmatpush1.msra.mxu0 0.0
    %2175 = vmatprep.subr.mxu0 0.0
    %2176 = vmatpush1.msra.mxu0 0.0
    %2177 = vmatprep.subr.mxu0 0.0
    %2178 = vmatpush1.msra.mxu0 0.0
    %2179 = vmatprep.subr.mxu0 0.0
    %2180 = vmatpush1.msra.mxu0 0.0
    %2181 = vmatprep.subr.mxu0 0.0
    %2182 = vmatpush1.msra.mxu0 0.0
    %2183 = vmatprep.subr.mxu0 0.0
    %2184 = vmatpush1.msra.mxu0 0.0
    %2185 = vmatprep.subr.mxu0 0.0
    %2186 = vmatpush1.msra.mxu0 0.0
    %2187 = vmatprep.subr.mxu0 0.0
    %2188 = vmatpush1.msra.mxu0 0.0
    %2189 = vmatprep.subr.mxu0 0.0
    %2190 = vmatpush1.msra.mxu0 0.0
    %2191 = vmatprep.subr.mxu0 0.0
    %2192 = vmatpush1.msra.mxu0 0.0
    %2193 = vmatprep.subr.mxu0 0.0
    %2194 = vmatpush1.msra.mxu0 0.0
    %2195 = vmatprep.subr.mxu0 0.0
    %2196 = vmatpush1.msra.mxu0 0.0
    %2197 = vmatprep.subr.mxu0 0.0
    %2198 = vmatpush1.msra.mxu0 0.0
    %2199 = vmatprep.subr.mxu0 0.0
    %2200 = vmatpush1.msra.mxu0 0.0
    %2201 = vmatprep.subr.mxu0 0.0
    %2202 = vmatpush1.msra.mxu0 0.0
    %2203 = vmatprep.subr.mxu0 0.0
    %2204 = vmatpush1.msra.mxu0 0.0
    %2205 = vmatprep.subr.mxu0 0.0
    %2206 = vmatpush1.msra.mxu0 0.0
    %2207 = vmatprep.subr.mxu0 0.0
    %2208 = vmatpush1.msra.mxu0 0.0
    %2209 = vmatprep.subr.mxu0 0.0
    %2210 = vmatpush1.msra.mxu0 0.0
    %2211 = vmatprep.subr.mxu0 0.0
    %2212 = vmatpush1.msra.mxu0 0.0
    %2213 = vmatprep.subr.mxu0 0.0
    %2214 = vmatpush1.msra.mxu0 0.0
    %2215 = vmatprep.subr.mxu0 0.0
    %2216 = vmatpush1.msra.mxu0 0.0
    %2217 = vmatprep.subr.mxu0 0.0
    %2218 = vmatpush1.msra.mxu0 0.0
    %2219 = vmatprep.subr.mxu0 0.0
    %2220 = vmatpush1.msra.mxu0 0.0
    %2221 = vmatprep.subr.mxu0 0.0
    %2222 = vmatpush1.msra.mxu0 0.0
    %2223 = vmatprep.subr.mxu0 0.0
    %2224 = vmatpush1.msra.mxu0 0.0
    %2225 = vmatprep.subr.mxu0 0.0
    %2226 = vmatpush1.msra.mxu0 0.0
    %2227 = vmatprep.subr.mxu0 0.0
    %2228 = vmatpush1.msra.mxu0 0.0
    %2229 = vmatprep.subr.mxu0 0.0
    %2230 = vmatpush1.msra.mxu0 0.0
    %2231 = vmatprep.subr.mxu0 0.0
    %2232 = vmatpush1.msra.mxu0 0.0
    %2233 = vmatprep.subr.mxu0 0.0
    %2234 = vmatpush1.msra.mxu0 0.0
    %2235 = vmatprep.mubr.f32.mxu0 0.0
    %2236 = vmatmul.mubr.f32.gmra.mrb[0].mxu0 %v2169
    %v2237 = vpop.f32.mrb[0].mxu0
    %v2238 = vadd.f32 0.0, %v2237
    %v2239 = vpop.f32.mrb[0].mxu0
    %2240 = vdwg.mxu0
    %v2242 = vsel %vm2079, %v2161, 0
    %2244 = vmatprep.subr.mxu0 0.0
    %2245 = vmatpush1.msra.mxu0 %v1346
    %2246 = vmatprep.subr.mxu0 0.0
    %2247 = vmatpush1.msra.mxu0 0.0
    %2248 = vmatprep.subr.mxu0 0.0
    %2249 = vmatpush1.msra.mxu0 0.0
    %2250 = vmatprep.subr.mxu0 0.0
    %2251 = vmatpush1.msra.mxu0 0.0
    %2252 = vmatprep.subr.mxu0 0.0
    %2253 = vmatpush1.msra.mxu0 0.0
    %2254 = vmatprep.subr.mxu0 0.0
    %2255 = vmatpush1.msra.mxu0 0.0
    %2256 = vmatprep.subr.mxu0 0.0
    %2257 = vmatpush1.msra.mxu0 0.0
    %2258 = vmatprep.subr.mxu0 0.0
    %2259 = vmatpush1.msra.mxu0 0.0
    %2260 = vmatprep.subr.mxu0 0.0
    %2261 = vmatpush1.msra.mxu0 0.0
    %2262 = vmatprep.subr.mxu0 0.0
    %2263 = vmatpush1.msra.mxu0 0.0
    %2264 = vmatprep.subr.mxu0 0.0
    %2265 = vmatpush1.msra.mxu0 0.0
    %2266 = vmatprep.subr.mxu0 0.0
    %2267 = vmatpush1.msra.mxu0 0.0
    %2268 = vmatprep.subr.mxu0 0.0
    %2269 = vmatpush1.msra.mxu0 0.0
    %2270 = vmatprep.subr.mxu0 0.0
    %2271 = vmatpush1.msra.mxu0 0.0
    %2272 = vmatprep.subr.mxu0 0.0
    %2273 = vmatpush1.msra.mxu0 0.0
    %2274 = vmatprep.subr.mxu0 0.0
    %2275 = vmatpush1.msra.mxu0 0.0
    %2276 = vmatprep.subr.mxu0 0.0
    %2277 = vmatpush1.msra.mxu0 0.0
    %2278 = vmatprep.subr.mxu0 0.0
    %2279 = vmatpush1.msra.mxu0 0.0
    %2280 = vmatprep.subr.mxu0 0.0
    %2281 = vmatpush1.msra.mxu0 0.0
    %2282 = vmatprep.subr.mxu0 0.0
    %2283 = vmatpush1.msra.mxu0 0.0
    %2284 = vmatprep.subr.mxu0 0.0
    %2285 = vmatpush1.msra.mxu0 0.0
    %2286 = vmatprep.subr.mxu0 0.0
    %2287 = vmatpush1.msra.mxu0 0.0
    %2288 = vmatprep.subr.mxu0 0.0
    %2289 = vmatpush1.msra.mxu0 0.0
    %2290 = vmatprep.subr.mxu0 0.0
    %2291 = vmatpush1.msra.mxu0 0.0
    %2292 = vmatprep.subr.mxu0 0.0
    %2293 = vmatpush1.msra.mxu0 0.0
    %2294 = vmatprep.subr.mxu0 0.0
    %2295 = vmatpush1.msra.mxu0 0.0
    %2296 = vmatprep.subr.mxu0 0.0
    %2297 = vmatpush1.msra.mxu0 0.0
    %2298 = vmatprep.subr.mxu0 0.0
    %2299 = vmatpush1.msra.mxu0 0.0
    %2300 = vmatprep.subr.mxu0 0.0
    %2301 = vmatpush1.msra.mxu0 0.0
    %2302 = vmatprep.subr.mxu0 0.0
    %2303 = vmatpush1.msra.mxu0 0.0
    %2304 = vmatprep.subr.mxu0 0.0
    %2305 = vmatpush1.msra.mxu0 0.0
    %2306 = vmatprep.subr.mxu0 0.0
    %2307 = vmatpush1.msra.mxu0 0.0
    %2308 = vmatprep.mubr.f32.mxu0 0.0
    %2309 = vmatmul.mubr.f32.gmra.mrb[0].mxu0 %v2242
    %v2310 = vpop.f32.mrb[0].mxu0
    %v2311 = vadd.f32 0.0, %v2310
    %v2312 = vpop.f32.mrb[0].mxu0
    %2313 = vdwg.mxu0
    %v2315 = vsel %vm2079, %v2162, 0
    %2317 = vmatprep.subr.mxu0 0.0
    %2318 = vmatpush1.msra.mxu0 %v1352
    %2319 = vmatprep.subr.mxu0 0.0
    %2320 = vmatpush1.msra.mxu0 0.0
    %2321 = vmatprep.subr.mxu0 0.0
    %2322 = vmatpush1.msra.mxu0 0.0
    %2323 = vmatprep.subr.mxu0 0.0
    %2324 = vmatpush1.msra.mxu0 0.0
    %2325 = vmatprep.subr.mxu0 0.0
    %2326 = vmatpush1.msra.mxu0 0.0
    %2327 = vmatprep.subr.mxu0 0.0
    %2328 = vmatpush1.msra.mxu0 0.0
    %2329 = vmatprep.subr.mxu0 0.0
    %2330 = vmatpush1.msra.mxu0 0.0
    %2331 = vmatprep.subr.mxu0 0.0
    %2332 = vmatpush1.msra.mxu0 0.0
    %2333 = vmatprep.subr.mxu0 0.0
    %2334 = vmatpush1.msra.mxu0 0.0
    %2335 = vmatprep.subr.mxu0 0.0
    %2336 = vmatpush1.msra.mxu0 0.0
    %2337 = vmatprep.subr.mxu0 0.0
    %2338 = vmatpush1.msra.mxu0 0.0
    %2339 = vmatprep.subr.mxu0 0.0
    %2340 = vmatpush1.msra.mxu0 0.0
    %2341 = vmatprep.subr.mxu0 0.0
    %2342 = vmatpush1.msra.mxu0 0.0
    %2343 = vmatprep.subr.mxu0 0.0
    %2344 = vmatpush1.msra.mxu0 0.0
    %2345 = vmatprep.subr.mxu0 0.0
    %2346 = vmatpush1.msra.mxu0 0.0
    %2347 = vmatprep.subr.mxu0 0.0
    %2348 = vmatpush1.msra.mxu0 0.0
    %2349 = vmatprep.subr.mxu0 0.0
    %2350 = vmatpush1.msra.mxu0 0.0
    %2351 = vmatprep.subr.mxu0 0.0
    %2352 = vmatpush1.msra.mxu0 0.0
    %2353 = vmatprep.subr.mxu0 0.0
    %2354 = vmatpush1.msra.mxu0 0.0
    %2355 = vmatprep.subr.mxu0 0.0
    %2356 = vmatpush1.msra.mxu0 0.0
    %2357 = vmatprep.subr.mxu0 0.0
    %2358 = vmatpush1.msra.mxu0 0.0
    %2359 = vmatprep.subr.mxu0 0.0
    %2360 = vmatpush1.msra.mxu0 0.0
    %2361 = vmatprep.subr.mxu0 0.0
    %2362 = vmatpush1.msra.mxu0 0.0
    %2363 = vmatprep.subr.mxu0 0.0
    %2364 = vmatpush1.msra.mxu0 0.0
    %2365 = vmatprep.subr.mxu0 0.0
    %2366 = vmatpush1.msra.mxu0 0.0
    %2367 = vmatprep.subr.mxu0 0.0
    %2368 = vmatpush1.msra.mxu0 0.0
    %2369 = vmatprep.subr.mxu0 0.0
    %2370 = vmatpush1.msra.mxu0 0.0
    %2371 = vmatprep.subr.mxu0 0.0
    %2372 = vmatpush1.msra.mxu0 0.0
    %2373 = vmatprep.subr.mxu0 0.0
    %2374 = vmatpush1.msra.mxu0 0.0
    %2375 = vmatprep.subr.mxu0 0.0
    %2376 = vmatpush1.msra.mxu0 0.0
    %2377 = vmatprep.subr.mxu0 0.0
    %2378 = vmatpush1.msra.mxu0 0.0
    %2379 = vmatprep.subr.mxu0 0.0
    %2380 = vmatpush1.msra.mxu0 0.0
    %2381 = vmatprep.mubr.f32.mxu0 0.0
    %2382 = vmatmul.mubr.f32.gmra.mrb[0].mxu0 %v2315
    %v2383 = vpop.f32.mrb[0].mxu0
    %v2384 = vadd.f32 0.0, %v2383
    %v2385 = vpop.f32.mrb[0].mxu0
    %2386 = vdwg.mxu0
    %v2388 = vsel %vm2079, %v2163, 0
    %2390 = vmatprep.subr.mxu0 0.0
    %2391 = vmatpush1.msra.mxu0 %v1358
    %2392 = vmatprep.subr.mxu0 0.0
    %2393 = vmatpush1.msra.mxu0 0.0
    %2394 = vmatprep.subr.mxu0 0.0
    %2395 = vmatpush1.msra.mxu0 0.0
    %2396 = vmatprep.subr.mxu0 0.0
    %2397 = vmatpush1.msra.mxu0 0.0
    %2398 = vmatprep.subr.mxu0 0.0
    %2399 = vmatpush1.msra.mxu0 0.0
    %2400 = vmatprep.subr.mxu0 0.0
    %2401 = vmatpush1.msra.mxu0 0.0
    %2402 = vmatprep.subr.mxu0 0.0
    %2403 = vmatpush1.msra.mxu0 0.0
    %2404 = vmatprep.subr.mxu0 0.0
    %2405 = vmatpush1.msra.mxu0 0.0
    %2406 = vmatprep.subr.mxu0 0.0
    %2407 = vmatpush1.msra.mxu0 0.0
    %2408 = vmatprep.subr.mxu0 0.0
    %2409 = vmatpush1.msra.mxu0 0.0
    %2410 = vmatprep.subr.mxu0 0.0
    %2411 = vmatpush1.msra.mxu0 0.0
    %2412 = vmatprep.subr.mxu0 0.0
    %2413 = vmatpush1.msra.mxu0 0.0
    %2414 = vmatprep.subr.mxu0 0.0
    %2415 = vmatpush1.msra.mxu0 0.0
    %2416 = vmatprep.subr.mxu0 0.0
    %2417 = vmatpush1.msra.mxu0 0.0
    %2418 = vmatprep.subr.mxu0 0.0
    %2419 = vmatpush1.msra.mxu0 0.0
    %2420 = vmatprep.subr.mxu0 0.0
    %2421 = vmatpush1.msra.mxu0 0.0
    %2422 = vmatprep.subr.mxu0 0.0
    %2423 = vmatpush1.msra.mxu0 0.0
    %2424 = vmatprep.subr.mxu0 0.0
    %2425 = vmatpush1.msra.mxu0 0.0
    %2426 = vmatprep.subr.mxu0 0.0
    %2427 = vmatpush1.msra.mxu0 0.0
    %2428 = vmatprep.subr.mxu0 0.0
    %2429 = vmatpush1.msra.mxu0 0.0
    %2430 = vmatprep.subr.mxu0 0.0
    %2431 = vmatpush1.msra.mxu0 0.0
    %2432 = vmatprep.subr.mxu0 0.0
    %2433 = vmatpush1.msra.mxu0 0.0
    %2434 = vmatprep.subr.mxu0 0.0
    %2435 = vmatpush1.msra.mxu0 0.0
    %2436 = vmatprep.subr.mxu0 0.0
    %2437 = vmatpush1.msra.mxu0 0.0
    %2438 = vmatprep.subr.mxu0 0.0
    %2439 = vmatpush1.msra.mxu0 0.0
    %2440 = vmatprep.subr.mxu0 0.0
    %2441 = vmatpush1.msra.mxu0 0.0
    %2442 = vmatprep.subr.mxu0 0.0
    %2443 = vmatpush1.msra.mxu0 0.0
    %2444 = vmatprep.subr.mxu0 0.0
    %2445 = vmatpush1.msra.mxu0 0.0
    %2446 = vmatprep.subr.mxu0 0.0
    %2447 = vmatpush1.msra.mxu0 0.0
    %2448 = vmatprep.subr.mxu0 0.0
    %2449 = vmatpush1.msra.mxu0 0.0
    %2450 = vmatprep.subr.mxu0 0.0
    %2451 = vmatpush1.msra.mxu0 0.0
    %2452 = vmatprep.subr.mxu0 0.0
    %2453 = vmatpush1.msra.mxu0 0.0
    %2454 = vmatprep.mubr.f32.mxu0 0.0
    %2455 = vmatmul.mubr.f32.gmra.mrb[0].mxu0 %v2388
    %v2456 = vpop.f32.mrb[0].mxu0
    %v2457 = vadd.f32 0.0, %v2456
    %v2458 = vpop.f32.mrb[0].mxu0
    %2459 = vdwg.mxu0
    %v2461 = vsel %vm2079, %v2164, 0
    %2463 = vmatprep.subr.mxu0 0.0
    %2464 = vmatpush1.msra.mxu0 %v1364
    %2465 = vmatprep.subr.mxu0 0.0
    %2466 = vmatpush1.msra.mxu0 0.0
    %2467 = vmatprep.subr.mxu0 0.0
    %2468 = vmatpush1.msra.mxu0 0.0
    %2469 = vmatprep.subr.mxu0 0.0
    %2470 = vmatpush1.msra.mxu0 0.0
    %2471 = vmatprep.subr.mxu0 0.0
    %2472 = vmatpush1.msra.mxu0 0.0
    %2473 = vmatprep.subr.mxu0 0.0
    %2474 = vmatpush1.msra.mxu0 0.0
    %2475 = vmatprep.subr.mxu0 0.0
    %2476 = vmatpush1.msra.mxu0 0.0
    %2477 = vmatprep.subr.mxu0 0.0
    %2478 = vmatpush1.msra.mxu0 0.0
    %2479 = vmatprep.subr.mxu0 0.0
    %2480 = vmatpush1.msra.mxu0 0.0
    %2481 = vmatprep.subr.mxu0 0.0
    %2482 = vmatpush1.msra.mxu0 0.0
    %2483 = vmatprep.subr.mxu0 0.0
    %2484 = vmatpush1.msra.mxu0 0.0
    %2485 = vmatprep.subr.mxu0 0.0
    %2486 = vmatpush1.msra.mxu0 0.0
    %2487 = vmatprep.subr.mxu0 0.0
    %2488 = vmatpush1.msra.mxu0 0.0
    %2489 = vmatprep.subr.mxu0 0.0
    %2490 = vmatpush1.msra.mxu0 0.0
    %2491 = vmatprep.subr.mxu0 0.0
    %2492 = vmatpush1.msra.mxu0 0.0
    %2493 = vmatprep.subr.mxu0 0.0
    %2494 = vmatpush1.msra.mxu0 0.0
    %2495 = vmatprep.subr.mxu0 0.0
    %2496 = vmatpush1.msra.mxu0 0.0
    %2497 = vmatprep.subr.mxu0 0.0
    %2498 = vmatpush1.msra.mxu0 0.0
    %2499 = vmatprep.subr.mxu0 0.0
    %2500 = vmatpush1.msra.mxu0 0.0
    %2501 = vmatprep.subr.mxu0 0.0
    %2502 = vmatpush1.msra.mxu0 0.0
    %2503 = vmatprep.subr.mxu0 0.0
    %2504 = vmatpush1.msra.mxu0 0.0
    %2505 = vmatprep.subr.mxu0 0.0
    %2506 = vmatpush1.msra.mxu0 0.0
    %2507 = vmatprep.subr.mxu0 0.0
    %2508 = vmatpush1.msra.mxu0 0.0
    %2509 = vmatprep.subr.mxu0 0.0
    %2510 = vmatpush1.msra.mxu0 0.0
    %2511 = vmatprep.subr.mxu0 0.0
    %2512 = vmatpush1.msra.mxu0 0.0
    %2513 = vmatprep.subr.mxu0 0.0
    %2514 = vmatpush1.msra.mxu0 0.0
    %2515 = vmatprep.subr.mxu0 0.0
    %2516 = vmatpush1.msra.mxu0 0.0
    %2517 = vmatprep.subr.mxu0 0.0
    %2518 = vmatpush1.msra.mxu0 0.0
    %2519 = vmatprep.subr.mxu0 0.0
    %2520 = vmatpush1.msra.mxu0 0.0
    %2521 = vmatprep.subr.mxu0 0.0
    %2522 = vmatpush1.msra.mxu0 0.0
    %2523 = vmatprep.subr.mxu0 0.0
    %2524 = vmatpush1.msra.mxu0 0.0
    %2525 = vmatprep.subr.mxu0 0.0
    %2526 = vmatpush1.msra.mxu0 0.0
    %2527 = vmatprep.mubr.f32.mxu0 0.0
    %2528 = vmatmul.mubr.f32.gmra.mrb[0].mxu0 %v2461
    %v2529 = vpop.f32.mrb[0].mxu0
    %v2530 = vadd.f32 0.0, %v2529
    %v2531 = vpop.f32.mrb[0].mxu0
    %2532 = vdwg.mxu0
    %v2534 = vsel %vm2079, %v2165, 0
    %2536 = vmatprep.subr.mxu0 0.0
    %2537 = vmatpush1.msra.mxu0 %v1370
    %2538 = vmatprep.subr.mxu0 0.0
    %2539 = vmatpush1.msra.mxu0 0.0
    %2540 = vmatprep.subr.mxu0 0.0
    %2541 = vmatpush1.msra.mxu0 0.0
    %2542 = vmatprep.subr.mxu0 0.0
    %2543 = vmatpush1.msra.mxu0 0.0
    %2544 = vmatprep.subr.mxu0 0.0
    %2545 = vmatpush1.msra.mxu0 0.0
    %2546 = vmatprep.subr.mxu0 0.0
    %2547 = vmatpush1.msra.mxu0 0.0
    %2548 = vmatprep.subr.mxu0 0.0
    %2549 = vmatpush1.msra.mxu0 0.0
    %2550 = vmatprep.subr.mxu0 0.0
    %2551 = vmatpush1.msra.mxu0 0.0
    %2552 = vmatprep.subr.mxu0 0.0
    %2553 = vmatpush1.msra.mxu0 0.0
    %2554 = vmatprep.subr.mxu0 0.0
    %2555 = vmatpush1.msra.mxu0 0.0
    %2556 = vmatprep.subr.mxu0 0.0
    %2557 = vmatpush1.msra.mxu0 0.0
    %2558 = vmatprep.subr.mxu0 0.0
    %2559 = vmatpush1.msra.mxu0 0.0
    %2560 = vmatprep.subr.mxu0 0.0
    %2561 = vmatpush1.msra.mxu0 0.0
    %2562 = vmatprep.subr.mxu0 0.0
    %2563 = vmatpush1.msra.mxu0 0.0
    %2564 = vmatprep.subr.mxu0 0.0
    %2565 = vmatpush1.msra.mxu0 0.0
    %2566 = vmatprep.subr.mxu0 0.0
    %2567 = vmatpush1.msra.mxu0 0.0
    %2568 = vmatprep.subr.mxu0 0.0
    %2569 = vmatpush1.msra.mxu0 0.0
    %2570 = vmatprep.subr.mxu0 0.0
    %2571 = vmatpush1.msra.mxu0 0.0
    %2572 = vmatprep.subr.mxu0 0.0
    %2573 = vmatpush1.msra.mxu0 0.0
    %2574 = vmatprep.subr.mxu0 0.0
    %2575 = vmatpush1.msra.mxu0 0.0
    %2576 = vmatprep.subr.mxu0 0.0
    %2577 = vmatpush1.msra.mxu0 0.0
    %2578 = vmatprep.subr.mxu0 0.0
    %2579 = vmatpush1.msra.mxu0 0.0
    %2580 = vmatprep.subr.mxu0 0.0
    %2581 = vmatpush1.msra.mxu0 0.0
    %2582 = vmatprep.subr.mxu0 0.0
    %2583 = vmatpush1.msra.mxu0 0.0
    %2584 = vmatprep.subr.mxu0 0.0
    %2585 = vmatpush1.msra.mxu0 0.0
    %2586 = vmatprep.subr.mxu0 0.0
    %2587 = vmatpush1.msra.mxu0 0.0
    %2588 = vmatprep.subr.mxu0 0.0
    %2589 = vmatpush1.msra.mxu0 0.0
    %2590 = vmatprep.subr.mxu0 0.0
    %2591 = vmatpush1.msra.mxu0 0.0
    %2592 = vmatprep.subr.mxu0 0.0
    %2593 = vmatpush1.msra.mxu0 0.0
    %2594 = vmatprep.subr.mxu0 0.0
    %2595 = vmatpush1.msra.mxu0 0.0
    %2596 = vmatprep.subr.mxu0 0.0
    %2597 = vmatpush1.msra.mxu0 0.0
    %2598 = vmatprep.subr.mxu0 0.0
    %2599 = vmatpush1.msra.mxu0 0.0
    %2600 = vmatprep.mubr.f32.mxu0 0.0
    %2601 = vmatmul.mubr.f32.gmra.mrb[0].mxu0 %v2534
    %v2602 = vpop.f32.mrb[0].mxu0
    %v2603 = vadd.f32 0.0, %v2602
    %v2604 = vpop.f32.mrb[0].mxu0
    %2605 = vdwg.mxu0
    %v2607 = vsel %vm2079, %v2166, 0
    %2609 = vmatprep.subr.mxu0 0.0
    %2610 = vmatpush1.msra.mxu0 %v1376
    %2611 = vmatprep.subr.mxu0 0.0
    %2612 = vmatpush1.msra.mxu0 0.0
    %2613 = vmatprep.subr.mxu0 0.0
    %2614 = vmatpush1.msra.mxu0 0.0
    %2615 = vmatprep.subr.mxu0 0.0
    %2616 = vmatpush1.msra.mxu0 0.0
    %2617 = vmatprep.subr.mxu0 0.0
    %2618 = vmatpush1.msra.mxu0 0.0
    %2619 = vmatprep.subr.mxu0 0.0
    %2620 = vmatpush1.msra.mxu0 0.0
    %2621 = vmatprep.subr.mxu0 0.0
    %2622 = vmatpush1.msra.mxu0 0.0
    %2623 = vmatprep.subr.mxu0 0.0
    %2624 = vmatpush1.msra.mxu0 0.0
    %2625 = vmatprep.subr.mxu0 0.0
    %2626 = vmatpush1.msra.mxu0 0.0
    %2627 = vmatprep.subr.mxu0 0.0
    %2628 = vmatpush1.msra.mxu0 0.0
    %2629 = vmatprep.subr.mxu0 0.0
    %2630 = vmatpush1.msra.mxu0 0.0
    %2631 = vmatprep.subr.mxu0 0.0
    %2632 = vmatpush1.msra.mxu0 0.0
    %2633 = vmatprep.subr.mxu0 0.0
    %2634 = vmatpush1.msra.mxu0 0.0
    %2635 = vmatprep.subr.mxu0 0.0
    %2636 = vmatpush1.msra.mxu0 0.0
    %2637 = vmatprep.subr.mxu0 0.0
    %2638 = vmatpush1.msra.mxu0 0.0
    %2639 = vmatprep.subr.mxu0 0.0
    %2640 = vmatpush1.msra.mxu0 0.0
    %2641 = vmatprep.subr.mxu0 0.0
    %2642 = vmatpush1.msra.mxu0 0.0
    %2643 = vmatprep.subr.mxu0 0.0
    %2644 = vmatpush1.msra.mxu0 0.0
    %2645 = vmatprep.subr.mxu0 0.0
    %2646 = vmatpush1.msra.mxu0 0.0
    %2647 = vmatprep.subr.mxu0 0.0
    %2648 = vmatpush1.msra.mxu0 0.0
    %2649 = vmatprep.subr.mxu0 0.0
    %2650 = vmatpush1.msra.mxu0 0.0
    %2651 = vmatprep.subr.mxu0 0.0
    %2652 = vmatpush1.msra.mxu0 0.0
    %2653 = vmatprep.subr.mxu0 0.0
    %2654 = vmatpush1.msra.mxu0 0.0
    %2655 = vmatprep.subr.mxu0 0.0
    %2656 = vmatpush1.msra.mxu0 0.0
    %2657 = vmatprep.subr.mxu0 0.0
    %2658 = vmatpush1.msra.mxu0 0.0
    %2659 = vmatprep.subr.mxu0 0.0
    %2660 = vmatpush1.msra.mxu0 0.0
    %2661 = vmatprep.subr.mxu0 0.0
    %2662 = vmatpush1.msra.mxu0 0.0
    %2663 = vmatprep.subr.mxu0 0.0
    %2664 = vmatpush1.msra.mxu0 0.0
    %2665 = vmatprep.subr.mxu0 0.0
    %2666 = vmatpush1.msra.mxu0 0.0
    %2667 = vmatprep.subr.mxu0 0.0
    %2668 = vmatpush1.msra.mxu0 0.0
    %2669 = vmatprep.subr.mxu0 0.0
    %2670 = vmatpush1.msra.mxu0 0.0
    %2671 = vmatprep.subr.mxu0 0.0
    %2672 = vmatpush1.msra.mxu0 0.0
    %2673 = vmatprep.mubr.f32.mxu0 0.0
    %2674 = vmatmul.mubr.f32.gmra.mrb[0].mxu0 %v2607
    %v2675 = vpop.f32.mrb[0].mxu0
    %v2676 = vadd.f32 0.0, %v2675
    %v2677 = vpop.f32.mrb[0].mxu0
    %2678 = vdwg.mxu0
    %v2680 = vsel %vm2079, %v2167, 0
    %2682 = vmatprep.subr.mxu0 0.0
    %2683 = vmatpush1.msra.mxu0 %v1382
    %2684 = vmatprep.subr.mxu0 0.0
    %2685 = vmatpush1.msra.mxu0 0.0
    %2686 = vmatprep.subr.mxu0 0.0
    %2687 = vmatpush1.msra.mxu0 0.0
    %2688 = vmatprep.subr.mxu0 0.0
    %2689 = vmatpush1.msra.mxu0 0.0
    %2690 = vmatprep.subr.mxu0 0.0
    %2691 = vmatpush1.msra.mxu0 0.0
    %2692 = vmatprep.subr.mxu0 0.0
    %2693 = vmatpush1.msra.mxu0 0.0
    %2694 = vmatprep.subr.mxu0 0.0
    %2695 = vmatpush1.msra.mxu0 0.0
    %2696 = vmatprep.subr.mxu0 0.0
    %2697 = vmatpush1.msra.mxu0 0.0
    %2698 = vmatprep.subr.mxu0 0.0
    %2699 = vmatpush1.msra.mxu0 0.0
    %2700 = vmatprep.subr.mxu0 0.0
    %2701 = vmatpush1.msra.mxu0 0.0
    %2702 = vmatprep.subr.mxu0 0.0
    %2703 = vmatpush1.msra.mxu0 0.0
    %2704 = vmatprep.subr.mxu0 0.0
    %2705 = vmatpush1.msra.mxu0 0.0
    %2706 = vmatprep.subr.mxu0 0.0
    %2707 = vmatpush1.msra.mxu0 0.0
    %2708 = vmatprep.subr.mxu0 0.0
    %2709 = vmatpush1.msra.mxu0 0.0
    %2710 = vmatprep.subr.mxu0 0.0
    %2711 = vmatpush1.msra.mxu0 0.0
    %2712 = vmatprep.subr.mxu0 0.0
    %2713 = vmatpush1.msra.mxu0 0.0
    %2714 = vmatprep.subr.mxu0 0.0
    %2715 = vmatpush1.msra.mxu0 0.0
    %2716 = vmatprep.subr.mxu0 0.0
    %2717 = vmatpush1.msra.mxu0 0.0
    %2718 = vmatprep.subr.mxu0 0.0
    %2719 = vmatpush1.msra.mxu0 0.0
    %2720 = vmatprep.subr.mxu0 0.0
    %2721 = vmatpush1.msra.mxu0 0.0
    %2722 = vmatprep.subr.mxu0 0.0
    %2723 = vmatpush1.msra.mxu0 0.0
    %2724 = vmatprep.subr.mxu0 0.0
    %2725 = vmatpush1.msra.mxu0 0.0
    %2726 = vmatprep.subr.mxu0 0.0
    %2727 = vmatpush1.msra.mxu0 0.0
    %2728 = vmatprep.subr.mxu0 0.0
    %2729 = vmatpush1.msra.mxu0 0.0
    %2730 = vmatprep.subr.mxu0 0.0
    %2731 = vmatpush1.msra.mxu0 0.0
    %2732 = vmatprep.subr.mxu0 0.0
    %2733 = vmatpush1.msra.mxu0 0.0
    %2734 = vmatprep.subr.mxu0 0.0
    %2735 = vmatpush1.msra.mxu0 0.0
    %2736 = vmatprep.subr.mxu0 0.0
    %2737 = vmatpush1.msra.mxu0 0.0
    %2738 = vmatprep.subr.mxu0 0.0
    %2739 = vmatpush1.msra.mxu0 0.0
    %2740 = vmatprep.subr.mxu0 0.0
    %2741 = vmatpush1.msra.mxu0 0.0
    %2742 = vmatprep.subr.mxu0 0.0
    %2743 = vmatpush1.msra.mxu0 0.0
    %2744 = vmatprep.subr.mxu0 0.0
    %2745 = vmatpush1.msra.mxu0 0.0
    %2746 = vmatprep.mubr.f32.mxu0 0.0
    %2747 = vmatmul.mubr.f32.gmra.mrb[0].mxu0 %v2680
    %v2748 = vpop.f32.mrb[0].mxu0
    %v2749 = vadd.f32 0.0, %v2748
    %v2750 = vpop.f32.mrb[0].mxu0
    %2751 = vdwg.mxu0
    %v2752 = vld [vmem:[#allocation7] sm:$0xff]
    %v2753 = vld [vmem:[#allocation7 + $0x8] sm:$0xff]
    %v2754 = vld [vmem:[#allocation7 + $0x10] sm:$0xff]
    %v2755 = vld [vmem:[#allocation7 + $0x18] sm:$0xff]
    %v2756 = vld [vmem:[#allocation7 + $0x20] sm:$0xff]
    %v2757 = vld [vmem:[#allocation7 + $0x28] sm:$0xff]
    %v2758 = vld [vmem:[#allocation7 + $0x30] sm:$0xff]
    %v2759 = vld [vmem:[#allocation7 + $0x38] sm:$0xff]
    %v2760 = vld [vmem:[#allocation7 + $0x40] sm:$0xff]
    %v2761 = vld [vmem:[#allocation7 + $0x48] sm:$0xff]
    %v2762 = vld [vmem:[#allocation7 + $0x50] sm:$0xff]
    %v2763 = vld [vmem:[#allocation7 + $0x58] sm:$0xff]
    %v2764 = vld [vmem:[#allocation7 + $0x60] sm:$0xff]
    %v2765 = vld [vmem:[#allocation7 + $0x68] sm:$0xff]
    %v2766 = vld [vmem:[#allocation7 + $0x70] sm:$0xff]
    %v2767 = vld [vmem:[#allocation7 + $0x78] sm:$0xff]
    %2768 = vmatprep.subr.mxu0 0.0
    %2769 = vmatpush1.msra.mxu0 %v2752
    %2770 = vmatprep.subr.mxu0 0.0
    %2771 = vmatpush1.msra.mxu0 %v2753
    %2772 = vmatprep.subr.mxu0 0.0
    %2773 = vmatpush1.msra.mxu0 %v2754
    %2774 = vmatprep.subr.mxu0 0.0
    %2775 = vmatpush1.msra.mxu0 %v2755
    %2776 = vmatprep.subr.mxu0 0.0
    %2777 = vmatpush1.msra.mxu0 %v2756
    %2778 = vmatprep.subr.mxu0 0.0
    %2779 = vmatpush1.msra.mxu0 %v2757
    %2780 = vmatprep.subr.mxu0 0.0
    %2781 = vmatpush1.msra.mxu0 %v2758
    %2782 = vmatprep.subr.mxu0 0.0
    %2783 = vmatpush1.msra.mxu0 %v2759
    %2784 = vmatprep.subr.mxu0 0.0
    %2785 = vmatpush1.msra.mxu0 %v2760
    %2786 = vmatprep.subr.mxu0 0.0
    %2787 = vmatpush1.msra.mxu0 %v2761
    %2788 = vmatprep.subr.mxu0 0.0
    %2789 = vmatpush1.msra.mxu0 %v2762
    %2790 = vmatprep.subr.mxu0 0.0
    %2791 = vmatpush1.msra.mxu0 %v2763
    %2792 = vmatprep.subr.mxu0 0.0
    %2793 = vmatpush1.msra.mxu0 %v2764
    %2794 = vmatprep.subr.mxu0 0.0
    %2795 = vmatpush1.msra.mxu0 %v2765
    %2796 = vmatprep.subr.mxu0 0.0
    %2797 = vmatpush1.msra.mxu0 %v2766
    %2798 = vmatprep.subr.mxu0 0.0
    %2799 = vmatpush1.msra.mxu0 %v2767
    %2800 = vmatprep.subr.mxu0 0.0
    %2801 = vmatpush1.msra.mxu0 0.0
    %2802 = vmatprep.subr.mxu0 0.0
    %2803 = vmatpush1.msra.mxu0 0.0
    %2804 = vmatprep.subr.mxu0 0.0
    %2805 = vmatpush1.msra.mxu0 0.0
    %2806 = vmatprep.subr.mxu0 0.0
    %2807 = vmatpush1.msra.mxu0 0.0
    %2808 = vmatprep.subr.mxu0 0.0
    %2809 = vmatpush1.msra.mxu0 0.0
    %2810 = vmatprep.subr.mxu0 0.0
    %2811 = vmatpush1.msra.mxu0 0.0
    %2812 = vmatprep.subr.mxu0 0.0
    %2813 = vmatpush1.msra.mxu0 0.0
    %2814 = vmatprep.subr.mxu0 0.0
    %2815 = vmatpush1.msra.mxu0 0.0
    %2816 = vmatprep.subr.mxu0 0.0
    %2817 = vmatpush1.msra.mxu0 0.0
    %2818 = vmatprep.subr.mxu0 0.0
    %2819 = vmatpush1.msra.mxu0 0.0
    %2820 = vmatprep.subr.mxu0 0.0
    %2821 = vmatpush1.msra.mxu0 0.0
    %2822 = vmatprep.subr.mxu0 0.0
    %2823 = vmatpush1.msra.mxu0 0.0
    %2824 = vmatprep.subr.mxu0 0.0
    %2825 = vmatpush1.msra.mxu0 0.0
    %2826 = vmatprep.subr.mxu0 0.0
    %2827 = vmatpush1.msra.mxu0 0.0
    %2828 = vmatprep.subr.mxu0 0.0
    %2829 = vmatpush1.msra.mxu0 0.0
    %2830 = vmatprep.subr.mxu0 0.0
    %2831 = vmatpush1.msra.mxu0 0.0
    %2832 = vmatprep.mubr.f32.mxu0 0.0
    %2833 = vmatmul.mubr.f32.gmra.mrb[0].mxu0 %v2238
    %v2834 = vpop.f32.mrb[0].mxu0
    %v2835 = vadd.f32 0.0, %v2834
    %v2836 = vpop.f32.mrb[0].mxu0
    %2837 = vmatprep.mubr.f32.mxu0 0.0
    %2838 = vmatmul.mubr.f32.gmra.mrb[0].mxu0 %v2311
    %v2839 = vpop.f32.mrb[0].mxu0
    %v2840 = vadd.f32 0.0, %v2839
    %v2841 = vpop.f32.mrb[0].mxu0
    %2842 = vmatprep.mubr.f32.mxu0 0.0
    %2843 = vmatmul.mubr.f32.gmra.mrb[0].mxu0 %v2384
    %v2844 = vpop.f32.mrb[0].mxu0
    %v2845 = vadd.f32 0.0, %v2844
    %v2846 = vpop.f32.mrb[0].mxu0
    %2847 = vmatprep.mubr.f32.mxu0 0.0
    %2848 = vmatmul.mubr.f32.gmra.mrb[0].mxu0 %v2457
    %v2849 = vpop.f32.mrb[0].mxu0
    %v2850 = vadd.f32 0.0, %v2849
    %v2851 = vpop.f32.mrb[0].mxu0
    %2852 = vmatprep.mubr.f32.mxu0 0.0
    %2853 = vmatmul.mubr.f32.gmra.mrb[0].mxu0 %v2530
    %v2854 = vpop.f32.mrb[0].mxu0
    %v2855 = vadd.f32 0.0, %v2854
    %v2856 = vpop.f32.mrb[0].mxu0
    %2857 = vmatprep.mubr.f32.mxu0 0.0
    %2858 = vmatmul.mubr.f32.gmra.mrb[0].mxu0 %v2603
    %v2859 = vpop.f32.mrb[0].mxu0
    %v2860 = vadd.f32 0.0, %v2859
    %v2861 = vpop.f32.mrb[0].mxu0
    %2862 = vmatprep.mubr.f32.mxu0 0.0
    %2863 = vmatmul.mubr.f32.gmra.mrb[0].mxu0 %v2676
    %v2864 = vpop.f32.mrb[0].mxu0
    %v2865 = vadd.f32 0.0, %v2864
    %v2866 = vpop.f32.mrb[0].mxu0
    %2867 = vmatprep.mubr.f32.mxu0 0.0
    %2868 = vmatmul.mubr.f32.gmra.mrb[0].mxu0 %v2749
    %v2869 = vpop.f32.mrb[0].mxu0
    %v2870 = vadd.f32 0.0, %v2869
    %v2871 = vpop.f32.mrb[0].mxu0
    %2872 = vdwg.mxu0
    %v2873 = vadd.f32 %v1503, %v2835
    %v2874 = vadd.f32 %v1504, %v2840
    %v2875 = vadd.f32 %v1505, %v2845
    %v2876 = vadd.f32 %v1506, %v2850
    %v2877 = vadd.f32 %v1507, %v2855
    %v2878 = vadd.f32 %v1508, %v2860
    %v2879 = vadd.f32 %v1509, %v2865
    %v2880 = vadd.f32 %v1510, %v2870
    %2881 = vmatprep.subr.mxu0 0.0
    %2882 = vmatpush1.xpose.msra.mxu0 %v1116
    %2883 = vmatprep.subr.mxu0 0.0
    %2884 = vmatpush1.xpose.msra.mxu0 0.0
    %2885 = vmatprep.subr.mxu0 0.0
    %2886 = vmatpush1.xpose.msra.mxu0 0.0
    %2887 = vmatprep.subr.mxu0 0.0
    %2888 = vmatpush1.xpose.msra.mxu0 0.0
    %2889 = vmatprep.subr.mxu0 0.0
    %2890 = vmatpush1.xpose.msra.mxu0 0.0
    %2891 = vmatprep.subr.mxu0 0.0
    %2892 = vmatpush1.xpose.msra.mxu0 0.0
    %2893 = vmatprep.subr.mxu0 0.0
    %2894 = vmatpush1.xpose.msra.mxu0 0.0
    %2895 = vmatprep.subr.mxu0 0.0
    %2896 = vmatpush1.xpose.msra.mxu0 0.0
    %2897 = vmatprep.subr.mxu0 0.0
    %2898 = vmatpush1.xpose.msra.mxu0 0.0
    %2899 = vmatprep.subr.mxu0 0.0
    %2900 = vmatpush1.xpose.msra.mxu0 0.0
    %2901 = vmatprep.subr.mxu0 0.0
    %2902 = vmatpush1.xpose.msra.mxu0 0.0
    %2903 = vmatprep.subr.mxu0 0.0
    %2904 = vmatpush1.xpose.msra.mxu0 0.0
    %2905 = vmatprep.subr.mxu0 0.0
    %2906 = vmatpush1.xpose.msra.mxu0 0.0
    %2907 = vmatprep.subr.mxu0 0.0
    %2908 = vmatpush1.xpose.msra.mxu0 0.0
    %2909 = vmatprep.subr.mxu0 0.0
    %2910 = vmatpush1.xpose.msra.mxu0 0.0
    %2911 = vmatprep.subr.mxu0 0.0
    %2912 = vmatpush1.xpose.msra.mxu0 0.0
    %2913 = vmatprep.subr.mxu0 0.0
    %2914 = vmatpush1.xpose.msra.mxu0 0.0
    %2915 = vmatprep.subr.mxu0 0.0
    %2916 = vmatpush1.xpose.msra.mxu0 0.0
    %2917 = vmatprep.subr.mxu0 0.0
    %2918 = vmatpush1.xpose.msra.mxu0 0.0
    %2919 = vmatprep.subr.mxu0 0.0
    %2920 = vmatpush1.xpose.msra.mxu0 0.0
    %2921 = vmatprep.subr.mxu0 0.0
    %2922 = vmatpush1.xpose.msra.mxu0 0.0
    %2923 = vmatprep.subr.mxu0 0.0
    %2924 = vmatpush1.xpose.msra.mxu0 0.0
    %2925 = vmatprep.subr.mxu0 0.0
    %2926 = vmatpush1.xpose.msra.mxu0 0.0
    %2927 = vmatprep.subr.mxu0 0.0
    %2928 = vmatpush1.xpose.msra.mxu0 0.0
    %2929 = vmatprep.subr.mxu0 0.0
    %2930 = vmatpush1.xpose.msra.mxu0 0.0
    %2931 = vmatprep.subr.mxu0 0.0
    %2932 = vmatpush1.xpose.msra.mxu0 0.0
    %2933 = vmatprep.subr.mxu0 0.0
    %2934 = vmatpush1.xpose.msra.mxu0 0.0
    %2935 = vmatprep.subr.mxu0 0.0
    %2936 = vmatpush1.xpose.msra.mxu0 0.0
    %2937 = vmatprep.subr.mxu0 0.0
    %2938 = vmatpush1.xpose.msra.mxu0 0.0
    %2939 = vmatprep.subr.mxu0 0.0
    %2940 = vmatpush1.xpose.msra.mxu0 0.0
    %2941 = vmatprep.subr.mxu0 0.0
    %2942 = vmatpush1.xpose.msra.mxu0 0.0
    %2943 = vmatprep.subr.mxu0 0.0
    %2944 = vmatpush1.xpose.msra.mxu0 0.0
    %2945 = vmatprep.mubr.f32.mxu0 0.0
    %2946 = vmatmul.mubr.f32.gmra.mrb[0].mxu0 %v890
    %v2947 = vpop.f32.mrb[0].mxu0
    %v2948 = vadd.f32 0.0, %v2947
    %v2949 = vpop.f32.mrb[0].mxu0
    %2950 = vdwg.mxu0
    %2951 = vmatprep.subr.mxu0 0.0
    %2952 = vmatpush1.xpose.msra.mxu0 %v1122
    %2953 = vmatprep.subr.mxu0 0.0
    %2954 = vmatpush1.xpose.msra.mxu0 0.0
    %2955 = vmatprep.subr.mxu0 0.0
    %2956 = vmatpush1.xpose.msra.mxu0 0.0
    %2957 = vmatprep.subr.mxu0 0.0
    %2958 = vmatpush1.xpose.msra.mxu0 0.0
    %2959 = vmatprep.subr.mxu0 0.0
    %2960 = vmatpush1.xpose.msra.mxu0 0.0
    %2961 = vmatprep.subr.mxu0 0.0
    %2962 = vmatpush1.xpose.msra.mxu0 0.0
    %2963 = vmatprep.subr.mxu0 0.0
    %2964 = vmatpush1.xpose.msra.mxu0 0.0
    %2965 = vmatprep.subr.mxu0 0.0
    %2966 = vmatpush1.xpose.msra.mxu0 0.0
    %2967 = vmatprep.subr.mxu0 0.0
    %2968 = vmatpush1.xpose.msra.mxu0 0.0
    %2969 = vmatprep.subr.mxu0 0.0
    %2970 = vmatpush1.xpose.msra.mxu0 0.0
    %2971 = vmatprep.subr.mxu0 0.0
    %2972 = vmatpush1.xpose.msra.mxu0 0.0
    %2973 = vmatprep.subr.mxu0 0.0
    %2974 = vmatpush1.xpose.msra.mxu0 0.0
    %2975 = vmatprep.subr.mxu0 0.0
    %2976 = vmatpush1.xpose.msra.mxu0 0.0
    %2977 = vmatprep.subr.mxu0 0.0
    %2978 = vmatpush1.xpose.msra.mxu0 0.0
    %2979 = vmatprep.subr.mxu0 0.0
    %2980 = vmatpush1.xpose.msra.mxu0 0.0
    %2981 = vmatprep.subr.mxu0 0.0
    %2982 = vmatpush1.xpose.msra.mxu0 0.0
    %2983 = vmatprep.subr.mxu0 0.0
    %2984 = vmatpush1.xpose.msra.mxu0 0.0
    %2985 = vmatprep.subr.mxu0 0.0
    %2986 = vmatpush1.xpose.msra.mxu0 0.0
    %2987 = vmatprep.subr.mxu0 0.0
    %2988 = vmatpush1.xpose.msra.mxu0 0.0
    %2989 = vmatprep.subr.mxu0 0.0
    %2990 = vmatpush1.xpose.msra.mxu0 0.0
    %2991 = vmatprep.subr.mxu0 0.0
    %2992 = vmatpush1.xpose.msra.mxu0 0.0
    %2993 = vmatprep.subr.mxu0 0.0
    %2994 = vmatpush1.xpose.msra.mxu0 0.0
    %2995 = vmatprep.subr.mxu0 0.0
    %2996 = vmatpush1.xpose.msra.mxu0 0.0
    %2997 = vmatprep.subr.mxu0 0.0
    %2998 = vmatpush1.xpose.msra.mxu0 0.0
    %2999 = vmatprep.subr.mxu0 0.0
    %3000 = vmatpush1.xpose.msra.mxu0 0.0
    %3001 = vmatprep.subr.mxu0 0.0
    %3002 = vmatpush1.xpose.msra.mxu0 0.0
    %3003 = vmatprep.subr.mxu0 0.0
    %3004 = vmatpush1.xpose.msra.mxu0 0.0
    %3005 = vmatprep.subr.mxu0 0.0
    %3006 = vmatpush1.xpose.msra.mxu0 0.0
    %3007 = vmatprep.subr.mxu0 0.0
    %3008 = vmatpush1.xpose.msra.mxu0 0.0
    %3009 = vmatprep.subr.mxu0 0.0
    %3010 = vmatpush1.xpose.msra.mxu0 0.0
    %3011 = vmatprep.subr.mxu0 0.0
    %3012 = vmatpush1.xpose.msra.mxu0 0.0
    %3013 = vmatprep.subr.mxu0 0.0
    %3014 = vmatpush1.xpose.msra.mxu0 0.0
    %3015 = vmatprep.mubr.f32.mxu0 0.0
    %3016 = vmatmul.mubr.f32.gmra.mrb[0].mxu0 %v896
    %v3017 = vpop.f32.mrb[0].mxu0
    %v3018 = vadd.f32 0.0, %v3017
    %v3019 = vpop.f32.mrb[0].mxu0
    %3020 = vdwg.mxu0
    %3021 = vmatprep.subr.mxu0 0.0
    %3022 = vmatpush1.xpose.msra.mxu0 %v1128
    %3023 = vmatprep.subr.mxu0 0.0
    %3024 = vmatpush1.xpose.msra.mxu0 0.0
    %3025 = vmatprep.subr.mxu0 0.0
    %3026 = vmatpush1.xpose.msra.mxu0 0.0
    %3027 = vmatprep.subr.mxu0 0.0
    %3028 = vmatpush1.xpose.msra.mxu0 0.0
    %3029 = vmatprep.subr.mxu0 0.0
    %3030 = vmatpush1.xpose.msra.mxu0 0.0
    %3031 = vmatprep.subr.mxu0 0.0
    %3032 = vmatpush1.xpose.msra.mxu0 0.0
    %3033 = vmatprep.subr.mxu0 0.0
    %3034 = vmatpush1.xpose.msra.mxu0 0.0
    %3035 = vmatprep.subr.mxu0 0.0
    %3036 = vmatpush1.xpose.msra.mxu0 0.0
    %3037 = vmatprep.subr.mxu0 0.0
    %3038 = vmatpush1.xpose.msra.mxu0 0.0
    %3039 = vmatprep.subr.mxu0 0.0
    %3040 = vmatpush1.xpose.msra.mxu0 0.0
    %3041 = vmatprep.subr.mxu0 0.0
    %3042 = vmatpush1.xpose.msra.mxu0 0.0
    %3043 = vmatprep.subr.mxu0 0.0
    %3044 = vmatpush1.xpose.msra.mxu0 0.0
    %3045 = vmatprep.subr.mxu0 0.0
    %3046 = vmatpush1.xpose.msra.mxu0 0.0
    %3047 = vmatprep.subr.mxu0 0.0
    %3048 = vmatpush1.xpose.msra.mxu0 0.0
    %3049 = vmatprep.subr.mxu0 0.0
    %3050 = vmatpush1.xpose.msra.mxu0 0.0
    %3051 = vmatprep.subr.mxu0 0.0
    %3052 = vmatpush1.xpose.msra.mxu0 0.0
    %3053 = vmatprep.subr.mxu0 0.0
    %3054 = vmatpush1.xpose.msra.mxu0 0.0
    %3055 = vmatprep.subr.mxu0 0.0
    %3056 = vmatpush1.xpose.msra.mxu0 0.0
    %3057 = vmatprep.subr.mxu0 0.0
    %3058 = vmatpush1.xpose.msra.mxu0 0.0
    %3059 = vmatprep.subr.mxu0 0.0
    %3060 = vmatpush1.xpose.msra.mxu0 0.0
    %3061 = vmatprep.subr.mxu0 0.0
    %3062 = vmatpush1.xpose.msra.mxu0 0.0
    %3063 = vmatprep.subr.mxu0 0.0
    %3064 = vmatpush1.xpose.msra.mxu0 0.0
    %3065 = vmatprep.subr.mxu0 0.0
    %3066 = vmatpush1.xpose.msra.mxu0 0.0
    %3067 = vmatprep.subr.mxu0 0.0
    %3068 = vmatpush1.xpose.msra.mxu0 0.0
    %3069 = vmatprep.subr.mxu0 0.0
    %3070 = vmatpush1.xpose.msra.mxu0 0.0
    %3071 = vmatprep.subr.mxu0 0.0
    %3072 = vmatpush1.xpose.msra.mxu0 0.0
    %3073 = vmatprep.subr.mxu0 0.0
    %3074 = vmatpush1.xpose.msra.mxu0 0.0
    %3075 = vmatprep.subr.mxu0 0.0
    %3076 = vmatpush1.xpose.msra.mxu0 0.0
    %3077 = vmatprep.subr.mxu0 0.0
    %3078 = vmatpush1.xpose.msra.mxu0 0.0
    %3079 = vmatprep.subr.mxu0 0.0
    %3080 = vmatpush1.xpose.msra.mxu0 0.0
    %3081 = vmatprep.subr.mxu0 0.0
    %3082 = vmatpush1.xpose.msra.mxu0 0.0
    %3083 = vmatprep.subr.mxu0 0.0
    %3084 = vmatpush1.xpose.msra.mxu0 0.0
    %3085 = vmatprep.mubr.f32.mxu0 0.0
    %3086 = vmatmul.mubr.f32.gmra.mrb[0].mxu0 %v902
    %v3087 = vpop.f32.mrb[0].mxu0
    %v3088 = vadd.f32 0.0, %v3087
    %v3089 = vpop.f32.mrb[0].mxu0
    %3090 = vdwg.mxu0
    %3091 = vmatprep.subr.mxu0 0.0
    %3092 = vmatpush1.xpose.msra.mxu0 %v1134
    %3093 = vmatprep.subr.mxu0 0.0
    %3094 = vmatpush1.xpose.msra.mxu0 0.0
    %3095 = vmatprep.subr.mxu0 0.0
    %3096 = vmatpush1.xpose.msra.mxu0 0.0
    %3097 = vmatprep.subr.mxu0 0.0
    %3098 = vmatpush1.xpose.msra.mxu0 0.0
    %3099 = vmatprep.subr.mxu0 0.0
    %3100 = vmatpush1.xpose.msra.mxu0 0.0
    %3101 = vmatprep.subr.mxu0 0.0
    %3102 = vmatpush1.xpose.msra.mxu0 0.0
    %3103 = vmatprep.subr.mxu0 0.0
    %3104 = vmatpush1.xpose.msra.mxu0 0.0
    %3105 = vmatprep.subr.mxu0 0.0
    %3106 = vmatpush1.xpose.msra.mxu0 0.0
    %3107 = vmatprep.subr.mxu0 0.0
    %3108 = vmatpush1.xpose.msra.mxu0 0.0
    %3109 = vmatprep.subr.mxu0 0.0
    %3110 = vmatpush1.xpose.msra.mxu0 0.0
    %3111 = vmatprep.subr.mxu0 0.0
    %3112 = vmatpush1.xpose.msra.mxu0 0.0
    %3113 = vmatprep.subr.mxu0 0.0
    %3114 = vmatpush1.xpose.msra.mxu0 0.0
    %3115 = vmatprep.subr.mxu0 0.0
    %3116 = vmatpush1.xpose.msra.mxu0 0.0
    %3117 = vmatprep.subr.mxu0 0.0
    %3118 = vmatpush1.xpose.msra.mxu0 0.0
    %3119 = vmatprep.subr.mxu0 0.0
    %3120 = vmatpush1.xpose.msra.mxu0 0.0
    %3121 = vmatprep.subr.mxu0 0.0
    %3122 = vmatpush1.xpose.msra.mxu0 0.0
    %3123 = vmatprep.subr.mxu0 0.0
    %3124 = vmatpush1.xpose.msra.mxu0 0.0
    %3125 = vmatprep.subr.mxu0 0.0
    %3126 = vmatpush1.xpose.msra.mxu0 0.0
    %3127 = vmatprep.subr.mxu0 0.0
    %3128 = vmatpush1.xpose.msra.mxu0 0.0
    %3129 = vmatprep.subr.mxu0 0.0
    %3130 = vmatpush1.xpose.msra.mxu0 0.0
    %3131 = vmatprep.subr.mxu0 0.0
    %3132 = vmatpush1.xpose.msra.mxu0 0.0
    %3133 = vmatprep.subr.mxu0 0.0
    %3134 = vmatpush1.xpose.msra.mxu0 0.0
    %3135 = vmatprep.subr.mxu0 0.0
    %3136 = vmatpush1.xpose.msra.mxu0 0.0
    %3137 = vmatprep.subr.mxu0 0.0
    %3138 = vmatpush1.xpose.msra.mxu0 0.0
    %3139 = vmatprep.subr.mxu0 0.0
    %3140 = vmatpush1.xpose.msra.mxu0 0.0
    %3141 = vmatprep.subr.mxu0 0.0
    %3142 = vmatpush1.xpose.msra.mxu0 0.0
    %3143 = vmatprep.subr.mxu0 0.0
    %3144 = vmatpush1.xpose.msra.mxu0 0.0
    %3145 = vmatprep.subr.mxu0 0.0
    %3146 = vmatpush1.xpose.msra.mxu0 0.0
    %3147 = vmatprep.subr.mxu0 0.0
    %3148 = vmatpush1.xpose.msra.mxu0 0.0
    %3149 = vmatprep.subr.mxu0 0.0
    %3150 = vmatpush1.xpose.msra.mxu0 0.0
    %3151 = vmatprep.subr.mxu0 0.0
    %3152 = vmatpush1.xpose.msra.mxu0 0.0
    %3153 = vmatprep.subr.mxu0 0.0
    %3154 = vmatpush1.xpose.msra.mxu0 0.0
    %3155 = vmatprep.mubr.f32.mxu0 0.0
    %3156 = vmatmul.mubr.f32.gmra.mrb[0].mxu0 %v908
    %v3157 = vpop.f32.mrb[0].mxu0
    %v3158 = vadd.f32 0.0, %v3157
    %v3159 = vpop.f32.mrb[0].mxu0
    %3160 = vdwg.mxu0
    %3161 = vmatprep.subr.mxu0 0.0
    %3162 = vmatpush1.xpose.msra.mxu0 %v1140
    %3163 = vmatprep.subr.mxu0 0.0
    %3164 = vmatpush1.xpose.msra.mxu0 0.0
    %3165 = vmatprep.subr.mxu0 0.0
    %3166 = vmatpush1.xpose.msra.mxu0 0.0
    %3167 = vmatprep.subr.mxu0 0.0
    %3168 = vmatpush1.xpose.msra.mxu0 0.0
    %3169 = vmatprep.subr.mxu0 0.0
    %3170 = vmatpush1.xpose.msra.mxu0 0.0
    %3171 = vmatprep.subr.mxu0 0.0
    %3172 = vmatpush1.xpose.msra.mxu0 0.0
    %3173 = vmatprep.subr.mxu0 0.0
    %3174 = vmatpush1.xpose.msra.mxu0 0.0
    %3175 = vmatprep.subr.mxu0 0.0
    %3176 = vmatpush1.xpose.msra.mxu0 0.0
    %3177 = vmatprep.subr.mxu0 0.0
    %3178 = vmatpush1.xpose.msra.mxu0 0.0
    %3179 = vmatprep.subr.mxu0 0.0
    %3180 = vmatpush1.xpose.msra.mxu0 0.0
    %3181 = vmatprep.subr.mxu0 0.0
    %3182 = vmatpush1.xpose.msra.mxu0 0.0
    %3183 = vmatprep.subr.mxu0 0.0
    %3184 = vmatpush1.xpose.msra.mxu0 0.0
    %3185 = vmatprep.subr.mxu0 0.0
    %3186 = vmatpush1.xpose.msra.mxu0 0.0
    %3187 = vmatprep.subr.mxu0 0.0
    %3188 = vmatpush1.xpose.msra.mxu0 0.0
    %3189 = vmatprep.subr.mxu0 0.0
    %3190 = vmatpush1.xpose.msra.mxu0 0.0
    %3191 = vmatprep.subr.mxu0 0.0
    %3192 = vmatpush1.xpose.msra.mxu0 0.0
    %3193 = vmatprep.subr.mxu0 0.0
    %3194 = vmatpush1.xpose.msra.mxu0 0.0
    %3195 = vmatprep.subr.mxu0 0.0
    %3196 = vmatpush1.xpose.msra.mxu0 0.0
    %3197 = vmatprep.subr.mxu0 0.0
    %3198 = vmatpush1.xpose.msra.mxu0 0.0
    %3199 = vmatprep.subr.mxu0 0.0
    %3200 = vmatpush1.xpose.msra.mxu0 0.0
    %3201 = vmatprep.subr.mxu0 0.0
    %3202 = vmatpush1.xpose.msra.mxu0 0.0
    %3203 = vmatprep.subr.mxu0 0.0
    %3204 = vmatpush1.xpose.msra.mxu0 0.0
    %3205 = vmatprep.subr.mxu0 0.0
    %3206 = vmatpush1.xpose.msra.mxu0 0.0
    %3207 = vmatprep.subr.mxu0 0.0
    %3208 = vmatpush1.xpose.msra.mxu0 0.0
    %3209 = vmatprep.subr.mxu0 0.0
    %3210 = vmatpush1.xpose.msra.mxu0 0.0
    %3211 = vmatprep.subr.mxu0 0.0
    %3212 = vmatpush1.xpose.msra.mxu0 0.0
    %3213 = vmatprep.subr.mxu0 0.0
    %3214 = vmatpush1.xpose.msra.mxu0 0.0
    %3215 = vmatprep.subr.mxu0 0.0
    %3216 = vmatpush1.xpose.msra.mxu0 0.0
    %3217 = vmatprep.subr.mxu0 0.0
    %3218 = vmatpush1.xpose.msra.mxu0 0.0
    %3219 = vmatprep.subr.mxu0 0.0
    %3220 = vmatpush1.xpose.msra.mxu0 0.0
    %3221 = vmatprep.subr.mxu0 0.0
    %3222 = vmatpush1.xpose.msra.mxu0 0.0
    %3223 = vmatprep.subr.mxu0 0.0
    %3224 = vmatpush1.xpose.msra.mxu0 0.0
    %3225 = vmatprep.mubr.f32.mxu0 0.0
    %3226 = vmatmul.mubr.f32.gmra.mrb[0].mxu0 %v914
    %v3227 = vpop.f32.mrb[0].mxu0
    %v3228 = vadd.f32 0.0, %v3227
    %v3229 = vpop.f32.mrb[0].mxu0
    %3230 = vdwg.mxu0
    %3231 = vmatprep.subr.mxu0 0.0
    %3232 = vmatpush1.xpose.msra.mxu0 %v1146
    %3233 = vmatprep.subr.mxu0 0.0
    %3234 = vmatpush1.xpose.msra.mxu0 0.0
    %3235 = vmatprep.subr.mxu0 0.0
    %3236 = vmatpush1.xpose.msra.mxu0 0.0
    %3237 = vmatprep.subr.mxu0 0.0
    %3238 = vmatpush1.xpose.msra.mxu0 0.0
    %3239 = vmatprep.subr.mxu0 0.0
    %3240 = vmatpush1.xpose.msra.mxu0 0.0
    %3241 = vmatprep.subr.mxu0 0.0
    %3242 = vmatpush1.xpose.msra.mxu0 0.0
    %3243 = vmatprep.subr.mxu0 0.0
    %3244 = vmatpush1.xpose.msra.mxu0 0.0
    %3245 = vmatprep.subr.mxu0 0.0
    %3246 = vmatpush1.xpose.msra.mxu0 0.0
    %3247 = vmatprep.subr.mxu0 0.0
    %3248 = vmatpush1.xpose.msra.mxu0 0.0
    %3249 = vmatprep.subr.mxu0 0.0
    %3250 = vmatpush1.xpose.msra.mxu0 0.0
    %3251 = vmatprep.subr.mxu0 0.0
    %3252 = vmatpush1.xpose.msra.mxu0 0.0
    %3253 = vmatprep.subr.mxu0 0.0
    %3254 = vmatpush1.xpose.msra.mxu0 0.0
    %3255 = vmatprep.subr.mxu0 0.0
    %3256 = vmatpush1.xpose.msra.mxu0 0.0
    %3257 = vmatprep.subr.mxu0 0.0
    %3258 = vmatpush1.xpose.msra.mxu0 0.0
    %3259 = vmatprep.subr.mxu0 0.0
    %3260 = vmatpush1.xpose.msra.mxu0 0.0
    %3261 = vmatprep.subr.mxu0 0.0
    %3262 = vmatpush1.xpose.msra.mxu0 0.0
    %3263 = vmatprep.subr.mxu0 0.0
    %3264 = vmatpush1.xpose.msra.mxu0 0.0
    %3265 = vmatprep.subr.mxu0 0.0
    %3266 = vmatpush1.xpose.msra.mxu0 0.0
    %3267 = vmatprep.subr.mxu0 0.0
    %3268 = vmatpush1.xpose.msra.mxu0 0.0
    %3269 = vmatprep.subr.mxu0 0.0
    %3270 = vmatpush1.xpose.msra.mxu0 0.0
    %3271 = vmatprep.subr.mxu0 0.0
    %3272 = vmatpush1.xpose.msra.mxu0 0.0
    %3273 = vmatprep.subr.mxu0 0.0
    %3274 = vmatpush1.xpose.msra.mxu0 0.0
    %3275 = vmatprep.subr.mxu0 0.0
    %3276 = vmatpush1.xpose.msra.mxu0 0.0
    %3277 = vmatprep.subr.mxu0 0.0
    %3278 = vmatpush1.xpose.msra.mxu0 0.0
    %3279 = vmatprep.subr.mxu0 0.0
    %3280 = vmatpush1.xpose.msra.mxu0 0.0
    %3281 = vmatprep.subr.mxu0 0.0
    %3282 = vmatpush1.xpose.msra.mxu0 0.0
    %3283 = vmatprep.subr.mxu0 0.0
    %3284 = vmatpush1.xpose.msra.mxu0 0.0
    %3285 = vmatprep.subr.mxu0 0.0
    %3286 = vmatpush1.xpose.msra.mxu0 0.0
    %3287 = vmatprep.subr.mxu0 0.0
    %3288 = vmatpush1.xpose.msra.mxu0 0.0
    %3289 = vmatprep.subr.mxu0 0.0
    %3290 = vmatpush1.xpose.msra.mxu0 0.0
    %3291 = vmatprep.subr.mxu0 0.0
    %3292 = vmatpush1.xpose.msra.mxu0 0.0
    %3293 = vmatprep.subr.mxu0 0.0
    %3294 = vmatpush1.xpose.msra.mxu0 0.0
    %3295 = vmatprep.mubr.f32.mxu0 0.0
    %3296 = vmatmul.mubr.f32.gmra.mrb[0].mxu0 %v920
    %v3297 = vpop.f32.mrb[0].mxu0
    %v3298 = vadd.f32 0.0, %v3297
    %v3299 = vpop.f32.mrb[0].mxu0
    %3300 = vdwg.mxu0
    %3301 = vmatprep.subr.mxu0 0.0
    %3302 = vmatpush1.xpose.msra.mxu0 %v1152
    %3303 = vmatprep.subr.mxu0 0.0
    %3304 = vmatpush1.xpose.msra.mxu0 0.0
    %3305 = vmatprep.subr.mxu0 0.0
    %3306 = vmatpush1.xpose.msra.mxu0 0.0
    %3307 = vmatprep.subr.mxu0 0.0
    %3308 = vmatpush1.xpose.msra.mxu0 0.0
    %3309 = vmatprep.subr.mxu0 0.0
    %3310 = vmatpush1.xpose.msra.mxu0 0.0
    %3311 = vmatprep.subr.mxu0 0.0
    %3312 = vmatpush1.xpose.msra.mxu0 0.0
    %3313 = vmatprep.subr.mxu0 0.0
    %3314 = vmatpush1.xpose.msra.mxu0 0.0
    %3315 = vmatprep.subr.mxu0 0.0
    %3316 = vmatpush1.xpose.msra.mxu0 0.0
    %3317 = vmatprep.subr.mxu0 0.0
    %3318 = vmatpush1.xpose.msra.mxu0 0.0
    %3319 = vmatprep.subr.mxu0 0.0
    %3320 = vmatpush1.xpose.msra.mxu0 0.0
    %3321 = vmatprep.subr.mxu0 0.0
    %3322 = vmatpush1.xpose.msra.mxu0 0.0
    %3323 = vmatprep.subr.mxu0 0.0
    %3324 = vmatpush1.xpose.msra.mxu0 0.0
    %3325 = vmatprep.subr.mxu0 0.0
    %3326 = vmatpush1.xpose.msra.mxu0 0.0
    %3327 = vmatprep.subr.mxu0 0.0
    %3328 = vmatpush1.xpose.msra.mxu0 0.0
    %3329 = vmatprep.subr.mxu0 0.0
    %3330 = vmatpush1.xpose.msra.mxu0 0.0
    %3331 = vmatprep.subr.mxu0 0.0
    %3332 = vmatpush1.xpose.msra.mxu0 0.0
    %3333 = vmatprep.subr.mxu0 0.0
    %3334 = vmatpush1.xpose.msra.mxu0 0.0
    %3335 = vmatprep.subr.mxu0 0.0
    %3336 = vmatpush1.xpose.msra.mxu0 0.0
    %3337 = vmatprep.subr.mxu0 0.0
    %3338 = vmatpush1.xpose.msra.mxu0 0.0
    %3339 = vmatprep.subr.mxu0 0.0
    %3340 = vmatpush1.xpose.msra.mxu0 0.0
    %3341 = vmatprep.subr.mxu0 0.0
    %3342 = vmatpush1.xpose.msra.mxu0 0.0
    %3343 = vmatprep.subr.mxu0 0.0
    %3344 = vmatpush1.xpose.msra.mxu0 0.0
    %3345 = vmatprep.subr.mxu0 0.0
    %3346 = vmatpush1.xpose.msra.mxu0 0.0
    %3347 = vmatprep.subr.mxu0 0.0
    %3348 = vmatpush1.xpose.msra.mxu0 0.0
    %3349 = vmatprep.subr.mxu0 0.0
    %3350 = vmatpush1.xpose.msra.mxu0 0.0
    %3351 = vmatprep.subr.mxu0 0.0
    %3352 = vmatpush1.xpose.msra.mxu0 0.0
    %3353 = vmatprep.subr.mxu0 0.0
    %3354 = vmatpush1.xpose.msra.mxu0 0.0
    %3355 = vmatprep.subr.mxu0 0.0
    %3356 = vmatpush1.xpose.msra.mxu0 0.0
    %3357 = vmatprep.subr.mxu0 0.0
    %3358 = vmatpush1.xpose.msra.mxu0 0.0
    %3359 = vmatprep.subr.mxu0 0.0
    %3360 = vmatpush1.xpose.msra.mxu0 0.0
    %3361 = vmatprep.subr.mxu0 0.0
    %3362 = vmatpush1.xpose.msra.mxu0 0.0
    %3363 = vmatprep.subr.mxu0 0.0
    %3364 = vmatpush1.xpose.msra.mxu0 0.0
    %3365 = vmatprep.mubr.f32.mxu0 0.0
    %3366 = vmatmul.mubr.f32.gmra.mrb[0].mxu0 %v926
    %v3367 = vpop.f32.mrb[0].mxu0
    %v3368 = vadd.f32 0.0, %v3367
    %v3369 = vpop.f32.mrb[0].mxu0
    %3370 = vdwg.mxu0
    %3371 = vmatprep.subr.mxu0 0.0
    %3372 = vmatpush1.xpose.msra.mxu0 %v1158
    %3373 = vmatprep.subr.mxu0 0.0
    %3374 = vmatpush1.xpose.msra.mxu0 0.0
    %3375 = vmatprep.subr.mxu0 0.0
    %3376 = vmatpush1.xpose.msra.mxu0 0.0
    %3377 = vmatprep.subr.mxu0 0.0
    %3378 = vmatpush1.xpose.msra.mxu0 0.0
    %3379 = vmatprep.subr.mxu0 0.0
    %3380 = vmatpush1.xpose.msra.mxu0 0.0
    %3381 = vmatprep.subr.mxu0 0.0
    %3382 = vmatpush1.xpose.msra.mxu0 0.0
    %3383 = vmatprep.subr.mxu0 0.0
    %3384 = vmatpush1.xpose.msra.mxu0 0.0
    %3385 = vmatprep.subr.mxu0 0.0
    %3386 = vmatpush1.xpose.msra.mxu0 0.0
    %3387 = vmatprep.subr.mxu0 0.0
    %3388 = vmatpush1.xpose.msra.mxu0 0.0
    %3389 = vmatprep.subr.mxu0 0.0
    %3390 = vmatpush1.xpose.msra.mxu0 0.0
    %3391 = vmatprep.subr.mxu0 0.0
    %3392 = vmatpush1.xpose.msra.mxu0 0.0
    %3393 = vmatprep.subr.mxu0 0.0
    %3394 = vmatpush1.xpose.msra.mxu0 0.0
    %3395 = vmatprep.subr.mxu0 0.0
    %3396 = vmatpush1.xpose.msra.mxu0 0.0
    %3397 = vmatprep.subr.mxu0 0.0
    %3398 = vmatpush1.xpose.msra.mxu0 0.0
    %3399 = vmatprep.subr.mxu0 0.0
    %3400 = vmatpush1.xpose.msra.mxu0 0.0
    %3401 = vmatprep.subr.mxu0 0.0
    %3402 = vmatpush1.xpose.msra.mxu0 0.0
    %3403 = vmatprep.subr.mxu0 0.0
    %3404 = vmatpush1.xpose.msra.mxu0 0.0
    %3405 = vmatprep.subr.mxu0 0.0
    %3406 = vmatpush1.xpose.msra.mxu0 0.0
    %3407 = vmatprep.subr.mxu0 0.0
    %3408 = vmatpush1.xpose.msra.mxu0 0.0
    %3409 = vmatprep.subr.mxu0 0.0
    %3410 = vmatpush1.xpose.msra.mxu0 0.0
    %3411 = vmatprep.subr.mxu0 0.0
    %3412 = vmatpush1.xpose.msra.mxu0 0.0
    %3413 = vmatprep.subr.mxu0 0.0
    %3414 = vmatpush1.xpose.msra.mxu0 0.0
    %3415 = vmatprep.subr.mxu0 0.0
    %3416 = vmatpush1.xpose.msra.mxu0 0.0
    %3417 = vmatprep.subr.mxu0 0.0
    %3418 = vmatpush1.xpose.msra.mxu0 0.0
    %3419 = vmatprep.subr.mxu0 0.0
    %3420 = vmatpush1.xpose.msra.mxu0 0.0
    %3421 = vmatprep.subr.mxu0 0.0
    %3422 = vmatpush1.xpose.msra.mxu0 0.0
    %3423 = vmatprep.subr.mxu0 0.0
    %3424 = vmatpush1.xpose.msra.mxu0 0.0
    %3425 = vmatprep.subr.mxu0 0.0
    %3426 = vmatpush1.xpose.msra.mxu0 0.0
    %3427 = vmatprep.subr.mxu0 0.0
    %3428 = vmatpush1.xpose.msra.mxu0 0.0
    %3429 = vmatprep.subr.mxu0 0.0
    %3430 = vmatpush1.xpose.msra.mxu0 0.0
    %3431 = vmatprep.subr.mxu0 0.0
    %3432 = vmatpush1.xpose.msra.mxu0 0.0
    %3433 = vmatprep.subr.mxu0 0.0
    %3434 = vmatpush1.xpose.msra.mxu0 0.0
    %3435 = vmatprep.mubr.f32.mxu0 0.0
    %3436 = vmatmul.mubr.f32.gmra.mrb[0].mxu0 %v932
    %v3437 = vpop.f32.mrb[0].mxu0
    %v3438 = vadd.f32 0.0, %v3437
    %v3439 = vpop.f32.mrb[0].mxu0
    %3440 = vdwg.mxu0
    %v3441 = vmul.f32 %v2948, 0.088388346
    %v3442 = vmul.f32 %v3018, 0.088388346
    %v3443 = vmul.f32 %v3088, 0.088388346
    %v3444 = vmul.f32 %v3158, 0.088388346
    %v3445 = vmul.f32 %v3228, 0.088388346
    %v3446 = vmul.f32 %v3298, 0.088388346
    %v3447 = vmul.f32 %v3368, 0.088388346
    %v3448 = vmul.f32 %v3438, 0.088388346
    %v3449 = vsel %vm2079, %v3441, -inf
    %3450 = vmax.xlane.f32.xlu0 %v3449
    %v3451 = vpop.xlane.xlu0 %3450
    %v3452 = vsel %vm2079, %v3442, -inf
    %3453 = vmax.xlane.f32.xlu0 %v3452
    %v3454 = vpop.xlane.xlu0 %3453
    %v3455 = vsel %vm2079, %v3443, -inf
    %3456 = vmax.xlane.f32.xlu0 %v3455
    %v3457 = vpop.xlane.xlu0 %3456
    %v3458 = vsel %vm2079, %v3444, -inf
    %3459 = vmax.xlane.f32.xlu0 %v3458
    %v3460 = vpop.xlane.xlu0 %3459
    %v3461 = vsel %vm2079, %v3445, -inf
    %3462 = vmax.xlane.f32.xlu0 %v3461
    %v3463 = vpop.xlane.xlu0 %3462
    %v3464 = vsel %vm2079, %v3446, -inf
    %3465 = vmax.xlane.f32.xlu0 %v3464
    %v3466 = vpop.xlane.xlu0 %3465
    %v3467 = vsel %vm2079, %v3447, -inf
    %3468 = vmax.xlane.f32.xlu0 %v3467
    %v3469 = vpop.xlane.xlu0 %3468
    %v3470 = vsel %vm2079, %v3448, -inf
    %3471 = vmax.xlane.f32.xlu0 %v3470
    %v3472 = vpop.xlane.xlu0 %3471
    %v3473 = vsub.f32 %v3441, %v3451
    %v3474 = vsub.f32 %v3442, %v3454
    %v3475 = vsub.f32 %v3443, %v3457
    %v3476 = vsub.f32 %v3444, %v3460
    %v3477 = vsub.f32 %v3445, %v3463
    %v3478 = vsub.f32 %v3446, %v3466
    %v3479 = vsub.f32 %v3447, %v3469
    %v3480 = vsub.f32 %v3448, %v3472
    %v3481 = vmul.f32 %v3473, 1.442695
    %v3482 = vpow.pop %v3481
    %v3483 = vmul.f32 %v3474, 1.442695
    %v3484 = vpow.pop %v3483
    %v3485 = vmul.f32 %v3475, 1.442695
    %v3486 = vpow.pop %v3485
    %v3487 = vmul.f32 %v3476, 1.442695
    %v3488 = vpow.pop %v3487
    %v3489 = vmul.f32 %v3477, 1.442695
    %v3490 = vpow.pop %v3489
    %v3491 = vmul.f32 %v3478, 1.442695
    %v3492 = vpow.pop %v3491
    %v3493 = vmul.f32 %v3479, 1.442695
    %v3494 = vpow.pop %v3493
    %v3495 = vmul.f32 %v3480, 1.442695
    %v3496 = vpow.pop %v3495
    %v3497 = vsel %vm2079, %v3482, 0.0
    %3498 = vadd.xlane.f32.xlu0 %v3497
    %v3499 = vpop.xlane.xlu0 %3498
    %v3500 = vsel %vm2079, %v3484, 0.0
    %3501 = vadd.xlane.f32.xlu0 %v3500
    %v3502 = vpop.xlane.xlu0 %3501
    %v3503 = vsel %vm2079, %v3486, 0.0
    %3504 = vadd.xlane.f32.xlu0 %v3503
    %v3505 = vpop.xlane.xlu0 %3504
    %v3506 = vsel %vm2079, %v3488, 0.0
    %3507 = vadd.xlane.f32.xlu0 %v3506
    %v3508 = vpop.xlane.xlu0 %3507
    %v3509 = vsel %vm2079, %v3490, 0.0
    %3510 = vadd.xlane.f32.xlu0 %v3509
    %v3511 = vpop.xlane.xlu0 %3510
    %v3512 = vsel %vm2079, %v3492, 0.0
    %3513 = vadd.xlane.f32.xlu0 %v3512
    %v3514 = vpop.xlane.xlu0 %3513
    %v3515 = vsel %vm2079, %v3494, 0.0
    %3516 = vadd.xlane.f32.xlu0 %v3515
    %v3517 = vpop.xlane.xlu0 %3516
    %v3518 = vsel %vm2079, %v3496, 0.0
    %3519 = vadd.xlane.f32.xlu0 %v3518
    %v3520 = vpop.xlane.xlu0 %3519
    %v3521 = vrcp.pop %v3499
    %v3522 = vrcp.pop %v3502
    %v3523 = vrcp.pop %v3505
    %v3524 = vrcp.pop %v3508
    %v3525 = vrcp.pop %v3511
    %v3526 = vrcp.pop %v3514
    %v3527 = vrcp.pop %v3517
    %v3528 = vrcp.pop %v3520
    %v3529 = vmul.f32 %v3482, %v3521
    %v3530 = vmul.f32 %v3484, %v3522
    %v3531 = vmul.f32 %v3486, %v3523
    %v3532 = vmul.f32 %v3488, %v3524
    %v3533 = vmul.f32 %v3490, %v3525
    %v3534 = vmul.f32 %v3492, %v3526
    %v3535 = vmul.f32 %v3494, %v3527
    %v3536 = vmul.f32 %v3496, %v3528
    %v3538 = vsel %vm2079, %v3529, 0
    %3540 = vmatprep.subr.mxu0 0.0
    %3541 = vmatpush1.msra.mxu0 %v1342
    %3542 = vmatprep.subr.mxu0 0.0
    %3543 = vmatpush1.msra.mxu0 0.0
    %3544 = vmatprep.subr.mxu0 0.0
    %3545 = vmatpush1.msra.mxu0 0.0
    %3546 = vmatprep.subr.mxu0 0.0
    %3547 = vmatpush1.msra.mxu0 0.0
    %3548 = vmatprep.subr.mxu0 0.0
    %3549 = vmatpush1.msra.mxu0 0.0
    %3550 = vmatprep.subr.mxu0 0.0
    %3551 = vmatpush1.msra.mxu0 0.0
    %3552 = vmatprep.subr.mxu0 0.0
    %3553 = vmatpush1.msra.mxu0 0.0
    %3554 = vmatprep.subr.mxu0 0.0
    %3555 = vmatpush1.msra.mxu0 0.0
    %3556 = vmatprep.subr.mxu0 0.0
    %3557 = vmatpush1.msra.mxu0 0.0
    %3558 = vmatprep.subr.mxu0 0.0
    %3559 = vmatpush1.msra.mxu0 0.0
    %3560 = vmatprep.subr.mxu0 0.0
    %3561 = vmatpush1.msra.mxu0 0.0
    %3562 = vmatprep.subr.mxu0 0.0
    %3563 = vmatpush1.msra.mxu0 0.0
    %3564 = vmatprep.subr.mxu0 0.0
    %3565 = vmatpush1.msra.mxu0 0.0
    %3566 = vmatprep.subr.mxu0 0.0
    %3567 = vmatpush1.msra.mxu0 0.0
    %3568 = vmatprep.subr.mxu0 0.0
    %3569 = vmatpush1.msra.mxu0 0.0
    %3570 = vmatprep.subr.mxu0 0.0
    %3571 = vmatpush1.msra.mxu0 0.0
    %3572 = vmatprep.subr.mxu0 0.0
    %3573 = vmatpush1.msra.mxu0 0.0
    %3574 = vmatprep.subr.mxu0 0.0
    %3575 = vmatpush1.msra.mxu0 0.0
    %3576 = vmatprep.subr.mxu0 0.0
    %3577 = vmatpush1.msra.mxu0 0.0
    %3578 = vmatprep.subr.mxu0 0.0
    %3579 = vmatpush1.msra.mxu0 0.0
    %3580 = vmatprep.subr.mxu0 0.0
    %3581 = vmatpush1.msra.mxu0 0.0
    %3582 = vmatprep.subr.mxu0 0.0
    %3583 = vmatpush1.msra.mxu0 0.0
    %3584 = vmatprep.subr.mxu0 0.0
    %3585 = vmatpush1.msra.mxu0 0.0
    %3586 = vmatprep.subr.mxu0 0.0
    %3587 = vmatpush1.msra.mxu0 0.0
    %3588 = vmatprep.subr.mxu0 0.0
    %3589 = vmatpush1.msra.mxu0 0.0
    %3590 = vmatprep.subr.mxu0 0.0
    %3591 = vmatpush1.msra.mxu0 0.0
    %3592 = vmatprep.subr.mxu0 0.0
    %3593 = vmatpush1.msra.mxu0 0.0
    %3594 = vmatprep.subr.mxu0 0.0
    %3595 = vmatpush1.msra.mxu0 0.0
    %3596 = vmatprep.subr.mxu0 0.0
    %3597 = vmatpush1.msra.mxu0 0.0
    %3598 = vmatprep.subr.mxu0 0.0
    %3599 = vmatpush1.msra.mxu0 0.0
    %3600 = vmatprep.subr.mxu0 0.0
    %3601 = vmatpush1.msra.mxu0 0.0
    %3602 = vmatprep.subr.mxu0 0.0
    %3603 = vmatpush1.msra.mxu0 0.0
    %3604 = vmatprep.mubr.f32.mxu0 0.0
    %3605 = vmatmul.mubr.f32.gmra.mrb[0].mxu0 %v3538
    %v3606 = vpop.f32.mrb[0].mxu0
    %v3607 = vadd.f32 0.0, %v3606
    %v3608 = vpop.f32.mrb[0].mxu0
    %3609 = vdwg.mxu0
    %v3611 = vsel %vm2079, %v3530, 0
    %3613 = vmatprep.subr.mxu0 0.0
    %3614 = vmatpush1.msra.mxu0 %v1348
    %3615 = vmatprep.subr.mxu0 0.0
    %3616 = vmatpush1.msra.mxu0 0.0
    %3617 = vmatprep.subr.mxu0 0.0
    %3618 = vmatpush1.msra.mxu0 0.0
    %3619 = vmatprep.subr.mxu0 0.0
    %3620 = vmatpush1.msra.mxu0 0.0
    %3621 = vmatprep.subr.mxu0 0.0
    %3622 = vmatpush1.msra.mxu0 0.0
    %3623 = vmatprep.subr.mxu0 0.0
    %3624 = vmatpush1.msra.mxu0 0.0
    %3625 = vmatprep.subr.mxu0 0.0
    %3626 = vmatpush1.msra.mxu0 0.0
    %3627 = vmatprep.subr.mxu0 0.0
    %3628 = vmatpush1.msra.mxu0 0.0
    %3629 = vmatprep.subr.mxu0 0.0
    %3630 = vmatpush1.msra.mxu0 0.0
    %3631 = vmatprep.subr.mxu0 0.0
    %3632 = vmatpush1.msra.mxu0 0.0
    %3633 = vmatprep.subr.mxu0 0.0
    %3634 = vmatpush1.msra.mxu0 0.0
    %3635 = vmatprep.subr.mxu0 0.0
    %3636 = vmatpush1.msra.mxu0 0.0
    %3637 = vmatprep.subr.mxu0 0.0
    %3638 = vmatpush1.msra.mxu0 0.0
    %3639 = vmatprep.subr.mxu0 0.0
    %3640 = vmatpush1.msra.mxu0 0.0
    %3641 = vmatprep.subr.mxu0 0.0
    %3642 = vmatpush1.msra.mxu0 0.0
    %3643 = vmatprep.subr.mxu0 0.0
    %3644 = vmatpush1.msra.mxu0 0.0
    %3645 = vmatprep.subr.mxu0 0.0
    %3646 = vmatpush1.msra.mxu0 0.0
    %3647 = vmatprep.subr.mxu0 0.0
    %3648 = vmatpush1.msra.mxu0 0.0
    %3649 = vmatprep.subr.mxu0 0.0
    %3650 = vmatpush1.msra.mxu0 0.0
    %3651 = vmatprep.subr.mxu0 0.0
    %3652 = vmatpush1.msra.mxu0 0.0
    %3653 = vmatprep.subr.mxu0 0.0
    %3654 = vmatpush1.msra.mxu0 0.0
    %3655 = vmatprep.subr.mxu0 0.0
    %3656 = vmatpush1.msra.mxu0 0.0
    %3657 = vmatprep.subr.mxu0 0.0
    %3658 = vmatpush1.msra.mxu0 0.0
    %3659 = vmatprep.subr.mxu0 0.0
    %3660 = vmatpush1.msra.mxu0 0.0
    %3661 = vmatprep.subr.mxu0 0.0
    %3662 = vmatpush1.msra.mxu0 0.0
    %3663 = vmatprep.subr.mxu0 0.0
    %3664 = vmatpush1.msra.mxu0 0.0
    %3665 = vmatprep.subr.mxu0 0.0
    %3666 = vmatpush1.msra.mxu0 0.0
    %3667 = vmatprep.subr.mxu0 0.0
    %3668 = vmatpush1.msra.mxu0 0.0
    %3669 = vmatprep.subr.mxu0 0.0
    %3670 = vmatpush1.msra.mxu0 0.0
    %3671 = vmatprep.subr.mxu0 0.0
    %3672 = vmatpush1.msra.mxu0 0.0
    %3673 = vmatprep.subr.mxu0 0.0
    %3674 = vmatpush1.msra.mxu0 0.0
    %3675 = vmatprep.subr.mxu0 0.0
    %3676 = vmatpush1.msra.mxu0 0.0
    %3677 = vmatprep.mubr.f32.mxu0 0.0
    %3678 = vmatmul.mubr.f32.gmra.mrb[0].mxu0 %v3611
    %v3679 = vpop.f32.mrb[0].mxu0
    %v3680 = vadd.f32 0.0, %v3679
    %v3681 = vpop.f32.mrb[0].mxu0
    %3682 = vdwg.mxu0
    %v3684 = vsel %vm2079, %v3531, 0
    %3686 = vmatprep.subr.mxu0 0.0
    %3687 = vmatpush1.msra.mxu0 %v1354
    %3688 = vmatprep.subr.mxu0 0.0
    %3689 = vmatpush1.msra.mxu0 0.0
    %3690 = vmatprep.subr.mxu0 0.0
    %3691 = vmatpush1.msra.mxu0 0.0
    %3692 = vmatprep.subr.mxu0 0.0
    %3693 = vmatpush1.msra.mxu0 0.0
    %3694 = vmatprep.subr.mxu0 0.0
    %3695 = vmatpush1.msra.mxu0 0.0
    %3696 = vmatprep.subr.mxu0 0.0
    %3697 = vmatpush1.msra.mxu0 0.0
    %3698 = vmatprep.subr.mxu0 0.0
    %3699 = vmatpush1.msra.mxu0 0.0
    %3700 = vmatprep.subr.mxu0 0.0
    %3701 = vmatpush1.msra.mxu0 0.0
    %3702 = vmatprep.subr.mxu0 0.0
    %3703 = vmatpush1.msra.mxu0 0.0
    %3704 = vmatprep.subr.mxu0 0.0
    %3705 = vmatpush1.msra.mxu0 0.0
    %3706 = vmatprep.subr.mxu0 0.0
    %3707 = vmatpush1.msra.mxu0 0.0
    %3708 = vmatprep.subr.mxu0 0.0
    %3709 = vmatpush1.msra.mxu0 0.0
    %3710 = vmatprep.subr.mxu0 0.0
    %3711 = vmatpush1.msra.mxu0 0.0
    %3712 = vmatprep.subr.mxu0 0.0
    %3713 = vmatpush1.msra.mxu0 0.0
    %3714 = vmatprep.subr.mxu0 0.0
    %3715 = vmatpush1.msra.mxu0 0.0
    %3716 = vmatprep.subr.mxu0 0.0
    %3717 = vmatpush1.msra.mxu0 0.0
    %3718 = vmatprep.subr.mxu0 0.0
    %3719 = vmatpush1.msra.mxu0 0.0
    %3720 = vmatprep.subr.mxu0 0.0
    %3721 = vmatpush1.msra.mxu0 0.0
    %3722 = vmatprep.subr.mxu0 0.0
    %3723 = vmatpush1.msra.mxu0 0.0
    %3724 = vmatprep.subr.mxu0 0.0
    %3725 = vmatpush1.msra.mxu0 0.0
    %3726 = vmatprep.subr.mxu0 0.0
    %3727 = vmatpush1.msra.mxu0 0.0
    %3728 = vmatprep.subr.mxu0 0.0
    %3729 = vmatpush1.msra.mxu0 0.0
    %3730 = vmatprep.subr.mxu0 0.0
    %3731 = vmatpush1.msra.mxu0 0.0
    %3732 = vmatprep.subr.mxu0 0.0
    %3733 = vmatpush1.msra.mxu0 0.0
    %3734 = vmatprep.subr.mxu0 0.0
    %3735 = vmatpush1.msra.mxu0 0.0
    %3736 = vmatprep.subr.mxu0 0.0
    %3737 = vmatpush1.msra.mxu0 0.0
    %3738 = vmatprep.subr.mxu0 0.0
    %3739 = vmatpush1.msra.mxu0 0.0
    %3740 = vmatprep.subr.mxu0 0.0
    %3741 = vmatpush1.msra.mxu0 0.0
    %3742 = vmatprep.subr.mxu0 0.0
    %3743 = vmatpush1.msra.mxu0 0.0
    %3744 = vmatprep.subr.mxu0 0.0
    %3745 = vmatpush1.msra.mxu0 0.0
    %3746 = vmatprep.subr.mxu0 0.0
    %3747 = vmatpush1.msra.mxu0 0.0
    %3748 = vmatprep.subr.mxu0 0.0
    %3749 = vmatpush1.msra.mxu0 0.0
    %3750 = vmatprep.mubr.f32.mxu0 0.0
    %3751 = vmatmul.mubr.f32.gmra.mrb[0].mxu0 %v3684
    %v3752 = vpop.f32.mrb[0].mxu0
    %v3753 = vadd.f32 0.0, %v3752
    %v3754 = vpop.f32.mrb[0].mxu0
    %3755 = vdwg.mxu0
    %v3757 = vsel %vm2079, %v3532, 0
    %3759 = vmatprep.subr.mxu0 0.0
    %3760 = vmatpush1.msra.mxu0 %v1360
    %3761 = vmatprep.subr.mxu0 0.0
    %3762 = vmatpush1.msra.mxu0 0.0
    %3763 = vmatprep.subr.mxu0 0.0
    %3764 = vmatpush1.msra.mxu0 0.0
    %3765 = vmatprep.subr.mxu0 0.0
    %3766 = vmatpush1.msra.mxu0 0.0
    %3767 = vmatprep.subr.mxu0 0.0
    %3768 = vmatpush1.msra.mxu0 0.0
    %3769 = vmatprep.subr.mxu0 0.0
    %3770 = vmatpush1.msra.mxu0 0.0
    %3771 = vmatprep.subr.mxu0 0.0
    %3772 = vmatpush1.msra.mxu0 0.0
    %3773 = vmatprep.subr.mxu0 0.0
    %3774 = vmatpush1.msra.mxu0 0.0
    %3775 = vmatprep.subr.mxu0 0.0
    %3776 = vmatpush1.msra.mxu0 0.0
    %3777 = vmatprep.subr.mxu0 0.0
    %3778 = vmatpush1.msra.mxu0 0.0
    %3779 = vmatprep.subr.mxu0 0.0
    %3780 = vmatpush1.msra.mxu0 0.0
    %3781 = vmatprep.subr.mxu0 0.0
    %3782 = vmatpush1.msra.mxu0 0.0
    %3783 = vmatprep.subr.mxu0 0.0
    %3784 = vmatpush1.msra.mxu0 0.0
    %3785 = vmatprep.subr.mxu0 0.0
    %3786 = vmatpush1.msra.mxu0 0.0
    %3787 = vmatprep.subr.mxu0 0.0
    %3788 = vmatpush1.msra.mxu0 0.0
    %3789 = vmatprep.subr.mxu0 0.0
    %3790 = vmatpush1.msra.mxu0 0.0
    %3791 = vmatprep.subr.mxu0 0.0
    %3792 = vmatpush1.msra.mxu0 0.0
    %3793 = vmatprep.subr.mxu0 0.0
    %3794 = vmatpush1.msra.mxu0 0.0
    %3795 = vmatprep.subr.mxu0 0.0
    %3796 = vmatpush1.msra.mxu0 0.0
    %3797 = vmatprep.subr.mxu0 0.0
    %3798 = vmatpush1.msra.mxu0 0.0
    %3799 = vmatprep.subr.mxu0 0.0
    %3800 = vmatpush1.msra.mxu0 0.0
    %3801 = vmatprep.subr.mxu0 0.0
    %3802 = vmatpush1.msra.mxu0 0.0
    %3803 = vmatprep.subr.mxu0 0.0
    %3804 = vmatpush1.msra.mxu0 0.0
    %3805 = vmatprep.subr.mxu0 0.0
    %3806 = vmatpush1.msra.mxu0 0.0
    %3807 = vmatprep.subr.mxu0 0.0
    %3808 = vmatpush1.msra.mxu0 0.0
    %3809 = vmatprep.subr.mxu0 0.0
    %3810 = vmatpush1.msra.mxu0 0.0
    %3811 = vmatprep.subr.mxu0 0.0
    %3812 = vmatpush1.msra.mxu0 0.0
    %3813 = vmatprep.subr.mxu0 0.0
    %3814 = vmatpush1.msra.mxu0 0.0
    %3815 = vmatprep.subr.mxu0 0.0
    %3816 = vmatpush1.msra.mxu0 0.0
    %3817 = vmatprep.subr.mxu0 0.0
    %3818 = vmatpush1.msra.mxu0 0.0
    %3819 = vmatprep.subr.mxu0 0.0
    %3820 = vmatpush1.msra.mxu0 0.0
    %3821 = vmatprep.subr.mxu0 0.0
    %3822 = vmatpush1.msra.mxu0 0.0
    %3823 = vmatprep.mubr.f32.mxu0 0.0
    %3824 = vmatmul.mubr.f32.gmra.mrb[0].mxu0 %v3757
    %v3825 = vpop.f32.mrb[0].mxu0
    %v3826 = vadd.f32 0.0, %v3825
    %v3827 = vpop.f32.mrb[0].mxu0
    %3828 = vdwg.mxu0
    %v3830 = vsel %vm2079, %v3533, 0
    %3832 = vmatprep.subr.mxu0 0.0
    %3833 = vmatpush1.msra.mxu0 %v1366
    %3834 = vmatprep.subr.mxu0 0.0
    %3835 = vmatpush1.msra.mxu0 0.0
    %3836 = vmatprep.subr.mxu0 0.0
    %3837 = vmatpush1.msra.mxu0 0.0
    %3838 = vmatprep.subr.mxu0 0.0
    %3839 = vmatpush1.msra.mxu0 0.0
    %3840 = vmatprep.subr.mxu0 0.0
    %3841 = vmatpush1.msra.mxu0 0.0
    %3842 = vmatprep.subr.mxu0 0.0
    %3843 = vmatpush1.msra.mxu0 0.0
    %3844 = vmatprep.subr.mxu0 0.0
    %3845 = vmatpush1.msra.mxu0 0.0
    %3846 = vmatprep.subr.mxu0 0.0
    %3847 = vmatpush1.msra.mxu0 0.0
    %3848 = vmatprep.subr.mxu0 0.0
    %3849 = vmatpush1.msra.mxu0 0.0
    %3850 = vmatprep.subr.mxu0 0.0
    %3851 = vmatpush1.msra.mxu0 0.0
    %3852 = vmatprep.subr.mxu0 0.0
    %3853 = vmatpush1.msra.mxu0 0.0
    %3854 = vmatprep.subr.mxu0 0.0
    %3855 = vmatpush1.msra.mxu0 0.0
    %3856 = vmatprep.subr.mxu0 0.0
    %3857 = vmatpush1.msra.mxu0 0.0
    %3858 = vmatprep.subr.mxu0 0.0
    %3859 = vmatpush1.msra.mxu0 0.0
    %3860 = vmatprep.subr.mxu0 0.0
    %3861 = vmatpush1.msra.mxu0 0.0
    %3862 = vmatprep.subr.mxu0 0.0
    %3863 = vmatpush1.msra.mxu0 0.0
    %3864 = vmatprep.subr.mxu0 0.0
    %3865 = vmatpush1.msra.mxu0 0.0
    %3866 = vmatprep.subr.mxu0 0.0
    %3867 = vmatpush1.msra.mxu0 0.0
    %3868 = vmatprep.subr.mxu0 0.0
    %3869 = vmatpush1.msra.mxu0 0.0
    %3870 = vmatprep.subr.mxu0 0.0
    %3871 = vmatpush1.msra.mxu0 0.0
    %3872 = vmatprep.subr.mxu0 0.0
    %3873 = vmatpush1.msra.mxu0 0.0
    %3874 = vmatprep.subr.mxu0 0.0
    %3875 = vmatpush1.msra.mxu0 0.0
    %3876 = vmatprep.subr.mxu0 0.0
    %3877 = vmatpush1.msra.mxu0 0.0
    %3878 = vmatprep.subr.mxu0 0.0
    %3879 = vmatpush1.msra.mxu0 0.0
    %3880 = vmatprep.subr.mxu0 0.0
    %3881 = vmatpush1.msra.mxu0 0.0
    %3882 = vmatprep.subr.mxu0 0.0
    %3883 = vmatpush1.msra.mxu0 0.0
    %3884 = vmatprep.subr.mxu0 0.0
    %3885 = vmatpush1.msra.mxu0 0.0
    %3886 = vmatprep.subr.mxu0 0.0
    %3887 = vmatpush1.msra.mxu0 0.0
    %3888 = vmatprep.subr.mxu0 0.0
    %3889 = vmatpush1.msra.mxu0 0.0
    %3890 = vmatprep.subr.mxu0 0.0
    %3891 = vmatpush1.msra.mxu0 0.0
    %3892 = vmatprep.subr.mxu0 0.0
    %3893 = vmatpush1.msra.mxu0 0.0
    %3894 = vmatprep.subr.mxu0 0.0
    %3895 = vmatpush1.msra.mxu0 0.0
    %3896 = vmatprep.mubr.f32.mxu0 0.0
    %3897 = vmatmul.mubr.f32.gmra.mrb[0].mxu0 %v3830
    %v3898 = vpop.f32.mrb[0].mxu0
    %v3899 = vadd.f32 0.0, %v3898
    %v3900 = vpop.f32.mrb[0].mxu0
    %3901 = vdwg.mxu0
    %v3903 = vsel %vm2079, %v3534, 0
    %3905 = vmatprep.subr.mxu0 0.0
    %3906 = vmatpush1.msra.mxu0 %v1372
    %3907 = vmatprep.subr.mxu0 0.0
    %3908 = vmatpush1.msra.mxu0 0.0
    %3909 = vmatprep.subr.mxu0 0.0
    %3910 = vmatpush1.msra.mxu0 0.0
    %3911 = vmatprep.subr.mxu0 0.0
    %3912 = vmatpush1.msra.mxu0 0.0
    %3913 = vmatprep.subr.mxu0 0.0
    %3914 = vmatpush1.msra.mxu0 0.0
    %3915 = vmatprep.subr.mxu0 0.0
    %3916 = vmatpush1.msra.mxu0 0.0
    %3917 = vmatprep.subr.mxu0 0.0
    %3918 = vmatpush1.msra.mxu0 0.0
    %3919 = vmatprep.subr.mxu0 0.0
    %3920 = vmatpush1.msra.mxu0 0.0
    %3921 = vmatprep.subr.mxu0 0.0
    %3922 = vmatpush1.msra.mxu0 0.0
    %3923 = vmatprep.subr.mxu0 0.0
    %3924 = vmatpush1.msra.mxu0 0.0
    %3925 = vmatprep.subr.mxu0 0.0
    %3926 = vmatpush1.msra.mxu0 0.0
    %3927 = vmatprep.subr.mxu0 0.0
    %3928 = vmatpush1.msra.mxu0 0.0
    %3929 = vmatprep.subr.mxu0 0.0
    %3930 = vmatpush1.msra.mxu0 0.0
    %3931 = vmatprep.subr.mxu0 0.0
    %3932 = vmatpush1.msra.mxu0 0.0
    %3933 = vmatprep.subr.mxu0 0.0
    %3934 = vmatpush1.msra.mxu0 0.0
    %3935 = vmatprep.subr.mxu0 0.0
    %3936 = vmatpush1.msra.mxu0 0.0
    %3937 = vmatprep.subr.mxu0 0.0
    %3938 = vmatpush1.msra.mxu0 0.0
    %3939 = vmatprep.subr.mxu0 0.0
    %3940 = vmatpush1.msra.mxu0 0.0
    %3941 = vmatprep.subr.mxu0 0.0
    %3942 = vmatpush1.msra.mxu0 0.0
    %3943 = vmatprep.subr.mxu0 0.0
    %3944 = vmatpush1.msra.mxu0 0.0
    %3945 = vmatprep.subr.mxu0 0.0
    %3946 = vmatpush1.msra.mxu0 0.0
    %3947 = vmatprep.subr.mxu0 0.0
    %3948 = vmatpush1.msra.mxu0 0.0
    %3949 = vmatprep.subr.mxu0 0.0
    %3950 = vmatpush1.msra.mxu0 0.0
    %3951 = vmatprep.subr.mxu0 0.0
    %3952 = vmatpush1.msra.mxu0 0.0
    %3953 = vmatprep.subr.mxu0 0.0
    %3954 = vmatpush1.msra.mxu0 0.0
    %3955 = vmatprep.subr.mxu0 0.0
    %3956 = vmatpush1.msra.mxu0 0.0
    %3957 = vmatprep.subr.mxu0 0.0
    %3958 = vmatpush1.msra.mxu0 0.0
    %3959 = vmatprep.subr.mxu0 0.0
    %3960 = vmatpush1.msra.mxu0 0.0
    %3961 = vmatprep.subr.mxu0 0.0
    %3962 = vmatpush1.msra.mxu0 0.0
    %3963 = vmatprep.subr.mxu0 0.0
    %3964 = vmatpush1.msra.mxu0 0.0
    %3965 = vmatprep.subr.mxu0 0.0
    %3966 = vmatpush1.msra.mxu0 0.0
    %3967 = vmatprep.subr.mxu0 0.0
    %3968 = vmatpush1.msra.mxu0 0.0
    %3969 = vmatprep.mubr.f32.mxu0 0.0
    %3970 = vmatmul.mubr.f32.gmra.mrb[0].mxu0 %v3903
    %v3971 = vpop.f32.mrb[0].mxu0
    %v3972 = vadd.f32 0.0, %v3971
    %v3973 = vpop.f32.mrb[0].mxu0
    %3974 = vdwg.mxu0
    %v3976 = vsel %vm2079, %v3535, 0
    %3978 = vmatprep.subr.mxu0 0.0
    %3979 = vmatpush1.msra.mxu0 %v1378
    %3980 = vmatprep.subr.mxu0 0.0
    %3981 = vmatpush1.msra.mxu0 0.0
    %3982 = vmatprep.subr.mxu0 0.0
    %3983 = vmatpush1.msra.mxu0 0.0
    %3984 = vmatprep.subr.mxu0 0.0
    %3985 = vmatpush1.msra.mxu0 0.0
    %3986 = vmatprep.subr.mxu0 0.0
    %3987 = vmatpush1.msra.mxu0 0.0
    %3988 = vmatprep.subr.mxu0 0.0
    %3989 = vmatpush1.msra.mxu0 0.0
    %3990 = vmatprep.subr.mxu0 0.0
    %3991 = vmatpush1.msra.mxu0 0.0
    %3992 = vmatprep.subr.mxu0 0.0
    %3993 = vmatpush1.msra.mxu0 0.0
    %3994 = vmatprep.subr.mxu0 0.0
    %3995 = vmatpush1.msra.mxu0 0.0
    %3996 = vmatprep.subr.mxu0 0.0
    %3997 = vmatpush1.msra.mxu0 0.0
    %3998 = vmatprep.subr.mxu0 0.0
    %3999 = vmatpush1.msra.mxu0 0.0
    %4000 = vmatprep.subr.mxu0 0.0
    %4001 = vmatpush1.msra.mxu0 0.0
    %4002 = vmatprep.subr.mxu0 0.0
    %4003 = vmatpush1.msra.mxu0 0.0
    %4004 = vmatprep.subr.mxu0 0.0
    %4005 = vmatpush1.msra.mxu0 0.0
    %4006 = vmatprep.subr.mxu0 0.0
    %4007 = vmatpush1.msra.mxu0 0.0
    %4008 = vmatprep.subr.mxu0 0.0
    %4009 = vmatpush1.msra.mxu0 0.0
    %4010 = vmatprep.subr.mxu0 0.0
    %4011 = vmatpush1.msra.mxu0 0.0
    %4012 = vmatprep.subr.mxu0 0.0
    %4013 = vmatpush1.msra.mxu0 0.0
    %4014 = vmatprep.subr.mxu0 0.0
    %4015 = vmatpush1.msra.mxu0 0.0
    %4016 = vmatprep.subr.mxu0 0.0
    %4017 = vmatpush1.msra.mxu0 0.0
    %4018 = vmatprep.subr.mxu0 0.0
    %4019 = vmatpush1.msra.mxu0 0.0
    %4020 = vmatprep.subr.mxu0 0.0
    %4021 = vmatpush1.msra.mxu0 0.0
    %4022 = vmatprep.subr.mxu0 0.0
    %4023 = vmatpush1.msra.mxu0 0.0
    %4024 = vmatprep.subr.mxu0 0.0
    %4025 = vmatpush1.msra.mxu0 0.0
    %4026 = vmatprep.subr.mxu0 0.0
    %4027 = vmatpush1.msra.mxu0 0.0
    %4028 = vmatprep.subr.mxu0 0.0
    %4029 = vmatpush1.msra.mxu0 0.0
    %4030 = vmatprep.subr.mxu0 0.0
    %4031 = vmatpush1.msra.mxu0 0.0
    %4032 = vmatprep.subr.mxu0 0.0
    %4033 = vmatpush1.msra.mxu0 0.0
    %4034 = vmatprep.subr.mxu0 0.0
    %4035 = vmatpush1.msra.mxu0 0.0
    %4036 = vmatprep.subr.mxu0 0.0
    %4037 = vmatpush1.msra.mxu0 0.0
    %4038 = vmatprep.subr.mxu0 0.0
    %4039 = vmatpush1.msra.mxu0 0.0
    %4040 = vmatprep.subr.mxu0 0.0
    %4041 = vmatpush1.msra.mxu0 0.0
    %4042 = vmatprep.mubr.f32.mxu0 0.0
    %4043 = vmatmul.mubr.f32.gmra.mrb[0].mxu0 %v3976
    %v4044 = vpop.f32.mrb[0].mxu0
    %v4045 = vadd.f32 0.0, %v4044
    %v4046 = vpop.f32.mrb[0].mxu0
    %4047 = vdwg.mxu0
    %v4049 = vsel %vm2079, %v3536, 0
    %4051 = vmatprep.subr.mxu0 0.0
    %4052 = vmatpush1.msra.mxu0 %v1384
    %4053 = vmatprep.subr.mxu0 0.0
    %4054 = vmatpush1.msra.mxu0 0.0
    %4055 = vmatprep.subr.mxu0 0.0
    %4056 = vmatpush1.msra.mxu0 0.0
    %4057 = vmatprep.subr.mxu0 0.0
    %4058 = vmatpush1.msra.mxu0 0.0
    %4059 = vmatprep.subr.mxu0 0.0
    %4060 = vmatpush1.msra.mxu0 0.0
    %4061 = vmatprep.subr.mxu0 0.0
    %4062 = vmatpush1.msra.mxu0 0.0
    %4063 = vmatprep.subr.mxu0 0.0
    %4064 = vmatpush1.msra.mxu0 0.0
    %4065 = vmatprep.subr.mxu0 0.0
    %4066 = vmatpush1.msra.mxu0 0.0
    %4067 = vmatprep.subr.mxu0 0.0
    %4068 = vmatpush1.msra.mxu0 0.0
    %4069 = vmatprep.subr.mxu0 0.0
    %4070 = vmatpush1.msra.mxu0 0.0
    %4071 = vmatprep.subr.mxu0 0.0
    %4072 = vmatpush1.msra.mxu0 0.0
    %4073 = vmatprep.subr.mxu0 0.0
    %4074 = vmatpush1.msra.mxu0 0.0
    %4075 = vmatprep.subr.mxu0 0.0
    %4076 = vmatpush1.msra.mxu0 0.0
    %4077 = vmatprep.subr.mxu0 0.0
    %4078 = vmatpush1.msra.mxu0 0.0
    %4079 = vmatprep.subr.mxu0 0.0
    %4080 = vmatpush1.msra.mxu0 0.0
    %4081 = vmatprep.subr.mxu0 0.0
    %4082 = vmatpush1.msra.mxu0 0.0
    %4083 = vmatprep.subr.mxu0 0.0
    %4084 = vmatpush1.msra.mxu0 0.0
    %4085 = vmatprep.subr.mxu0 0.0
    %4086 = vmatpush1.msra.mxu0 0.0
    %4087 = vmatprep.subr.mxu0 0.0
    %4088 = vmatpush1.msra.mxu0 0.0
    %4089 = vmatprep.subr.mxu0 0.0
    %4090 = vmatpush1.msra.mxu0 0.0
    %4091 = vmatprep.subr.mxu0 0.0
    %4092 = vmatpush1.msra.mxu0 0.0
    %4093 = vmatprep.subr.mxu0 0.0
    %4094 = vmatpush1.msra.mxu0 0.0
    %4095 = vmatprep.subr.mxu0 0.0
    %4096 = vmatpush1.msra.mxu0 0.0
    %4097 = vmatprep.subr.mxu0 0.0
    %4098 = vmatpush1.msra.mxu0 0.0
    %4099 = vmatprep.subr.mxu0 0.0
    %4100 = vmatpush1.msra.mxu0 0.0
    %4101 = vmatprep.subr.mxu0 0.0
    %4102 = vmatpush1.msra.mxu0 0.0
    %4103 = vmatprep.subr.mxu0 0.0
    %4104 = vmatpush1.msra.mxu0 0.0
    %4105 = vmatprep.subr.mxu0 0.0
    %4106 = vmatpush1.msra.mxu0 0.0
    %4107 = vmatprep.subr.mxu0 0.0
    %4108 = vmatpush1.msra.mxu0 0.0
    %4109 = vmatprep.subr.mxu0 0.0
    %4110 = vmatpush1.msra.mxu0 0.0
    %4111 = vmatprep.subr.mxu0 0.0
    %4112 = vmatpush1.msra.mxu0 0.0
    %4113 = vmatprep.subr.mxu0 0.0
    %4114 = vmatpush1.msra.mxu0 0.0
    %4115 = vmatprep.mubr.f32.mxu0 0.0
    %4116 = vmatmul.mubr.f32.gmra.mrb[0].mxu0 %v4049
    %v4117 = vpop.f32.mrb[0].mxu0
    %v4118 = vadd.f32 0.0, %v4117
    %v4119 = vpop.f32.mrb[0].mxu0
    %4120 = vdwg.mxu0
    %v4121 = vld [vmem:[#allocation7 + $0x80] sm:$0xff]
    %v4122 = vld [vmem:[#allocation7 + $0x88] sm:$0xff]
    %v4123 = vld [vmem:[#allocation7 + $0x90] sm:$0xff]
    %v4124 = vld [vmem:[#allocation7 + $0x98] sm:$0xff]
    %v4125 = vld [vmem:[#allocation7 + $0xa0] sm:$0xff]
    %v4126 = vld [vmem:[#allocation7 + $0xa8] sm:$0xff]
    %v4127 = vld [vmem:[#allocation7 + $0xb0] sm:$0xff]
    %v4128 = vld [vmem:[#allocation7 + $0xb8] sm:$0xff]
    %v4129 = vld [vmem:[#allocation7 + $0xc0] sm:$0xff]
    %v4130 = vld [vmem:[#allocation7 + $0xc8] sm:$0xff]
    %v4131 = vld [vmem:[#allocation7 + $0xd0] sm:$0xff]
    %v4132 = vld [vmem:[#allocation7 + $0xd8] sm:$0xff]
    %v4133 = vld [vmem:[#allocation7 + $0xe0] sm:$0xff]
    %v4134 = vld [vmem:[#allocation7 + $0xe8] sm:$0xff]
    %v4135 = vld [vmem:[#allocation7 + $0xf0] sm:$0xff]
    %v4136 = vld [vmem:[#allocation7 + $0xf8] sm:$0xff]
    %4137 = vmatprep.subr.mxu0 0.0
    %4138 = vmatpush1.msra.mxu0 %v4121
    %4139 = vmatprep.subr.mxu0 0.0
    %4140 = vmatpush1.msra.mxu0 %v4122
    %4141 = vmatprep.subr.mxu0 0.0
    %4142 = vmatpush1.msra.mxu0 %v4123
    %4143 = vmatprep.subr.mxu0 0.0
    %4144 = vmatpush1.msra.mxu0 %v4124
    %4145 = vmatprep.subr.mxu0 0.0
    %4146 = vmatpush1.msra.mxu0 %v4125
    %4147 = vmatprep.subr.mxu0 0.0
    %4148 = vmatpush1.msra.mxu0 %v4126
    %4149 = vmatprep.subr.mxu0 0.0
    %4150 = vmatpush1.msra.mxu0 %v4127
    %4151 = vmatprep.subr.mxu0 0.0
    %4152 = vmatpush1.msra.mxu0 %v4128
    %4153 = vmatprep.subr.mxu0 0.0
    %4154 = vmatpush1.msra.mxu0 %v4129
    %4155 = vmatprep.subr.mxu0 0.0
    %4156 = vmatpush1.msra.mxu0 %v4130
    %4157 = vmatprep.subr.mxu0 0.0
    %4158 = vmatpush1.msra.mxu0 %v4131
    %4159 = vmatprep.subr.mxu0 0.0
    %4160 = vmatpush1.msra.mxu0 %v4132
    %4161 = vmatprep.subr.mxu0 0.0
    %4162 = vmatpush1.msra.mxu0 %v4133
    %4163 = vmatprep.subr.mxu0 0.0
    %4164 = vmatpush1.msra.mxu0 %v4134
    %4165 = vmatprep.subr.mxu0 0.0
    %4166 = vmatpush1.msra.mxu0 %v4135
    %4167 = vmatprep.subr.mxu0 0.0
    %4168 = vmatpush1.msra.mxu0 %v4136
    %4169 = vmatprep.subr.mxu0 0.0
    %4170 = vmatpush1.msra.mxu0 0.0
    %4171 = vmatprep.subr.mxu0 0.0
    %4172 = vmatpush1.msra.mxu0 0.0
    %4173 = vmatprep.subr.mxu0 0.0
    %4174 = vmatpush1.msra.mxu0 0.0
    %4175 = vmatprep.subr.mxu0 0.0
    %4176 = vmatpush1.msra.mxu0 0.0
    %4177 = vmatprep.subr.mxu0 0.0
    %4178 = vmatpush1.msra.mxu0 0.0
    %4179 = vmatprep.subr.mxu0 0.0
    %4180 = vmatpush1.msra.mxu0 0.0
    %4181 = vmatprep.subr.mxu0 0.0
    %4182 = vmatpush1.msra.mxu0 0.0
    %4183 = vmatprep.subr.mxu0 0.0
    %4184 = vmatpush1.msra.mxu0 0.0
    %4185 = vmatprep.subr.mxu0 0.0
    %4186 = vmatpush1.msra.mxu0 0.0
    %4187 = vmatprep.subr.mxu0 0.0
    %4188 = vmatpush1.msra.mxu0 0.0
    %4189 = vmatprep.subr.mxu0 0.0
    %4190 = vmatpush1.msra.mxu0 0.0
    %4191 = vmatprep.subr.mxu0 0.0
    %4192 = vmatpush1.msra.mxu0 0.0
    %4193 = vmatprep.subr.mxu0 0.0
    %4194 = vmatpush1.msra.mxu0 0.0
    %4195 = vmatprep.subr.mxu0 0.0
    %4196 = vmatpush1.msra.mxu0 0.0
    %4197 = vmatprep.subr.mxu0 0.0
    %4198 = vmatpush1.msra.mxu0 0.0
    %4199 = vmatprep.subr.mxu0 0.0
    %4200 = vmatpush1.msra.mxu0 0.0
    %4201 = vmatprep.mubr.f32.mxu0 0.0
    %4202 = vmatmul.mubr.f32.gmra.mrb[0].mxu0 %v3607
    %v4203 = vpop.f32.mrb[0].mxu0
    %v4204 = vadd.f32 0.0, %v4203
    %v4205 = vpop.f32.mrb[0].mxu0
    %4206 = vmatprep.mubr.f32.mxu0 0.0
    %4207 = vmatmul.mubr.f32.gmra.mrb[0].mxu0 %v3680
    %v4208 = vpop.f32.mrb[0].mxu0
    %v4209 = vadd.f32 0.0, %v4208
    %v4210 = vpop.f32.mrb[0].mxu0
    %4211 = vmatprep.mubr.f32.mxu0 0.0
    %4212 = vmatmul.mubr.f32.gmra.mrb[0].mxu0 %v3753
    %v4213 = vpop.f32.mrb[0].mxu0
    %v4214 = vadd.f32 0.0, %v4213
    %v4215 = vpop.f32.mrb[0].mxu0
    %4216 = vmatprep.mubr.f32.mxu0 0.0
    %4217 = vmatmul.mubr.f32.gmra.mrb[0].mxu0 %v3826
    %v4218 = vpop.f32.mrb[0].mxu0
    %v4219 = vadd.f32 0.0, %v4218
    %v4220 = vpop.f32.mrb[0].mxu0
    %4221 = vmatprep.mubr.f32.mxu0 0.0
    %4222 = vmatmul.mubr.f32.gmra.mrb[0].mxu0 %v3899
    %v4223 = vpop.f32.mrb[0].mxu0
    %v4224 = vadd.f32 0.0, %v4223
    %v4225 = vpop.f32.mrb[0].mxu0
    %4226 = vmatprep.mubr.f32.mxu0 0.0
    %4227 = vmatmul.mubr.f32.gmra.mrb[0].mxu0 %v3972
    %v4228 = vpop.f32.mrb[0].mxu0
    %v4229 = vadd.f32 0.0, %v4228
    %v4230 = vpop.f32.mrb[0].mxu0
    %4231 = vmatprep.mubr.f32.mxu0 0.0
    %4232 = vmatmul.mubr.f32.gmra.mrb[0].mxu0 %v4045
    %v4233 = vpop.f32.mrb[0].mxu0
    %v4234 = vadd.f32 0.0, %v4233
    %v4235 = vpop.f32.mrb[0].mxu0
    %4236 = vmatprep.mubr.f32.mxu0 0.0
    %4237 = vmatmul.mubr.f32.gmra.mrb[0].mxu0 %v4118
    %v4238 = vpop.f32.mrb[0].mxu0
    %v4239 = vadd.f32 0.0, %v4238
    %v4240 = vpop.f32.mrb[0].mxu0
    %4241 = vdwg.mxu0
    %v4242 = vadd.f32 %v2873, %v4204
    %v4243 = vadd.f32 %v2874, %v4209
    %v4244 = vadd.f32 %v2875, %v4214
    %v4245 = vadd.f32 %v2876, %v4219
    %v4246 = vadd.f32 %v2877, %v4224
    %v4247 = vadd.f32 %v2878, %v4229
    %v4248 = vadd.f32 %v2879, %v4234
    %v4249 = vadd.f32 %v2880, %v4239
    %4250 = vmatprep.subr.mxu0 0.0
    %4251 = vmatpush1.xpose.msra.mxu0 %v1227
    %4252 = vmatprep.subr.mxu0 0.0
    %4253 = vmatpush1.xpose.msra.mxu0 0.0
    %4254 = vmatprep.subr.mxu0 0.0
    %4255 = vmatpush1.xpose.msra.mxu0 0.0
    %4256 = vmatprep.subr.mxu0 0.0
    %4257 = vmatpush1.xpose.msra.mxu0 0.0
    %4258 = vmatprep.subr.mxu0 0.0
    %4259 = vmatpush1.xpose.msra.mxu0 0.0
    %4260 = vmatprep.subr.mxu0 0.0
    %4261 = vmatpush1.xpose.msra.mxu0 0.0
    %4262 = vmatprep.subr.mxu0 0.0
    %4263 = vmatpush1.xpose.msra.mxu0 0.0
    %4264 = vmatprep.subr.mxu0 0.0
    %4265 = vmatpush1.xpose.msra.mxu0 0.0
    %4266 = vmatprep.subr.mxu0 0.0
    %4267 = vmatpush1.xpose.msra.mxu0 0.0
    %4268 = vmatprep.subr.mxu0 0.0
    %4269 = vmatpush1.xpose.msra.mxu0 0.0
    %4270 = vmatprep.subr.mxu0 0.0
    %4271 = vmatpush1.xpose.msra.mxu0 0.0
    %4272 = vmatprep.subr.mxu0 0.0
    %4273 = vmatpush1.xpose.msra.mxu0 0.0
    %4274 = vmatprep.subr.mxu0 0.0
    %4275 = vmatpush1.xpose.msra.mxu0 0.0
    %4276 = vmatprep.subr.mxu0 0.0
    %4277 = vmatpush1.xpose.msra.mxu0 0.0
    %4278 = vmatprep.subr.mxu0 0.0
    %4279 = vmatpush1.xpose.msra.mxu0 0.0
    %4280 = vmatprep.subr.mxu0 0.0
    %4281 = vmatpush1.xpose.msra.mxu0 0.0
    %4282 = vmatprep.subr.mxu0 0.0
    %4283 = vmatpush1.xpose.msra.mxu0 0.0
    %4284 = vmatprep.subr.mxu0 0.0
    %4285 = vmatpush1.xpose.msra.mxu0 0.0
    %4286 = vmatprep.subr.mxu0 0.0
    %4287 = vmatpush1.xpose.msra.mxu0 0.0
    %4288 = vmatprep.subr.mxu0 0.0
    %4289 = vmatpush1.xpose.msra.mxu0 0.0
    %4290 = vmatprep.subr.mxu0 0.0
    %4291 = vmatpush1.xpose.msra.mxu0 0.0
    %4292 = vmatprep.subr.mxu0 0.0
    %4293 = vmatpush1.xpose.msra.mxu0 0.0
    %4294 = vmatprep.subr.mxu0 0.0
    %4295 = vmatpush1.xpose.msra.mxu0 0.0
    %4296 = vmatprep.subr.mxu0 0.0
    %4297 = vmatpush1.xpose.msra.mxu0 0.0
    %4298 = vmatprep.subr.mxu0 0.0
    %4299 = vmatpush1.xpose.msra.mxu0 0.0
    %4300 = vmatprep.subr.mxu0 0.0
    %4301 = vmatpush1.xpose.msra.mxu0 0.0
    %4302 = vmatprep.subr.mxu0 0.0
    %4303 = vmatpush1.xpose.msra.mxu0 0.0
    %4304 = vmatprep.subr.mxu0 0.0
    %4305 = vmatpush1.xpose.msra.mxu0 0.0
    %4306 = vmatprep.subr.mxu0 0.0
    %4307 = vmatpush1.xpose.msra.mxu0 0.0
    %4308 = vmatprep.subr.mxu0 0.0
    %4309 = vmatpush1.xpose.msra.mxu0 0.0
    %4310 = vmatprep.subr.mxu0 0.0
    %4311 = vmatpush1.xpose.msra.mxu0 0.0
    %4312 = vmatprep.subr.mxu0 0.0
    %4313 = vmatpush1.xpose.msra.mxu0 0.0
    %4314 = vmatprep.mubr.f32.mxu0 0.0
    %4315 = vmatmul.mubr.f32.gmra.mrb[0].mxu0 %v1001
    %v4316 = vpop.f32.mrb[0].mxu0
    %v4317 = vadd.f32 0.0, %v4316
    %v4318 = vpop.f32.mrb[0].mxu0
    %4319 = vdwg.mxu0
    %4320 = vmatprep.subr.mxu0 0.0
    %4321 = vmatpush1.xpose.msra.mxu0 %v1233
    %4322 = vmatprep.subr.mxu0 0.0
    %4323 = vmatpush1.xpose.msra.mxu0 0.0
    %4324 = vmatprep.subr.mxu0 0.0
    %4325 = vmatpush1.xpose.msra.mxu0 0.0
    %4326 = vmatprep.subr.mxu0 0.0
    %4327 = vmatpush1.xpose.msra.mxu0 0.0
    %4328 = vmatprep.subr.mxu0 0.0
    %4329 = vmatpush1.xpose.msra.mxu0 0.0
    %4330 = vmatprep.subr.mxu0 0.0
    %4331 = vmatpush1.xpose.msra.mxu0 0.0
    %4332 = vmatprep.subr.mxu0 0.0
    %4333 = vmatpush1.xpose.msra.mxu0 0.0
    %4334 = vmatprep.subr.mxu0 0.0
    %4335 = vmatpush1.xpose.msra.mxu0 0.0
    %4336 = vmatprep.subr.mxu0 0.0
    %4337 = vmatpush1.xpose.msra.mxu0 0.0
    %4338 = vmatprep.subr.mxu0 0.0
    %4339 = vmatpush1.xpose.msra.mxu0 0.0
    %4340 = vmatprep.subr.mxu0 0.0
    %4341 = vmatpush1.xpose.msra.mxu0 0.0
    %4342 = vmatprep.subr.mxu0 0.0
    %4343 = vmatpush1.xpose.msra.mxu0 0.0
    %4344 = vmatprep.subr.mxu0 0.0
    %4345 = vmatpush1.xpose.msra.mxu0 0.0
    %4346 = vmatprep.subr.mxu0 0.0
    %4347 = vmatpush1.xpose.msra.mxu0 0.0
    %4348 = vmatprep.subr.mxu0 0.0
    %4349 = vmatpush1.xpose.msra.mxu0 0.0
    %4350 = vmatprep.subr.mxu0 0.0
    %4351 = vmatpush1.xpose.msra.mxu0 0.0
    %4352 = vmatprep.subr.mxu0 0.0
    %4353 = vmatpush1.xpose.msra.mxu0 0.0
    %4354 = vmatprep.subr.mxu0 0.0
    %4355 = vmatpush1.xpose.msra.mxu0 0.0
    %4356 = vmatprep.subr.mxu0 0.0
    %4357 = vmatpush1.xpose.msra.mxu0 0.0
    %4358 = vmatprep.subr.mxu0 0.0
    %4359 = vmatpush1.xpose.msra.mxu0 0.0
    %4360 = vmatprep.subr.mxu0 0.0
    %4361 = vmatpush1.xpose.msra.mxu0 0.0
    %4362 = vmatprep.subr.mxu0 0.0
    %4363 = vmatpush1.xpose.msra.mxu0 0.0
    %4364 = vmatprep.subr.mxu0 0.0
    %4365 = vmatpush1.xpose.msra.mxu0 0.0
    %4366 = vmatprep.subr.mxu0 0.0
    %4367 = vmatpush1.xpose.msra.mxu0 0.0
    %4368 = vmatprep.subr.mxu0 0.0
    %4369 = vmatpush1.xpose.msra.mxu0 0.0
    %4370 = vmatprep.subr.mxu0 0.0
    %4371 = vmatpush1.xpose.msra.mxu0 0.0
    %4372 = vmatprep.subr.mxu0 0.0
    %4373 = vmatpush1.xpose.msra.mxu0 0.0
    %4374 = vmatprep.subr.mxu0 0.0
    %4375 = vmatpush1.xpose.msra.mxu0 0.0
    %4376 = vmatprep.subr.mxu0 0.0
    %4377 = vmatpush1.xpose.msra.mxu0 0.0
    %4378 = vmatprep.subr.mxu0 0.0
    %4379 = vmatpush1.xpose.msra.mxu0 0.0
    %4380 = vmatprep.subr.mxu0 0.0
    %4381 = vmatpush1.xpose.msra.mxu0 0.0
    %4382 = vmatprep.subr.mxu0 0.0
    %4383 = vmatpush1.xpose.msra.mxu0 0.0
    %4384 = vmatprep.mubr.f32.mxu0 0.0
    %4385 = vmatmul.mubr.f32.gmra.mrb[0].mxu0 %v1007
    %v4386 = vpop.f32.mrb[0].mxu0
    %v4387 = vadd.f32 0.0, %v4386
    %v4388 = vpop.f32.mrb[0].mxu0
    %4389 = vdwg.mxu0
    %4390 = vmatprep.subr.mxu0 0.0
    %4391 = vmatpush1.xpose.msra.mxu0 %v1239
    %4392 = vmatprep.subr.mxu0 0.0
    %4393 = vmatpush1.xpose.msra.mxu0 0.0
    %4394 = vmatprep.subr.mxu0 0.0
    %4395 = vmatpush1.xpose.msra.mxu0 0.0
    %4396 = vmatprep.subr.mxu0 0.0
    %4397 = vmatpush1.xpose.msra.mxu0 0.0
    %4398 = vmatprep.subr.mxu0 0.0
    %4399 = vmatpush1.xpose.msra.mxu0 0.0
    %4400 = vmatprep.subr.mxu0 0.0
    %4401 = vmatpush1.xpose.msra.mxu0 0.0
    %4402 = vmatprep.subr.mxu0 0.0
    %4403 = vmatpush1.xpose.msra.mxu0 0.0
    %4404 = vmatprep.subr.mxu0 0.0
    %4405 = vmatpush1.xpose.msra.mxu0 0.0
    %4406 = vmatprep.subr.mxu0 0.0
    %4407 = vmatpush1.xpose.msra.mxu0 0.0
    %4408 = vmatprep.subr.mxu0 0.0
    %4409 = vmatpush1.xpose.msra.mxu0 0.0
    %4410 = vmatprep.subr.mxu0 0.0
    %4411 = vmatpush1.xpose.msra.mxu0 0.0
    %4412 = vmatprep.subr.mxu0 0.0
    %4413 = vmatpush1.xpose.msra.mxu0 0.0
    %4414 = vmatprep.subr.mxu0 0.0
    %4415 = vmatpush1.xpose.msra.mxu0 0.0
    %4416 = vmatprep.subr.mxu0 0.0
    %4417 = vmatpush1.xpose.msra.mxu0 0.0
    %4418 = vmatprep.subr.mxu0 0.0
    %4419 = vmatpush1.xpose.msra.mxu0 0.0
    %4420 = vmatprep.subr.mxu0 0.0
    %4421 = vmatpush1.xpose.msra.mxu0 0.0
    %4422 = vmatprep.subr.mxu0 0.0
    %4423 = vmatpush1.xpose.msra.mxu0 0.0
    %4424 = vmatprep.subr.mxu0 0.0
    %4425 = vmatpush1.xpose.msra.mxu0 0.0
    %4426 = vmatprep.subr.mxu0 0.0
    %4427 = vmatpush1.xpose.msra.mxu0 0.0
    %4428 = vmatprep.subr.mxu0 0.0
    %4429 = vmatpush1.xpose.msra.mxu0 0.0
    %4430 = vmatprep.subr.mxu0 0.0
    %4431 = vmatpush1.xpose.msra.mxu0 0.0
    %4432 = vmatprep.subr.mxu0 0.0
    %4433 = vmatpush1.xpose.msra.mxu0 0.0
    %4434 = vmatprep.subr.mxu0 0.0
    %4435 = vmatpush1.xpose.msra.mxu0 0.0
    %4436 = vmatprep.subr.mxu0 0.0
    %4437 = vmatpush1.xpose.msra.mxu0 0.0
    %4438 = vmatprep.subr.mxu0 0.0
    %4439 = vmatpush1.xpose.msra.mxu0 0.0
    %4440 = vmatprep.subr.mxu0 0.0
    %4441 = vmatpush1.xpose.msra.mxu0 0.0
    %4442 = vmatprep.subr.mxu0 0.0
    %4443 = vmatpush1.xpose.msra.mxu0 0.0
    %4444 = vmatprep.subr.mxu0 0.0
    %4445 = vmatpush1.xpose.msra.mxu0 0.0
    %4446 = vmatprep.subr.mxu0 0.0
    %4447 = vmatpush1.xpose.msra.mxu0 0.0
    %4448 = vmatprep.subr.mxu0 0.0
    %4449 = vmatpush1.xpose.msra.mxu0 0.0
    %4450 = vmatprep.subr.mxu0 0.0
    %4451 = vmatpush1.xpose.msra.mxu0 0.0
    %4452 = vmatprep.subr.mxu0 0.0
    %4453 = vmatpush1.xpose.msra.mxu0 0.0
    %4454 = vmatprep.mubr.f32.mxu0 0.0
    %4455 = vmatmul.mubr.f32.gmra.mrb[0].mxu0 %v1013
    %v4456 = vpop.f32.mrb[0].mxu0
    %v4457 = vadd.f32 0.0, %v4456
    %v4458 = vpop.f32.mrb[0].mxu0
    %4459 = vdwg.mxu0
    %4460 = vmatprep.subr.mxu0 0.0
    %4461 = vmatpush1.xpose.msra.mxu0 %v1245
    %4462 = vmatprep.subr.mxu0 0.0
    %4463 = vmatpush1.xpose.msra.mxu0 0.0
    %4464 = vmatprep.subr.mxu0 0.0
    %4465 = vmatpush1.xpose.msra.mxu0 0.0
    %4466 = vmatprep.subr.mxu0 0.0
    %4467 = vmatpush1.xpose.msra.mxu0 0.0
    %4468 = vmatprep.subr.mxu0 0.0
    %4469 = vmatpush1.xpose.msra.mxu0 0.0
    %4470 = vmatprep.subr.mxu0 0.0
    %4471 = vmatpush1.xpose.msra.mxu0 0.0
    %4472 = vmatprep.subr.mxu0 0.0
    %4473 = vmatpush1.xpose.msra.mxu0 0.0
    %4474 = vmatprep.subr.mxu0 0.0
    %4475 = vmatpush1.xpose.msra.mxu0 0.0
    %4476 = vmatprep.subr.mxu0 0.0
    %4477 = vmatpush1.xpose.msra.mxu0 0.0
    %4478 = vmatprep.subr.mxu0 0.0
    %4479 = vmatpush1.xpose.msra.mxu0 0.0
    %4480 = vmatprep.subr.mxu0 0.0
    %4481 = vmatpush1.xpose.msra.mxu0 0.0
    %4482 = vmatprep.subr.mxu0 0.0
    %4483 = vmatpush1.xpose.msra.mxu0 0.0
    %4484 = vmatprep.subr.mxu0 0.0
    %4485 = vmatpush1.xpose.msra.mxu0 0.0
    %4486 = vmatprep.subr.mxu0 0.0
    %4487 = vmatpush1.xpose.msra.mxu0 0.0
    %4488 = vmatprep.subr.mxu0 0.0
    %4489 = vmatpush1.xpose.msra.mxu0 0.0
    %4490 = vmatprep.subr.mxu0 0.0
    %4491 = vmatpush1.xpose.msra.mxu0 0.0
    %4492 = vmatprep.subr.mxu0 0.0
    %4493 = vmatpush1.xpose.msra.mxu0 0.0
    %4494 = vmatprep.subr.mxu0 0.0
    %4495 = vmatpush1.xpose.msra.mxu0 0.0
    %4496 = vmatprep.subr.mxu0 0.0
    %4497 = vmatpush1.xpose.msra.mxu0 0.0
    %4498 = vmatprep.subr.mxu0 0.0
    %4499 = vmatpush1.xpose.msra.mxu0 0.0
    %4500 = vmatprep.subr.mxu0 0.0
    %4501 = vmatpush1.xpose.msra.mxu0 0.0
    %4502 = vmatprep.subr.mxu0 0.0
    %4503 = vmatpush1.xpose.msra.mxu0 0.0
    %4504 = vmatprep.subr.mxu0 0.0
    %4505 = vmatpush1.xpose.msra.mxu0 0.0
    %4506 = vmatprep.subr.mxu0 0.0
    %4507 = vmatpush1.xpose.msra.mxu0 0.0
    %4508 = vmatprep.subr.mxu0 0.0
    %4509 = vmatpush1.xpose.msra.mxu0 0.0
    %4510 = vmatprep.subr.mxu0 0.0
    %4511 = vmatpush1.xpose.msra.mxu0 0.0
    %4512 = vmatprep.subr.mxu0 0.0
    %4513 = vmatpush1.xpose.msra.mxu0 0.0
    %4514 = vmatprep.subr.mxu0 0.0
    %4515 = vmatpush1.xpose.msra.mxu0 0.0
    %4516 = vmatprep.subr.mxu0 0.0
    %4517 = vmatpush1.xpose.msra.mxu0 0.0
    %4518 = vmatprep.subr.mxu0 0.0
    %4519 = vmatpush1.xpose.msra.mxu0 0.0
    %4520 = vmatprep.subr.mxu0 0.0
    %4521 = vmatpush1.xpose.msra.mxu0 0.0
    %4522 = vmatprep.subr.mxu0 0.0
    %4523 = vmatpush1.xpose.msra.mxu0 0.0
    %4524 = vmatprep.mubr.f32.mxu0 0.0
    %4525 = vmatmul.mubr.f32.gmra.mrb[0].mxu0 %v1019
    %v4526 = vpop.f32.mrb[0].mxu0
    %v4527 = vadd.f32 0.0, %v4526
    %v4528 = vpop.f32.mrb[0].mxu0
    %4529 = vdwg.mxu0
    %4530 = vmatprep.subr.mxu0 0.0
    %4531 = vmatpush1.xpose.msra.mxu0 %v1251
    %4532 = vmatprep.subr.mxu0 0.0
    %4533 = vmatpush1.xpose.msra.mxu0 0.0
    %4534 = vmatprep.subr.mxu0 0.0
    %4535 = vmatpush1.xpose.msra.mxu0 0.0
    %4536 = vmatprep.subr.mxu0 0.0
    %4537 = vmatpush1.xpose.msra.mxu0 0.0
    %4538 = vmatprep.subr.mxu0 0.0
    %4539 = vmatpush1.xpose.msra.mxu0 0.0
    %4540 = vmatprep.subr.mxu0 0.0
    %4541 = vmatpush1.xpose.msra.mxu0 0.0
    %4542 = vmatprep.subr.mxu0 0.0
    %4543 = vmatpush1.xpose.msra.mxu0 0.0
    %4544 = vmatprep.subr.mxu0 0.0
    %4545 = vmatpush1.xpose.msra.mxu0 0.0
    %4546 = vmatprep.subr.mxu0 0.0
    %4547 = vmatpush1.xpose.msra.mxu0 0.0
    %4548 = vmatprep.subr.mxu0 0.0
    %4549 = vmatpush1.xpose.msra.mxu0 0.0
    %4550 = vmatprep.subr.mxu0 0.0
    %4551 = vmatpush1.xpose.msra.mxu0 0.0
    %4552 = vmatprep.subr.mxu0 0.0
    %4553 = vmatpush1.xpose.msra.mxu0 0.0
    %4554 = vmatprep.subr.mxu0 0.0
    %4555 = vmatpush1.xpose.msra.mxu0 0.0
    %4556 = vmatprep.subr.mxu0 0.0
    %4557 = vmatpush1.xpose.msra.mxu0 0.0
    %4558 = vmatprep.subr.mxu0 0.0
    %4559 = vmatpush1.xpose.msra.mxu0 0.0
    %4560 = vmatprep.subr.mxu0 0.0
    %4561 = vmatpush1.xpose.msra.mxu0 0.0
    %4562 = vmatprep.subr.mxu0 0.0
    %4563 = vmatpush1.xpose.msra.mxu0 0.0
    %4564 = vmatprep.subr.mxu0 0.0
    %4565 = vmatpush1.xpose.msra.mxu0 0.0
    %4566 = vmatprep.subr.mxu0 0.0
    %4567 = vmatpush1.xpose.msra.mxu0 0.0
    %4568 = vmatprep.subr.mxu0 0.0
    %4569 = vmatpush1.xpose.msra.mxu0 0.0
    %4570 = vmatprep.subr.mxu0 0.0
    %4571 = vmatpush1.xpose.msra.mxu0 0.0
    %4572 = vmatprep.subr.mxu0 0.0
    %4573 = vmatpush1.xpose.msra.mxu0 0.0
    %4574 = vmatprep.subr.mxu0 0.0
    %4575 = vmatpush1.xpose.msra.mxu0 0.0
    %4576 = vmatprep.subr.mxu0 0.0
    %4577 = vmatpush1.xpose.msra.mxu0 0.0
    %4578 = vmatprep.subr.mxu0 0.0
    %4579 = vmatpush1.xpose.msra.mxu0 0.0
    %4580 = vmatprep.subr.mxu0 0.0
    %4581 = vmatpush1.xpose.msra.mxu0 0.0
    %4582 = vmatprep.subr.mxu0 0.0
    %4583 = vmatpush1.xpose.msra.mxu0 0.0
    %4584 = vmatprep.subr.mxu0 0.0
    %4585 = vmatpush1.xpose.msra.mxu0 0.0
    %4586 = vmatprep.subr.mxu0 0.0
    %4587 = vmatpush1.xpose.msra.mxu0 0.0
    %4588 = vmatprep.subr.mxu0 0.0
    %4589 = vmatpush1.xpose.msra.mxu0 0.0
    %4590 = vmatprep.subr.mxu0 0.0
    %4591 = vmatpush1.xpose.msra.mxu0 0.0
    %4592 = vmatprep.subr.mxu0 0.0
    %4593 = vmatpush1.xpose.msra.mxu0 0.0
    %4594 = vmatprep.mubr.f32.mxu0 0.0
    %4595 = vmatmul.mubr.f32.gmra.mrb[0].mxu0 %v1025
    %v4596 = vpop.f32.mrb[0].mxu0
    %v4597 = vadd.f32 0.0, %v4596
    %v4598 = vpop.f32.mrb[0].mxu0
    %4599 = vdwg.mxu0
    %4600 = vmatprep.subr.mxu0 0.0
    %4601 = vmatpush1.xpose.msra.mxu0 %v1257
    %4602 = vmatprep.subr.mxu0 0.0
    %4603 = vmatpush1.xpose.msra.mxu0 0.0
    %4604 = vmatprep.subr.mxu0 0.0
    %4605 = vmatpush1.xpose.msra.mxu0 0.0
    %4606 = vmatprep.subr.mxu0 0.0
    %4607 = vmatpush1.xpose.msra.mxu0 0.0
    %4608 = vmatprep.subr.mxu0 0.0
    %4609 = vmatpush1.xpose.msra.mxu0 0.0
    %4610 = vmatprep.subr.mxu0 0.0
    %4611 = vmatpush1.xpose.msra.mxu0 0.0
    %4612 = vmatprep.subr.mxu0 0.0
    %4613 = vmatpush1.xpose.msra.mxu0 0.0
    %4614 = vmatprep.subr.mxu0 0.0
    %4615 = vmatpush1.xpose.msra.mxu0 0.0
    %4616 = vmatprep.subr.mxu0 0.0
    %4617 = vmatpush1.xpose.msra.mxu0 0.0
    %4618 = vmatprep.subr.mxu0 0.0
    %4619 = vmatpush1.xpose.msra.mxu0 0.0
    %4620 = vmatprep.subr.mxu0 0.0
    %4621 = vmatpush1.xpose.msra.mxu0 0.0
    %4622 = vmatprep.subr.mxu0 0.0
    %4623 = vmatpush1.xpose.msra.mxu0 0.0
    %4624 = vmatprep.subr.mxu0 0.0
    %4625 = vmatpush1.xpose.msra.mxu0 0.0
    %4626 = vmatprep.subr.mxu0 0.0
    %4627 = vmatpush1.xpose.msra.mxu0 0.0
    %4628 = vmatprep.subr.mxu0 0.0
    %4629 = vmatpush1.xpose.msra.mxu0 0.0
    %4630 = vmatprep.subr.mxu0 0.0
    %4631 = vmatpush1.xpose.msra.mxu0 0.0
    %4632 = vmatprep.subr.mxu0 0.0
    %4633 = vmatpush1.xpose.msra.mxu0 0.0
    %4634 = vmatprep.subr.mxu0 0.0
    %4635 = vmatpush1.xpose.msra.mxu0 0.0
    %4636 = vmatprep.subr.mxu0 0.0
    %4637 = vmatpush1.xpose.msra.mxu0 0.0
    %4638 = vmatprep.subr.mxu0 0.0
    %4639 = vmatpush1.xpose.msra.mxu0 0.0
    %4640 = vmatprep.subr.mxu0 0.0
    %4641 = vmatpush1.xpose.msra.mxu0 0.0
    %4642 = vmatprep.subr.mxu0 0.0
    %4643 = vmatpush1.xpose.msra.mxu0 0.0
    %4644 = vmatprep.subr.mxu0 0.0
    %4645 = vmatpush1.xpose.msra.mxu0 0.0
    %4646 = vmatprep.subr.mxu0 0.0
    %4647 = vmatpush1.xpose.msra.mxu0 0.0
    %4648 = vmatprep.subr.mxu0 0.0
    %4649 = vmatpush1.xpose.msra.mxu0 0.0
    %4650 = vmatprep.subr.mxu0 0.0
    %4651 = vmatpush1.xpose.msra.mxu0 0.0
    %4652 = vmatprep.subr.mxu0 0.0
    %4653 = vmatpush1.xpose.msra.mxu0 0.0
    %4654 = vmatprep.subr.mxu0 0.0
    %4655 = vmatpush1.xpose.msra.mxu0 0.0
    %4656 = vmatprep.subr.mxu0 0.0
    %4657 = vmatpush1.xpose.msra.mxu0 0.0
    %4658 = vmatprep.subr.mxu0 0.0
    %4659 = vmatpush1.xpose.msra.mxu0 0.0
    %4660 = vmatprep.subr.mxu0 0.0
    %4661 = vmatpush1.xpose.msra.mxu0 0.0
    %4662 = vmatprep.subr.mxu0 0.0
    %4663 = vmatpush1.xpose.msra.mxu0 0.0
    %4664 = vmatprep.mubr.f32.mxu0 0.0
    %4665 = vmatmul.mubr.f32.gmra.mrb[0].mxu0 %v1031
    %v4666 = vpop.f32.mrb[0].mxu0
    %v4667 = vadd.f32 0.0, %v4666
    %v4668 = vpop.f32.mrb[0].mxu0
    %4669 = vdwg.mxu0
    %4670 = vmatprep.subr.mxu0 0.0
    %4671 = vmatpush1.xpose.msra.mxu0 %v1263
    %4672 = vmatprep.subr.mxu0 0.0
    %4673 = vmatpush1.xpose.msra.mxu0 0.0
    %4674 = vmatprep.subr.mxu0 0.0
    %4675 = vmatpush1.xpose.msra.mxu0 0.0
    %4676 = vmatprep.subr.mxu0 0.0
    %4677 = vmatpush1.xpose.msra.mxu0 0.0
    %4678 = vmatprep.subr.mxu0 0.0
    %4679 = vmatpush1.xpose.msra.mxu0 0.0
    %4680 = vmatprep.subr.mxu0 0.0
    %4681 = vmatpush1.xpose.msra.mxu0 0.0
    %4682 = vmatprep.subr.mxu0 0.0
    %4683 = vmatpush1.xpose.msra.mxu0 0.0
    %4684 = vmatprep.subr.mxu0 0.0
    %4685 = vmatpush1.xpose.msra.mxu0 0.0
    %4686 = vmatprep.subr.mxu0 0.0
    %4687 = vmatpush1.xpose.msra.mxu0 0.0
    %4688 = vmatprep.subr.mxu0 0.0
    %4689 = vmatpush1.xpose.msra.mxu0 0.0
    %4690 = vmatprep.subr.mxu0 0.0
    %4691 = vmatpush1.xpose.msra.mxu0 0.0
    %4692 = vmatprep.subr.mxu0 0.0
    %4693 = vmatpush1.xpose.msra.mxu0 0.0
    %4694 = vmatprep.subr.mxu0 0.0
    %4695 = vmatpush1.xpose.msra.mxu0 0.0
    %4696 = vmatprep.subr.mxu0 0.0
    %4697 = vmatpush1.xpose.msra.mxu0 0.0
    %4698 = vmatprep.subr.mxu0 0.0
    %4699 = vmatpush1.xpose.msra.mxu0 0.0
    %4700 = vmatprep.subr.mxu0 0.0
    %4701 = vmatpush1.xpose.msra.mxu0 0.0
    %4702 = vmatprep.subr.mxu0 0.0
    %4703 = vmatpush1.xpose.msra.mxu0 0.0
    %4704 = vmatprep.subr.mxu0 0.0
    %4705 = vmatpush1.xpose.msra.mxu0 0.0
    %4706 = vmatprep.subr.mxu0 0.0
    %4707 = vmatpush1.xpose.msra.mxu0 0.0
    %4708 = vmatprep.subr.mxu0 0.0
    %4709 = vmatpush1.xpose.msra.mxu0 0.0
    %4710 = vmatprep.subr.mxu0 0.0
    %4711 = vmatpush1.xpose.msra.mxu0 0.0
    %4712 = vmatprep.subr.mxu0 0.0
    %4713 = vmatpush1.xpose.msra.mxu0 0.0
    %4714 = vmatprep.subr.mxu0 0.0
    %4715 = vmatpush1.xpose.msra.mxu0 0.0
    %4716 = vmatprep.subr.mxu0 0.0
    %4717 = vmatpush1.xpose.msra.mxu0 0.0
    %4718 = vmatprep.subr.mxu0 0.0
    %4719 = vmatpush1.xpose.msra.mxu0 0.0
    %4720 = vmatprep.subr.mxu0 0.0
    %4721 = vmatpush1.xpose.msra.mxu0 0.0
    %4722 = vmatprep.subr.mxu0 0.0
    %4723 = vmatpush1.xpose.msra.mxu0 0.0
    %4724 = vmatprep.subr.mxu0 0.0
    %4725 = vmatpush1.xpose.msra.mxu0 0.0
    %4726 = vmatprep.subr.mxu0 0.0
    %4727 = vmatpush1.xpose.msra.mxu0 0.0
    %4728 = vmatprep.subr.mxu0 0.0
    %4729 = vmatpush1.xpose.msra.mxu0 0.0
    %4730 = vmatprep.subr.mxu0 0.0
    %4731 = vmatpush1.xpose.msra.mxu0 0.0
    %4732 = vmatprep.subr.mxu0 0.0
    %4733 = vmatpush1.xpose.msra.mxu0 0.0
    %4734 = vmatprep.mubr.f32.mxu0 0.0
    %4735 = vmatmul.mubr.f32.gmra.mrb[0].mxu0 %v1037
    %v4736 = vpop.f32.mrb[0].mxu0
    %v4737 = vadd.f32 0.0, %v4736
    %v4738 = vpop.f32.mrb[0].mxu0
    %4739 = vdwg.mxu0
    %4740 = vmatprep.subr.mxu0 0.0
    %4741 = vmatpush1.xpose.msra.mxu0 %v1269
    %4742 = vmatprep.subr.mxu0 0.0
    %4743 = vmatpush1.xpose.msra.mxu0 0.0
    %4744 = vmatprep.subr.mxu0 0.0
    %4745 = vmatpush1.xpose.msra.mxu0 0.0
    %4746 = vmatprep.subr.mxu0 0.0
    %4747 = vmatpush1.xpose.msra.mxu0 0.0
    %4748 = vmatprep.subr.mxu0 0.0
    %4749 = vmatpush1.xpose.msra.mxu0 0.0
    %4750 = vmatprep.subr.mxu0 0.0
    %4751 = vmatpush1.xpose.msra.mxu0 0.0
    %4752 = vmatprep.subr.mxu0 0.0
    %4753 = vmatpush1.xpose.msra.mxu0 0.0
    %4754 = vmatprep.subr.mxu0 0.0
    %4755 = vmatpush1.xpose.msra.mxu0 0.0
    %4756 = vmatprep.subr.mxu0 0.0
    %4757 = vmatpush1.xpose.msra.mxu0 0.0
    %4758 = vmatprep.subr.mxu0 0.0
    %4759 = vmatpush1.xpose.msra.mxu0 0.0
    %4760 = vmatprep.subr.mxu0 0.0
    %4761 = vmatpush1.xpose.msra.mxu0 0.0
    %4762 = vmatprep.subr.mxu0 0.0
    %4763 = vmatpush1.xpose.msra.mxu0 0.0
    %4764 = vmatprep.subr.mxu0 0.0
    %4765 = vmatpush1.xpose.msra.mxu0 0.0
    %4766 = vmatprep.subr.mxu0 0.0
    %4767 = vmatpush1.xpose.msra.mxu0 0.0
    %4768 = vmatprep.subr.mxu0 0.0
    %4769 = vmatpush1.xpose.msra.mxu0 0.0
    %4770 = vmatprep.subr.mxu0 0.0
    %4771 = vmatpush1.xpose.msra.mxu0 0.0
    %4772 = vmatprep.subr.mxu0 0.0
    %4773 = vmatpush1.xpose.msra.mxu0 0.0
    %4774 = vmatprep.subr.mxu0 0.0
    %4775 = vmatpush1.xpose.msra.mxu0 0.0
    %4776 = vmatprep.subr.mxu0 0.0
    %4777 = vmatpush1.xpose.msra.mxu0 0.0
    %4778 = vmatprep.subr.mxu0 0.0
    %4779 = vmatpush1.xpose.msra.mxu0 0.0
    %4780 = vmatprep.subr.mxu0 0.0
    %4781 = vmatpush1.xpose.msra.mxu0 0.0
    %4782 = vmatprep.subr.mxu0 0.0
    %4783 = vmatpush1.xpose.msra.mxu0 0.0
    %4784 = vmatprep.subr.mxu0 0.0
    %4785 = vmatpush1.xpose.msra.mxu0 0.0
    %4786 = vmatprep.subr.mxu0 0.0
    %4787 = vmatpush1.xpose.msra.mxu0 0.0
    %4788 = vmatprep.subr.mxu0 0.0
    %4789 = vmatpush1.xpose.msra.mxu0 0.0
    %4790 = vmatprep.subr.mxu0 0.0
    %4791 = vmatpush1.xpose.msra.mxu0 0.0
    %4792 = vmatprep.subr.mxu0 0.0
    %4793 = vmatpush1.xpose.msra.mxu0 0.0
    %4794 = vmatprep.subr.mxu0 0.0
    %4795 = vmatpush1.xpose.msra.mxu0 0.0
    %4796 = vmatprep.subr.mxu0 0.0
    %4797 = vmatpush1.xpose.msra.mxu0 0.0
    %4798 = vmatprep.subr.mxu0 0.0
    %4799 = vmatpush1.xpose.msra.mxu0 0.0
    %4800 = vmatprep.subr.mxu0 0.0
    %4801 = vmatpush1.xpose.msra.mxu0 0.0
    %4802 = vmatprep.subr.mxu0 0.0
    %4803 = vmatpush1.xpose.msra.mxu0 0.0
    %4804 = vmatprep.mubr.f32.mxu0 0.0
    %4805 = vmatmul.mubr.f32.gmra.mrb[0].mxu0 %v1043
    %v4806 = vpop.f32.mrb[0].mxu0
    %v4807 = vadd.f32 0.0, %v4806
    %v4808 = vpop.f32.mrb[0].mxu0
    %4809 = vdwg.mxu0
    %v4810 = vmul.f32 %v4317, 0.088388346
    %v4811 = vmul.f32 %v4387, 0.088388346
    %v4812 = vmul.f32 %v4457, 0.088388346
    %v4813 = vmul.f32 %v4527, 0.088388346
    %v4814 = vmul.f32 %v4597, 0.088388346
    %v4815 = vmul.f32 %v4667, 0.088388346
    %v4816 = vmul.f32 %v4737, 0.088388346
    %v4817 = vmul.f32 %v4807, 0.088388346
    %v4818 = vsel %vm2079, %v4810, -inf
    %4819 = vmax.xlane.f32.xlu0 %v4818
    %v4820 = vpop.xlane.xlu0 %4819
    %v4821 = vsel %vm2079, %v4811, -inf
    %4822 = vmax.xlane.f32.xlu0 %v4821
    %v4823 = vpop.xlane.xlu0 %4822
    %v4824 = vsel %vm2079, %v4812, -inf
    %4825 = vmax.xlane.f32.xlu0 %v4824
    %v4826 = vpop.xlane.xlu0 %4825
    %v4827 = vsel %vm2079, %v4813, -inf
    %4828 = vmax.xlane.f32.xlu0 %v4827
    %v4829 = vpop.xlane.xlu0 %4828
    %v4830 = vsel %vm2079, %v4814, -inf
    %4831 = vmax.xlane.f32.xlu0 %v4830
    %v4832 = vpop.xlane.xlu0 %4831
    %v4833 = vsel %vm2079, %v4815, -inf
    %4834 = vmax.xlane.f32.xlu0 %v4833
    %v4835 = vpop.xlane.xlu0 %4834
    %v4836 = vsel %vm2079, %v4816, -inf
    %4837 = vmax.xlane.f32.xlu0 %v4836
    %v4838 = vpop.xlane.xlu0 %4837
    %v4839 = vsel %vm2079, %v4817, -inf
    %4840 = vmax.xlane.f32.xlu0 %v4839
    %v4841 = vpop.xlane.xlu0 %4840
    %v4842 = vsub.f32 %v4810, %v4820
    %v4843 = vsub.f32 %v4811, %v4823
    %v4844 = vsub.f32 %v4812, %v4826
    %v4845 = vsub.f32 %v4813, %v4829
    %v4846 = vsub.f32 %v4814, %v4832
    %v4847 = vsub.f32 %v4815, %v4835
    %v4848 = vsub.f32 %v4816, %v4838
    %v4849 = vsub.f32 %v4817, %v4841
    %v4850 = vmul.f32 %v4842, 1.442695
    %v4851 = vpow.pop %v4850
    %v4852 = vmul.f32 %v4843, 1.442695
    %v4853 = vpow.pop %v4852
    %v4854 = vmul.f32 %v4844, 1.442695
    %v4855 = vpow.pop %v4854
    %v4856 = vmul.f32 %v4845, 1.442695
    %v4857 = vpow.pop %v4856
    %v4858 = vmul.f32 %v4846, 1.442695
    %v4859 = vpow.pop %v4858
    %v4860 = vmul.f32 %v4847, 1.442695
    %v4861 = vpow.pop %v4860
    %v4862 = vmul.f32 %v4848, 1.442695
    %v4863 = vpow.pop %v4862
    %v4864 = vmul.f32 %v4849, 1.442695
    %v4865 = vpow.pop %v4864
    %v4866 = vsel %vm2079, %v4851, 0.0
    %4867 = vadd.xlane.f32.xlu0 %v4866
    %v4868 = vpop.xlane.xlu0 %4867
    %v4869 = vsel %vm2079, %v4853, 0.0
    %4870 = vadd.xlane.f32.xlu0 %v4869
    %v4871 = vpop.xlane.xlu0 %4870
    %v4872 = vsel %vm2079, %v4855, 0.0
    %4873 = vadd.xlane.f32.xlu0 %v4872
    %v4874 = vpop.xlane.xlu0 %4873
    %v4875 = vsel %vm2079, %v4857, 0.0
    %4876 = vadd.xlane.f32.xlu0 %v4875
    %v4877 = vpop.xlane.xlu0 %4876
    %v4878 = vsel %vm2079, %v4859, 0.0
    %4879 = vadd.xlane.f32.xlu0 %v4878
    %v4880 = vpop.xlane.xlu0 %4879
    %v4881 = vsel %vm2079, %v4861, 0.0
    %4882 = vadd.xlane.f32.xlu0 %v4881
    %v4883 = vpop.xlane.xlu0 %4882
    %v4884 = vsel %vm2079, %v4863, 0.0
    %4885 = vadd.xlane.f32.xlu0 %v4884
    %v4886 = vpop.xlane.xlu0 %4885
    %v4887 = vsel %vm2079, %v4865, 0.0
    %4888 = vadd.xlane.f32.xlu0 %v4887
    %v4889 = vpop.xlane.xlu0 %4888
    %v4890 = vrcp.pop %v4868
    %v4891 = vrcp.pop %v4871
    %v4892 = vrcp.pop %v4874
    %v4893 = vrcp.pop %v4877
    %v4894 = vrcp.pop %v4880
    %v4895 = vrcp.pop %v4883
    %v4896 = vrcp.pop %v4886
    %v4897 = vrcp.pop %v4889
    %v4898 = vmul.f32 %v4851, %v4890
    %v4899 = vmul.f32 %v4853, %v4891
    %v4900 = vmul.f32 %v4855, %v4892
    %v4901 = vmul.f32 %v4857, %v4893
    %v4902 = vmul.f32 %v4859, %v4894
    %v4903 = vmul.f32 %v4861, %v4895
    %v4904 = vmul.f32 %v4863, %v4896
    %v4905 = vmul.f32 %v4865, %v4897
    %v4907 = vsel %vm2079, %v4898, 0
    %4909 = vmatprep.subr.mxu0 0.0
    %4910 = vmatpush1.msra.mxu0 %v1453
    %4911 = vmatprep.subr.mxu0 0.0
    %4912 = vmatpush1.msra.mxu0 0.0
    %4913 = vmatprep.subr.mxu0 0.0
    %4914 = vmatpush1.msra.mxu0 0.0
    %4915 = vmatprep.subr.mxu0 0.0
    %4916 = vmatpush1.msra.mxu0 0.0
    %4917 = vmatprep.subr.mxu0 0.0
    %4918 = vmatpush1.msra.mxu0 0.0
    %4919 = vmatprep.subr.mxu0 0.0
    %4920 = vmatpush1.msra.mxu0 0.0
    %4921 = vmatprep.subr.mxu0 0.0
    %4922 = vmatpush1.msra.mxu0 0.0
    %4923 = vmatprep.subr.mxu0 0.0
    %4924 = vmatpush1.msra.mxu0 0.0
    %4925 = vmatprep.subr.mxu0 0.0
    %4926 = vmatpush1.msra.mxu0 0.0
    %4927 = vmatprep.subr.mxu0 0.0
    %4928 = vmatpush1.msra.mxu0 0.0
    %4929 = vmatprep.subr.mxu0 0.0
    %4930 = vmatpush1.msra.mxu0 0.0
    %4931 = vmatprep.subr.mxu0 0.0
    %4932 = vmatpush1.msra.mxu0 0.0
    %4933 = vmatprep.subr.mxu0 0.0
    %4934 = vmatpush1.msra.mxu0 0.0
    %4935 = vmatprep.subr.mxu0 0.0
    %4936 = vmatpush1.msra.mxu0 0.0
    %4937 = vmatprep.subr.mxu0 0.0
    %4938 = vmatpush1.msra.mxu0 0.0
    %4939 = vmatprep.subr.mxu0 0.0
    %4940 = vmatpush1.msra.mxu0 0.0
    %4941 = vmatprep.subr.mxu0 0.0
    %4942 = vmatpush1.msra.mxu0 0.0
    %4943 = vmatprep.subr.mxu0 0.0
    %4944 = vmatpush1.msra.mxu0 0.0
    %4945 = vmatprep.subr.mxu0 0.0
    %4946 = vmatpush1.msra.mxu0 0.0
    %4947 = vmatprep.subr.mxu0 0.0
    %4948 = vmatpush1.msra.mxu0 0.0
    %4949 = vmatprep.subr.mxu0 0.0
    %4950 = vmatpush1.msra.mxu0 0.0
    %4951 = vmatprep.subr.mxu0 0.0
    %4952 = vmatpush1.msra.mxu0 0.0
    %4953 = vmatprep.subr.mxu0 0.0
    %4954 = vmatpush1.msra.mxu0 0.0
    %4955 = vmatprep.subr.mxu0 0.0
    %4956 = vmatpush1.msra.mxu0 0.0
    %4957 = vmatprep.subr.mxu0 0.0
    %4958 = vmatpush1.msra.mxu0 0.0
    %4959 = vmatprep.subr.mxu0 0.0
    %4960 = vmatpush1.msra.mxu0 0.0
    %4961 = vmatprep.subr.mxu0 0.0
    %4962 = vmatpush1.msra.mxu0 0.0
    %4963 = vmatprep.subr.mxu0 0.0
    %4964 = vmatpush1.msra.mxu0 0.0
    %4965 = vmatprep.subr.mxu0 0.0
    %4966 = vmatpush1.msra.mxu0 0.0
    %4967 = vmatprep.subr.mxu0 0.0
    %4968 = vmatpush1.msra.mxu0 0.0
    %4969 = vmatprep.subr.mxu0 0.0
    %4970 = vmatpush1.msra.mxu0 0.0
    %4971 = vmatprep.subr.mxu0 0.0
    %4972 = vmatpush1.msra.mxu0 0.0
    %4973 = vmatprep.mubr.f32.mxu0 0.0
    %4974 = vmatmul.mubr.f32.gmra.mrb[0].mxu0 %v4907
    %v4975 = vpop.f32.mrb[0].mxu0
    %v4976 = vadd.f32 0.0, %v4975
    %v4977 = vpop.f32.mrb[0].mxu0
    %4978 = vdwg.mxu0
    %v4980 = vsel %vm2079, %v4899, 0
    %4982 = vmatprep.subr.mxu0 0.0
    %4983 = vmatpush1.msra.mxu0 %v1459
    %4984 = vmatprep.subr.mxu0 0.0
    %4985 = vmatpush1.msra.mxu0 0.0
    %4986 = vmatprep.subr.mxu0 0.0
    %4987 = vmatpush1.msra.mxu0 0.0
    %4988 = vmatprep.subr.mxu0 0.0
    %4989 = vmatpush1.msra.mxu0 0.0
    %4990 = vmatprep.subr.mxu0 0.0
    %4991 = vmatpush1.msra.mxu0 0.0
    %4992 = vmatprep.subr.mxu0 0.0
    %4993 = vmatpush1.msra.mxu0 0.0
    %4994 = vmatprep.subr.mxu0 0.0
    %4995 = vmatpush1.msra.mxu0 0.0
    %4996 = vmatprep.subr.mxu0 0.0
    %4997 = vmatpush1.msra.mxu0 0.0
    %4998 = vmatprep.subr.mxu0 0.0
    %4999 = vmatpush1.msra.mxu0 0.0
    %5000 = vmatprep.subr.mxu0 0.0
    %5001 = vmatpush1.msra.mxu0 0.0
    %5002 = vmatprep.subr.mxu0 0.0
    %5003 = vmatpush1.msra.mxu0 0.0
    %5004 = vmatprep.subr.mxu0 0.0
    %5005 = vmatpush1.msra.mxu0 0.0
    %5006 = vmatprep.subr.mxu0 0.0
    %5007 = vmatpush1.msra.mxu0 0.0
    %5008 = vmatprep.subr.mxu0 0.0
    %5009 = vmatpush1.msra.mxu0 0.0
    %5010 = vmatprep.subr.mxu0 0.0
    %5011 = vmatpush1.msra.mxu0 0.0
    %5012 = vmatprep.subr.mxu0 0.0
    %5013 = vmatpush1.msra.mxu0 0.0
    %5014 = vmatprep.subr.mxu0 0.0
    %5015 = vmatpush1.msra.mxu0 0.0
    %5016 = vmatprep.subr.mxu0 0.0
    %5017 = vmatpush1.msra.mxu0 0.0
    %5018 = vmatprep.subr.mxu0 0.0
    %5019 = vmatpush1.msra.mxu0 0.0
    %5020 = vmatprep.subr.mxu0 0.0
    %5021 = vmatpush1.msra.mxu0 0.0
    %5022 = vmatprep.subr.mxu0 0.0
    %5023 = vmatpush1.msra.mxu0 0.0
    %5024 = vmatprep.subr.mxu0 0.0
    %5025 = vmatpush1.msra.mxu0 0.0
    %5026 = vmatprep.subr.mxu0 0.0
    %5027 = vmatpush1.msra.mxu0 0.0
    %5028 = vmatprep.subr.mxu0 0.0
    %5029 = vmatpush1.msra.mxu0 0.0
    %5030 = vmatprep.subr.mxu0 0.0
    %5031 = vmatpush1.msra.mxu0 0.0
    %5032 = vmatprep.subr.mxu0 0.0
    %5033 = vmatpush1.msra.mxu0 0.0
    %5034 = vmatprep.subr.mxu0 0.0
    %5035 = vmatpush1.msra.mxu0 0.0
    %5036 = vmatprep.subr.mxu0 0.0
    %5037 = vmatpush1.msra.mxu0 0.0
    %5038 = vmatprep.subr.mxu0 0.0
    %5039 = vmatpush1.msra.mxu0 0.0
    %5040 = vmatprep.subr.mxu0 0.0
    %5041 = vmatpush1.msra.mxu0 0.0
    %5042 = vmatprep.subr.mxu0 0.0
    %5043 = vmatpush1.msra.mxu0 0.0
    %5044 = vmatprep.subr.mxu0 0.0
    %5045 = vmatpush1.msra.mxu0 0.0
    %5046 = vmatprep.mubr.f32.mxu0 0.0
    %5047 = vmatmul.mubr.f32.gmra.mrb[0].mxu0 %v4980
    %v5048 = vpop.f32.mrb[0].mxu0
    %v5049 = vadd.f32 0.0, %v5048
    %v5050 = vpop.f32.mrb[0].mxu0
    %5051 = vdwg.mxu0
    %v5053 = vsel %vm2079, %v4900, 0
    %5055 = vmatprep.subr.mxu0 0.0
    %5056 = vmatpush1.msra.mxu0 %v1465
    %5057 = vmatprep.subr.mxu0 0.0
    %5058 = vmatpush1.msra.mxu0 0.0
    %5059 = vmatprep.subr.mxu0 0.0
    %5060 = vmatpush1.msra.mxu0 0.0
    %5061 = vmatprep.subr.mxu0 0.0
    %5062 = vmatpush1.msra.mxu0 0.0
    %5063 = vmatprep.subr.mxu0 0.0
    %5064 = vmatpush1.msra.mxu0 0.0
    %5065 = vmatprep.subr.mxu0 0.0
    %5066 = vmatpush1.msra.mxu0 0.0
    %5067 = vmatprep.subr.mxu0 0.0
    %5068 = vmatpush1.msra.mxu0 0.0
    %5069 = vmatprep.subr.mxu0 0.0
    %5070 = vmatpush1.msra.mxu0 0.0
    %5071 = vmatprep.subr.mxu0 0.0
    %5072 = vmatpush1.msra.mxu0 0.0
    %5073 = vmatprep.subr.mxu0 0.0
    %5074 = vmatpush1.msra.mxu0 0.0
    %5075 = vmatprep.subr.mxu0 0.0
    %5076 = vmatpush1.msra.mxu0 0.0
    %5077 = vmatprep.subr.mxu0 0.0
    %5078 = vmatpush1.msra.mxu0 0.0
    %5079 = vmatprep.subr.mxu0 0.0
    %5080 = vmatpush1.msra.mxu0 0.0
    %5081 = vmatprep.subr.mxu0 0.0
    %5082 = vmatpush1.msra.mxu0 0.0
    %5083 = vmatprep.subr.mxu0 0.0
    %5084 = vmatpush1.msra.mxu0 0.0
    %5085 = vmatprep.subr.mxu0 0.0
    %5086 = vmatpush1.msra.mxu0 0.0
    %5087 = vmatprep.subr.mxu0 0.0
    %5088 = vmatpush1.msra.mxu0 0.0
    %5089 = vmatprep.subr.mxu0 0.0
    %5090 = vmatpush1.msra.mxu0 0.0
    %5091 = vmatprep.subr.mxu0 0.0
    %5092 = vmatpush1.msra.mxu0 0.0
    %5093 = vmatprep.subr.mxu0 0.0
    %5094 = vmatpush1.msra.mxu0 0.0
    %5095 = vmatprep.subr.mxu0 0.0
    %5096 = vmatpush1.msra.mxu0 0.0
    %5097 = vmatprep.subr.mxu0 0.0
    %5098 = vmatpush1.msra.mxu0 0.0
    %5099 = vmatprep.subr.mxu0 0.0
    %5100 = vmatpush1.msra.mxu0 0.0
    %5101 = vmatprep.subr.mxu0 0.0
    %5102 = vmatpush1.msra.mxu0 0.0
    %5103 = vmatprep.subr.mxu0 0.0
    %5104 = vmatpush1.msra.mxu0 0.0
    %5105 = vmatprep.subr.mxu0 0.0
    %5106 = vmatpush1.msra.mxu0 0.0
    %5107 = vmatprep.subr.mxu0 0.0
    %5108 = vmatpush1.msra.mxu0 0.0
    %5109 = vmatprep.subr.mxu0 0.0
    %5110 = vmatpush1.msra.mxu0 0.0
    %5111 = vmatprep.subr.mxu0 0.0
    %5112 = vmatpush1.msra.mxu0 0.0
    %5113 = vmatprep.subr.mxu0 0.0
    %5114 = vmatpush1.msra.mxu0 0.0
    %5115 = vmatprep.subr.mxu0 0.0
    %5116 = vmatpush1.msra.mxu0 0.0
    %5117 = vmatprep.subr.mxu0 0.0
    %5118 = vmatpush1.msra.mxu0 0.0
    %5119 = vmatprep.mubr.f32.mxu0 0.0
    %5120 = vmatmul.mubr.f32.gmra.mrb[0].mxu0 %v5053
    %v5121 = vpop.f32.mrb[0].mxu0
    %v5122 = vadd.f32 0.0, %v5121
    %v5123 = vpop.f32.mrb[0].mxu0
    %5124 = vdwg.mxu0
    %v5126 = vsel %vm2079, %v4901, 0
    %5128 = vmatprep.subr.mxu0 0.0
    %5129 = vmatpush1.msra.mxu0 %v1471
    %5130 = vmatprep.subr.mxu0 0.0
    %5131 = vmatpush1.msra.mxu0 0.0
    %5132 = vmatprep.subr.mxu0 0.0
    %5133 = vmatpush1.msra.mxu0 0.0
    %5134 = vmatprep.subr.mxu0 0.0
    %5135 = vmatpush1.msra.mxu0 0.0
    %5136 = vmatprep.subr.mxu0 0.0
    %5137 = vmatpush1.msra.mxu0 0.0
    %5138 = vmatprep.subr.mxu0 0.0
    %5139 = vmatpush1.msra.mxu0 0.0
    %5140 = vmatprep.subr.mxu0 0.0
    %5141 = vmatpush1.msra.mxu0 0.0
    %5142 = vmatprep.subr.mxu0 0.0
    %5143 = vmatpush1.msra.mxu0 0.0
    %5144 = vmatprep.subr.mxu0 0.0
    %5145 = vmatpush1.msra.mxu0 0.0
    %5146 = vmatprep.subr.mxu0 0.0
    %5147 = vmatpush1.msra.mxu0 0.0
    %5148 = vmatprep.subr.mxu0 0.0
    %5149 = vmatpush1.msra.mxu0 0.0
    %5150 = vmatprep.subr.mxu0 0.0
    %5151 = vmatpush1.msra.mxu0 0.0
    %5152 = vmatprep.subr.mxu0 0.0
    %5153 = vmatpush1.msra.mxu0 0.0
    %5154 = vmatprep.subr.mxu0 0.0
    %5155 = vmatpush1.msra.mxu0 0.0
    %5156 = vmatprep.subr.mxu0 0.0
    %5157 = vmatpush1.msra.mxu0 0.0
    %5158 = vmatprep.subr.mxu0 0.0
    %5159 = vmatpush1.msra.mxu0 0.0
    %5160 = vmatprep.subr.mxu0 0.0
    %5161 = vmatpush1.msra.mxu0 0.0
    %5162 = vmatprep.subr.mxu0 0.0
    %5163 = vmatpush1.msra.mxu0 0.0
    %5164 = vmatprep.subr.mxu0 0.0
    %5165 = vmatpush1.msra.mxu0 0.0
    %5166 = vmatprep.subr.mxu0 0.0
    %5167 = vmatpush1.msra.mxu0 0.0
    %5168 = vmatprep.subr.mxu0 0.0
    %5169 = vmatpush1.msra.mxu0 0.0
    %5170 = vmatprep.subr.mxu0 0.0
    %5171 = vmatpush1.msra.mxu0 0.0
    %5172 = vmatprep.subr.mxu0 0.0
    %5173 = vmatpush1.msra.mxu0 0.0
    %5174 = vmatprep.subr.mxu0 0.0
    %5175 = vmatpush1.msra.mxu0 0.0
    %5176 = vmatprep.subr.mxu0 0.0
    %5177 = vmatpush1.msra.mxu0 0.0
    %5178 = vmatprep.subr.mxu0 0.0
    %5179 = vmatpush1.msra.mxu0 0.0
    %5180 = vmatprep.subr.mxu0 0.0
    %5181 = vmatpush1.msra.mxu0 0.0
    %5182 = vmatprep.subr.mxu0 0.0
    %5183 = vmatpush1.msra.mxu0 0.0
    %5184 = vmatprep.subr.mxu0 0.0
    %5185 = vmatpush1.msra.mxu0 0.0
    %5186 = vmatprep.subr.mxu0 0.0
    %5187 = vmatpush1.msra.mxu0 0.0
    %5188 = vmatprep.subr.mxu0 0.0
    %5189 = vmatpush1.msra.mxu0 0.0
    %5190 = vmatprep.subr.mxu0 0.0
    %5191 = vmatpush1.msra.mxu0 0.0
    %5192 = vmatprep.mubr.f32.mxu0 0.0
    %5193 = vmatmul.mubr.f32.gmra.mrb[0].mxu0 %v5126
    %v5194 = vpop.f32.mrb[0].mxu0
    %v5195 = vadd.f32 0.0, %v5194
    %v5196 = vpop.f32.mrb[0].mxu0
    %5197 = vdwg.mxu0
    %v5199 = vsel %vm2079, %v4902, 0
    %5201 = vmatprep.subr.mxu0 0.0
    %5202 = vmatpush1.msra.mxu0 %v1477
    %5203 = vmatprep.subr.mxu0 0.0
    %5204 = vmatpush1.msra.mxu0 0.0
    %5205 = vmatprep.subr.mxu0 0.0
    %5206 = vmatpush1.msra.mxu0 0.0
    %5207 = vmatprep.subr.mxu0 0.0
    %5208 = vmatpush1.msra.mxu0 0.0
    %5209 = vmatprep.subr.mxu0 0.0
    %5210 = vmatpush1.msra.mxu0 0.0
    %5211 = vmatprep.subr.mxu0 0.0
    %5212 = vmatpush1.msra.mxu0 0.0
    %5213 = vmatprep.subr.mxu0 0.0
    %5214 = vmatpush1.msra.mxu0 0.0
    %5215 = vmatprep.subr.mxu0 0.0
    %5216 = vmatpush1.msra.mxu0 0.0
    %5217 = vmatprep.subr.mxu0 0.0
    %5218 = vmatpush1.msra.mxu0 0.0
    %5219 = vmatprep.subr.mxu0 0.0
    %5220 = vmatpush1.msra.mxu0 0.0
    %5221 = vmatprep.subr.mxu0 0.0
    %5222 = vmatpush1.msra.mxu0 0.0
    %5223 = vmatprep.subr.mxu0 0.0
    %5224 = vmatpush1.msra.mxu0 0.0
    %5225 = vmatprep.subr.mxu0 0.0
    %5226 = vmatpush1.msra.mxu0 0.0
    %5227 = vmatprep.subr.mxu0 0.0
    %5228 = vmatpush1.msra.mxu0 0.0
    %5229 = vmatprep.subr.mxu0 0.0
    %5230 = vmatpush1.msra.mxu0 0.0
    %5231 = vmatprep.subr.mxu0 0.0
    %5232 = vmatpush1.msra.mxu0 0.0
    %5233 = vmatprep.subr.mxu0 0.0
    %5234 = vmatpush1.msra.mxu0 0.0
    %5235 = vmatprep.subr.mxu0 0.0
    %5236 = vmatpush1.msra.mxu0 0.0
    %5237 = vmatprep.subr.mxu0 0.0
    %5238 = vmatpush1.msra.mxu0 0.0
    %5239 = vmatprep.subr.mxu0 0.0
    %5240 = vmatpush1.msra.mxu0 0.0
    %5241 = vmatprep.subr.mxu0 0.0
    %5242 = vmatpush1.msra.mxu0 0.0
    %5243 = vmatprep.subr.mxu0 0.0
    %5244 = vmatpush1.msra.mxu0 0.0
    %5245 = vmatprep.subr.mxu0 0.0
    %5246 = vmatpush1.msra.mxu0 0.0
    %5247 = vmatprep.subr.mxu0 0.0
    %5248 = vmatpush1.msra.mxu0 0.0
    %5249 = vmatprep.subr.mxu0 0.0
    %5250 = vmatpush1.msra.mxu0 0.0
    %5251 = vmatprep.subr.mxu0 0.0
    %5252 = vmatpush1.msra.mxu0 0.0
    %5253 = vmatprep.subr.mxu0 0.0
    %5254 = vmatpush1.msra.mxu0 0.0
    %5255 = vmatprep.subr.mxu0 0.0
    %5256 = vmatpush1.msra.mxu0 0.0
    %5257 = vmatprep.subr.mxu0 0.0
    %5258 = vmatpush1.msra.mxu0 0.0
    %5259 = vmatprep.subr.mxu0 0.0
    %5260 = vmatpush1.msra.mxu0 0.0
    %5261 = vmatprep.subr.mxu0 0.0
    %5262 = vmatpush1.msra.mxu0 0.0
    %5263 = vmatprep.subr.mxu0 0.0
    %5264 = vmatpush1.msra.mxu0 0.0
    %5265 = vmatprep.mubr.f32.mxu0 0.0
    %5266 = vmatmul.mubr.f32.gmra.mrb[0].mxu0 %v5199
    %v5267 = vpop.f32.mrb[0].mxu0
    %v5268 = vadd.f32 0.0, %v5267
    %v5269 = vpop.f32.mrb[0].mxu0
    %5270 = vdwg.mxu0
    %v5272 = vsel %vm2079, %v4903, 0
    %5274 = vmatprep.subr.mxu0 0.0
    %5275 = vmatpush1.msra.mxu0 %v1483
    %5276 = vmatprep.subr.mxu0 0.0
    %5277 = vmatpush1.msra.mxu0 0.0
    %5278 = vmatprep.subr.mxu0 0.0
    %5279 = vmatpush1.msra.mxu0 0.0
    %5280 = vmatprep.subr.mxu0 0.0
    %5281 = vmatpush1.msra.mxu0 0.0
    %5282 = vmatprep.subr.mxu0 0.0
    %5283 = vmatpush1.msra.mxu0 0.0
    %5284 = vmatprep.subr.mxu0 0.0
    %5285 = vmatpush1.msra.mxu0 0.0
    %5286 = vmatprep.subr.mxu0 0.0
    %5287 = vmatpush1.msra.mxu0 0.0
    %5288 = vmatprep.subr.mxu0 0.0
    %5289 = vmatpush1.msra.mxu0 0.0
    %5290 = vmatprep.subr.mxu0 0.0
    %5291 = vmatpush1.msra.mxu0 0.0
    %5292 = vmatprep.subr.mxu0 0.0
    %5293 = vmatpush1.msra.mxu0 0.0
    %5294 = vmatprep.subr.mxu0 0.0
    %5295 = vmatpush1.msra.mxu0 0.0
    %5296 = vmatprep.subr.mxu0 0.0
    %5297 = vmatpush1.msra.mxu0 0.0
    %5298 = vmatprep.subr.mxu0 0.0
    %5299 = vmatpush1.msra.mxu0 0.0
    %5300 = vmatprep.subr.mxu0 0.0
    %5301 = vmatpush1.msra.mxu0 0.0
    %5302 = vmatprep.subr.mxu0 0.0
    %5303 = vmatpush1.msra.mxu0 0.0
    %5304 = vmatprep.subr.mxu0 0.0
    %5305 = vmatpush1.msra.mxu0 0.0
    %5306 = vmatprep.subr.mxu0 0.0
    %5307 = vmatpush1.msra.mxu0 0.0
    %5308 = vmatprep.subr.mxu0 0.0
    %5309 = vmatpush1.msra.mxu0 0.0
    %5310 = vmatprep.subr.mxu0 0.0
    %5311 = vmatpush1.msra.mxu0 0.0
    %5312 = vmatprep.subr.mxu0 0.0
    %5313 = vmatpush1.msra.mxu0 0.0
    %5314 = vmatprep.subr.mxu0 0.0
    %5315 = vmatpush1.msra.mxu0 0.0
    %5316 = vmatprep.subr.mxu0 0.0
    %5317 = vmatpush1.msra.mxu0 0.0
    %5318 = vmatprep.subr.mxu0 0.0
    %5319 = vmatpush1.msra.mxu0 0.0
    %5320 = vmatprep.subr.mxu0 0.0
    %5321 = vmatpush1.msra.mxu0 0.0
    %5322 = vmatprep.subr.mxu0 0.0
    %5323 = vmatpush1.msra.mxu0 0.0
    %5324 = vmatprep.subr.mxu0 0.0
    %5325 = vmatpush1.msra.mxu0 0.0
    %5326 = vmatprep.subr.mxu0 0.0
    %5327 = vmatpush1.msra.mxu0 0.0
    %5328 = vmatprep.subr.mxu0 0.0
    %5329 = vmatpush1.msra.mxu0 0.0
    %5330 = vmatprep.subr.mxu0 0.0
    %5331 = vmatpush1.msra.mxu0 0.0
    %5332 = vmatprep.subr.mxu0 0.0
    %5333 = vmatpush1.msra.mxu0 0.0
    %5334 = vmatprep.subr.mxu0 0.0
    %5335 = vmatpush1.msra.mxu0 0.0
    %5336 = vmatprep.subr.mxu0 0.0
    %5337 = vmatpush1.msra.mxu0 0.0
    %5338 = vmatprep.mubr.f32.mxu0 0.0
    %5339 = vmatmul.mubr.f32.gmra.mrb[0].mxu0 %v5272
    %v5340 = vpop.f32.mrb[0].mxu0
    %v5341 = vadd.f32 0.0, %v5340
    %v5342 = vpop.f32.mrb[0].mxu0
    %5343 = vdwg.mxu0
    %v5345 = vsel %vm2079, %v4904, 0
    %5347 = vmatprep.subr.mxu0 0.0
    %5348 = vmatpush1.msra.mxu0 %v1489
    %5349 = vmatprep.subr.mxu0 0.0
    %5350 = vmatpush1.msra.mxu0 0.0
    %5351 = vmatprep.subr.mxu0 0.0
    %5352 = vmatpush1.msra.mxu0 0.0
    %5353 = vmatprep.subr.mxu0 0.0
    %5354 = vmatpush1.msra.mxu0 0.0
    %5355 = vmatprep.subr.mxu0 0.0
    %5356 = vmatpush1.msra.mxu0 0.0
    %5357 = vmatprep.subr.mxu0 0.0
    %5358 = vmatpush1.msra.mxu0 0.0
    %5359 = vmatprep.subr.mxu0 0.0
    %5360 = vmatpush1.msra.mxu0 0.0
    %5361 = vmatprep.subr.mxu0 0.0
    %5362 = vmatpush1.msra.mxu0 0.0
    %5363 = vmatprep.subr.mxu0 0.0
    %5364 = vmatpush1.msra.mxu0 0.0
    %5365 = vmatprep.subr.mxu0 0.0
    %5366 = vmatpush1.msra.mxu0 0.0
    %5367 = vmatprep.subr.mxu0 0.0
    %5368 = vmatpush1.msra.mxu0 0.0
    %5369 = vmatprep.subr.mxu0 0.0
    %5370 = vmatpush1.msra.mxu0 0.0
    %5371 = vmatprep.subr.mxu0 0.0
    %5372 = vmatpush1.msra.mxu0 0.0
    %5373 = vmatprep.subr.mxu0 0.0
    %5374 = vmatpush1.msra.mxu0 0.0
    %5375 = vmatprep.subr.mxu0 0.0
    %5376 = vmatpush1.msra.mxu0 0.0
    %5377 = vmatprep.subr.mxu0 0.0
    %5378 = vmatpush1.msra.mxu0 0.0
    %5379 = vmatprep.subr.mxu0 0.0
    %5380 = vmatpush1.msra.mxu0 0.0
    %5381 = vmatprep.subr.mxu0 0.0
    %5382 = vmatpush1.msra.mxu0 0.0
    %5383 = vmatprep.subr.mxu0 0.0
    %5384 = vmatpush1.msra.mxu0 0.0
    %5385 = vmatprep.subr.mxu0 0.0
    %5386 = vmatpush1.msra.mxu0 0.0
    %5387 = vmatprep.subr.mxu0 0.0
    %5388 = vmatpush1.msra.mxu0 0.0
    %5389 = vmatprep.subr.mxu0 0.0
    %5390 = vmatpush1.msra.mxu0 0.0
    %5391 = vmatprep.subr.mxu0 0.0
    %5392 = vmatpush1.msra.mxu0 0.0
    %5393 = vmatprep.subr.mxu0 0.0
    %5394 = vmatpush1.msra.mxu0 0.0
    %5395 = vmatprep.subr.mxu0 0.0
    %5396 = vmatpush1.msra.mxu0 0.0
    %5397 = vmatprep.subr.mxu0 0.0
    %5398 = vmatpush1.msra.mxu0 0.0
    %5399 = vmatprep.subr.mxu0 0.0
    %5400 = vmatpush1.msra.mxu0 0.0
    %5401 = vmatprep.subr.mxu0 0.0
    %5402 = vmatpush1.msra.mxu0 0.0
    %5403 = vmatprep.subr.mxu0 0.0
    %5404 = vmatpush1.msra.mxu0 0.0
    %5405 = vmatprep.subr.mxu0 0.0
    %5406 = vmatpush1.msra.mxu0 0.0
    %5407 = vmatprep.subr.mxu0 0.0
    %5408 = vmatpush1.msra.mxu0 0.0
    %5409 = vmatprep.subr.mxu0 0.0
    %5410 = vmatpush1.msra.mxu0 0.0
    %5411 = vmatprep.mubr.f32.mxu0 0.0
    %5412 = vmatmul.mubr.f32.gmra.mrb[0].mxu0 %v5345
    %v5413 = vpop.f32.mrb[0].mxu0
    %v5414 = vadd.f32 0.0, %v5413
    %v5415 = vpop.f32.mrb[0].mxu0
    %5416 = vdwg.mxu0
    %v5418 = vsel %vm2079, %v4905, 0
    %5420 = vmatprep.subr.mxu0 0.0
    %5421 = vmatpush1.msra.mxu0 %v1495
    %5422 = vmatprep.subr.mxu0 0.0
    %5423 = vmatpush1.msra.mxu0 0.0
    %5424 = vmatprep.subr.mxu0 0.0
    %5425 = vmatpush1.msra.mxu0 0.0
    %5426 = vmatprep.subr.mxu0 0.0
    %5427 = vmatpush1.msra.mxu0 0.0
    %5428 = vmatprep.subr.mxu0 0.0
    %5429 = vmatpush1.msra.mxu0 0.0
    %5430 = vmatprep.subr.mxu0 0.0
    %5431 = vmatpush1.msra.mxu0 0.0
    %5432 = vmatprep.subr.mxu0 0.0
    %5433 = vmatpush1.msra.mxu0 0.0
    %5434 = vmatprep.subr.mxu0 0.0
    %5435 = vmatpush1.msra.mxu0 0.0
    %5436 = vmatprep.subr.mxu0 0.0
    %5437 = vmatpush1.msra.mxu0 0.0
    %5438 = vmatprep.subr.mxu0 0.0
    %5439 = vmatpush1.msra.mxu0 0.0
    %5440 = vmatprep.subr.mxu0 0.0
    %5441 = vmatpush1.msra.mxu0 0.0
    %5442 = vmatprep.subr.mxu0 0.0
    %5443 = vmatpush1.msra.mxu0 0.0
    %5444 = vmatprep.subr.mxu0 0.0
    %5445 = vmatpush1.msra.mxu0 0.0
    %5446 = vmatprep.subr.mxu0 0.0
    %5447 = vmatpush1.msra.mxu0 0.0
    %5448 = vmatprep.subr.mxu0 0.0
    %5449 = vmatpush1.msra.mxu0 0.0
    %5450 = vmatprep.subr.mxu0 0.0
    %5451 = vmatpush1.msra.mxu0 0.0
    %5452 = vmatprep.subr.mxu0 0.0
    %5453 = vmatpush1.msra.mxu0 0.0
    %5454 = vmatprep.subr.mxu0 0.0
    %5455 = vmatpush1.msra.mxu0 0.0
    %5456 = vmatprep.subr.mxu0 0.0
    %5457 = vmatpush1.msra.mxu0 0.0
    %5458 = vmatprep.subr.mxu0 0.0
    %5459 = vmatpush1.msra.mxu0 0.0
    %5460 = vmatprep.subr.mxu0 0.0
    %5461 = vmatpush1.msra.mxu0 0.0
    %5462 = vmatprep.subr.mxu0 0.0
    %5463 = vmatpush1.msra.mxu0 0.0
    %5464 = vmatprep.subr.mxu0 0.0
    %5465 = vmatpush1.msra.mxu0 0.0
    %5466 = vmatprep.subr.mxu0 0.0
    %5467 = vmatpush1.msra.mxu0 0.0
    %5468 = vmatprep.subr.mxu0 0.0
    %5469 = vmatpush1.msra.mxu0 0.0
    %5470 = vmatprep.subr.mxu0 0.0
    %5471 = vmatpush1.msra.mxu0 0.0
    %5472 = vmatprep.subr.mxu0 0.0
    %5473 = vmatpush1.msra.mxu0 0.0
    %5474 = vmatprep.subr.mxu0 0.0
    %5475 = vmatpush1.msra.mxu0 0.0
    %5476 = vmatprep.subr.mxu0 0.0
    %5477 = vmatpush1.msra.mxu0 0.0
    %5478 = vmatprep.subr.mxu0 0.0
    %5479 = vmatpush1.msra.mxu0 0.0
    %5480 = vmatprep.subr.mxu0 0.0
    %5481 = vmatpush1.msra.mxu0 0.0
    %5482 = vmatprep.subr.mxu0 0.0
    %5483 = vmatpush1.msra.mxu0 0.0
    %5484 = vmatprep.mubr.f32.mxu0 0.0
    %5485 = vmatmul.mubr.f32.gmra.mrb[0].mxu0 %v5418
    %v5486 = vpop.f32.mrb[0].mxu0
    %v5487 = vadd.f32 0.0, %v5486
    %v5488 = vpop.f32.mrb[0].mxu0
    %5489 = vdwg.mxu0
    %v5490 = vld [vmem:[#allocation7 + $0x100] sm:$0xff]
    %v5491 = vld [vmem:[#allocation7 + $0x108] sm:$0xff]
    %v5492 = vld [vmem:[#allocation7 + $0x110] sm:$0xff]
    %v5493 = vld [vmem:[#allocation7 + $0x118] sm:$0xff]
    %v5494 = vld [vmem:[#allocation7 + $0x120] sm:$0xff]
    %v5495 = vld [vmem:[#allocation7 + $0x128] sm:$0xff]
    %v5496 = vld [vmem:[#allocation7 + $0x130] sm:$0xff]
    %v5497 = vld [vmem:[#allocation7 + $0x138] sm:$0xff]
    %v5498 = vld [vmem:[#allocation7 + $0x140] sm:$0xff]
    %v5499 = vld [vmem:[#allocation7 + $0x148] sm:$0xff]
    %v5500 = vld [vmem:[#allocation7 + $0x150] sm:$0xff]
    %v5501 = vld [vmem:[#allocation7 + $0x158] sm:$0xff]
    %v5502 = vld [vmem:[#allocation7 + $0x160] sm:$0xff]
    %v5503 = vld [vmem:[#allocation7 + $0x168] sm:$0xff]
    %v5504 = vld [vmem:[#allocation7 + $0x170] sm:$0xff]
    %v5505 = vld [vmem:[#allocation7 + $0x178] sm:$0xff]
    %5506 = vmatprep.subr.mxu0 0.0
    %5507 = vmatpush1.msra.mxu0 %v5490
    %5508 = vmatprep.subr.mxu0 0.0
    %5509 = vmatpush1.msra.mxu0 %v5491
    %5510 = vmatprep.subr.mxu0 0.0
    %5511 = vmatpush1.msra.mxu0 %v5492
    %5512 = vmatprep.subr.mxu0 0.0
    %5513 = vmatpush1.msra.mxu0 %v5493
    %5514 = vmatprep.subr.mxu0 0.0
    %5515 = vmatpush1.msra.mxu0 %v5494
    %5516 = vmatprep.subr.mxu0 0.0
    %5517 = vmatpush1.msra.mxu0 %v5495
    %5518 = vmatprep.subr.mxu0 0.0
    %5519 = vmatpush1.msra.mxu0 %v5496
    %5520 = vmatprep.subr.mxu0 0.0
    %5521 = vmatpush1.msra.mxu0 %v5497
    %5522 = vmatprep.subr.mxu0 0.0
    %5523 = vmatpush1.msra.mxu0 %v5498
    %5524 = vmatprep.subr.mxu0 0.0
    %5525 = vmatpush1.msra.mxu0 %v5499
    %5526 = vmatprep.subr.mxu0 0.0
    %5527 = vmatpush1.msra.mxu0 %v5500
    %5528 = vmatprep.subr.mxu0 0.0
    %5529 = vmatpush1.msra.mxu0 %v5501
    %5530 = vmatprep.subr.mxu0 0.0
    %5531 = vmatpush1.msra.mxu0 %v5502
    %5532 = vmatprep.subr.mxu0 0.0
    %5533 = vmatpush1.msra.mxu0 %v5503
    %5534 = vmatprep.subr.mxu0 0.0
    %5535 = vmatpush1.msra.mxu0 %v5504
    %5536 = vmatprep.subr.mxu0 0.0
    %5537 = vmatpush1.msra.mxu0 %v5505
    %5538 = vmatprep.subr.mxu0 0.0
    %5539 = vmatpush1.msra.mxu0 0.0
    %5540 = vmatprep.subr.mxu0 0.0
    %5541 = vmatpush1.msra.mxu0 0.0
    %5542 = vmatprep.subr.mxu0 0.0
    %5543 = vmatpush1.msra.mxu0 0.0
    %5544 = vmatprep.subr.mxu0 0.0
    %5545 = vmatpush1.msra.mxu0 0.0
    %5546 = vmatprep.subr.mxu0 0.0
    %5547 = vmatpush1.msra.mxu0 0.0
    %5548 = vmatprep.subr.mxu0 0.0
    %5549 = vmatpush1.msra.mxu0 0.0
    %5550 = vmatprep.subr.mxu0 0.0
    %5551 = vmatpush1.msra.mxu0 0.0
    %5552 = vmatprep.subr.mxu0 0.0
    %5553 = vmatpush1.msra.mxu0 0.0
    %5554 = vmatprep.subr.mxu0 0.0
    %5555 = vmatpush1.msra.mxu0 0.0
    %5556 = vmatprep.subr.mxu0 0.0
    %5557 = vmatpush1.msra.mxu0 0.0
    %5558 = vmatprep.subr.mxu0 0.0
    %5559 = vmatpush1.msra.mxu0 0.0
    %5560 = vmatprep.subr.mxu0 0.0
    %5561 = vmatpush1.msra.mxu0 0.0
    %5562 = vmatprep.subr.mxu0 0.0
    %5563 = vmatpush1.msra.mxu0 0.0
    %5564 = vmatprep.subr.mxu0 0.0
    %5565 = vmatpush1.msra.mxu0 0.0
    %5566 = vmatprep.subr.mxu0 0.0
    %5567 = vmatpush1.msra.mxu0 0.0
    %5568 = vmatprep.subr.mxu0 0.0
    %5569 = vmatpush1.msra.mxu0 0.0
    %5570 = vmatprep.mubr.f32.mxu0 0.0
    %5571 = vmatmul.mubr.f32.gmra.mrb[0].mxu0 %v4976
    %v5572 = vpop.f32.mrb[0].mxu0
    %v5573 = vadd.f32 0.0, %v5572
    %v5574 = vpop.f32.mrb[0].mxu0
    %5575 = vmatprep.mubr.f32.mxu0 0.0
    %5576 = vmatmul.mubr.f32.gmra.mrb[0].mxu0 %v5049
    %v5577 = vpop.f32.mrb[0].mxu0
    %v5578 = vadd.f32 0.0, %v5577
    %v5579 = vpop.f32.mrb[0].mxu0
    %5580 = vmatprep.mubr.f32.mxu0 0.0
    %5581 = vmatmul.mubr.f32.gmra.mrb[0].mxu0 %v5122
    %v5582 = vpop.f32.mrb[0].mxu0
    %v5583 = vadd.f32 0.0, %v5582
    %v5584 = vpop.f32.mrb[0].mxu0
    %5585 = vmatprep.mubr.f32.mxu0 0.0
    %5586 = vmatmul.mubr.f32.gmra.mrb[0].mxu0 %v5195
    %v5587 = vpop.f32.mrb[0].mxu0
    %v5588 = vadd.f32 0.0, %v5587
    %v5589 = vpop.f32.mrb[0].mxu0
    %5590 = vmatprep.mubr.f32.mxu0 0.0
    %5591 = vmatmul.mubr.f32.gmra.mrb[0].mxu0 %v5268
    %v5592 = vpop.f32.mrb[0].mxu0
    %v5593 = vadd.f32 0.0, %v5592
    %v5594 = vpop.f32.mrb[0].mxu0
    %5595 = vmatprep.mubr.f32.mxu0 0.0
    %5596 = vmatmul.mubr.f32.gmra.mrb[0].mxu0 %v5341
    %v5597 = vpop.f32.mrb[0].mxu0
    %v5598 = vadd.f32 0.0, %v5597
    %v5599 = vpop.f32.mrb[0].mxu0
    %5600 = vmatprep.mubr.f32.mxu0 0.0
    %5601 = vmatmul.mubr.f32.gmra.mrb[0].mxu0 %v5414
    %v5602 = vpop.f32.mrb[0].mxu0
    %v5603 = vadd.f32 0.0, %v5602
    %v5604 = vpop.f32.mrb[0].mxu0
    %5605 = vmatprep.mubr.f32.mxu0 0.0
    %5606 = vmatmul.mubr.f32.gmra.mrb[0].mxu0 %v5487
    %v5607 = vpop.f32.mrb[0].mxu0
    %v5608 = vadd.f32 0.0, %v5607
    %v5609 = vpop.f32.mrb[0].mxu0
    %5610 = vdwg.mxu0
    %v5611 = vadd.f32 %v4242, %v5573
    %v5612 = vadd.f32 %v4243, %v5578
    %v5613 = vadd.f32 %v4244, %v5583
    %v5614 = vadd.f32 %v4245, %v5588
    %v5615 = vadd.f32 %v4246, %v5593
    %v5616 = vadd.f32 %v4247, %v5598
    %v5617 = vadd.f32 %v4248, %v5603
    %v5618 = vadd.f32 %v4249, %v5608
    %5619 = vmatprep.subr.mxu0 0.0
    %5620 = vmatpush1.xpose.msra.mxu0 %v1229
    %5621 = vmatprep.subr.mxu0 0.0
    %5622 = vmatpush1.xpose.msra.mxu0 0.0
    %5623 = vmatprep.subr.mxu0 0.0
    %5624 = vmatpush1.xpose.msra.mxu0 0.0
    %5625 = vmatprep.subr.mxu0 0.0
    %5626 = vmatpush1.xpose.msra.mxu0 0.0
    %5627 = vmatprep.subr.mxu0 0.0
    %5628 = vmatpush1.xpose.msra.mxu0 0.0
    %5629 = vmatprep.subr.mxu0 0.0
    %5630 = vmatpush1.xpose.msra.mxu0 0.0
    %5631 = vmatprep.subr.mxu0 0.0
    %5632 = vmatpush1.xpose.msra.mxu0 0.0
    %5633 = vmatprep.subr.mxu0 0.0
    %5634 = vmatpush1.xpose.msra.mxu0 0.0
    %5635 = vmatprep.subr.mxu0 0.0
    %5636 = vmatpush1.xpose.msra.mxu0 0.0
    %5637 = vmatprep.subr.mxu0 0.0
    %5638 = vmatpush1.xpose.msra.mxu0 0.0
    %5639 = vmatprep.subr.mxu0 0.0
    %5640 = vmatpush1.xpose.msra.mxu0 0.0
    %5641 = vmatprep.subr.mxu0 0.0
    %5642 = vmatpush1.xpose.msra.mxu0 0.0
    %5643 = vmatprep.subr.mxu0 0.0
    %5644 = vmatpush1.xpose.msra.mxu0 0.0
    %5645 = vmatprep.subr.mxu0 0.0
    %5646 = vmatpush1.xpose.msra.mxu0 0.0
    %5647 = vmatprep.subr.mxu0 0.0
    %5648 = vmatpush1.xpose.msra.mxu0 0.0
    %5649 = vmatprep.subr.mxu0 0.0
    %5650 = vmatpush1.xpose.msra.mxu0 0.0
    %5651 = vmatprep.subr.mxu0 0.0
    %5652 = vmatpush1.xpose.msra.mxu0 0.0
    %5653 = vmatprep.subr.mxu0 0.0
    %5654 = vmatpush1.xpose.msra.mxu0 0.0
    %5655 = vmatprep.subr.mxu0 0.0
    %5656 = vmatpush1.xpose.msra.mxu0 0.0
    %5657 = vmatprep.subr.mxu0 0.0
    %5658 = vmatpush1.xpose.msra.mxu0 0.0
    %5659 = vmatprep.subr.mxu0 0.0
    %5660 = vmatpush1.xpose.msra.mxu0 0.0
    %5661 = vmatprep.subr.mxu0 0.0
    %5662 = vmatpush1.xpose.msra.mxu0 0.0
    %5663 = vmatprep.subr.mxu0 0.0
    %5664 = vmatpush1.xpose.msra.mxu0 0.0
    %5665 = vmatprep.subr.mxu0 0.0
    %5666 = vmatpush1.xpose.msra.mxu0 0.0
    %5667 = vmatprep.subr.mxu0 0.0
    %5668 = vmatpush1.xpose.msra.mxu0 0.0
    %5669 = vmatprep.subr.mxu0 0.0
    %5670 = vmatpush1.xpose.msra.mxu0 0.0
    %5671 = vmatprep.subr.mxu0 0.0
    %5672 = vmatpush1.xpose.msra.mxu0 0.0
    %5673 = vmatprep.subr.mxu0 0.0
    %5674 = vmatpush1.xpose.msra.mxu0 0.0
    %5675 = vmatprep.subr.mxu0 0.0
    %5676 = vmatpush1.xpose.msra.mxu0 0.0
    %5677 = vmatprep.subr.mxu0 0.0
    %5678 = vmatpush1.xpose.msra.mxu0 0.0
    %5679 = vmatprep.subr.mxu0 0.0
    %5680 = vmatpush1.xpose.msra.mxu0 0.0
    %5681 = vmatprep.subr.mxu0 0.0
    %5682 = vmatpush1.xpose.msra.mxu0 0.0
    %5683 = vmatprep.mubr.f32.mxu0 0.0
    %5684 = vmatmul.mubr.f32.gmra.mrb[0].mxu0 %v1003
    %v5685 = vpop.f32.mrb[0].mxu0
    %v5686 = vadd.f32 0.0, %v5685
    %v5687 = vpop.f32.mrb[0].mxu0
    %5688 = vdwg.mxu0
    %5689 = vmatprep.subr.mxu0 0.0
    %5690 = vmatpush1.xpose.msra.mxu0 %v1235
    %5691 = vmatprep.subr.mxu0 0.0
    %5692 = vmatpush1.xpose.msra.mxu0 0.0
    %5693 = vmatprep.subr.mxu0 0.0
    %5694 = vmatpush1.xpose.msra.mxu0 0.0
    %5695 = vmatprep.subr.mxu0 0.0
    %5696 = vmatpush1.xpose.msra.mxu0 0.0
    %5697 = vmatprep.subr.mxu0 0.0
    %5698 = vmatpush1.xpose.msra.mxu0 0.0
    %5699 = vmatprep.subr.mxu0 0.0
    %5700 = vmatpush1.xpose.msra.mxu0 0.0
    %5701 = vmatprep.subr.mxu0 0.0
    %5702 = vmatpush1.xpose.msra.mxu0 0.0
    %5703 = vmatprep.subr.mxu0 0.0
    %5704 = vmatpush1.xpose.msra.mxu0 0.0
    %5705 = vmatprep.subr.mxu0 0.0
    %5706 = vmatpush1.xpose.msra.mxu0 0.0
    %5707 = vmatprep.subr.mxu0 0.0
    %5708 = vmatpush1.xpose.msra.mxu0 0.0
    %5709 = vmatprep.subr.mxu0 0.0
    %5710 = vmatpush1.xpose.msra.mxu0 0.0
    %5711 = vmatprep.subr.mxu0 0.0
    %5712 = vmatpush1.xpose.msra.mxu0 0.0
    %5713 = vmatprep.subr.mxu0 0.0
    %5714 = vmatpush1.xpose.msra.mxu0 0.0
    %5715 = vmatprep.subr.mxu0 0.0
    %5716 = vmatpush1.xpose.msra.mxu0 0.0
    %5717 = vmatprep.subr.mxu0 0.0
    %5718 = vmatpush1.xpose.msra.mxu0 0.0
    %5719 = vmatprep.subr.mxu0 0.0
    %5720 = vmatpush1.xpose.msra.mxu0 0.0
    %5721 = vmatprep.subr.mxu0 0.0
    %5722 = vmatpush1.xpose.msra.mxu0 0.0
    %5723 = vmatprep.subr.mxu0 0.0
    %5724 = vmatpush1.xpose.msra.mxu0 0.0
    %5725 = vmatprep.subr.mxu0 0.0
    %5726 = vmatpush1.xpose.msra.mxu0 0.0
    %5727 = vmatprep.subr.mxu0 0.0
    %5728 = vmatpush1.xpose.msra.mxu0 0.0
    %5729 = vmatprep.subr.mxu0 0.0
    %5730 = vmatpush1.xpose.msra.mxu0 0.0
    %5731 = vmatprep.subr.mxu0 0.0
    %5732 = vmatpush1.xpose.msra.mxu0 0.0
    %5733 = vmatprep.subr.mxu0 0.0
    %5734 = vmatpush1.xpose.msra.mxu0 0.0
    %5735 = vmatprep.subr.mxu0 0.0
    %5736 = vmatpush1.xpose.msra.mxu0 0.0
    %5737 = vmatprep.subr.mxu0 0.0
    %5738 = vmatpush1.xpose.msra.mxu0 0.0
    %5739 = vmatprep.subr.mxu0 0.0
    %5740 = vmatpush1.xpose.msra.mxu0 0.0
    %5741 = vmatprep.subr.mxu0 0.0
    %5742 = vmatpush1.xpose.msra.mxu0 0.0
    %5743 = vmatprep.subr.mxu0 0.0
    %5744 = vmatpush1.xpose.msra.mxu0 0.0
    %5745 = vmatprep.subr.mxu0 0.0
    %5746 = vmatpush1.xpose.msra.mxu0 0.0
    %5747 = vmatprep.subr.mxu0 0.0
    %5748 = vmatpush1.xpose.msra.mxu0 0.0
    %5749 = vmatprep.subr.mxu0 0.0
    %5750 = vmatpush1.xpose.msra.mxu0 0.0
    %5751 = vmatprep.subr.mxu0 0.0
    %5752 = vmatpush1.xpose.msra.mxu0 0.0
    %5753 = vmatprep.mubr.f32.mxu0 0.0
    %5754 = vmatmul.mubr.f32.gmra.mrb[0].mxu0 %v1009
    %v5755 = vpop.f32.mrb[0].mxu0
    %v5756 = vadd.f32 0.0, %v5755
    %v5757 = vpop.f32.mrb[0].mxu0
    %5758 = vdwg.mxu0
    %5759 = vmatprep.subr.mxu0 0.0
    %5760 = vmatpush1.xpose.msra.mxu0 %v1241
    %5761 = vmatprep.subr.mxu0 0.0
    %5762 = vmatpush1.xpose.msra.mxu0 0.0
    %5763 = vmatprep.subr.mxu0 0.0
    %5764 = vmatpush1.xpose.msra.mxu0 0.0
    %5765 = vmatprep.subr.mxu0 0.0
    %5766 = vmatpush1.xpose.msra.mxu0 0.0
    %5767 = vmatprep.subr.mxu0 0.0
    %5768 = vmatpush1.xpose.msra.mxu0 0.0
    %5769 = vmatprep.subr.mxu0 0.0
    %5770 = vmatpush1.xpose.msra.mxu0 0.0
    %5771 = vmatprep.subr.mxu0 0.0
    %5772 = vmatpush1.xpose.msra.mxu0 0.0
    %5773 = vmatprep.subr.mxu0 0.0
    %5774 = vmatpush1.xpose.msra.mxu0 0.0
    %5775 = vmatprep.subr.mxu0 0.0
    %5776 = vmatpush1.xpose.msra.mxu0 0.0
    %5777 = vmatprep.subr.mxu0 0.0
    %5778 = vmatpush1.xpose.msra.mxu0 0.0
    %5779 = vmatprep.subr.mxu0 0.0
    %5780 = vmatpush1.xpose.msra.mxu0 0.0
    %5781 = vmatprep.subr.mxu0 0.0
    %5782 = vmatpush1.xpose.msra.mxu0 0.0
    %5783 = vmatprep.subr.mxu0 0.0
    %5784 = vmatpush1.xpose.msra.mxu0 0.0
    %5785 = vmatprep.subr.mxu0 0.0
    %5786 = vmatpush1.xpose.msra.mxu0 0.0
    %5787 = vmatprep.subr.mxu0 0.0
    %5788 = vmatpush1.xpose.msra.mxu0 0.0
    %5789 = vmatprep.subr.mxu0 0.0
    %5790 = vmatpush1.xpose.msra.mxu0 0.0
    %5791 = vmatprep.subr.mxu0 0.0
    %5792 = vmatpush1.xpose.msra.mxu0 0.0
    %5793 = vmatprep.subr.mxu0 0.0
    %5794 = vmatpush1.xpose.msra.mxu0 0.0
    %5795 = vmatprep.subr.mxu0 0.0
    %5796 = vmatpush1.xpose.msra.mxu0 0.0
    %5797 = vmatprep.subr.mxu0 0.0
    %5798 = vmatpush1.xpose.msra.mxu0 0.0
    %5799 = vmatprep.subr.mxu0 0.0
    %5800 = vmatpush1.xpose.msra.mxu0 0.0
    %5801 = vmatprep.subr.mxu0 0.0
    %5802 = vmatpush1.xpose.msra.mxu0 0.0
    %5803 = vmatprep.subr.mxu0 0.0
    %5804 = vmatpush1.xpose.msra.mxu0 0.0
    %5805 = vmatprep.subr.mxu0 0.0
    %5806 = vmatpush1.xpose.msra.mxu0 0.0
    %5807 = vmatprep.subr.mxu0 0.0
    %5808 = vmatpush1.xpose.msra.mxu0 0.0
    %5809 = vmatprep.subr.mxu0 0.0
    %5810 = vmatpush1.xpose.msra.mxu0 0.0
    %5811 = vmatprep.subr.mxu0 0.0
    %5812 = vmatpush1.xpose.msra.mxu0 0.0
    %5813 = vmatprep.subr.mxu0 0.0
    %5814 = vmatpush1.xpose.msra.mxu0 0.0
    %5815 = vmatprep.subr.mxu0 0.0
    %5816 = vmatpush1.xpose.msra.mxu0 0.0
    %5817 = vmatprep.subr.mxu0 0.0
    %5818 = vmatpush1.xpose.msra.mxu0 0.0
    %5819 = vmatprep.subr.mxu0 0.0
    %5820 = vmatpush1.xpose.msra.mxu0 0.0
    %5821 = vmatprep.subr.mxu0 0.0
    %5822 = vmatpush1.xpose.msra.mxu0 0.0
    %5823 = vmatprep.mubr.f32.mxu0 0.0
    %5824 = vmatmul.mubr.f32.gmra.mrb[0].mxu0 %v1015
    %v5825 = vpop.f32.mrb[0].mxu0
    %v5826 = vadd.f32 0.0, %v5825
    %v5827 = vpop.f32.mrb[0].mxu0
    %5828 = vdwg.mxu0
    %5829 = vmatprep.subr.mxu0 0.0
    %5830 = vmatpush1.xpose.msra.mxu0 %v1247
    %5831 = vmatprep.subr.mxu0 0.0
    %5832 = vmatpush1.xpose.msra.mxu0 0.0
    %5833 = vmatprep.subr.mxu0 0.0
    %5834 = vmatpush1.xpose.msra.mxu0 0.0
    %5835 = vmatprep.subr.mxu0 0.0
    %5836 = vmatpush1.xpose.msra.mxu0 0.0
    %5837 = vmatprep.subr.mxu0 0.0
    %5838 = vmatpush1.xpose.msra.mxu0 0.0
    %5839 = vmatprep.subr.mxu0 0.0
    %5840 = vmatpush1.xpose.msra.mxu0 0.0
    %5841 = vmatprep.subr.mxu0 0.0
    %5842 = vmatpush1.xpose.msra.mxu0 0.0
    %5843 = vmatprep.subr.mxu0 0.0
    %5844 = vmatpush1.xpose.msra.mxu0 0.0
    %5845 = vmatprep.subr.mxu0 0.0
    %5846 = vmatpush1.xpose.msra.mxu0 0.0
    %5847 = vmatprep.subr.mxu0 0.0
    %5848 = vmatpush1.xpose.msra.mxu0 0.0
    %5849 = vmatprep.subr.mxu0 0.0
    %5850 = vmatpush1.xpose.msra.mxu0 0.0
    %5851 = vmatprep.subr.mxu0 0.0
    %5852 = vmatpush1.xpose.msra.mxu0 0.0
    %5853 = vmatprep.subr.mxu0 0.0
    %5854 = vmatpush1.xpose.msra.mxu0 0.0
    %5855 = vmatprep.subr.mxu0 0.0
    %5856 = vmatpush1.xpose.msra.mxu0 0.0
    %5857 = vmatprep.subr.mxu0 0.0
    %5858 = vmatpush1.xpose.msra.mxu0 0.0
    %5859 = vmatprep.subr.mxu0 0.0
    %5860 = vmatpush1.xpose.msra.mxu0 0.0
    %5861 = vmatprep.subr.mxu0 0.0
    %5862 = vmatpush1.xpose.msra.mxu0 0.0
    %5863 = vmatprep.subr.mxu0 0.0
    %5864 = vmatpush1.xpose.msra.mxu0 0.0
    %5865 = vmatprep.subr.mxu0 0.0
    %5866 = vmatpush1.xpose.msra.mxu0 0.0
    %5867 = vmatprep.subr.mxu0 0.0
    %5868 = vmatpush1.xpose.msra.mxu0 0.0
    %5869 = vmatprep.subr.mxu0 0.0
    %5870 = vmatpush1.xpose.msra.mxu0 0.0
    %5871 = vmatprep.subr.mxu0 0.0
    %5872 = vmatpush1.xpose.msra.mxu0 0.0
    %5873 = vmatprep.subr.mxu0 0.0
    %5874 = vmatpush1.xpose.msra.mxu0 0.0
    %5875 = vmatprep.subr.mxu0 0.0
    %5876 = vmatpush1.xpose.msra.mxu0 0.0
    %5877 = vmatprep.subr.mxu0 0.0
    %5878 = vmatpush1.xpose.msra.mxu0 0.0
    %5879 = vmatprep.subr.mxu0 0.0
    %5880 = vmatpush1.xpose.msra.mxu0 0.0
    %5881 = vmatprep.subr.mxu0 0.0
    %5882 = vmatpush1.xpose.msra.mxu0 0.0
    %5883 = vmatprep.subr.mxu0 0.0
    %5884 = vmatpush1.xpose.msra.mxu0 0.0
    %5885 = vmatprep.subr.mxu0 0.0
    %5886 = vmatpush1.xpose.msra.mxu0 0.0
    %5887 = vmatprep.subr.mxu0 0.0
    %5888 = vmatpush1.xpose.msra.mxu0 0.0
    %5889 = vmatprep.subr.mxu0 0.0
    %5890 = vmatpush1.xpose.msra.mxu0 0.0
    %5891 = vmatprep.subr.mxu0 0.0
    %5892 = vmatpush1.xpose.msra.mxu0 0.0
    %5893 = vmatprep.mubr.f32.mxu0 0.0
    %5894 = vmatmul.mubr.f32.gmra.mrb[0].mxu0 %v1021
    %v5895 = vpop.f32.mrb[0].mxu0
    %v5896 = vadd.f32 0.0, %v5895
    %v5897 = vpop.f32.mrb[0].mxu0
    %5898 = vdwg.mxu0
    %5899 = vmatprep.subr.mxu0 0.0
    %5900 = vmatpush1.xpose.msra.mxu0 %v1253
    %5901 = vmatprep.subr.mxu0 0.0
    %5902 = vmatpush1.xpose.msra.mxu0 0.0
    %5903 = vmatprep.subr.mxu0 0.0
    %5904 = vmatpush1.xpose.msra.mxu0 0.0
    %5905 = vmatprep.subr.mxu0 0.0
    %5906 = vmatpush1.xpose.msra.mxu0 0.0
    %5907 = vmatprep.subr.mxu0 0.0
    %5908 = vmatpush1.xpose.msra.mxu0 0.0
    %5909 = vmatprep.subr.mxu0 0.0
    %5910 = vmatpush1.xpose.msra.mxu0 0.0
    %5911 = vmatprep.subr.mxu0 0.0
    %5912 = vmatpush1.xpose.msra.mxu0 0.0
    %5913 = vmatprep.subr.mxu0 0.0
    %5914 = vmatpush1.xpose.msra.mxu0 0.0
    %5915 = vmatprep.subr.mxu0 0.0
    %5916 = vmatpush1.xpose.msra.mxu0 0.0
    %5917 = vmatprep.subr.mxu0 0.0
    %5918 = vmatpush1.xpose.msra.mxu0 0.0
    %5919 = vmatprep.subr.mxu0 0.0
    %5920 = vmatpush1.xpose.msra.mxu0 0.0
    %5921 = vmatprep.subr.mxu0 0.0
    %5922 = vmatpush1.xpose.msra.mxu0 0.0
    %5923 = vmatprep.subr.mxu0 0.0
    %5924 = vmatpush1.xpose.msra.mxu0 0.0
    %5925 = vmatprep.subr.mxu0 0.0
    %5926 = vmatpush1.xpose.msra.mxu0 0.0
    %5927 = vmatprep.subr.mxu0 0.0
    %5928 = vmatpush1.xpose.msra.mxu0 0.0
    %5929 = vmatprep.subr.mxu0 0.0
    %5930 = vmatpush1.xpose.msra.mxu0 0.0
    %5931 = vmatprep.subr.mxu0 0.0
    %5932 = vmatpush1.xpose.msra.mxu0 0.0
    %5933 = vmatprep.subr.mxu0 0.0
    %5934 = vmatpush1.xpose.msra.mxu0 0.0
    %5935 = vmatprep.subr.mxu0 0.0
    %5936 = vmatpush1.xpose.msra.mxu0 0.0
    %5937 = vmatprep.subr.mxu0 0.0
    %5938 = vmatpush1.xpose.msra.mxu0 0.0
    %5939 = vmatprep.subr.mxu0 0.0
    %5940 = vmatpush1.xpose.msra.mxu0 0.0
    %5941 = vmatprep.subr.mxu0 0.0
    %5942 = vmatpush1.xpose.msra.mxu0 0.0
    %5943 = vmatprep.subr.mxu0 0.0
    %5944 = vmatpush1.xpose.msra.mxu0 0.0
    %5945 = vmatprep.subr.mxu0 0.0
    %5946 = vmatpush1.xpose.msra.mxu0 0.0
    %5947 = vmatprep.subr.mxu0 0.0
    %5948 = vmatpush1.xpose.msra.mxu0 0.0
    %5949 = vmatprep.subr.mxu0 0.0
    %5950 = vmatpush1.xpose.msra.mxu0 0.0
    %5951 = vmatprep.subr.mxu0 0.0
    %5952 = vmatpush1.xpose.msra.mxu0 0.0
    %5953 = vmatprep.subr.mxu0 0.0
    %5954 = vmatpush1.xpose.msra.mxu0 0.0
    %5955 = vmatprep.subr.mxu0 0.0
    %5956 = vmatpush1.xpose.msra.mxu0 0.0
    %5957 = vmatprep.subr.mxu0 0.0
    %5958 = vmatpush1.xpose.msra.mxu0 0.0
    %5959 = vmatprep.subr.mxu0 0.0
    %5960 = vmatpush1.xpose.msra.mxu0 0.0
    %5961 = vmatprep.subr.mxu0 0.0
    %5962 = vmatpush1.xpose.msra.mxu0 0.0
    %5963 = vmatprep.mubr.f32.mxu0 0.0
    %5964 = vmatmul.mubr.f32.gmra.mrb[0].mxu0 %v1027
    %v5965 = vpop.f32.mrb[0].mxu0
    %v5966 = vadd.f32 0.0, %v5965
    %v5967 = vpop.f32.mrb[0].mxu0
    %5968 = vdwg.mxu0
    %5969 = vmatprep.subr.mxu0 0.0
    %5970 = vmatpush1.xpose.msra.mxu0 %v1259
    %5971 = vmatprep.subr.mxu0 0.0
    %5972 = vmatpush1.xpose.msra.mxu0 0.0
    %5973 = vmatprep.subr.mxu0 0.0
    %5974 = vmatpush1.xpose.msra.mxu0 0.0
    %5975 = vmatprep.subr.mxu0 0.0
    %5976 = vmatpush1.xpose.msra.mxu0 0.0
    %5977 = vmatprep.subr.mxu0 0.0
    %5978 = vmatpush1.xpose.msra.mxu0 0.0
    %5979 = vmatprep.subr.mxu0 0.0
    %5980 = vmatpush1.xpose.msra.mxu0 0.0
    %5981 = vmatprep.subr.mxu0 0.0
    %5982 = vmatpush1.xpose.msra.mxu0 0.0
    %5983 = vmatprep.subr.mxu0 0.0
    %5984 = vmatpush1.xpose.msra.mxu0 0.0
    %5985 = vmatprep.subr.mxu0 0.0
    %5986 = vmatpush1.xpose.msra.mxu0 0.0
    %5987 = vmatprep.subr.mxu0 0.0
    %5988 = vmatpush1.xpose.msra.mxu0 0.0
    %5989 = vmatprep.subr.mxu0 0.0
    %5990 = vmatpush1.xpose.msra.mxu0 0.0
    %5991 = vmatprep.subr.mxu0 0.0
    %5992 = vmatpush1.xpose.msra.mxu0 0.0
    %5993 = vmatprep.subr.mxu0 0.0
    %5994 = vmatpush1.xpose.msra.mxu0 0.0
    %5995 = vmatprep.subr.mxu0 0.0
    %5996 = vmatpush1.xpose.msra.mxu0 0.0
    %5997 = vmatprep.subr.mxu0 0.0
    %5998 = vmatpush1.xpose.msra.mxu0 0.0
    %5999 = vmatprep.subr.mxu0 0.0
    %6000 = vmatpush1.xpose.msra.mxu0 0.0
    %6001 = vmatprep.subr.mxu0 0.0
    %6002 = vmatpush1.xpose.msra.mxu0 0.0
    %6003 = vmatprep.subr.mxu0 0.0
    %6004 = vmatpush1.xpose.msra.mxu0 0.0
    %6005 = vmatprep.subr.mxu0 0.0
    %6006 = vmatpush1.xpose.msra.mxu0 0.0
    %6007 = vmatprep.subr.mxu0 0.0
    %6008 = vmatpush1.xpose.msra.mxu0 0.0
    %6009 = vmatprep.subr.mxu0 0.0
    %6010 = vmatpush1.xpose.msra.mxu0 0.0
    %6011 = vmatprep.subr.mxu0 0.0
    %6012 = vmatpush1.xpose.msra.mxu0 0.0
    %6013 = vmatprep.subr.mxu0 0.0
    %6014 = vmatpush1.xpose.msra.mxu0 0.0
    %6015 = vmatprep.subr.mxu0 0.0
    %6016 = vmatpush1.xpose.msra.mxu0 0.0
    %6017 = vmatprep.subr.mxu0 0.0
    %6018 = vmatpush1.xpose.msra.mxu0 0.0
    %6019 = vmatprep.subr.mxu0 0.0
    %6020 = vmatpush1.xpose.msra.mxu0 0.0
    %6021 = vmatprep.subr.mxu0 0.0
    %6022 = vmatpush1.xpose.msra.mxu0 0.0
    %6023 = vmatprep.subr.mxu0 0.0
    %6024 = vmatpush1.xpose.msra.mxu0 0.0
    %6025 = vmatprep.subr.mxu0 0.0
    %6026 = vmatpush1.xpose.msra.mxu0 0.0
    %6027 = vmatprep.subr.mxu0 0.0
    %6028 = vmatpush1.xpose.msra.mxu0 0.0
    %6029 = vmatprep.subr.mxu0 0.0
    %6030 = vmatpush1.xpose.msra.mxu0 0.0
    %6031 = vmatprep.subr.mxu0 0.0
    %6032 = vmatpush1.xpose.msra.mxu0 0.0
    %6033 = vmatprep.mubr.f32.mxu0 0.0
    %6034 = vmatmul.mubr.f32.gmra.mrb[0].mxu0 %v1033
    %v6035 = vpop.f32.mrb[0].mxu0
    %v6036 = vadd.f32 0.0, %v6035
    %v6037 = vpop.f32.mrb[0].mxu0
    %6038 = vdwg.mxu0
    %6039 = vmatprep.subr.mxu0 0.0
    %6040 = vmatpush1.xpose.msra.mxu0 %v1265
    %6041 = vmatprep.subr.mxu0 0.0
    %6042 = vmatpush1.xpose.msra.mxu0 0.0
    %6043 = vmatprep.subr.mxu0 0.0
    %6044 = vmatpush1.xpose.msra.mxu0 0.0
    %6045 = vmatprep.subr.mxu0 0.0
    %6046 = vmatpush1.xpose.msra.mxu0 0.0
    %6047 = vmatprep.subr.mxu0 0.0
    %6048 = vmatpush1.xpose.msra.mxu0 0.0
    %6049 = vmatprep.subr.mxu0 0.0
    %6050 = vmatpush1.xpose.msra.mxu0 0.0
    %6051 = vmatprep.subr.mxu0 0.0
    %6052 = vmatpush1.xpose.msra.mxu0 0.0
    %6053 = vmatprep.subr.mxu0 0.0
    %6054 = vmatpush1.xpose.msra.mxu0 0.0
    %6055 = vmatprep.subr.mxu0 0.0
    %6056 = vmatpush1.xpose.msra.mxu0 0.0
    %6057 = vmatprep.subr.mxu0 0.0
    %6058 = vmatpush1.xpose.msra.mxu0 0.0
    %6059 = vmatprep.subr.mxu0 0.0
    %6060 = vmatpush1.xpose.msra.mxu0 0.0
    %6061 = vmatprep.subr.mxu0 0.0
    %6062 = vmatpush1.xpose.msra.mxu0 0.0
    %6063 = vmatprep.subr.mxu0 0.0
    %6064 = vmatpush1.xpose.msra.mxu0 0.0
    %6065 = vmatprep.subr.mxu0 0.0
    %6066 = vmatpush1.xpose.msra.mxu0 0.0
    %6067 = vmatprep.subr.mxu0 0.0
    %6068 = vmatpush1.xpose.msra.mxu0 0.0
    %6069 = vmatprep.subr.mxu0 0.0
    %6070 = vmatpush1.xpose.msra.mxu0 0.0
    %6071 = vmatprep.subr.mxu0 0.0
    %6072 = vmatpush1.xpose.msra.mxu0 0.0
    %6073 = vmatprep.subr.mxu0 0.0
    %6074 = vmatpush1.xpose.msra.mxu0 0.0
    %6075 = vmatprep.subr.mxu0 0.0
    %6076 = vmatpush1.xpose.msra.mxu0 0.0
    %6077 = vmatprep.subr.mxu0 0.0
    %6078 = vmatpush1.xpose.msra.mxu0 0.0
    %6079 = vmatprep.subr.mxu0 0.0
    %6080 = vmatpush1.xpose.msra.mxu0 0.0
    %6081 = vmatprep.subr.mxu0 0.0
    %6082 = vmatpush1.xpose.msra.mxu0 0.0
    %6083 = vmatprep.subr.mxu0 0.0
    %6084 = vmatpush1.xpose.msra.mxu0 0.0
    %6085 = vmatprep.subr.mxu0 0.0
    %6086 = vmatpush1.xpose.msra.mxu0 0.0
    %6087 = vmatprep.subr.mxu0 0.0
    %6088 = vmatpush1.xpose.msra.mxu0 0.0
    %6089 = vmatprep.subr.mxu0 0.0
    %6090 = vmatpush1.xpose.msra.mxu0 0.0
    %6091 = vmatprep.subr.mxu0 0.0
    %6092 = vmatpush1.xpose.msra.mxu0 0.0
    %6093 = vmatprep.subr.mxu0 0.0
    %6094 = vmatpush1.xpose.msra.mxu0 0.0
    %6095 = vmatprep.subr.mxu0 0.0
    %6096 = vmatpush1.xpose.msra.mxu0 0.0
    %6097 = vmatprep.subr.mxu0 0.0
    %6098 = vmatpush1.xpose.msra.mxu0 0.0
    %6099 = vmatprep.subr.mxu0 0.0
    %6100 = vmatpush1.xpose.msra.mxu0 0.0
    %6101 = vmatprep.subr.mxu0 0.0
    %6102 = vmatpush1.xpose.msra.mxu0 0.0
    %6103 = vmatprep.mubr.f32.mxu0 0.0
    %6104 = vmatmul.mubr.f32.gmra.mrb[0].mxu0 %v1039
    %v6105 = vpop.f32.mrb[0].mxu0
    %v6106 = vadd.f32 0.0, %v6105
    %v6107 = vpop.f32.mrb[0].mxu0
    %6108 = vdwg.mxu0
    %6109 = vmatprep.subr.mxu0 0.0
    %6110 = vmatpush1.xpose.msra.mxu0 %v1271
    %6111 = vmatprep.subr.mxu0 0.0
    %6112 = vmatpush1.xpose.msra.mxu0 0.0
    %6113 = vmatprep.subr.mxu0 0.0
    %6114 = vmatpush1.xpose.msra.mxu0 0.0
    %6115 = vmatprep.subr.mxu0 0.0
    %6116 = vmatpush1.xpose.msra.mxu0 0.0
    %6117 = vmatprep.subr.mxu0 0.0
    %6118 = vmatpush1.xpose.msra.mxu0 0.0
    %6119 = vmatprep.subr.mxu0 0.0
    %6120 = vmatpush1.xpose.msra.mxu0 0.0
    %6121 = vmatprep.subr.mxu0 0.0
    %6122 = vmatpush1.xpose.msra.mxu0 0.0
    %6123 = vmatprep.subr.mxu0 0.0
    %6124 = vmatpush1.xpose.msra.mxu0 0.0
    %6125 = vmatprep.subr.mxu0 0.0
    %6126 = vmatpush1.xpose.msra.mxu0 0.0
    %6127 = vmatprep.subr.mxu0 0.0
    %6128 = vmatpush1.xpose.msra.mxu0 0.0
    %6129 = vmatprep.subr.mxu0 0.0
    %6130 = vmatpush1.xpose.msra.mxu0 0.0
    %6131 = vmatprep.subr.mxu0 0.0
    %6132 = vmatpush1.xpose.msra.mxu0 0.0
    %6133 = vmatprep.subr.mxu0 0.0
    %6134 = vmatpush1.xpose.msra.mxu0 0.0
    %6135 = vmatprep.subr.mxu0 0.0
    %6136 = vmatpush1.xpose.msra.mxu0 0.0
    %6137 = vmatprep.subr.mxu0 0.0
    %6138 = vmatpush1.xpose.msra.mxu0 0.0
    %6139 = vmatprep.subr.mxu0 0.0
    %6140 = vmatpush1.xpose.msra.mxu0 0.0
    %6141 = vmatprep.subr.mxu0 0.0
    %6142 = vmatpush1.xpose.msra.mxu0 0.0
    %6143 = vmatprep.subr.mxu0 0.0
    %6144 = vmatpush1.xpose.msra.mxu0 0.0
    %6145 = vmatprep.subr.mxu0 0.0
    %6146 = vmatpush1.xpose.msra.mxu0 0.0
    %6147 = vmatprep.subr.mxu0 0.0
    %6148 = vmatpush1.xpose.msra.mxu0 0.0
    %6149 = vmatprep.subr.mxu0 0.0
    %6150 = vmatpush1.xpose.msra.mxu0 0.0
    %6151 = vmatprep.subr.mxu0 0.0
    %6152 = vmatpush1.xpose.msra.mxu0 0.0
    %6153 = vmatprep.subr.mxu0 0.0
    %6154 = vmatpush1.xpose.msra.mxu0 0.0
    %6155 = vmatprep.subr.mxu0 0.0
    %6156 = vmatpush1.xpose.msra.mxu0 0.0
    %6157 = vmatprep.subr.mxu0 0.0
    %6158 = vmatpush1.xpose.msra.mxu0 0.0
    %6159 = vmatprep.subr.mxu0 0.0
    %6160 = vmatpush1.xpose.msra.mxu0 0.0
    %6161 = vmatprep.subr.mxu0 0.0
    %6162 = vmatpush1.xpose.msra.mxu0 0.0
    %6163 = vmatprep.subr.mxu0 0.0
    %6164 = vmatpush1.xpose.msra.mxu0 0.0
    %6165 = vmatprep.subr.mxu0 0.0
    %6166 = vmatpush1.xpose.msra.mxu0 0.0
    %6167 = vmatprep.subr.mxu0 0.0
    %6168 = vmatpush1.xpose.msra.mxu0 0.0
    %6169 = vmatprep.subr.mxu0 0.0
    %6170 = vmatpush1.xpose.msra.mxu0 0.0
    %6171 = vmatprep.subr.mxu0 0.0
    %6172 = vmatpush1.xpose.msra.mxu0 0.0
    %6173 = vmatprep.mubr.f32.mxu0 0.0
    %6174 = vmatmul.mubr.f32.gmra.mrb[0].mxu0 %v1045
    %v6175 = vpop.f32.mrb[0].mxu0
    %v6176 = vadd.f32 0.0, %v6175
    %v6177 = vpop.f32.mrb[0].mxu0
    %6178 = vdwg.mxu0
    %v6179 = vmul.f32 %v5686, 0.088388346
    %v6180 = vmul.f32 %v5756, 0.088388346
    %v6181 = vmul.f32 %v5826, 0.088388346
    %v6182 = vmul.f32 %v5896, 0.088388346
    %v6183 = vmul.f32 %v5966, 0.088388346
    %v6184 = vmul.f32 %v6036, 0.088388346
    %v6185 = vmul.f32 %v6106, 0.088388346
    %v6186 = vmul.f32 %v6176, 0.088388346
    %v6187 = vsel %vm2079, %v6179, -inf
    %6188 = vmax.xlane.f32.xlu0 %v6187
    %v6189 = vpop.xlane.xlu0 %6188
    %v6190 = vsel %vm2079, %v6180, -inf
    %6191 = vmax.xlane.f32.xlu0 %v6190
    %v6192 = vpop.xlane.xlu0 %6191
    %v6193 = vsel %vm2079, %v6181, -inf
    %6194 = vmax.xlane.f32.xlu0 %v6193
    %v6195 = vpop.xlane.xlu0 %6194
    %v6196 = vsel %vm2079, %v6182, -inf
    %6197 = vmax.xlane.f32.xlu0 %v6196
    %v6198 = vpop.xlane.xlu0 %6197
    %v6199 = vsel %vm2079, %v6183, -inf
    %6200 = vmax.xlane.f32.xlu0 %v6199
    %v6201 = vpop.xlane.xlu0 %6200
    %v6202 = vsel %vm2079, %v6184, -inf
    %6203 = vmax.xlane.f32.xlu0 %v6202
    %v6204 = vpop.xlane.xlu0 %6203
    %v6205 = vsel %vm2079, %v6185, -inf
    %6206 = vmax.xlane.f32.xlu0 %v6205
    %v6207 = vpop.xlane.xlu0 %6206
    %v6208 = vsel %vm2079, %v6186, -inf
    %6209 = vmax.xlane.f32.xlu0 %v6208
    %v6210 = vpop.xlane.xlu0 %6209
    %v6211 = vsub.f32 %v6179, %v6189
    %v6212 = vsub.f32 %v6180, %v6192
    %v6213 = vsub.f32 %v6181, %v6195
    %v6214 = vsub.f32 %v6182, %v6198
    %v6215 = vsub.f32 %v6183, %v6201
    %v6216 = vsub.f32 %v6184, %v6204
    %v6217 = vsub.f32 %v6185, %v6207
    %v6218 = vsub.f32 %v6186, %v6210
    %v6219 = vmul.f32 %v6211, 1.442695
    %v6220 = vpow.pop %v6219
    %v6221 = vmul.f32 %v6212, 1.442695
    %v6222 = vpow.pop %v6221
    %v6223 = vmul.f32 %v6213, 1.442695
    %v6224 = vpow.pop %v6223
    %v6225 = vmul.f32 %v6214, 1.442695
    %v6226 = vpow.pop %v6225
    %v6227 = vmul.f32 %v6215, 1.442695
    %v6228 = vpow.pop %v6227
    %v6229 = vmul.f32 %v6216, 1.442695
    %v6230 = vpow.pop %v6229
    %v6231 = vmul.f32 %v6217, 1.442695
    %v6232 = vpow.pop %v6231
    %v6233 = vmul.f32 %v6218, 1.442695
    %v6234 = vpow.pop %v6233
    %v6235 = vsel %vm2079, %v6220, 0.0
    %6236 = vadd.xlane.f32.xlu0 %v6235
    %v6237 = vpop.xlane.xlu0 %6236
    %v6238 = vsel %vm2079, %v6222, 0.0
    %6239 = vadd.xlane.f32.xlu0 %v6238
    %v6240 = vpop.xlane.xlu0 %6239
    %v6241 = vsel %vm2079, %v6224, 0.0
    %6242 = vadd.xlane.f32.xlu0 %v6241
    %v6243 = vpop.xlane.xlu0 %6242
    %v6244 = vsel %vm2079, %v6226, 0.0
    %6245 = vadd.xlane.f32.xlu0 %v6244
    %v6246 = vpop.xlane.xlu0 %6245
    %v6247 = vsel %vm2079, %v6228, 0.0
    %6248 = vadd.xlane.f32.xlu0 %v6247
    %v6249 = vpop.xlane.xlu0 %6248
    %v6250 = vsel %vm2079, %v6230, 0.0
    %6251 = vadd.xlane.f32.xlu0 %v6250
    %v6252 = vpop.xlane.xlu0 %6251
    %v6253 = vsel %vm2079, %v6232, 0.0
    %6254 = vadd.xlane.f32.xlu0 %v6253
    %v6255 = vpop.xlane.xlu0 %6254
    %v6256 = vsel %vm2079, %v6234, 0.0
    %6257 = vadd.xlane.f32.xlu0 %v6256
    %v6258 = vpop.xlane.xlu0 %6257
    %v6259 = vrcp.pop %v6237
    %v6260 = vrcp.pop %v6240
    %v6261 = vrcp.pop %v6243
    %v6262 = vrcp.pop %v6246
    %v6263 = vrcp.pop %v6249
    %v6264 = vrcp.pop %v6252
    %v6265 = vrcp.pop %v6255
    %v6266 = vrcp.pop %v6258
    %v6267 = vmul.f32 %v6220, %v6259
    %v6268 = vmul.f32 %v6222, %v6260
    %v6269 = vmul.f32 %v6224, %v6261
    %v6270 = vmul.f32 %v6226, %v6262
    %v6271 = vmul.f32 %v6228, %v6263
    %v6272 = vmul.f32 %v6230, %v6264
    %v6273 = vmul.f32 %v6232, %v6265
    %v6274 = vmul.f32 %v6234, %v6266
    %v6276 = vsel %vm2079, %v6267, 0
    %6278 = vmatprep.subr.mxu0 0.0
    %6279 = vmatpush1.msra.mxu0 %v1455
    %6280 = vmatprep.subr.mxu0 0.0
    %6281 = vmatpush1.msra.mxu0 0.0
    %6282 = vmatprep.subr.mxu0 0.0
    %6283 = vmatpush1.msra.mxu0 0.0
    %6284 = vmatprep.subr.mxu0 0.0
    %6285 = vmatpush1.msra.mxu0 0.0
    %6286 = vmatprep.subr.mxu0 0.0
    %6287 = vmatpush1.msra.mxu0 0.0
    %6288 = vmatprep.subr.mxu0 0.0
    %6289 = vmatpush1.msra.mxu0 0.0
    %6290 = vmatprep.subr.mxu0 0.0
    %6291 = vmatpush1.msra.mxu0 0.0
    %6292 = vmatprep.subr.mxu0 0.0
    %6293 = vmatpush1.msra.mxu0 0.0
    %6294 = vmatprep.subr.mxu0 0.0
    %6295 = vmatpush1.msra.mxu0 0.0
    %6296 = vmatprep.subr.mxu0 0.0
    %6297 = vmatpush1.msra.mxu0 0.0
    %6298 = vmatprep.subr.mxu0 0.0
    %6299 = vmatpush1.msra.mxu0 0.0
    %6300 = vmatprep.subr.mxu0 0.0
    %6301 = vmatpush1.msra.mxu0 0.0
    %6302 = vmatprep.subr.mxu0 0.0
    %6303 = vmatpush1.msra.mxu0 0.0
    %6304 = vmatprep.subr.mxu0 0.0
    %6305 = vmatpush1.msra.mxu0 0.0
    %6306 = vmatprep.subr.mxu0 0.0
    %6307 = vmatpush1.msra.mxu0 0.0
    %6308 = vmatprep.subr.mxu0 0.0
    %6309 = vmatpush1.msra.mxu0 0.0
    %6310 = vmatprep.subr.mxu0 0.0
    %6311 = vmatpush1.msra.mxu0 0.0
    %6312 = vmatprep.subr.mxu0 0.0
    %6313 = vmatpush1.msra.mxu0 0.0
    %6314 = vmatprep.subr.mxu0 0.0
    %6315 = vmatpush1.msra.mxu0 0.0
    %6316 = vmatprep.subr.mxu0 0.0
    %6317 = vmatpush1.msra.mxu0 0.0
    %6318 = vmatprep.subr.mxu0 0.0
    %6319 = vmatpush1.msra.mxu0 0.0
    %6320 = vmatprep.subr.mxu0 0.0
    %6321 = vmatpush1.msra.mxu0 0.0
    %6322 = vmatprep.subr.mxu0 0.0
    %6323 = vmatpush1.msra.mxu0 0.0
    %6324 = vmatprep.subr.mxu0 0.0
    %6325 = vmatpush1.msra.mxu0 0.0
    %6326 = vmatprep.subr.mxu0 0.0
    %6327 = vmatpush1.msra.mxu0 0.0
    %6328 = vmatprep.subr.mxu0 0.0
    %6329 = vmatpush1.msra.mxu0 0.0
    %6330 = vmatprep.subr.mxu0 0.0
    %6331 = vmatpush1.msra.mxu0 0.0
    %6332 = vmatprep.subr.mxu0 0.0
    %6333 = vmatpush1.msra.mxu0 0.0
    %6334 = vmatprep.subr.mxu0 0.0
    %6335 = vmatpush1.msra.mxu0 0.0
    %6336 = vmatprep.subr.mxu0 0.0
    %6337 = vmatpush1.msra.mxu0 0.0
    %6338 = vmatprep.subr.mxu0 0.0
    %6339 = vmatpush1.msra.mxu0 0.0
    %6340 = vmatprep.subr.mxu0 0.0
    %6341 = vmatpush1.msra.mxu0 0.0
    %6342 = vmatprep.mubr.f32.mxu0 0.0
    %6343 = vmatmul.mubr.f32.gmra.mrb[0].mxu0 %v6276
    %v6344 = vpop.f32.mrb[0].mxu0
    %v6345 = vadd.f32 0.0, %v6344
    %v6346 = vpop.f32.mrb[0].mxu0
    %6347 = vdwg.mxu0
    %v6349 = vsel %vm2079, %v6268, 0
    %6351 = vmatprep.subr.mxu0 0.0
    %6352 = vmatpush1.msra.mxu0 %v1461
    %6353 = vmatprep.subr.mxu0 0.0
    %6354 = vmatpush1.msra.mxu0 0.0
    %6355 = vmatprep.subr.mxu0 0.0
    %6356 = vmatpush1.msra.mxu0 0.0
    %6357 = vmatprep.subr.mxu0 0.0
    %6358 = vmatpush1.msra.mxu0 0.0
    %6359 = vmatprep.subr.mxu0 0.0
    %6360 = vmatpush1.msra.mxu0 0.0
    %6361 = vmatprep.subr.mxu0 0.0
    %6362 = vmatpush1.msra.mxu0 0.0
    %6363 = vmatprep.subr.mxu0 0.0
    %6364 = vmatpush1.msra.mxu0 0.0
    %6365 = vmatprep.subr.mxu0 0.0
    %6366 = vmatpush1.msra.mxu0 0.0
    %6367 = vmatprep.subr.mxu0 0.0
    %6368 = vmatpush1.msra.mxu0 0.0
    %6369 = vmatprep.subr.mxu0 0.0
    %6370 = vmatpush1.msra.mxu0 0.0
    %6371 = vmatprep.subr.mxu0 0.0
    %6372 = vmatpush1.msra.mxu0 0.0
    %6373 = vmatprep.subr.mxu0 0.0
    %6374 = vmatpush1.msra.mxu0 0.0
    %6375 = vmatprep.subr.mxu0 0.0
    %6376 = vmatpush1.msra.mxu0 0.0
    %6377 = vmatprep.subr.mxu0 0.0
    %6378 = vmatpush1.msra.mxu0 0.0
    %6379 = vmatprep.subr.mxu0 0.0
    %6380 = vmatpush1.msra.mxu0 0.0
    %6381 = vmatprep.subr.mxu0 0.0
    %6382 = vmatpush1.msra.mxu0 0.0
    %6383 = vmatprep.subr.mxu0 0.0
    %6384 = vmatpush1.msra.mxu0 0.0
    %6385 = vmatprep.subr.mxu0 0.0
    %6386 = vmatpush1.msra.mxu0 0.0
    %6387 = vmatprep.subr.mxu0 0.0
    %6388 = vmatpush1.msra.mxu0 0.0
    %6389 = vmatprep.subr.mxu0 0.0
    %6390 = vmatpush1.msra.mxu0 0.0
    %6391 = vmatprep.subr.mxu0 0.0
    %6392 = vmatpush1.msra.mxu0 0.0
    %6393 = vmatprep.subr.mxu0 0.0
    %6394 = vmatpush1.msra.mxu0 0.0
    %6395 = vmatprep.subr.mxu0 0.0
    %6396 = vmatpush1.msra.mxu0 0.0
    %6397 = vmatprep.subr.mxu0 0.0
    %6398 = vmatpush1.msra.mxu0 0.0
    %6399 = vmatprep.subr.mxu0 0.0
    %6400 = vmatpush1.msra.mxu0 0.0
    %6401 = vmatprep.subr.mxu0 0.0
    %6402 = vmatpush1.msra.mxu0 0.0
    %6403 = vmatprep.subr.mxu0 0.0
    %6404 = vmatpush1.msra.mxu0 0.0
    %6405 = vmatprep.subr.mxu0 0.0
    %6406 = vmatpush1.msra.mxu0 0.0
    %6407 = vmatprep.subr.mxu0 0.0
    %6408 = vmatpush1.msra.mxu0 0.0
    %6409 = vmatprep.subr.mxu0 0.0
    %6410 = vmatpush1.msra.mxu0 0.0
    %6411 = vmatprep.subr.mxu0 0.0
    %6412 = vmatpush1.msra.mxu0 0.0
    %6413 = vmatprep.subr.mxu0 0.0
    %6414 = vmatpush1.msra.mxu0 0.0
    %6415 = vmatprep.mubr.f32.mxu0 0.0
    %6416 = vmatmul.mubr.f32.gmra.mrb[0].mxu0 %v6349
    %v6417 = vpop.f32.mrb[0].mxu0
    %v6418 = vadd.f32 0.0, %v6417
    %v6419 = vpop.f32.mrb[0].mxu0
    %6420 = vdwg.mxu0
    %v6422 = vsel %vm2079, %v6269, 0
    %6424 = vmatprep.subr.mxu0 0.0
    %6425 = vmatpush1.msra.mxu0 %v1467
    %6426 = vmatprep.subr.mxu0 0.0
    %6427 = vmatpush1.msra.mxu0 0.0
    %6428 = vmatprep.subr.mxu0 0.0
    %6429 = vmatpush1.msra.mxu0 0.0
    %6430 = vmatprep.subr.mxu0 0.0
    %6431 = vmatpush1.msra.mxu0 0.0
    %6432 = vmatprep.subr.mxu0 0.0
    %6433 = vmatpush1.msra.mxu0 0.0
    %6434 = vmatprep.subr.mxu0 0.0
    %6435 = vmatpush1.msra.mxu0 0.0
    %6436 = vmatprep.subr.mxu0 0.0
    %6437 = vmatpush1.msra.mxu0 0.0
    %6438 = vmatprep.subr.mxu0 0.0
    %6439 = vmatpush1.msra.mxu0 0.0
    %6440 = vmatprep.subr.mxu0 0.0
    %6441 = vmatpush1.msra.mxu0 0.0
    %6442 = vmatprep.subr.mxu0 0.0
    %6443 = vmatpush1.msra.mxu0 0.0
    %6444 = vmatprep.subr.mxu0 0.0
    %6445 = vmatpush1.msra.mxu0 0.0
    %6446 = vmatprep.subr.mxu0 0.0
    %6447 = vmatpush1.msra.mxu0 0.0
    %6448 = vmatprep.subr.mxu0 0.0
    %6449 = vmatpush1.msra.mxu0 0.0
    %6450 = vmatprep.subr.mxu0 0.0
    %6451 = vmatpush1.msra.mxu0 0.0
    %6452 = vmatprep.subr.mxu0 0.0
    %6453 = vmatpush1.msra.mxu0 0.0
    %6454 = vmatprep.subr.mxu0 0.0
    %6455 = vmatpush1.msra.mxu0 0.0
    %6456 = vmatprep.subr.mxu0 0.0
    %6457 = vmatpush1.msra.mxu0 0.0
    %6458 = vmatprep.subr.mxu0 0.0
    %6459 = vmatpush1.msra.mxu0 0.0
    %6460 = vmatprep.subr.mxu0 0.0
    %6461 = vmatpush1.msra.mxu0 0.0
    %6462 = vmatprep.subr.mxu0 0.0
    %6463 = vmatpush1.msra.mxu0 0.0
    %6464 = vmatprep.subr.mxu0 0.0
    %6465 = vmatpush1.msra.mxu0 0.0
    %6466 = vmatprep.subr.mxu0 0.0
    %6467 = vmatpush1.msra.mxu0 0.0
    %6468 = vmatprep.subr.mxu0 0.0
    %6469 = vmatpush1.msra.mxu0 0.0
    %6470 = vmatprep.subr.mxu0 0.0
    %6471 = vmatpush1.msra.mxu0 0.0
    %6472 = vmatprep.subr.mxu0 0.0
    %6473 = vmatpush1.msra.mxu0 0.0
    %6474 = vmatprep.subr.mxu0 0.0
    %6475 = vmatpush1.msra.mxu0 0.0
    %6476 = vmatprep.subr.mxu0 0.0
    %6477 = vmatpush1.msra.mxu0 0.0
    %6478 = vmatprep.subr.mxu0 0.0
    %6479 = vmatpush1.msra.mxu0 0.0
    %6480 = vmatprep.subr.mxu0 0.0
    %6481 = vmatpush1.msra.mxu0 0.0
    %6482 = vmatprep.subr.mxu0 0.0
    %6483 = vmatpush1.msra.mxu0 0.0
    %6484 = vmatprep.subr.mxu0 0.0
    %6485 = vmatpush1.msra.mxu0 0.0
    %6486 = vmatprep.subr.mxu0 0.0
    %6487 = vmatpush1.msra.mxu0 0.0
    %6488 = vmatprep.mubr.f32.mxu0 0.0
    %6489 = vmatmul.mubr.f32.gmra.mrb[0].mxu0 %v6422
    %v6490 = vpop.f32.mrb[0].mxu0
    %v6491 = vadd.f32 0.0, %v6490
    %v6492 = vpop.f32.mrb[0].mxu0
    %6493 = vdwg.mxu0
    %v6495 = vsel %vm2079, %v6270, 0
    %6497 = vmatprep.subr.mxu0 0.0
    %6498 = vmatpush1.msra.mxu0 %v1473
    %6499 = vmatprep.subr.mxu0 0.0
    %6500 = vmatpush1.msra.mxu0 0.0
    %6501 = vmatprep.subr.mxu0 0.0
    %6502 = vmatpush1.msra.mxu0 0.0
    %6503 = vmatprep.subr.mxu0 0.0
    %6504 = vmatpush1.msra.mxu0 0.0
    %6505 = vmatprep.subr.mxu0 0.0
    %6506 = vmatpush1.msra.mxu0 0.0
    %6507 = vmatprep.subr.mxu0 0.0
    %6508 = vmatpush1.msra.mxu0 0.0
    %6509 = vmatprep.subr.mxu0 0.0
    %6510 = vmatpush1.msra.mxu0 0.0
    %6511 = vmatprep.subr.mxu0 0.0
    %6512 = vmatpush1.msra.mxu0 0.0
    %6513 = vmatprep.subr.mxu0 0.0
    %6514 = vmatpush1.msra.mxu0 0.0
    %6515 = vmatprep.subr.mxu0 0.0
    %6516 = vmatpush1.msra.mxu0 0.0
    %6517 = vmatprep.subr.mxu0 0.0
    %6518 = vmatpush1.msra.mxu0 0.0
    %6519 = vmatprep.subr.mxu0 0.0
    %6520 = vmatpush1.msra.mxu0 0.0
    %6521 = vmatprep.subr.mxu0 0.0
    %6522 = vmatpush1.msra.mxu0 0.0
    %6523 = vmatprep.subr.mxu0 0.0
    %6524 = vmatpush1.msra.mxu0 0.0
    %6525 = vmatprep.subr.mxu0 0.0
    %6526 = vmatpush1.msra.mxu0 0.0
    %6527 = vmatprep.subr.mxu0 0.0
    %6528 = vmatpush1.msra.mxu0 0.0
    %6529 = vmatprep.subr.mxu0 0.0
    %6530 = vmatpush1.msra.mxu0 0.0
    %6531 = vmatprep.subr.mxu0 0.0
    %6532 = vmatpush1.msra.mxu0 0.0
    %6533 = vmatprep.subr.mxu0 0.0
    %6534 = vmatpush1.msra.mxu0 0.0
    %6535 = vmatprep.subr.mxu0 0.0
    %6536 = vmatpush1.msra.mxu0 0.0
    %6537 = vmatprep.subr.mxu0 0.0
    %6538 = vmatpush1.msra.mxu0 0.0
    %6539 = vmatprep.subr.mxu0 0.0
    %6540 = vmatpush1.msra.mxu0 0.0
    %6541 = vmatprep.subr.mxu0 0.0
    %6542 = vmatpush1.msra.mxu0 0.0
    %6543 = vmatprep.subr.mxu0 0.0
    %6544 = vmatpush1.msra.mxu0 0.0
    %6545 = vmatprep.subr.mxu0 0.0
    %6546 = vmatpush1.msra.mxu0 0.0
    %6547 = vmatprep.subr.mxu0 0.0
    %6548 = vmatpush1.msra.mxu0 0.0
    %6549 = vmatprep.subr.mxu0 0.0
    %6550 = vmatpush1.msra.mxu0 0.0
    %6551 = vmatprep.subr.mxu0 0.0
    %6552 = vmatpush1.msra.mxu0 0.0
    %6553 = vmatprep.subr.mxu0 0.0
    %6554 = vmatpush1.msra.mxu0 0.0
    %6555 = vmatprep.subr.mxu0 0.0
    %6556 = vmatpush1.msra.mxu0 0.0
    %6557 = vmatprep.subr.mxu0 0.0
    %6558 = vmatpush1.msra.mxu0 0.0
    %6559 = vmatprep.subr.mxu0 0.0
    %6560 = vmatpush1.msra.mxu0 0.0
    %6561 = vmatprep.mubr.f32.mxu0 0.0
    %6562 = vmatmul.mubr.f32.gmra.mrb[0].mxu0 %v6495
    %v6563 = vpop.f32.mrb[0].mxu0
    %v6564 = vadd.f32 0.0, %v6563
    %v6565 = vpop.f32.mrb[0].mxu0
    %6566 = vdwg.mxu0
    %v6568 = vsel %vm2079, %v6271, 0
    %6570 = vmatprep.subr.mxu0 0.0
    %6571 = vmatpush1.msra.mxu0 %v1479
    %6572 = vmatprep.subr.mxu0 0.0
    %6573 = vmatpush1.msra.mxu0 0.0
    %6574 = vmatprep.subr.mxu0 0.0
    %6575 = vmatpush1.msra.mxu0 0.0
    %6576 = vmatprep.subr.mxu0 0.0
    %6577 = vmatpush1.msra.mxu0 0.0
    %6578 = vmatprep.subr.mxu0 0.0
    %6579 = vmatpush1.msra.mxu0 0.0
    %6580 = vmatprep.subr.mxu0 0.0
    %6581 = vmatpush1.msra.mxu0 0.0
    %6582 = vmatprep.subr.mxu0 0.0
    %6583 = vmatpush1.msra.mxu0 0.0
    %6584 = vmatprep.subr.mxu0 0.0
    %6585 = vmatpush1.msra.mxu0 0.0
    %6586 = vmatprep.subr.mxu0 0.0
    %6587 = vmatpush1.msra.mxu0 0.0
    %6588 = vmatprep.subr.mxu0 0.0
    %6589 = vmatpush1.msra.mxu0 0.0
    %6590 = vmatprep.subr.mxu0 0.0
    %6591 = vmatpush1.msra.mxu0 0.0
    %6592 = vmatprep.subr.mxu0 0.0
    %6593 = vmatpush1.msra.mxu0 0.0
    %6594 = vmatprep.subr.mxu0 0.0
    %6595 = vmatpush1.msra.mxu0 0.0
    %6596 = vmatprep.subr.mxu0 0.0
    %6597 = vmatpush1.msra.mxu0 0.0
    %6598 = vmatprep.subr.mxu0 0.0
    %6599 = vmatpush1.msra.mxu0 0.0
    %6600 = vmatprep.subr.mxu0 0.0
    %6601 = vmatpush1.msra.mxu0 0.0
    %6602 = vmatprep.subr.mxu0 0.0
    %6603 = vmatpush1.msra.mxu0 0.0
    %6604 = vmatprep.subr.mxu0 0.0
    %6605 = vmatpush1.msra.mxu0 0.0
    %6606 = vmatprep.subr.mxu0 0.0
    %6607 = vmatpush1.msra.mxu0 0.0
    %6608 = vmatprep.subr.mxu0 0.0
    %6609 = vmatpush1.msra.mxu0 0.0
    %6610 = vmatprep.subr.mxu0 0.0
    %6611 = vmatpush1.msra.mxu0 0.0
    %6612 = vmatprep.subr.mxu0 0.0
    %6613 = vmatpush1.msra.mxu0 0.0
    %6614 = vmatprep.subr.mxu0 0.0
    %6615 = vmatpush1.msra.mxu0 0.0
    %6616 = vmatprep.subr.mxu0 0.0
    %6617 = vmatpush1.msra.mxu0 0.0
    %6618 = vmatprep.subr.mxu0 0.0
    %6619 = vmatpush1.msra.mxu0 0.0
    %6620 = vmatprep.subr.mxu0 0.0
    %6621 = vmatpush1.msra.mxu0 0.0
    %6622 = vmatprep.subr.mxu0 0.0
    %6623 = vmatpush1.msra.mxu0 0.0
    %6624 = vmatprep.subr.mxu0 0.0
    %6625 = vmatpush1.msra.mxu0 0.0
    %6626 = vmatprep.subr.mxu0 0.0
    %6627 = vmatpush1.msra.mxu0 0.0
    %6628 = vmatprep.subr.mxu0 0.0
    %6629 = vmatpush1.msra.mxu0 0.0
    %6630 = vmatprep.subr.mxu0 0.0
    %6631 = vmatpush1.msra.mxu0 0.0
    %6632 = vmatprep.subr.mxu0 0.0
    %6633 = vmatpush1.msra.mxu0 0.0
    %6634 = vmatprep.mubr.f32.mxu0 0.0
    %6635 = vmatmul.mubr.f32.gmra.mrb[0].mxu0 %v6568
    %v6636 = vpop.f32.mrb[0].mxu0
    %v6637 = vadd.f32 0.0, %v6636
    %v6638 = vpop.f32.mrb[0].mxu0
    %6639 = vdwg.mxu0
    %v6641 = vsel %vm2079, %v6272, 0
    %6643 = vmatprep.subr.mxu0 0.0
    %6644 = vmatpush1.msra.mxu0 %v1485
    %6645 = vmatprep.subr.mxu0 0.0
    %6646 = vmatpush1.msra.mxu0 0.0
    %6647 = vmatprep.subr.mxu0 0.0
    %6648 = vmatpush1.msra.mxu0 0.0
    %6649 = vmatprep.subr.mxu0 0.0
    %6650 = vmatpush1.msra.mxu0 0.0
    %6651 = vmatprep.subr.mxu0 0.0
    %6652 = vmatpush1.msra.mxu0 0.0
    %6653 = vmatprep.subr.mxu0 0.0
    %6654 = vmatpush1.msra.mxu0 0.0
    %6655 = vmatprep.subr.mxu0 0.0
    %6656 = vmatpush1.msra.mxu0 0.0
    %6657 = vmatprep.subr.mxu0 0.0
    %6658 = vmatpush1.msra.mxu0 0.0
    %6659 = vmatprep.subr.mxu0 0.0
    %6660 = vmatpush1.msra.mxu0 0.0
    %6661 = vmatprep.subr.mxu0 0.0
    %6662 = vmatpush1.msra.mxu0 0.0
    %6663 = vmatprep.subr.mxu0 0.0
    %6664 = vmatpush1.msra.mxu0 0.0
    %6665 = vmatprep.subr.mxu0 0.0
    %6666 = vmatpush1.msra.mxu0 0.0
    %6667 = vmatprep.subr.mxu0 0.0
    %6668 = vmatpush1.msra.mxu0 0.0
    %6669 = vmatprep.subr.mxu0 0.0
    %6670 = vmatpush1.msra.mxu0 0.0
    %6671 = vmatprep.subr.mxu0 0.0
    %6672 = vmatpush1.msra.mxu0 0.0
    %6673 = vmatprep.subr.mxu0 0.0
    %6674 = vmatpush1.msra.mxu0 0.0
    %6675 = vmatprep.subr.mxu0 0.0
    %6676 = vmatpush1.msra.mxu0 0.0
    %6677 = vmatprep.subr.mxu0 0.0
    %6678 = vmatpush1.msra.mxu0 0.0
    %6679 = vmatprep.subr.mxu0 0.0
    %6680 = vmatpush1.msra.mxu0 0.0
    %6681 = vmatprep.subr.mxu0 0.0
    %6682 = vmatpush1.msra.mxu0 0.0
    %6683 = vmatprep.subr.mxu0 0.0
    %6684 = vmatpush1.msra.mxu0 0.0
    %6685 = vmatprep.subr.mxu0 0.0
    %6686 = vmatpush1.msra.mxu0 0.0
    %6687 = vmatprep.subr.mxu0 0.0
    %6688 = vmatpush1.msra.mxu0 0.0
    %6689 = vmatprep.subr.mxu0 0.0
    %6690 = vmatpush1.msra.mxu0 0.0
    %6691 = vmatprep.subr.mxu0 0.0
    %6692 = vmatpush1.msra.mxu0 0.0
    %6693 = vmatprep.subr.mxu0 0.0
    %6694 = vmatpush1.msra.mxu0 0.0
    %6695 = vmatprep.subr.mxu0 0.0
    %6696 = vmatpush1.msra.mxu0 0.0
    %6697 = vmatprep.subr.mxu0 0.0
    %6698 = vmatpush1.msra.mxu0 0.0
    %6699 = vmatprep.subr.mxu0 0.0
    %6700 = vmatpush1.msra.mxu0 0.0
    %6701 = vmatprep.subr.mxu0 0.0
    %6702 = vmatpush1.msra.mxu0 0.0
    %6703 = vmatprep.subr.mxu0 0.0
    %6704 = vmatpush1.msra.mxu0 0.0
    %6705 = vmatprep.subr.mxu0 0.0
    %6706 = vmatpush1.msra.mxu0 0.0
    %6707 = vmatprep.mubr.f32.mxu0 0.0
    %6708 = vmatmul.mubr.f32.gmra.mrb[0].mxu0 %v6641
    %v6709 = vpop.f32.mrb[0].mxu0
    %v6710 = vadd.f32 0.0, %v6709
    %v6711 = vpop.f32.mrb[0].mxu0
    %6712 = vdwg.mxu0
    %v6714 = vsel %vm2079, %v6273, 0
    %6716 = vmatprep.subr.mxu0 0.0
    %6717 = vmatpush1.msra.mxu0 %v1491
    %6718 = vmatprep.subr.mxu0 0.0
    %6719 = vmatpush1.msra.mxu0 0.0
    %6720 = vmatprep.subr.mxu0 0.0
    %6721 = vmatpush1.msra.mxu0 0.0
    %6722 = vmatprep.subr.mxu0 0.0
    %6723 = vmatpush1.msra.mxu0 0.0
    %6724 = vmatprep.subr.mxu0 0.0
    %6725 = vmatpush1.msra.mxu0 0.0
    %6726 = vmatprep.subr.mxu0 0.0
    %6727 = vmatpush1.msra.mxu0 0.0
    %6728 = vmatprep.subr.mxu0 0.0
    %6729 = vmatpush1.msra.mxu0 0.0
    %6730 = vmatprep.subr.mxu0 0.0
    %6731 = vmatpush1.msra.mxu0 0.0
    %6732 = vmatprep.subr.mxu0 0.0
    %6733 = vmatpush1.msra.mxu0 0.0
    %6734 = vmatprep.subr.mxu0 0.0
    %6735 = vmatpush1.msra.mxu0 0.0
    %6736 = vmatprep.subr.mxu0 0.0
    %6737 = vmatpush1.msra.mxu0 0.0
    %6738 = vmatprep.subr.mxu0 0.0
    %6739 = vmatpush1.msra.mxu0 0.0
    %6740 = vmatprep.subr.mxu0 0.0
    %6741 = vmatpush1.msra.mxu0 0.0
    %6742 = vmatprep.subr.mxu0 0.0
    %6743 = vmatpush1.msra.mxu0 0.0
    %6744 = vmatprep.subr.mxu0 0.0
    %6745 = vmatpush1.msra.mxu0 0.0
    %6746 = vmatprep.subr.mxu0 0.0
    %6747 = vmatpush1.msra.mxu0 0.0
    %6748 = vmatprep.subr.mxu0 0.0
    %6749 = vmatpush1.msra.mxu0 0.0
    %6750 = vmatprep.subr.mxu0 0.0
    %6751 = vmatpush1.msra.mxu0 0.0
    %6752 = vmatprep.subr.mxu0 0.0
    %6753 = vmatpush1.msra.mxu0 0.0
    %6754 = vmatprep.subr.mxu0 0.0
    %6755 = vmatpush1.msra.mxu0 0.0
    %6756 = vmatprep.subr.mxu0 0.0
    %6757 = vmatpush1.msra.mxu0 0.0
    %6758 = vmatprep.subr.mxu0 0.0
    %6759 = vmatpush1.msra.mxu0 0.0
    %6760 = vmatprep.subr.mxu0 0.0
    %6761 = vmatpush1.msra.mxu0 0.0
    %6762 = vmatprep.subr.mxu0 0.0
    %6763 = vmatpush1.msra.mxu0 0.0
    %6764 = vmatprep.subr.mxu0 0.0
    %6765 = vmatpush1.msra.mxu0 0.0
    %6766 = vmatprep.subr.mxu0 0.0
    %6767 = vmatpush1.msra.mxu0 0.0
    %6768 = vmatprep.subr.mxu0 0.0
    %6769 = vmatpush1.msra.mxu0 0.0
    %6770 = vmatprep.subr.mxu0 0.0
    %6771 = vmatpush1.msra.mxu0 0.0
    %6772 = vmatprep.subr.mxu0 0.0
    %6773 = vmatpush1.msra.mxu0 0.0
    %6774 = vmatprep.subr.mxu0 0.0
    %6775 = vmatpush1.msra.mxu0 0.0
    %6776 = vmatprep.subr.mxu0 0.0
    %6777 = vmatpush1.msra.mxu0 0.0
    %6778 = vmatprep.subr.mxu0 0.0
    %6779 = vmatpush1.msra.mxu0 0.0
    %6780 = vmatprep.mubr.f32.mxu0 0.0
    %6781 = vmatmul.mubr.f32.gmra.mrb[0].mxu0 %v6714
    %v6782 = vpop.f32.mrb[0].mxu0
    %v6783 = vadd.f32 0.0, %v6782
    %v6784 = vpop.f32.mrb[0].mxu0
    %6785 = vdwg.mxu0
    %v6787 = vsel %vm2079, %v6274, 0
    %6789 = vmatprep.subr.mxu0 0.0
    %6790 = vmatpush1.msra.mxu0 %v1497
    %6791 = vmatprep.subr.mxu0 0.0
    %6792 = vmatpush1.msra.mxu0 0.0
    %6793 = vmatprep.subr.mxu0 0.0
    %6794 = vmatpush1.msra.mxu0 0.0
    %6795 = vmatprep.subr.mxu0 0.0
    %6796 = vmatpush1.msra.mxu0 0.0
    %6797 = vmatprep.subr.mxu0 0.0
    %6798 = vmatpush1.msra.mxu0 0.0
    %6799 = vmatprep.subr.mxu0 0.0
    %6800 = vmatpush1.msra.mxu0 0.0
    %6801 = vmatprep.subr.mxu0 0.0
    %6802 = vmatpush1.msra.mxu0 0.0
    %6803 = vmatprep.subr.mxu0 0.0
    %6804 = vmatpush1.msra.mxu0 0.0
    %6805 = vmatprep.subr.mxu0 0.0
    %6806 = vmatpush1.msra.mxu0 0.0
    %6807 = vmatprep.subr.mxu0 0.0
    %6808 = vmatpush1.msra.mxu0 0.0
    %6809 = vmatprep.subr.mxu0 0.0
    %6810 = vmatpush1.msra.mxu0 0.0
    %6811 = vmatprep.subr.mxu0 0.0
    %6812 = vmatpush1.msra.mxu0 0.0
    %6813 = vmatprep.subr.mxu0 0.0
    %6814 = vmatpush1.msra.mxu0 0.0
    %6815 = vmatprep.subr.mxu0 0.0
    %6816 = vmatpush1.msra.mxu0 0.0
    %6817 = vmatprep.subr.mxu0 0.0
    %6818 = vmatpush1.msra.mxu0 0.0
    %6819 = vmatprep.subr.mxu0 0.0
    %6820 = vmatpush1.msra.mxu0 0.0
    %6821 = vmatprep.subr.mxu0 0.0
    %6822 = vmatpush1.msra.mxu0 0.0
    %6823 = vmatprep.subr.mxu0 0.0
    %6824 = vmatpush1.msra.mxu0 0.0
    %6825 = vmatprep.subr.mxu0 0.0
    %6826 = vmatpush1.msra.mxu0 0.0
    %6827 = vmatprep.subr.mxu0 0.0
    %6828 = vmatpush1.msra.mxu0 0.0
    %6829 = vmatprep.subr.mxu0 0.0
    %6830 = vmatpush1.msra.mxu0 0.0
    %6831 = vmatprep.subr.mxu0 0.0
    %6832 = vmatpush1.msra.mxu0 0.0
    %6833 = vmatprep.subr.mxu0 0.0
    %6834 = vmatpush1.msra.mxu0 0.0
    %6835 = vmatprep.subr.mxu0 0.0
    %6836 = vmatpush1.msra.mxu0 0.0
    %6837 = vmatprep.subr.mxu0 0.0
    %6838 = vmatpush1.msra.mxu0 0.0
    %6839 = vmatprep.subr.mxu0 0.0
    %6840 = vmatpush1.msra.mxu0 0.0
    %6841 = vmatprep.subr.mxu0 0.0
    %6842 = vmatpush1.msra.mxu0 0.0
    %6843 = vmatprep.subr.mxu0 0.0
    %6844 = vmatpush1.msra.mxu0 0.0
    %6845 = vmatprep.subr.mxu0 0.0
    %6846 = vmatpush1.msra.mxu0 0.0
    %6847 = vmatprep.subr.mxu0 0.0
    %6848 = vmatpush1.msra.mxu0 0.0
    %6849 = vmatprep.subr.mxu0 0.0
    %6850 = vmatpush1.msra.mxu0 0.0
    %6851 = vmatprep.subr.mxu0 0.0
    %6852 = vmatpush1.msra.mxu0 0.0
    %6853 = vmatprep.mubr.f32.mxu0 0.0
    %6854 = vmatmul.mubr.f32.gmra.mrb[0].mxu0 %v6787
    %v6855 = vpop.f32.mrb[0].mxu0
    %v6856 = vadd.f32 0.0, %v6855
    %v6857 = vpop.f32.mrb[0].mxu0
    %6858 = vdwg.mxu0
    %v6859 = vld [vmem:[#allocation7 + $0x180] sm:$0xff]
    %v6860 = vld [vmem:[#allocation7 + $0x188] sm:$0xff]
    %v6861 = vld [vmem:[#allocation7 + $0x190] sm:$0xff]
    %v6862 = vld [vmem:[#allocation7 + $0x198] sm:$0xff]
    %v6863 = vld [vmem:[#allocation7 + $0x1a0] sm:$0xff]
    %v6864 = vld [vmem:[#allocation7 + $0x1a8] sm:$0xff]
    %v6865 = vld [vmem:[#allocation7 + $0x1b0] sm:$0xff]
    %v6866 = vld [vmem:[#allocation7 + $0x1b8] sm:$0xff]
    %v6867 = vld [vmem:[#allocation7 + $0x1c0] sm:$0xff]
    %v6868 = vld [vmem:[#allocation7 + $0x1c8] sm:$0xff]
    %v6869 = vld [vmem:[#allocation7 + $0x1d0] sm:$0xff]
    %v6870 = vld [vmem:[#allocation7 + $0x1d8] sm:$0xff]
    %v6871 = vld [vmem:[#allocation7 + $0x1e0] sm:$0xff]
    %v6872 = vld [vmem:[#allocation7 + $0x1e8] sm:$0xff]
    %v6873 = vld [vmem:[#allocation7 + $0x1f0] sm:$0xff]
    %v6874 = vld [vmem:[#allocation7 + $0x1f8] sm:$0xff]
    %6875 = vmatprep.subr.mxu0 0.0
    %6876 = vmatpush1.msra.mxu0 %v6859
    %6877 = vmatprep.subr.mxu0 0.0
    %6878 = vmatpush1.msra.mxu0 %v6860
    %6879 = vmatprep.subr.mxu0 0.0
    %6880 = vmatpush1.msra.mxu0 %v6861
    %6881 = vmatprep.subr.mxu0 0.0
    %6882 = vmatpush1.msra.mxu0 %v6862
    %6883 = vmatprep.subr.mxu0 0.0
    %6884 = vmatpush1.msra.mxu0 %v6863
    %6885 = vmatprep.subr.mxu0 0.0
    %6886 = vmatpush1.msra.mxu0 %v6864
    %6887 = vmatprep.subr.mxu0 0.0
    %6888 = vmatpush1.msra.mxu0 %v6865
    %6889 = vmatprep.subr.mxu0 0.0
    %6890 = vmatpush1.msra.mxu0 %v6866
    %6891 = vmatprep.subr.mxu0 0.0
    %6892 = vmatpush1.msra.mxu0 %v6867
    %6893 = vmatprep.subr.mxu0 0.0
    %6894 = vmatpush1.msra.mxu0 %v6868
    %6895 = vmatprep.subr.mxu0 0.0
    %6896 = vmatpush1.msra.mxu0 %v6869
    %6897 = vmatprep.subr.mxu0 0.0
    %6898 = vmatpush1.msra.mxu0 %v6870
    %6899 = vmatprep.subr.mxu0 0.0
    %6900 = vmatpush1.msra.mxu0 %v6871
    %6901 = vmatprep.subr.mxu0 0.0
    %6902 = vmatpush1.msra.mxu0 %v6872
    %6903 = vmatprep.subr.mxu0 0.0
    %6904 = vmatpush1.msra.mxu0 %v6873
    %6905 = vmatprep.subr.mxu0 0.0
    %6906 = vmatpush1.msra.mxu0 %v6874
    %6907 = vmatprep.subr.mxu0 0.0
    %6908 = vmatpush1.msra.mxu0 0.0
    %6909 = vmatprep.subr.mxu0 0.0
    %6910 = vmatpush1.msra.mxu0 0.0
    %6911 = vmatprep.subr.mxu0 0.0
    %6912 = vmatpush1.msra.mxu0 0.0
    %6913 = vmatprep.subr.mxu0 0.0
    %6914 = vmatpush1.msra.mxu0 0.0
    %6915 = vmatprep.subr.mxu0 0.0
    %6916 = vmatpush1.msra.mxu0 0.0
    %6917 = vmatprep.subr.mxu0 0.0
    %6918 = vmatpush1.msra.mxu0 0.0
    %6919 = vmatprep.subr.mxu0 0.0
    %6920 = vmatpush1.msra.mxu0 0.0
    %6921 = vmatprep.subr.mxu0 0.0
    %6922 = vmatpush1.msra.mxu0 0.0
    %6923 = vmatprep.subr.mxu0 0.0
    %6924 = vmatpush1.msra.mxu0 0.0
    %6925 = vmatprep.subr.mxu0 0.0
    %6926 = vmatpush1.msra.mxu0 0.0
    %6927 = vmatprep.subr.mxu0 0.0
    %6928 = vmatpush1.msra.mxu0 0.0
    %6929 = vmatprep.subr.mxu0 0.0
    %6930 = vmatpush1.msra.mxu0 0.0
    %6931 = vmatprep.subr.mxu0 0.0
    %6932 = vmatpush1.msra.mxu0 0.0
    %6933 = vmatprep.subr.mxu0 0.0
    %6934 = vmatpush1.msra.mxu0 0.0
    %6935 = vmatprep.subr.mxu0 0.0
    %6936 = vmatpush1.msra.mxu0 0.0
    %6937 = vmatprep.subr.mxu0 0.0
    %6938 = vmatpush1.msra.mxu0 0.0
    %6939 = vmatprep.mubr.f32.mxu0 0.0
    %6940 = vmatmul.mubr.f32.gmra.mrb[0].mxu0 %v6345
    %v6941 = vpop.f32.mrb[0].mxu0
    %v6942 = vadd.f32 0.0, %v6941
    %v6943 = vpop.f32.mrb[0].mxu0
    %6944 = vmatprep.mubr.f32.mxu0 0.0
    %6945 = vmatmul.mubr.f32.gmra.mrb[0].mxu0 %v6418
    %v6946 = vpop.f32.mrb[0].mxu0
    %v6947 = vadd.f32 0.0, %v6946
    %v6948 = vpop.f32.mrb[0].mxu0
    %6949 = vmatprep.mubr.f32.mxu0 0.0
    %6950 = vmatmul.mubr.f32.gmra.mrb[0].mxu0 %v6491
    %v6951 = vpop.f32.mrb[0].mxu0
    %v6952 = vadd.f32 0.0, %v6951
    %v6953 = vpop.f32.mrb[0].mxu0
    %6954 = vmatprep.mubr.f32.mxu0 0.0
    %6955 = vmatmul.mubr.f32.gmra.mrb[0].mxu0 %v6564
    %v6956 = vpop.f32.mrb[0].mxu0
    %v6957 = vadd.f32 0.0, %v6956
    %v6958 = vpop.f32.mrb[0].mxu0
    %6959 = vmatprep.mubr.f32.mxu0 0.0
    %6960 = vmatmul.mubr.f32.gmra.mrb[0].mxu0 %v6637
    %v6961 = vpop.f32.mrb[0].mxu0
    %v6962 = vadd.f32 0.0, %v6961
    %v6963 = vpop.f32.mrb[0].mxu0
    %6964 = vmatprep.mubr.f32.mxu0 0.0
    %6965 = vmatmul.mubr.f32.gmra.mrb[0].mxu0 %v6710
    %v6966 = vpop.f32.mrb[0].mxu0
    %v6967 = vadd.f32 0.0, %v6966
    %v6968 = vpop.f32.mrb[0].mxu0
    %6969 = vmatprep.mubr.f32.mxu0 0.0
    %6970 = vmatmul.mubr.f32.gmra.mrb[0].mxu0 %v6783
    %v6971 = vpop.f32.mrb[0].mxu0
    %v6972 = vadd.f32 0.0, %v6971
    %v6973 = vpop.f32.mrb[0].mxu0
    %6974 = vmatprep.mubr.f32.mxu0 0.0
    %6975 = vmatmul.mubr.f32.gmra.mrb[0].mxu0 %v6856
    %v6976 = vpop.f32.mrb[0].mxu0
    %v6977 = vadd.f32 0.0, %v6976
    %v6978 = vpop.f32.mrb[0].mxu0
    %6979 = vdwg.mxu0
    %v6980 = vadd.f32 %v5611, %v6942
    %v6981 = vadd.f32 %v5612, %v6947
    %v6982 = vadd.f32 %v5613, %v6952
    %v6983 = vadd.f32 %v5614, %v6957
    %v6984 = vadd.f32 %v5615, %v6962
    %v6985 = vadd.f32 %v5616, %v6967
    %v6986 = vadd.f32 %v5617, %v6972
    %v6987 = vadd.f32 %v5618, %v6977
    %6988 = vadd.xlane.f32.xlu0 %v6980
    %v6989 = vpop.xlane.xlu0 %6988
    %6990 = vadd.xlane.f32.xlu0 %v6981
    %v6991 = vpop.xlane.xlu0 %6990
    %6992 = vadd.xlane.f32.xlu0 %v6982
    %v6993 = vpop.xlane.xlu0 %6992
    %6994 = vadd.xlane.f32.xlu0 %v6983
    %v6995 = vpop.xlane.xlu0 %6994
    %6996 = vadd.xlane.f32.xlu0 %v6984
    %v6997 = vpop.xlane.xlu0 %6996
    %6998 = vadd.xlane.f32.xlu0 %v6985
    %v6999 = vpop.xlane.xlu0 %6998
    %7000 = vadd.xlane.f32.xlu0 %v6986
    %v7001 = vpop.xlane.xlu0 %7000
    %7002 = vadd.xlane.f32.xlu0 %v6987
    %v7003 = vpop.xlane.xlu0 %7002
    %v7004 = vmul.f32 %v6989, %v532
    %v7005 = vmul.f32 %v6991, %v532
    %v7006 = vmul.f32 %v6993, %v532
    %v7007 = vmul.f32 %v6995, %v532
    %v7008 = vmul.f32 %v6997, %v532
    %v7009 = vmul.f32 %v6999, %v532
    %v7010 = vmul.f32 %v7001, %v532
    %v7011 = vmul.f32 %v7003, %v532
    %v7012 = vsub.f32 %v6980, %v7004
    %v7013 = vsub.f32 %v6981, %v7005
    %v7014 = vsub.f32 %v6982, %v7006
    %v7015 = vsub.f32 %v6983, %v7007
    %v7016 = vsub.f32 %v6984, %v7008
    %v7017 = vsub.f32 %v6985, %v7009
    %v7018 = vsub.f32 %v6986, %v7010
    %v7019 = vsub.f32 %v6987, %v7011
    %v7020 = vmul.f32 %v7012, %v7012
    %v7021 = vmul.f32 %v7013, %v7013
    %v7022 = vmul.f32 %v7014, %v7014
    %v7023 = vmul.f32 %v7015, %v7015
    %v7024 = vmul.f32 %v7016, %v7016
    %v7025 = vmul.f32 %v7017, %v7017
    %v7026 = vmul.f32 %v7018, %v7018
    %v7027 = vmul.f32 %v7019, %v7019
    %7028 = vadd.xlane.f32.xlu0 %v7020
    %v7029 = vpop.xlane.xlu0 %7028
    %7030 = vadd.xlane.f32.xlu0 %v7021
    %v7031 = vpop.xlane.xlu0 %7030
    %7032 = vadd.xlane.f32.xlu0 %v7022
    %v7033 = vpop.xlane.xlu0 %7032
    %7034 = vadd.xlane.f32.xlu0 %v7023
    %v7035 = vpop.xlane.xlu0 %7034
    %7036 = vadd.xlane.f32.xlu0 %v7024
    %v7037 = vpop.xlane.xlu0 %7036
    %7038 = vadd.xlane.f32.xlu0 %v7025
    %v7039 = vpop.xlane.xlu0 %7038
    %7040 = vadd.xlane.f32.xlu0 %v7026
    %v7041 = vpop.xlane.xlu0 %7040
    %7042 = vadd.xlane.f32.xlu0 %v7027
    %v7043 = vpop.xlane.xlu0 %7042
    %v7044 = vmul.f32 %v7029, %v532
    %v7045 = vmul.f32 %v7031, %v532
    %v7046 = vmul.f32 %v7033, %v532
    %v7047 = vmul.f32 %v7035, %v532
    %v7048 = vmul.f32 %v7037, %v532
    %v7049 = vmul.f32 %v7039, %v532
    %v7050 = vmul.f32 %v7041, %v532
    %v7051 = vmul.f32 %v7043, %v532
    %v7052 = vadd.f32 %v7044, 1e-05
    %v7053 = vadd.f32 %v7045, 1e-05
    %v7054 = vadd.f32 %v7046, 1e-05
    %v7055 = vadd.f32 %v7047, 1e-05
    %v7056 = vadd.f32 %v7048, 1e-05
    %v7057 = vadd.f32 %v7049, 1e-05
    %v7058 = vadd.f32 %v7050, 1e-05
    %v7059 = vadd.f32 %v7051, 1e-05
    %v7060 = vrsqrt.pop %v7052
    %v7061 = vrsqrt.pop %v7053
    %v7062 = vrsqrt.pop %v7054
    %v7063 = vrsqrt.pop %v7055
    %v7064 = vrsqrt.pop %v7056
    %v7065 = vrsqrt.pop %v7057
    %v7066 = vrsqrt.pop %v7058
    %v7067 = vrsqrt.pop %v7059
    %v7068 = vmul.f32 %v7012, %v7060
    %v7069 = vmul.f32 %v7013, %v7061
    %v7070 = vmul.f32 %v7014, %v7062
    %v7071 = vmul.f32 %v7015, %v7063
    %v7072 = vmul.f32 %v7016, %v7064
    %v7073 = vmul.f32 %v7017, %v7065
    %v7074 = vmul.f32 %v7018, %v7066
    %v7075 = vmul.f32 %v7019, %v7067
    %v7076 = vlaneseq
    %v7077 = vshrl.u32 %v7076, 7
    %v7078 = vsub.s32 4, %v7077
    %v7079 = vrot.slane %v118, %v7078
    %v7080 = vmul.f32 %v7068, %v7079
    %v7081 = vmul.f32 %v7069, %v7079
    %v7082 = vmul.f32 %v7070, %v7079
    %v7083 = vmul.f32 %v7071, %v7079
    %v7084 = vmul.f32 %v7072, %v7079
    %v7085 = vmul.f32 %v7073, %v7079
    %v7086 = vmul.f32 %v7074, %v7079
    %v7087 = vmul.f32 %v7075, %v7079
    %v7088 = vlaneseq
    %v7089 = vshrl.u32 %v7088, 7
    %v7090 = vsub.s32 5, %v7089
    %v7091 = vrot.slane %v118, %v7090
    %v7092 = vadd.f32 %v7080, %v7091
    %v7093 = vadd.f32 %v7081, %v7091
    %v7094 = vadd.f32 %v7082, %v7091
    %v7095 = vadd.f32 %v7083, %v7091
    %v7096 = vadd.f32 %v7084, %v7091
    %v7097 = vadd.f32 %v7085, %v7091
    %v7098 = vadd.f32 %v7086, %v7091
    %v7099 = vadd.f32 %v7087, %v7091
    %v7100 = vld [vmem:[#allocation8] sm:$0xff]
    %v7101 = vld [vmem:[#allocation8 + $0x8] sm:$0xff]
    %v7102 = vld [vmem:[#allocation8 + $0x10] sm:$0xff]
    %v7103 = vld [vmem:[#allocation8 + $0x18] sm:$0xff]
    %v7104 = vld [vmem:[#allocation8 + $0x20] sm:$0xff]
    %v7105 = vld [vmem:[#allocation8 + $0x28] sm:$0xff]
    %v7106 = vld [vmem:[#allocation8 + $0x30] sm:$0xff]
    %v7107 = vld [vmem:[#allocation8 + $0x38] sm:$0xff]
    %v7108 = vld [vmem:[#allocation8 + $0x40] sm:$0xff]
    %v7109 = vld [vmem:[#allocation8 + $0x48] sm:$0xff]
    %v7110 = vld [vmem:[#allocation8 + $0x50] sm:$0xff]
    %v7111 = vld [vmem:[#allocation8 + $0x58] sm:$0xff]
    %v7112 = vld [vmem:[#allocation8 + $0x60] sm:$0xff]
    %v7113 = vld [vmem:[#allocation8 + $0x68] sm:$0xff]
    %v7114 = vld [vmem:[#allocation8 + $0x70] sm:$0xff]
    %v7115 = vld [vmem:[#allocation8 + $0x78] sm:$0xff]
    %v7116 = vlaneseq
    %v7117 = vshrl.u32 %v7116, 7
    %v7118 = vsub.s32 6, %v7117
    %v7119 = vrot.slane %v118, %v7118
    %7120 = vmatprep.subr.mxu0 0.0
    %7121 = vmatpush1.msra.mxu0 %v7100
    %7122 = vmatprep.subr.mxu0 0.0
    %7123 = vmatpush1.msra.mxu0 %v7101
    %7124 = vmatprep.subr.mxu0 0.0
    %7125 = vmatpush1.msra.mxu0 %v7102
    %7126 = vmatprep.subr.mxu0 0.0
    %7127 = vmatpush1.msra.mxu0 %v7103
    %7128 = vmatprep.subr.mxu0 0.0
    %7129 = vmatpush1.msra.mxu0 %v7104
    %7130 = vmatprep.subr.mxu0 0.0
    %7131 = vmatpush1.msra.mxu0 %v7105
    %7132 = vmatprep.subr.mxu0 0.0
    %7133 = vmatpush1.msra.mxu0 %v7106
    %7134 = vmatprep.subr.mxu0 0.0
    %7135 = vmatpush1.msra.mxu0 %v7107
    %7136 = vmatprep.subr.mxu0 0.0
    %7137 = vmatpush1.msra.mxu0 %v7108
    %7138 = vmatprep.subr.mxu0 0.0
    %7139 = vmatpush1.msra.mxu0 %v7109
    %7140 = vmatprep.subr.mxu0 0.0
    %7141 = vmatpush1.msra.mxu0 %v7110
    %7142 = vmatprep.subr.mxu0 0.0
    %7143 = vmatpush1.msra.mxu0 %v7111
    %7144 = vmatprep.subr.mxu0 0.0
    %7145 = vmatpush1.msra.mxu0 %v7112
    %7146 = vmatprep.subr.mxu0 0.0
    %7147 = vmatpush1.msra.mxu0 %v7113
    %7148 = vmatprep.subr.mxu0 0.0
    %7149 = vmatpush1.msra.mxu0 %v7114
    %7150 = vmatprep.subr.mxu0 0.0
    %7151 = vmatpush1.msra.mxu0 %v7115
    %7152 = vmatprep.subr.mxu0 0.0
    %7153 = vmatpush1.msra.mxu0 0.0
    %7154 = vmatprep.subr.mxu0 0.0
    %7155 = vmatpush1.msra.mxu0 0.0
    %7156 = vmatprep.subr.mxu0 0.0
    %7157 = vmatpush1.msra.mxu0 0.0
    %7158 = vmatprep.subr.mxu0 0.0
    %7159 = vmatpush1.msra.mxu0 0.0
    %7160 = vmatprep.subr.mxu0 0.0
    %7161 = vmatpush1.msra.mxu0 0.0
    %7162 = vmatprep.subr.mxu0 0.0
    %7163 = vmatpush1.msra.mxu0 0.0
    %7164 = vmatprep.subr.mxu0 0.0
    %7165 = vmatpush1.msra.mxu0 0.0
    %7166 = vmatprep.subr.mxu0 0.0
    %7167 = vmatpush1.msra.mxu0 0.0
    %7168 = vmatprep.subr.mxu0 0.0
    %7169 = vmatpush1.msra.mxu0 0.0
    %7170 = vmatprep.subr.mxu0 0.0
    %7171 = vmatpush1.msra.mxu0 0.0
    %7172 = vmatprep.subr.mxu0 0.0
    %7173 = vmatpush1.msra.mxu0 0.0
    %7174 = vmatprep.subr.mxu0 0.0
    %7175 = vmatpush1.msra.mxu0 0.0
    %7176 = vmatprep.subr.mxu0 0.0
    %7177 = vmatpush1.msra.mxu0 0.0
    %7178 = vmatprep.subr.mxu0 0.0
    %7179 = vmatpush1.msra.mxu0 0.0
    %7180 = vmatprep.subr.mxu0 0.0
    %7181 = vmatpush1.msra.mxu0 0.0
    %7182 = vmatprep.subr.mxu0 0.0
    %7183 = vmatpush1.msra.mxu0 0.0
    %7184 = vmatprep.mubr.f32.mxu0 0.0
    %7185 = vmatmul.mubr.f32.gmra.mrb[0].mxu0 %v7092
    %v7186 = vpop.f32.mrb[0].mxu0
    %v7187 = vadd.f32 %v7119, %v7186
    %v7188 = vpop.f32.mrb[0].mxu0
    %7189 = vmatprep.mubr.f32.mxu0 0.0
    %7190 = vmatmul.mubr.f32.gmra.mrb[0].mxu0 %v7093
    %v7191 = vpop.f32.mrb[0].mxu0
    %v7192 = vadd.f32 %v7119, %v7191
    %v7193 = vpop.f32.mrb[0].mxu0
    %7194 = vmatprep.mubr.f32.mxu0 0.0
    %7195 = vmatmul.mubr.f32.gmra.mrb[0].mxu0 %v7094
    %v7196 = vpop.f32.mrb[0].mxu0
    %v7197 = vadd.f32 %v7119, %v7196
    %v7198 = vpop.f32.mrb[0].mxu0
    %7199 = vmatprep.mubr.f32.mxu0 0.0
    %7200 = vmatmul.mubr.f32.gmra.mrb[0].mxu0 %v7095
    %v7201 = vpop.f32.mrb[0].mxu0
    %v7202 = vadd.f32 %v7119, %v7201
    %v7203 = vpop.f32.mrb[0].mxu0
    %7204 = vmatprep.mubr.f32.mxu0 0.0
    %7205 = vmatmul.mubr.f32.gmra.mrb[0].mxu0 %v7096
    %v7206 = vpop.f32.mrb[0].mxu0
    %v7207 = vadd.f32 %v7119, %v7206
    %v7208 = vpop.f32.mrb[0].mxu0
    %7209 = vmatprep.mubr.f32.mxu0 0.0
    %7210 = vmatmul.mubr.f32.gmra.mrb[0].mxu0 %v7097
    %v7211 = vpop.f32.mrb[0].mxu0
    %v7212 = vadd.f32 %v7119, %v7211
    %v7213 = vpop.f32.mrb[0].mxu0
    %7214 = vmatprep.mubr.f32.mxu0 0.0
    %7215 = vmatmul.mubr.f32.gmra.mrb[0].mxu0 %v7098
    %v7216 = vpop.f32.mrb[0].mxu0
    %v7217 = vadd.f32 %v7119, %v7216
    %v7218 = vpop.f32.mrb[0].mxu0
    %7219 = vmatprep.mubr.f32.mxu0 0.0
    %7220 = vmatmul.mubr.f32.gmra.mrb[0].mxu0 %v7099
    %v7221 = vpop.f32.mrb[0].mxu0
    %v7222 = vadd.f32 %v7119, %v7221
    %v7223 = vpop.f32.mrb[0].mxu0
    %7224 = vdwg.mxu0
    %v7225 = vmul.f32 %v7187, 0.5
    %v7226 = vmul.f32 %v7192, 0.5
    %v7227 = vmul.f32 %v7197, 0.5
    %v7228 = vmul.f32 %v7202, 0.5
    %v7229 = vmul.f32 %v7207, 0.5
    %v7230 = vmul.f32 %v7212, 0.5
    %v7231 = vmul.f32 %v7217, 0.5
    %v7232 = vmul.f32 %v7222, 0.5
    %v7233 = vmul.f32 %v7187, 0.044715
    %v7234 = vmul.f32 %v7192, 0.044715
    %v7235 = vmul.f32 %v7197, 0.044715
    %v7236 = vmul.f32 %v7202, 0.044715
    %v7237 = vmul.f32 %v7207, 0.044715
    %v7238 = vmul.f32 %v7212, 0.044715
    %v7239 = vmul.f32 %v7217, 0.044715
    %v7240 = vmul.f32 %v7222, 0.044715
    %v7241 = vmul.f32 %v7233, %v7187
    %v7242 = vmul.f32 %v7234, %v7192
    %v7243 = vmul.f32 %v7235, %v7197
    %v7244 = vmul.f32 %v7236, %v7202
    %v7245 = vmul.f32 %v7237, %v7207
    %v7246 = vmul.f32 %v7238, %v7212
    %v7247 = vmul.f32 %v7239, %v7217
    %v7248 = vmul.f32 %v7240, %v7222
    %v7249 = vmul.f32 %v7241, %v7187
    %v7250 = vmul.f32 %v7242, %v7192
    %v7251 = vmul.f32 %v7243, %v7197
    %v7252 = vmul.f32 %v7244, %v7202
    %v7253 = vmul.f32 %v7245, %v7207
    %v7254 = vmul.f32 %v7246, %v7212
    %v7255 = vmul.f32 %v7247, %v7217
    %v7256 = vmul.f32 %v7248, %v7222
    %v7257 = vadd.f32 %v7187, %v7249
    %v7258 = vadd.f32 %v7192, %v7250
    %v7259 = vadd.f32 %v7197, %v7251
    %v7260 = vadd.f32 %v7202, %v7252
    %v7261 = vadd.f32 %v7207, %v7253
    %v7262 = vadd.f32 %v7212, %v7254
    %v7263 = vadd.f32 %v7217, %v7255
    %v7264 = vadd.f32 %v7222, %v7256
    %v7265 = vmul.f32 %v7257, 0.7978846
    %v7266 = vmul.f32 %v7258, 0.7978846
    %v7267 = vmul.f32 %v7259, 0.7978846
    %v7268 = vmul.f32 %v7260, 0.7978846
    %v7269 = vmul.f32 %v7261, 0.7978846
    %v7270 = vmul.f32 %v7262, 0.7978846
    %v7271 = vmul.f32 %v7263, 0.7978846
    %v7272 = vmul.f32 %v7264, 0.7978846
    %v7273 = vtanh.pop %v7265
    %v7274 = vtanh.pop %v7266
    %v7275 = vtanh.pop %v7267
    %v7276 = vtanh.pop %v7268
    %v7277 = vtanh.pop %v7269
    %v7278 = vtanh.pop %v7270
    %v7279 = vtanh.pop %v7271
    %v7280 = vtanh.pop %v7272
    %v7281 = vadd.f32 %v7273, 1.0
    %v7282 = vadd.f32 %v7274, 1.0
    %v7283 = vadd.f32 %v7275, 1.0
    %v7284 = vadd.f32 %v7276, 1.0
    %v7285 = vadd.f32 %v7277, 1.0
    %v7286 = vadd.f32 %v7278, 1.0
    %v7287 = vadd.f32 %v7279, 1.0
    %v7288 = vadd.f32 %v7280, 1.0
    %v7289 = vmul.f32 %v7225, %v7281
    %v7290 = vmul.f32 %v7226, %v7282
    %v7291 = vmul.f32 %v7227, %v7283
    %v7292 = vmul.f32 %v7228, %v7284
    %v7293 = vmul.f32 %v7229, %v7285
    %v7294 = vmul.f32 %v7230, %v7286
    %v7295 = vmul.f32 %v7231, %v7287
    %v7296 = vmul.f32 %v7232, %v7288
    %v7297 = vld [vmem:[#allocation10] sm:$0xff]
    %v7298 = vld [vmem:[#allocation10 + $0x8] sm:$0xff]
    %v7299 = vld [vmem:[#allocation10 + $0x10] sm:$0xff]
    %v7300 = vld [vmem:[#allocation10 + $0x18] sm:$0xff]
    %v7301 = vld [vmem:[#allocation10 + $0x20] sm:$0xff]
    %v7302 = vld [vmem:[#allocation10 + $0x28] sm:$0xff]
    %v7303 = vld [vmem:[#allocation10 + $0x30] sm:$0xff]
    %v7304 = vld [vmem:[#allocation10 + $0x38] sm:$0xff]
    %v7305 = vld [vmem:[#allocation10 + $0x40] sm:$0xff]
    %v7306 = vld [vmem:[#allocation10 + $0x48] sm:$0xff]
    %v7307 = vld [vmem:[#allocation10 + $0x50] sm:$0xff]
    %v7308 = vld [vmem:[#allocation10 + $0x58] sm:$0xff]
    %v7309 = vld [vmem:[#allocation10 + $0x60] sm:$0xff]
    %v7310 = vld [vmem:[#allocation10 + $0x68] sm:$0xff]
    %v7311 = vld [vmem:[#allocation10 + $0x70] sm:$0xff]
    %v7312 = vld [vmem:[#allocation10 + $0x78] sm:$0xff]
    %v7313 = vlaneseq
    %v7314 = vshrl.u32 %v7313, 7
    %v7315 = vsub.s32 7, %v7314
    %v7316 = vrot.slane %v118, %v7315
    %7317 = vmatprep.subr.mxu0 0.0
    %7318 = vmatpush1.msra.mxu0 %v7297
    %7319 = vmatprep.subr.mxu0 0.0
    %7320 = vmatpush1.msra.mxu0 %v7298
    %7321 = vmatprep.subr.mxu0 0.0
    %7322 = vmatpush1.msra.mxu0 %v7299
    %7323 = vmatprep.subr.mxu0 0.0
    %7324 = vmatpush1.msra.mxu0 %v7300
    %7325 = vmatprep.subr.mxu0 0.0
    %7326 = vmatpush1.msra.mxu0 %v7301
    %7327 = vmatprep.subr.mxu0 0.0
    %7328 = vmatpush1.msra.mxu0 %v7302
    %7329 = vmatprep.subr.mxu0 0.0
    %7330 = vmatpush1.msra.mxu0 %v7303
    %7331 = vmatprep.subr.mxu0 0.0
    %7332 = vmatpush1.msra.mxu0 %v7304
    %7333 = vmatprep.subr.mxu0 0.0
    %7334 = vmatpush1.msra.mxu0 %v7305
    %7335 = vmatprep.subr.mxu0 0.0
    %7336 = vmatpush1.msra.mxu0 %v7306
    %7337 = vmatprep.subr.mxu0 0.0
    %7338 = vmatpush1.msra.mxu0 %v7307
    %7339 = vmatprep.subr.mxu0 0.0
    %7340 = vmatpush1.msra.mxu0 %v7308
    %7341 = vmatprep.subr.mxu0 0.0
    %7342 = vmatpush1.msra.mxu0 %v7309
    %7343 = vmatprep.subr.mxu0 0.0
    %7344 = vmatpush1.msra.mxu0 %v7310
    %7345 = vmatprep.subr.mxu0 0.0
    %7346 = vmatpush1.msra.mxu0 %v7311
    %7347 = vmatprep.subr.mxu0 0.0
    %7348 = vmatpush1.msra.mxu0 %v7312
    %7349 = vmatprep.subr.mxu0 0.0
    %7350 = vmatpush1.msra.mxu0 0.0
    %7351 = vmatprep.subr.mxu0 0.0
    %7352 = vmatpush1.msra.mxu0 0.0
    %7353 = vmatprep.subr.mxu0 0.0
    %7354 = vmatpush1.msra.mxu0 0.0
    %7355 = vmatprep.subr.mxu0 0.0
    %7356 = vmatpush1.msra.mxu0 0.0
    %7357 = vmatprep.subr.mxu0 0.0
    %7358 = vmatpush1.msra.mxu0 0.0
    %7359 = vmatprep.subr.mxu0 0.0
    %7360 = vmatpush1.msra.mxu0 0.0
    %7361 = vmatprep.subr.mxu0 0.0
    %7362 = vmatpush1.msra.mxu0 0.0
    %7363 = vmatprep.subr.mxu0 0.0
    %7364 = vmatpush1.msra.mxu0 0.0
    %7365 = vmatprep.subr.mxu0 0.0
    %7366 = vmatpush1.msra.mxu0 0.0
    %7367 = vmatprep.subr.mxu0 0.0
    %7368 = vmatpush1.msra.mxu0 0.0
    %7369 = vmatprep.subr.mxu0 0.0
    %7370 = vmatpush1.msra.mxu0 0.0
    %7371 = vmatprep.subr.mxu0 0.0
    %7372 = vmatpush1.msra.mxu0 0.0
    %7373 = vmatprep.subr.mxu0 0.0
    %7374 = vmatpush1.msra.mxu0 0.0
    %7375 = vmatprep.subr.mxu0 0.0
    %7376 = vmatpush1.msra.mxu0 0.0
    %7377 = vmatprep.subr.mxu0 0.0
    %7378 = vmatpush1.msra.mxu0 0.0
    %7379 = vmatprep.subr.mxu0 0.0
    %7380 = vmatpush1.msra.mxu0 0.0
    %7381 = vmatprep.mubr.f32.mxu0 0.0
    %7382 = vmatmul.mubr.f32.gmra.mrb[0].mxu0 %v7289
    %v7383 = vpop.f32.mrb[0].mxu0
    %v7384 = vadd.f32 %v7316, %v7383
    %v7385 = vpop.f32.mrb[0].mxu0
    %7386 = vmatprep.mubr.f32.mxu0 0.0
    %7387 = vmatmul.mubr.f32.gmra.mrb[0].mxu0 %v7290
    %v7388 = vpop.f32.mrb[0].mxu0
    %v7389 = vadd.f32 %v7316, %v7388
    %v7390 = vpop.f32.mrb[0].mxu0
    %7391 = vmatprep.mubr.f32.mxu0 0.0
    %7392 = vmatmul.mubr.f32.gmra.mrb[0].mxu0 %v7291
    %v7393 = vpop.f32.mrb[0].mxu0
    %v7394 = vadd.f32 %v7316, %v7393
    %v7395 = vpop.f32.mrb[0].mxu0
    %7396 = vmatprep.mubr.f32.mxu0 0.0
    %7397 = vmatmul.mubr.f32.gmra.mrb[0].mxu0 %v7292
    %v7398 = vpop.f32.mrb[0].mxu0
    %v7399 = vadd.f32 %v7316, %v7398
    %v7400 = vpop.f32.mrb[0].mxu0
    %7401 = vmatprep.mubr.f32.mxu0 0.0
    %7402 = vmatmul.mubr.f32.gmra.mrb[0].mxu0 %v7293
    %v7403 = vpop.f32.mrb[0].mxu0
    %v7404 = vadd.f32 %v7316, %v7403
    %v7405 = vpop.f32.mrb[0].mxu0
    %7406 = vmatprep.mubr.f32.mxu0 0.0
    %7407 = vmatmul.mubr.f32.gmra.mrb[0].mxu0 %v7294
    %v7408 = vpop.f32.mrb[0].mxu0
    %v7409 = vadd.f32 %v7316, %v7408
    %v7410 = vpop.f32.mrb[0].mxu0
    %7411 = vmatprep.mubr.f32.mxu0 0.0
    %7412 = vmatmul.mubr.f32.gmra.mrb[0].mxu0 %v7295
    %v7413 = vpop.f32.mrb[0].mxu0
    %v7414 = vadd.f32 %v7316, %v7413
    %v7415 = vpop.f32.mrb[0].mxu0
    %7416 = vmatprep.mubr.f32.mxu0 0.0
    %7417 = vmatmul.mubr.f32.gmra.mrb[0].mxu0 %v7296
    %v7418 = vpop.f32.mrb[0].mxu0
    %v7419 = vadd.f32 %v7316, %v7418
    %v7420 = vpop.f32.mrb[0].mxu0
    %7421 = vdwg.mxu0
    %v7422 = vadd.f32 %v7384, %v6980
    %v7423 = vadd.f32 %v7389, %v6981
    %v7424 = vadd.f32 %v7394, %v6982
    %v7425 = vadd.f32 %v7399, %v6983
    %v7426 = vadd.f32 %v7404, %v6984
    %v7427 = vadd.f32 %v7409, %v6985
    %v7428 = vadd.f32 %v7414, %v6986
    %v7429 = vadd.f32 %v7419, %v6987
    %7430 = vst [vmem:[#allocation11] sm:$0xff] %v7422
    %7431 = vst [vmem:[#allocation11 + $0x8] sm:$0xff] %v7423
    %7432 = vst [vmem:[#allocation11 + $0x10] sm:$0xff] %v7424
    %7433 = vst [vmem:[#allocation11 + $0x18] sm:$0xff] %v7425
    %7434 = vst [vmem:[#allocation11 + $0x20] sm:$0xff] %v7426
    %7435 = vst [vmem:[#allocation11 + $0x28] sm:$0xff] %v7427
    %7436 = vst [vmem:[#allocation11 + $0x30] sm:$0xff] %v7428
    %7437 = vst [vmem:[#allocation11 + $0x38] sm:$0xff] %v7429
    // Predicated region
    $region58: #{tpu_custom_call.1} parent=1 // pred_check
      _
    $region59: #{tpu_custom_call.1} parent=1 // pred_check_branch
      %7439 = sbr.rel (0) target = $region61
    $region60: #{tpu_custom_call.1} parent=1 // pred_region
      %s7441 = ssub.s32 1024, 1024
      %7442 = vsyncadd [#allocation4], %s7441
      %s7443 = sshll.u32 [#allocation11], 4
      %s7444 = int_to_ptr.vmem [resolvable:$true] %s7443
      %7449 = dma.vmem_to_hbm [thread:$0]  %s7444, 1024, %s9, [#allocation4], 128, 128, 8
    $region61: #{tpu_custom_call.1} parent=1 // pred_fallthru
      _
    // Predicated region
    $region62: #{tpu_custom_call.1} parent=1 // pred_check
      _
    $region63: #{tpu_custom_call.1} parent=1 // pred_check_branch
      %7451 = sbr.rel (0) target = $region65
    $region64: #{tpu_custom_call.1} parent=1 // pred_region
      %7452 = dma.done [#allocation4], 1024
    $region65: #{tpu_custom_call.1} parent=1 // pred_fallthru
      _
    %7453 = vsyncpa [#allocation3], 1
    %7454 = vsyncpa [#allocation6], 1
    %7455 = vsyncpa [#allocation9], 1
    %7456 = vsyncpa [#allocation4], 1

</llo_original>
